<compile_context>
chip_gen: v6e
topology: v6e:2x2x1
jax: 0.10.0
libtpu: 0.0.40
codegen_flags: <defaults>
</compile_context>

<pallas_src>
import functools
import math

import jax
import jax.numpy as jnp
import numpy as np
from jax.experimental import pallas as pl
from jax.experimental.pallas import tpu as pltpu

EPS = 1e-12


# ----------------------------------------------------------------------------
# Fused Pallas kernel: one grid step = one (token-batch block, layer) pair
# ----------------------------------------------------------------------------
def _fused_inter_transformer_kernel(
        x_ref, pe_ref,
        wqkv_ref, bqkv_ref, wo_ref, bo_ref,
        ln1w_ref, ln1b_ref,
        w1_ref, b1_ref, w2_ref, b2_ref,
        ln2w_ref, ln2b_ref,
        gln_w_ref, gln_b_ref,
        out_ref,
        h_ref,
        *, num_heads, eps, approx_recip):
    """grid = (nb, L).  x_ref/out_ref: (Bp, S, F) token block (constant in l).
    Weight refs carry a leading singleton layer dim (block (1, ...), index l).
    h_ref: persistent VMEM scratch (Bp*S, F) holding the running activation.
    Wqkv columns are head-interleaved: per head h -> [q_h(dh) | k_h(dh) | v_h(dh)],
    with 1/sqrt(dh) folded into the q columns/bias."""
    Bp, S, F = x_ref.shape
    H = num_heads
    dh = F // H
    T = Bp * S
    md = wqkv_ref.dtype
    l = pl.program_id(1)

    # ---- first layer step: positional-encoding add ---------------------------
    # module: x + PositionalEncoding(x) == x + (x + pe) == 2x + pe  (eval mode)
    @pl.when(l == 0)
    def _init():
        x0 = x_ref[...].astype(jnp.float32)
        pe = pe_ref[...].astype(jnp.float32)
        h_ref[...] = (2.0 * x0 + pe).reshape(T, F)

    h = h_ref[...]                                            # (T, F) f32

    def layer_norm(y, w, b):
        mu = jnp.mean(y, axis=-1, keepdims=True)
        var = jnp.mean((y - mu) ** 2, axis=-1, keepdims=True)
        return (y - mu) * jax.lax.rsqrt(var + eps) * w + b

    # ---- multi-head self-attention (Q scale pre-folded into Wq/bq) -----------
    qkv = jnp.dot(h.astype(md), wqkv_ref[0],
                  preferred_element_type=jnp.float32) + bqkv_ref[0]   # (T, 3F)
    qkv3 = qkv.reshape(Bp, S, 3 * F)
    # heads to the leading (batch) axis: H lane slices + ONE concat
    heads = jnp.concatenate(
        [qkv3[:, :, hh * 3 * dh:(hh + 1) * 3 * dh] for hh in range(H)],
        axis=0)                                               # (H*Bp, S, 3dh)
    q = heads[:, :, 0:dh]
    k = heads[:, :, dh:2 * dh]
    v = heads[:, :, 2 * dh:3 * dh]

    # TODO(synk): for very large S, replace this fully-materialized
    # (H*Bp, S, S) score block with a flash-style online softmax over K tiles
    # so VMEM use is not quadratic in S.
    s = jnp.einsum('bqd,bkd->bqk', q.astype(md), k.astype(md),
                   preferred_element_type=jnp.float32)        # (H*Bp, S, S)
    s = s - jnp.max(s, axis=-1, keepdims=True)
    p = jnp.exp(s)
    p = p * pl.reciprocal(jnp.sum(p, axis=-1, keepdims=True), approx=approx_recip)
    ctx = jnp.einsum('bqk,bkd->bqd', p.astype(md), v.astype(md),
                     preferred_element_type=jnp.float32)      # (H*Bp, S, dh)

    # merge heads back onto the lane axis (head-major, matching torch concat)
    ctx = jnp.concatenate(
        [ctx[hh * Bp:(hh + 1) * Bp].reshape(T, dh) for hh in range(H)],
        axis=-1)                                              # (T, F)
    attn = jnp.dot(ctx.astype(md), wo_ref[0],
                   preferred_element_type=jnp.float32) + bo_ref[0]

    # ---- residual + LayerNorm 1 (post-LN) -------------------------------------
    y = layer_norm(h + attn, ln1w_ref[0], ln1b_ref[0])

    # ---- feed-forward (relu) ---------------------------------------------------
    h1 = jnp.dot(y.astype(md), w1_ref[0],
                 preferred_element_type=jnp.float32) + b1_ref[0]
    h1 = jnp.maximum(h1, 0.0)
    ff = jnp.dot(h1.astype(md), w2_ref[0],
                 preferred_element_type=jnp.float32) + b2_ref[0]

    # ---- residual + LayerNorm 2 ------------------------------------------------
    h_new = layer_norm(y + ff, ln2w_ref[0], ln2b_ref[0])
    h_ref[...] = h_new

    # ---- last layer step: gLN (GroupNorm(1,F) per token-batch element over
    #      (S, F)) + fused residual add, then the single output store ----------
    @pl.when(l == pl.num_programs(1) - 1)
    def _final():
        z = h_new.reshape(Bp, S, F)
        mu = jnp.mean(jnp.mean(z, axis=2, keepdims=True), axis=1, keepdims=True)
        d = z - mu
        var = jnp.mean(jnp.mean(d * d, axis=2, keepdims=True),
                       axis=1, keepdims=True)
        gln = d * jax.lax.rsqrt(var + eps) * gln_w_ref[...] + gln_b_ref[...]
        out_ref[...] = (gln + x_ref[...].astype(jnp.float32)).astype(out_ref.dtype)


# ----------------------------------------------------------------------------
# One-time parameter preparation (hoisted out of the jitted forward)
# ----------------------------------------------------------------------------
def positional_encoding(T, F, base=10000.0):
    pos = jnp.arange(T, dtype=jnp.float32)
    idx = jnp.arange(0, F, 2, dtype=jnp.float32) / F
    ind = pos[:, None] / (base ** idx[None, :])
    return jnp.stack([jnp.sin(ind), jnp.cos(ind)], axis=-1).reshape(T, F)


def prepare_params(params, num_heads, matmul_dtype=jnp.float32):
    """Pre-transpose, Q-scale-fold, head-interleave and stack all layer weights.
    Call once; the result is passed to the jitted forward (no per-call prep)."""
    layers = params["layers"]
    F = layers[0]["wo"].shape[0]
    d_ff = layers[0]["w1"].shape[0]
    dh = F // num_heads
    scale = dh ** -0.5
    md = matmul_dtype

    # column permutation: [Q(F)|K(F)|V(F)] -> per head h: [q_h(dh)|k_h(dh)|v_h(dh)]
    perm = np.concatenate(
        [np.arange(j * F + h * dh, j * F + (h + 1) * dh)
         for h in range(num_heads) for j in range(3)])

    def prep_wqkv(w):            # torch (3F, F) -> (F, 3F), scale Q cols, permute
        wt = w.T
        wt = jnp.concatenate([wt[:, :F] * scale, wt[:, F:]], axis=1)
        return wt[:, perm].astype(md)

    def prep_bqkv(b):
        bb = jnp.concatenate([b[:F] * scale, b[F:]])
        return bb[perm].reshape(1, 3 * F)

    return dict(
        wqkv=jnp.stack([prep_wqkv(lp["wqkv"]) for lp in layers]),
        bqkv=jnp.stack([prep_bqkv(lp["bqkv"]) for lp in layers]),
        wo=jnp.stack([lp["wo"].T.astype(md) for lp in layers]),
        bo=jnp.stack([lp["bo"].reshape(1, F) for lp in layers]),
        ln1w=jnp.stack([lp["ln1w"].reshape(1, F) for lp in layers]),
        ln1b=jnp.stack([lp["ln1b"].reshape(1, F) for lp in layers]),
        w1=jnp.stack([lp["w1"].T.astype(md) for lp in layers]),
        b1=jnp.stack([lp["b1"].reshape(1, d_ff) for lp in layers]),
        w2=jnp.stack([lp["w2"].T.astype(md) for lp in layers]),
        b2=jnp.stack([lp["b2"].reshape(1, F) for lp in layers]),
        ln2w=jnp.stack([lp["ln2w"].reshape(1, F) for lp in layers]),
        ln2b=jnp.stack([lp["ln2b"].reshape(1, F) for lp in layers]),
        gw=params["gln_gamma"].reshape(1, F),
        gb=params["gln_beta"].reshape(1, F),
    )


# ----------------------------------------------------------------------------
# Forward wrapper: layout plumbing + single pallas_call
# ----------------------------------------------------------------------------
def inter_transformer_forward(x, prep, *, num_heads, eps=EPS,
                              batch_blocks=None, vmem_budget_bytes=None):
    """x: (batch, num_features, S, chunk_size) -> same shape."""
    batch, F, S, chunk = x.shape
    B_tok = batch * chunk
    L = prep["wqkv"].shape[0]
    d_ff = prep["w1"].shape[2]
    md = prep["wqkv"].dtype
    H = num_heads

    # (batch, F, S, chunk) -> token-major (B_tok = batch*chunk, S, F)
    # TODO(synk): fold this permute (and the inverse below) into the kernel via
    # native (b, F, S, chunk) blocks + an in-VMEM relayout to drop two extra
    # HBM passes over the activation.
    x_tok = jnp.transpose(x, (0, 3, 2, 1)).reshape(B_tok, S, F)
    pe = positional_encoding(S, F)

    # ---- generation-aware VMEM budget & batch-block count ---------------------
    if vmem_budget_bytes is None:
        try:
            vmem_budget_bytes = int(0.75 * pltpu.get_tpu_info().vmem_capacity_bytes)
        except Exception:
            vmem_budget_bytes = 48 << 20
    vmem_budget_bytes = int(vmem_budget_bytes)

    w_isz = jnp.dtype(md).itemsize
    layer_w_bytes = ((F * 3 * F + F * F + 2 * F * d_ff) * w_isz
                     + (3 * F + 6 * F + d_ff) * 4)

    def _step_vmem_bytes(Bp):
        T = Bp * S
        io = 2 * 2 * Bp * S * F * 4            # x + out blocks, double-buffered
        scratch = T * F * 4                    # persistent activation
        scores = 2 * H * Bp * S * S * 4        # logits + probs
        acts = T * (2 * 3 * F + d_ff + 4 * F) * 4
        return int(1.25 * (io + scratch + scores + acts)) + 2 * layer_w_bytes

    if batch_blocks is None:
        # smallest split of B_tok whose per-step working set fits ~70% of budget
        # (on v7x, additionally consider >=2 so both TensorCores get work).
        nb = B_tok
        for cand in range(1, B_tok + 1):
            if B_tok % cand == 0 and \
                    _step_vmem_bytes(B_tok // cand) <= int(0.7 * vmem_budget_bytes):
                nb = cand
                break
    else:
        nb = batch_blocks
        assert B_tok % nb == 0, "batch_blocks must divide batch*chunk_size"
    Bp = B_tok // nb

    # ---- BlockSpecs ------------------------------------------------------------
    tok_spec = pl.BlockSpec((Bp, S, F), lambda i, l: (i, 0, 0))

    def per_layer(a, b):
        return pl.BlockSpec((1, a, b), lambda i, l: (l, 0, 0))

    def const2(a, b):  # truly constant-index small blocks: single-buffered
        return pl.BlockSpec((a, b), lambda i, l: (0, 0),
                            pipeline_mode=pl.Buffered(1))

    kernel = functools.partial(
        _fused_inter_transformer_kernel,
        num_heads=H, eps=float(eps),
        approx_recip=(jnp.dtype(md) != jnp.dtype(jnp.float32)))

    out_tok = pl.pallas_call(
        kernel,
        out_shape=jax.ShapeDtypeStruct((B_tok, S, F), jnp.float32),
        grid=(nb, L),
        in_specs=[
            tok_spec,                                    # tokens
            const2(S, F),                                # positional encoding
            per_layer(F, 3 * F), per_layer(1, 3 * F),    # Wqkv^T, bqkv
            per_layer(F, F), per_layer(1, F),            # Wo^T, bo
            per_layer(1, F), per_layer(1, F),            # ln1 w, b
            per_layer(F, d_ff), per_layer(1, d_ff),      # W1^T, b1
            per_layer(d_ff, F), per_layer(1, F),         # W2^T, b2
            per_layer(1, F), per_layer(1, F),            # ln2 w, b
            const2(1, F), const2(1, F),                  # gLN gamma, beta
        ],
        out_specs=tok_spec,
        scratch_shapes=[pltpu.VMEM((Bp * S, F), jnp.float32)],
        compiler_params=pltpu.CompilerParams(
            dimension_semantics=("parallel", "arbitrary"),
            vmem_limit_bytes=vmem_budget_bytes),
    )(x_tok, pe, prep["wqkv"], prep["bqkv"], prep["wo"], prep["bo"],
      prep["ln1w"], prep["ln1b"], prep["w1"], prep["b1"], prep["w2"],
      prep["b2"], prep["ln2w"], prep["ln2b"], prep["gw"], prep["gb"])

    # residual already added in-kernel; just undo the layout permute
    return jnp.transpose(out_tok.reshape(batch, chunk, S, F), (0, 3, 2, 1))


# ----------------------------------------------------------------------------
# Pure-JAX reference (true f32 module semantics) for correctness checking
# ----------------------------------------------------------------------------
def _ref_layer(x, lp, num_heads, eps):
    B, S, d = x.shape
    dh = d // num_heads
    qkv = jnp.einsum("bsd,ed->bse", x, lp["wqkv"]) + lp["bqkv"]
    q, k, v = qkv[..., :d], qkv[..., d:2 * d], qkv[..., 2 * d:]
    q = q.reshape(B, S, num_heads, dh).transpose(0, 2, 1, 3)
    k = k.reshape(B, S, num_heads, dh).transpose(0, 2, 1, 3)
    v = v.reshape(B, S, num_heads, dh).transpose(0, 2, 1, 3)
    s = jnp.einsum("bhqd,bhkd->bhqk", q, k) * (dh ** -0.5)
    p = jax.nn.softmax(s, axis=-1)
    a = jnp.einsum("bhqk,bhkd->bhqd", p, v).transpose(0, 2, 1, 3).reshape(B, S, d)
    a = jnp.einsum("bsd,ed->bse", a, lp["wo"]) + lp["bo"]

    def ln(y, w, b):
        mu = jnp.mean(y, -1, keepdims=True)
        var = jnp.mean((y - mu) ** 2, -1, keepdims=True)
        return (y - mu) / jnp.sqrt(var + eps) * w + b

    y = ln(x + a, lp["ln1w"], lp["ln1b"])
    h = jax.nn.relu(jnp.einsum("bsd,fd->bsf", y, lp["w1"]) + lp["b1"])
    f = jnp.einsum("bsf,df->bsd", h, lp["w2"]) + lp["b2"]
    return ln(y + f, lp["ln2w"], lp["ln2b"])


def inter_transformer_reference(x, params, num_heads, eps=EPS):
    batch, F, S, chunk = x.shape
    xt = jnp.transpose(x, (2, 0, 3, 1)).reshape(S, batch * chunk, F)
    xt = 2.0 * xt + positional_encoding(S, F)[:, None, :]
    xb = jnp.transpose(xt, (1, 0, 2))
    for lp in params["layers"]:
        xb = _ref_layer(xb, lp, num_heads, eps)
    mu = jnp.mean(xb, axis=(1, 2), keepdims=True)
    var = jnp.mean((xb - mu) ** 2, axis=(1, 2), keepdims=True)
    xb = (xb - mu) / jnp.sqrt(var + eps) * params["gln_gamma"] + params["gln_beta"]
    xo = jnp.transpose(xb, (1, 0, 2)).reshape(S, batch, chunk, F)
    return jnp.transpose(xo, (1, 3, 0, 2)) + x


# ----------------------------------------------------------------------------
# Deterministic parameter init (torch-layout weights)
# ----------------------------------------------------------------------------
def init_params(key, d, d_ff, num_layers):
    layers = []
    for _ in range(num_layers):
        key, k0, k1, k2, k3, k4, k5 = jax.random.split(key, 7)
        layers.append(dict(
            wqkv=jax.random.normal(k0, (3 * d, d), jnp.float32) / math.sqrt(d),
            bqkv=0.01 * jax.random.normal(k1, (3 * d,), jnp.float32),
            wo=jax.random.normal(k2, (d, d), jnp.float32) / math.sqrt(d),
            bo=0.01 * jax.random.normal(k3, (d,), jnp.float32),
            ln1w=jnp.ones((d,), jnp.float32),
            ln1b=jnp.zeros((d,), jnp.float32),
            w1=jax.random.normal(k4, (d_ff, d), jnp.float32) / math.sqrt(d),
            b1=jnp.zeros((d_ff,), jnp.float32),
            w2=jax.random.normal(k5, (d, d_ff), jnp.float32) / math.sqrt(d_ff),
            b2=jnp.zeros((d,), jnp.float32),
            ln2w=jnp.ones((d,), jnp.float32),
            ln2b=jnp.zeros((d,), jnp.float32),
        ))
    return dict(layers=layers,
                gln_gamma=jnp.ones((d,), jnp.float32),
                gln_beta=jnp.zeros((d,), jnp.float32))


# ----------------------------------------------------------------------------
if __name__ == "__main__":
    # InterTransformer(num_features=32, num_layers=2, num_heads=4, d_ff=64,
    #                  norm=True(gLN), nonlinear='relu') at eval time.
    batch, num_features, S, chunk = 2, 32, 8, 4
    num_heads, d_ff, num_layers = 4, 64, 2

    key = jax.random.PRNGKey(0)
    kx, kp = jax.random.split(key)
    x = jax.random.normal(kx, (batch, num_features, S, chunk), jnp.float32)
    params = init_params(kp, num_features, d_ff, num_layers)

    ref = jax.block_until_ready(inter_transformer_reference(x, params, num_heads))

    fwd = jax.jit(functools.partial(inter_transformer_forward,
                                    num_heads=num_heads))

    # --- f32 matmul path: strict correctness gate vs the pure-JAX reference ----
    prep_f32 = prepare_params(params, num_heads, matmul_dtype=jnp.float32)
    out = jax.block_until_ready(fwd(x, prep_f32))
    assert out.shape == x.shape
    diff = float(jnp.max(jnp.abs(out - ref)))
    assert diff < 5e-2, f"f32 kernel mismatch vs reference: {diff}"

    # --- bf16 matmul-operand path (recommended on v6e/v7x at production dims) --
    prep_bf16 = prepare_params(params, num_heads, matmul_dtype=jnp.bfloat16)
    out_bf16 = jax.block_until_ready(fwd(x, prep_bf16))
    diff_bf16 = float(jnp.max(jnp.abs(out_bf16 - ref)))
    assert bool(jnp.all(jnp.isfinite(out_bf16))) and diff_bf16 < 5e-1, \
        f"bf16 kernel sanity check failed: {diff_bf16}"

    print("KERNEL_OK")
</pallas_src>

<mosaic_0001>
module attributes {stable_mosaic.version = 11 : i64} {
  func.func @_fused_inter_transformer_kernel(%arg0: i32, %arg1: i32, %arg2: memref<8x8x32xf32, #tpu.memory_space<vmem>>, %arg3: memref<8x32xf32, #tpu.memory_space<vmem>>, %arg4: memref<1x32x96xf32, #tpu.memory_space<vmem>>, %arg5: memref<1x1x96xf32, #tpu.memory_space<vmem>>, %arg6: memref<1x32x32xf32, #tpu.memory_space<vmem>>, %arg7: memref<1x1x32xf32, #tpu.memory_space<vmem>>, %arg8: memref<1x1x32xf32, #tpu.memory_space<vmem>>, %arg9: memref<1x1x32xf32, #tpu.memory_space<vmem>>, %arg10: memref<1x32x64xf32, #tpu.memory_space<vmem>>, %arg11: memref<1x1x64xf32, #tpu.memory_space<vmem>>, %arg12: memref<1x64x32xf32, #tpu.memory_space<vmem>>, %arg13: memref<1x1x32xf32, #tpu.memory_space<vmem>>, %arg14: memref<1x1x32xf32, #tpu.memory_space<vmem>>, %arg15: memref<1x1x32xf32, #tpu.memory_space<vmem>>, %arg16: memref<1x32xf32, #tpu.memory_space<vmem>>, %arg17: memref<1x32xf32, #tpu.memory_space<vmem>>, %arg18: memref<8x8x32xf32, #tpu.memory_space<vmem>>, %arg19: memref<64x32xf32, #tpu.memory_space<vmem>>) attributes {dimension_semantics = [#tpu.dimension_semantics<parallel>, #tpu.dimension_semantics<arbitrary>], iteration_bounds = array<i64: 1, 2>, scalar_prefetch = 0 : i64, scratch_operands = 1 : i64, tpu.core_type = #tpu.core_type<tc>, window_params = [{transform_indices = @transform_0, window_bounds = array<i64: 8, 8, 32>}, {pipeline_mode = #tpu.pipeline_mode<synchronous>, transform_indices = @transform_1, window_bounds = array<i64: 8, 32>}, {transform_indices = @transform_2, window_bounds = array<i64: 1, 32, 96>}, {transform_indices = @transform_3, window_bounds = array<i64: 1, 1, 96>}, {transform_indices = @transform_4, window_bounds = array<i64: 1, 32, 32>}, {transform_indices = @transform_5, window_bounds = array<i64: 1, 1, 32>}, {transform_indices = @transform_6, window_bounds = array<i64: 1, 1, 32>}, {transform_indices = @transform_7, window_bounds = array<i64: 1, 1, 32>}, {transform_indices = @transform_8, window_bounds = array<i64: 1, 32, 64>}, {transform_indices = @transform_9, window_bounds = array<i64: 1, 1, 64>}, {transform_indices = @transform_10, window_bounds = array<i64: 1, 64, 32>}, {transform_indices = @transform_11, window_bounds = array<i64: 1, 1, 32>}, {transform_indices = @transform_12, window_bounds = array<i64: 1, 1, 32>}, {transform_indices = @transform_13, window_bounds = array<i64: 1, 1, 32>}, {pipeline_mode = #tpu.pipeline_mode<synchronous>, transform_indices = @transform_14, window_bounds = array<i64: 1, 32>}, {pipeline_mode = #tpu.pipeline_mode<synchronous>, transform_indices = @transform_15, window_bounds = array<i64: 1, 32>}, {transform_indices = @transform_16, window_bounds = array<i64: 8, 8, 32>}]} {
    %c0_i32 = arith.constant 0 : i32
    %0 = arith.cmpi eq, %arg1, %c0_i32 : i32
    %1 = arith.extui %0 : i1 to i32
    %c0_i32_0 = arith.constant 0 : i32
    %2 = arith.cmpi ne, %1, %c0_i32_0 : i32
    scf.if %2 {
      %c0_59 = arith.constant 0 : index
      %c0_60 = arith.constant 0 : index
      %c0_61 = arith.constant 0 : index
      %122 = vector.load %arg2[%c0_59, %c0_60, %c0_61] : memref<8x8x32xf32, #tpu.memory_space<vmem>>, vector<8x8x32xf32>
      %c0_62 = arith.constant 0 : index
      %c0_63 = arith.constant 0 : index
      %123 = vector.load %arg3[%c0_62, %c0_63] : memref<8x32xf32, #tpu.memory_space<vmem>>, vector<8x32xf32>
      %cst_64 = arith.constant 2.000000e+00 : f32
      %124 = vector.broadcast %cst_64 : f32 to vector<8x8x32xf32>
      %125 = arith.mulf %124, %122 : vector<8x8x32xf32>
      %126 = vector.shape_cast %123 : vector<8x32xf32> to vector<1x8x32xf32>
      %127 = vector.broadcast %126 : vector<1x8x32xf32> to vector<8x8x32xf32>
      %128 = arith.addf %125, %127 : vector<8x8x32xf32>
      %129 = vector.shape_cast %128 : vector<8x8x32xf32> to vector<64x32xf32>
      %c0_65 = arith.constant 0 : index
      %c0_66 = arith.constant 0 : index
      %130 = vector.load %arg19[%c0_65, %c0_66] : memref<64x32xf32, #tpu.memory_space<vmem>>, vector<64x32xf32>
      tpu.vector_store %arg19[%c0_65, %c0_66], %129 {strides = array<i32>} : memref<64x32xf32, #tpu.memory_space<vmem>>, vector<64x32xf32>,
    } else {
    }
    %c0 = arith.constant 0 : index
    %c0_1 = arith.constant 0 : index
    %3 = vector.load %arg19[%c0, %c0_1] : memref<64x32xf32, #tpu.memory_space<vmem>>, vector<64x32xf32>
    %c0_2 = arith.constant 0 : index
    %c0_3 = arith.constant 0 : index
    %c0_4 = arith.constant 0 : index
    %4 = vector.load %arg4[%c0_2, %c0_3, %c0_4] : memref<1x32x96xf32, #tpu.memory_space<vmem>>, vector<1x32x96xf32>
    %5 = vector.shape_cast %4 : vector<1x32x96xf32> to vector<32x96xf32>
    %cst = arith.constant dense<0.000000e+00> : vector<64x96xf32>
    %6 = tpu.matmul %3, %5, %cst {dimension_numbers = #tpu.dot_dimension_numbers<[1], [0], [0], [1], [0, 0, 1, 1], [], []>} : vector<64x32xf32>, vector<32x96xf32>, vector<64x96xf32> -> vector<64x96xf32>
    %c0_5 = arith.constant 0 : index
    %c0_6 = arith.constant 0 : index
    %c0_7 = arith.constant 0 : index
    %7 = vector.load %arg5[%c0_5, %c0_6, %c0_7] : memref<1x1x96xf32, #tpu.memory_space<vmem>>, vector<1x1x96xf32>
    %8 = vector.shape_cast %7 : vector<1x1x96xf32> to vector<1x96xf32>
    %9 = vector.broadcast %8 : vector<1x96xf32> to vector<64x96xf32>
    %10 = arith.addf %6, %9 : vector<64x96xf32>
    %11 = vector.shape_cast %10 : vector<64x96xf32> to vector<8x8x96xf32>
    %12 = vector.extract_strided_slice %11 {offsets = [0, 0, 0], sizes = [8, 8, 24], strides = [1, 1, 1]} : vector<8x8x96xf32> to vector<8x8x24xf32>
    %13 = vector.extract_strided_slice %11 {offsets = [0, 0, 24], sizes = [8, 8, 24], strides = [1, 1, 1]} : vector<8x8x96xf32> to vector<8x8x24xf32>
    %14 = vector.extract_strided_slice %11 {offsets = [0, 0, 48], sizes = [8, 8, 24], strides = [1, 1, 1]} : vector<8x8x96xf32> to vector<8x8x24xf32>
    %15 = vector.extract_strided_slice %11 {offsets = [0, 0, 72], sizes = [8, 8, 24], strides = [1, 1, 1]} : vector<8x8x96xf32> to vector<8x8x24xf32>
    %16 = tpu.concatenate %12, %13, %14, %15 in 0 : vector<8x8x24xf32>, vector<8x8x24xf32>, vector<8x8x24xf32>, vector<8x8x24xf32> -> vector<32x8x24xf32>
    %17 = vector.extract_strided_slice %16 {offsets = [0, 0, 0], sizes = [32, 8, 8], strides = [1, 1, 1]} : vector<32x8x24xf32> to vector<32x8x8xf32>
    %18 = vector.extract_strided_slice %16 {offsets = [0, 0, 8], sizes = [32, 8, 8], strides = [1, 1, 1]} : vector<32x8x24xf32> to vector<32x8x8xf32>
    %19 = vector.extract_strided_slice %16 {offsets = [0, 0, 16], sizes = [32, 8, 8], strides = [1, 1, 1]} : vector<32x8x24xf32> to vector<32x8x8xf32>
    "tpu.trace_start"() <{level = 10 : i32, message = "bqd,bkd->bqk"}> : () -> ()
    %cst_8 = arith.constant dense<0.000000e+00> : vector<32x8x8xf32>
    %20 = tpu.matmul %17, %18, %cst_8 {dimension_numbers = #tpu.dot_dimension_numbers<[2], [2], [1], [1], [0, 0, 0, 1, 1, 1], [0], [0]>} : vector<32x8x8xf32>, vector<32x8x8xf32>, vector<32x8x8xf32> -> vector<32x8x8xf32>
    "tpu.trace_stop"() : () -> ()
    %cst_9 = arith.constant dense<0xFF800000> : vector<32x8xf32>
    %21 = vector.multi_reduction <maximumf>, %20, %cst_9 [2] : vector<32x8x8xf32> to vector<32x8xf32>
    %22 = vector.shape_cast %21 : vector<32x8xf32> to vector<32x8x1xf32>
    %23 = vector.broadcast %22 : vector<32x8x1xf32> to vector<32x8x8xf32>
    %24 = arith.subf %20, %23 : vector<32x8x8xf32>
    %25 = math.exp %24 : vector<32x8x8xf32>
    %cst_10 = arith.constant dense<0.000000e+00> : vector<32x8xf32>
    %26 = vector.multi_reduction <add>, %25, %cst_10 [2] : vector<32x8x8xf32> to vector<32x8xf32>
    %27 = vector.shape_cast %26 : vector<32x8xf32> to vector<32x8x1xf32>
    %28 = tpu.reciprocal %27 : vector<32x8x1xf32> -> vector<32x8x1xf32>
    %29 = vector.broadcast %28 : vector<32x8x1xf32> to vector<32x8x8xf32>
    %30 = arith.mulf %25, %29 : vector<32x8x8xf32>
    "tpu.trace_start"() <{level = 10 : i32, message = "bqk,bkd->bqd"}> : () -> ()
    %cst_11 = arith.constant dense<0.000000e+00> : vector<32x8x8xf32>
    %31 = tpu.matmul %30, %19, %cst_11 {dimension_numbers = #tpu.dot_dimension_numbers<[2], [1], [1], [2], [0, 0, 0, 1, 1, 2], [0], [0]>} : vector<32x8x8xf32>, vector<32x8x8xf32>, vector<32x8x8xf32> -> vector<32x8x8xf32>
    "tpu.trace_stop"() : () -> ()
    %32 = vector.extract_strided_slice %31 {offsets = [0, 0, 0], sizes = [8, 8, 8], strides = [1, 1, 1]} : vector<32x8x8xf32> to vector<8x8x8xf32>
    %33 = vector.shape_cast %32 : vector<8x8x8xf32> to vector<64x8xf32>
    %34 = vector.extract_strided_slice %31 {offsets = [8, 0, 0], sizes = [8, 8, 8], strides = [1, 1, 1]} : vector<32x8x8xf32> to vector<8x8x8xf32>
    %35 = vector.shape_cast %34 : vector<8x8x8xf32> to vector<64x8xf32>
    %36 = vector.extract_strided_slice %31 {offsets = [16, 0, 0], sizes = [8, 8, 8], strides = [1, 1, 1]} : vector<32x8x8xf32> to vector<8x8x8xf32>
    %37 = vector.shape_cast %36 : vector<8x8x8xf32> to vector<64x8xf32>
    %38 = vector.extract_strided_slice %31 {offsets = [24, 0, 0], sizes = [8, 8, 8], strides = [1, 1, 1]} : vector<32x8x8xf32> to vector<8x8x8xf32>
    %39 = vector.shape_cast %38 : vector<8x8x8xf32> to vector<64x8xf32>
    %40 = tpu.concatenate %33, %35, %37, %39 in 1 : vector<64x8xf32>, vector<64x8xf32>, vector<64x8xf32>, vector<64x8xf32> -> vector<64x32xf32>
    %c0_12 = arith.constant 0 : index
    %c0_13 = arith.constant 0 : index
    %c0_14 = arith.constant 0 : index
    %41 = vector.load %arg6[%c0_12, %c0_13, %c0_14] : memref<1x32x32xf32, #tpu.memory_space<vmem>>, vector<1x32x32xf32>
    %42 = vector.shape_cast %41 : vector<1x32x32xf32> to vector<32x32xf32>
    %cst_15 = arith.constant dense<0.000000e+00> : vector<64x32xf32>
    %43 = tpu.matmul %40, %42, %cst_15 {dimension_numbers = #tpu.dot_dimension_numbers<[1], [0], [0], [1], [0, 0, 1, 1], [], []>} : vector<64x32xf32>, vector<32x32xf32>, vector<64x32xf32> -> vector<64x32xf32>
    %c0_16 = arith.constant 0 : index
    %c0_17 = arith.constant 0 : index
    %c0_18 = arith.constant 0 : index
    %44 = vector.load %arg7[%c0_16, %c0_17, %c0_18] : memref<1x1x32xf32, #tpu.memory_space<vmem>>, vector<1x1x32xf32>
    %45 = vector.shape_cast %44 : vector<1x1x32xf32> to vector<1x32xf32>
    %46 = vector.broadcast %45 : vector<1x32xf32> to vector<64x32xf32>
    %47 = arith.addf %43, %46 : vector<64x32xf32>
    %48 = arith.addf %3, %47 : vector<64x32xf32>
    %c0_19 = arith.constant 0 : index
    %c0_20 = arith.constant 0 : index
    %c0_21 = arith.constant 0 : index
    %49 = vector.load %arg8[%c0_19, %c0_20, %c0_21] : memref<1x1x32xf32, #tpu.memory_space<vmem>>, vector<1x1x32xf32>
    %50 = vector.shape_cast %49 : vector<1x1x32xf32> to vector<1x32xf32>
    %c0_22 = arith.constant 0 : index
    %c0_23 = arith.constant 0 : index
    %c0_24 = arith.constant 0 : index
    %51 = vector.load %arg9[%c0_22, %c0_23, %c0_24] : memref<1x1x32xf32, #tpu.memory_space<vmem>>, vector<1x1x32xf32>
    %52 = vector.shape_cast %51 : vector<1x1x32xf32> to vector<1x32xf32>
    %cst_25 = arith.constant dense<0.000000e+00> : vector<64xf32>
    %53 = vector.multi_reduction <add>, %48, %cst_25 [1] : vector<64x32xf32> to vector<64xf32>
    %54 = vector.shape_cast %53 : vector<64xf32> to vector<64x1xf32>
    %cst_26 = arith.constant 3.200000e+01 : f32
    %55 = vector.broadcast %cst_26 : f32 to vector<64x1xf32>
    %56 = arith.divf %54, %55 : vector<64x1xf32>
    %57 = vector.broadcast %56 : vector<64x1xf32> to vector<64x32xf32>
    %58 = arith.subf %48, %57 : vector<64x32xf32>
    %59 = arith.mulf %58, %58 : vector<64x32xf32>
    %cst_27 = arith.constant dense<0.000000e+00> : vector<64xf32>
    %60 = vector.multi_reduction <add>, %59, %cst_27 [1] : vector<64x32xf32> to vector<64xf32>
    %61 = vector.shape_cast %60 : vector<64xf32> to vector<64x1xf32>
    %cst_28 = arith.constant 3.200000e+01 : f32
    %62 = vector.broadcast %cst_28 : f32 to vector<64x1xf32>
    %63 = arith.divf %61, %62 : vector<64x1xf32>
    %64 = vector.broadcast %56 : vector<64x1xf32> to vector<64x32xf32>
    %65 = arith.subf %48, %64 : vector<64x32xf32>
    %cst_29 = arith.constant 9.99999996E-13 : f32
    %66 = vector.broadcast %cst_29 : f32 to vector<64x1xf32>
    %67 = arith.addf %63, %66 : vector<64x1xf32>
    %68 = math.rsqrt %67 : vector<64x1xf32>
    %69 = vector.broadcast %68 : vector<64x1xf32> to vector<64x32xf32>
    %70 = arith.mulf %65, %69 : vector<64x32xf32>
    %71 = vector.broadcast %50 : vector<1x32xf32> to vector<64x32xf32>
    %72 = arith.mulf %70, %71 : vector<64x32xf32>
    %73 = vector.broadcast %52 : vector<1x32xf32> to vector<64x32xf32>
    %74 = arith.addf %72, %73 : vector<64x32xf32>
    %c0_30 = arith.constant 0 : index
    %c0_31 = arith.constant 0 : index
    %c0_32 = arith.constant 0 : index
    %75 = vector.load %arg10[%c0_30, %c0_31, %c0_32] : memref<1x32x64xf32, #tpu.memory_space<vmem>>, vector<1x32x64xf32>
    %76 = vector.shape_cast %75 : vector<1x32x64xf32> to vector<32x64xf32>
    %cst_33 = arith.constant dense<0.000000e+00> : vector<64x64xf32>
    %77 = tpu.matmul %74, %76, %cst_33 {dimension_numbers = #tpu.dot_dimension_numbers<[1], [0], [0], [1], [0, 0, 1, 1], [], []>} : vector<64x32xf32>, vector<32x64xf32>, vector<64x64xf32> -> vector<64x64xf32>
    %c0_34 = arith.constant 0 : index
    %c0_35 = arith.constant 0 : index
    %c0_36 = arith.constant 0 : index
    %78 = vector.load %arg11[%c0_34, %c0_35, %c0_36] : memref<1x1x64xf32, #tpu.memory_space<vmem>>, vector<1x1x64xf32>
    %79 = vector.shape_cast %78 : vector<1x1x64xf32> to vector<1x64xf32>
    %80 = vector.broadcast %79 : vector<1x64xf32> to vector<64x64xf32>
    %81 = arith.addf %77, %80 : vector<64x64xf32>
    %cst_37 = arith.constant 0.000000e+00 : f32
    %82 = vector.broadcast %cst_37 : f32 to vector<64x64xf32>
    %83 = arith.maximumf %81, %82 : vector<64x64xf32>
    %c0_38 = arith.constant 0 : index
    %c0_39 = arith.constant 0 : index
    %c0_40 = arith.constant 0 : index
    %84 = vector.load %arg12[%c0_38, %c0_39, %c0_40] : memref<1x64x32xf32, #tpu.memory_space<vmem>>, vector<1x64x32xf32>
    %85 = vector.shape_cast %84 : vector<1x64x32xf32> to vector<64x32xf32>
    %cst_41 = arith.constant dense<0.000000e+00> : vector<64x32xf32>
    %86 = tpu.matmul %83, %85, %cst_41 {dimension_numbers = #tpu.dot_dimension_numbers<[1], [0], [0], [1], [0, 0, 1, 1], [], []>} : vector<64x64xf32>, vector<64x32xf32>, vector<64x32xf32> -> vector<64x32xf32>
    %c0_42 = arith.constant 0 : index
    %c0_43 = arith.constant 0 : index
    %c0_44 = arith.constant 0 : index
    %87 = vector.load %arg13[%c0_42, %c0_43, %c0_44] : memref<1x1x32xf32, #tpu.memory_space<vmem>>, vector<1x1x32xf32>
    %88 = vector.shape_cast %87 : vector<1x1x32xf32> to vector<1x32xf32>
    %89 = vector.broadcast %88 : vector<1x32xf32> to vector<64x32xf32>
    %90 = arith.addf %86, %89 : vector<64x32xf32>
    %91 = arith.addf %74, %90 : vector<64x32xf32>
    %c0_45 = arith.constant 0 : index
    %c0_46 = arith.constant 0 : index
    %c0_47 = arith.constant 0 : index
    %92 = vector.load %arg14[%c0_45, %c0_46, %c0_47] : memref<1x1x32xf32, #tpu.memory_space<vmem>>, vector<1x1x32xf32>
    %93 = vector.shape_cast %92 : vector<1x1x32xf32> to vector<1x32xf32>
    %c0_48 = arith.constant 0 : index
    %c0_49 = arith.constant 0 : index
    %c0_50 = arith.constant 0 : index
    %94 = vector.load %arg15[%c0_48, %c0_49, %c0_50] : memref<1x1x32xf32, #tpu.memory_space<vmem>>, vector<1x1x32xf32>
    %95 = vector.shape_cast %94 : vector<1x1x32xf32> to vector<1x32xf32>
    %cst_51 = arith.constant dense<0.000000e+00> : vector<64xf32>
    %96 = vector.multi_reduction <add>, %91, %cst_51 [1] : vector<64x32xf32> to vector<64xf32>
    %97 = vector.shape_cast %96 : vector<64xf32> to vector<64x1xf32>
    %cst_52 = arith.constant 3.200000e+01 : f32
    %98 = vector.broadcast %cst_52 : f32 to vector<64x1xf32>
    %99 = arith.divf %97, %98 : vector<64x1xf32>
    %100 = vector.broadcast %99 : vector<64x1xf32> to vector<64x32xf32>
    %101 = arith.subf %91, %100 : vector<64x32xf32>
    %102 = arith.mulf %101, %101 : vector<64x32xf32>
    %cst_53 = arith.constant dense<0.000000e+00> : vector<64xf32>
    %103 = vector.multi_reduction <add>, %102, %cst_53 [1] : vector<64x32xf32> to vector<64xf32>
    %104 = vector.shape_cast %103 : vector<64xf32> to vector<64x1xf32>
    %cst_54 = arith.constant 3.200000e+01 : f32
    %105 = vector.broadcast %cst_54 : f32 to vector<64x1xf32>
    %106 = arith.divf %104, %105 : vector<64x1xf32>
    %107 = vector.broadcast %99 : vector<64x1xf32> to vector<64x32xf32>
    %108 = arith.subf %91, %107 : vector<64x32xf32>
    %cst_55 = arith.constant 9.99999996E-13 : f32
    %109 = vector.broadcast %cst_55 : f32 to vector<64x1xf32>
    %110 = arith.addf %106, %109 : vector<64x1xf32>
    %111 = math.rsqrt %110 : vector<64x1xf32>
    %112 = vector.broadcast %111 : vector<64x1xf32> to vector<64x32xf32>
    %113 = arith.mulf %108, %112 : vector<64x32xf32>
    %114 = vector.broadcast %93 : vector<1x32xf32> to vector<64x32xf32>
    %115 = arith.mulf %113, %114 : vector<64x32xf32>
    %116 = vector.broadcast %95 : vector<1x32xf32> to vector<64x32xf32>
    %117 = arith.addf %115, %116 : vector<64x32xf32>
    %c0_56 = arith.constant 0 : index
    %c0_57 = arith.constant 0 : index
    %118 = vector.load %arg19[%c0_56, %c0_57] : memref<64x32xf32, #tpu.memory_space<vmem>>, vector<64x32xf32>
    tpu.vector_store %arg19[%c0_56, %c0_57], %117 {strides = array<i32>} : memref<64x32xf32, #tpu.memory_space<vmem>>, vector<64x32xf32>,
    %c1_i32 = arith.constant 1 : i32
    %119 = arith.cmpi eq, %arg1, %c1_i32 : i32
    %120 = arith.extui %119 : i1 to i32
    %c0_i32_58 = arith.constant 0 : i32
    %121 = arith.cmpi ne, %120, %c0_i32_58 : i32
    scf.if %121 {
      %122 = vector.shape_cast %117 : vector<64x32xf32> to vector<8x8x32xf32>
      %cst_59 = arith.constant dense<0.000000e+00> : vector<8x8xf32>
      %123 = vector.multi_reduction <add>, %122, %cst_59 [2] : vector<8x8x32xf32> to vector<8x8xf32>
      %124 = vector.shape_cast %123 : vector<8x8xf32> to vector<8x8x1xf32>
      %cst_60 = arith.constant 3.200000e+01 : f32
      %125 = vector.broadcast %cst_60 : f32 to vector<8x8x1xf32>
      %126 = arith.divf %124, %125 : vector<8x8x1xf32>
      %cst_61 = arith.constant dense<0.000000e+00> : vector<8x1xf32>
      %127 = vector.multi_reduction <add>, %126, %cst_61 [1] : vector<8x8x1xf32> to vector<8x1xf32>
      %128 = vector.shape_cast %127 : vector<8x1xf32> to vector<8x1x1xf32>
      %cst_62 = arith.constant 8.000000e+00 : f32
      %129 = vector.broadcast %cst_62 : f32 to vector<8x1x1xf32>
      %130 = arith.divf %128, %129 : vector<8x1x1xf32>
      %131 = vector.broadcast %130 : vector<8x1x1xf32> to vector<8x8x32xf32>
      %132 = arith.subf %122, %131 : vector<8x8x32xf32>
      %133 = arith.mulf %132, %132 : vector<8x8x32xf32>
      %cst_63 = arith.constant dense<0.000000e+00> : vector<8x8xf32>
      %134 = vector.multi_reduction <add>, %133, %cst_63 [2] : vector<8x8x32xf32> to vector<8x8xf32>
      %135 = vector.shape_cast %134 : vector<8x8xf32> to vector<8x8x1xf32>
      %cst_64 = arith.constant 3.200000e+01 : f32
      %136 = vector.broadcast %cst_64 : f32 to vector<8x8x1xf32>
      %137 = arith.divf %135, %136 : vector<8x8x1xf32>
      %cst_65 = arith.constant dense<0.000000e+00> : vector<8x1xf32>
      %138 = vector.multi_reduction <add>, %137, %cst_65 [1] : vector<8x8x1xf32> to vector<8x1xf32>
      %139 = vector.shape_cast %138 : vector<8x1xf32> to vector<8x1x1xf32>
      %cst_66 = arith.constant 8.000000e+00 : f32
      %140 = vector.broadcast %cst_66 : f32 to vector<8x1x1xf32>
      %141 = arith.divf %139, %140 : vector<8x1x1xf32>
      %cst_67 = arith.constant 9.99999996E-13 : f32
      %142 = vector.broadcast %cst_67 : f32 to vector<8x1x1xf32>
      %143 = arith.addf %141, %142 : vector<8x1x1xf32>
      %144 = math.rsqrt %143 : vector<8x1x1xf32>
      %145 = vector.broadcast %144 : vector<8x1x1xf32> to vector<8x8x32xf32>
      %146 = arith.mulf %132, %145 : vector<8x8x32xf32>
      %c0_68 = arith.constant 0 : index
      %c0_69 = arith.constant 0 : index
      %147 = vector.load %arg16[%c0_68, %c0_69] : memref<1x32xf32, #tpu.memory_space<vmem>>, vector<1x32xf32>
      %148 = vector.shape_cast %147 : vector<1x32xf32> to vector<1x1x32xf32>
      %149 = vector.broadcast %148 : vector<1x1x32xf32> to vector<8x8x32xf32>
      %150 = arith.mulf %146, %149 : vector<8x8x32xf32>
      %c0_70 = arith.constant 0 : index
      %c0_71 = arith.constant 0 : index
      %151 = vector.load %arg17[%c0_70, %c0_71] : memref<1x32xf32, #tpu.memory_space<vmem>>, vector<1x32xf32>
      %152 = vector.shape_cast %151 : vector<1x32xf32> to vector<1x1x32xf32>
      %153 = vector.broadcast %152 : vector<1x1x32xf32> to vector<8x8x32xf32>
      %154 = arith.addf %150, %153 : vector<8x8x32xf32>
      %c0_72 = arith.constant 0 : index
      %c0_73 = arith.constant 0 : index
      %c0_74 = arith.constant 0 : index
      %155 = vector.load %arg2[%c0_72, %c0_73, %c0_74] : memref<8x8x32xf32, #tpu.memory_space<vmem>>, vector<8x8x32xf32>
      %156 = arith.addf %154, %155 : vector<8x8x32xf32>
      %c0_75 = arith.constant 0 : index
      %c0_76 = arith.constant 0 : index
      %c0_77 = arith.constant 0 : index
      %157 = vector.load %arg18[%c0_75, %c0_76, %c0_77] : memref<8x8x32xf32, #tpu.memory_space<vmem>>, vector<8x8x32xf32>
      tpu.vector_store %arg18[%c0_75, %c0_76, %c0_77], %156 {strides = array<i32>} : memref<8x8x32xf32, #tpu.memory_space<vmem>>, vector<8x8x32xf32>,
    } else {
    }
    return
  }
  func.func @transform_0(%arg0: i32, %arg1: i32) -> (i32, i32, i32) {
    %c0_i32 = arith.constant 0 : i32
    %c0_i32_0 = arith.constant 0 : i32
    %c0_i32_1 = arith.constant 0 : i32
    return %arg0, %c0_i32, %c0_i32_0 : i32, i32, i32
  }
  func.func @transform_1(%arg0: i32, %arg1: i32) -> (i32, i32) {
    %c0_i32 = arith.constant 0 : i32
    %c0_i32_0 = arith.constant 0 : i32
    %c0_i32_1 = arith.constant 0 : i32
    return %c0_i32, %c0_i32_0 : i32, i32
  }
  func.func @transform_2(%arg0: i32, %arg1: i32) -> (i32, i32, i32) {
    %c0_i32 = arith.constant 0 : i32
    %c0_i32_0 = arith.constant 0 : i32
    %c0_i32_1 = arith.constant 0 : i32
    return %arg1, %c0_i32, %c0_i32_0 : i32, i32, i32
  }
  func.func @transform_3(%arg0: i32, %arg1: i32) -> (i32, i32, i32) {
    %c0_i32 = arith.constant 0 : i32
    %c0_i32_0 = arith.constant 0 : i32
    %c0_i32_1 = arith.constant 0 : i32
    return %arg1, %c0_i32, %c0_i32_0 : i32, i32, i32
  }
  func.func @transform_4(%arg0: i32, %arg1: i32) -> (i32, i32, i32) {
    %c0_i32 = arith.constant 0 : i32
    %c0_i32_0 = arith.constant 0 : i32
    %c0_i32_1 = arith.constant 0 : i32
    return %arg1, %c0_i32, %c0_i32_0 : i32, i32, i32
  }
  func.func @transform_5(%arg0: i32, %arg1: i32) -> (i32, i32, i32) {
    %c0_i32 = arith.constant 0 : i32
    %c0_i32_0 = arith.constant 0 : i32
    %c0_i32_1 = arith.constant 0 : i32
    return %arg1, %c0_i32, %c0_i32_0 : i32, i32, i32
  }
  func.func @transform_6(%arg0: i32, %arg1: i32) -> (i32, i32, i32) {
    %c0_i32 = arith.constant 0 : i32
    %c0_i32_0 = arith.constant 0 : i32
    %c0_i32_1 = arith.constant 0 : i32
    return %arg1, %c0_i32, %c0_i32_0 : i32, i32, i32
  }
  func.func @transform_7(%arg0: i32, %arg1: i32) -> (i32, i32, i32) {
    %c0_i32 = arith.constant 0 : i32
    %c0_i32_0 = arith.constant 0 : i32
    %c0_i32_1 = arith.constant 0 : i32
    return %arg1, %c0_i32, %c0_i32_0 : i32, i32, i32
  }
  func.func @transform_8(%arg0: i32, %arg1: i32) -> (i32, i32, i32) {
    %c0_i32 = arith.constant 0 : i32
    %c0_i32_0 = arith.constant 0 : i32
    %c0_i32_1 = arith.constant 0 : i32
    return %arg1, %c0_i32, %c0_i32_0 : i32, i32, i32
  }
  func.func @transform_9(%arg0: i32, %arg1: i32) -> (i32, i32, i32) {
    %c0_i32 = arith.constant 0 : i32
    %c0_i32_0 = arith.constant 0 : i32
    %c0_i32_1 = arith.constant 0 : i32
    return %arg1, %c0_i32, %c0_i32_0 : i32, i32, i32
  }
  func.func @transform_10(%arg0: i32, %arg1: i32) -> (i32, i32, i32) {
    %c0_i32 = arith.constant 0 : i32
    %c0_i32_0 = arith.constant 0 : i32
    %c0_i32_1 = arith.constant 0 : i32
    return %arg1, %c0_i32, %c0_i32_0 : i32, i32, i32
  }
  func.func @transform_11(%arg0: i32, %arg1: i32) -> (i32, i32, i32) {
    %c0_i32 = arith.constant 0 : i32
    %c0_i32_0 = arith.constant 0 : i32
    %c0_i32_1 = arith.constant 0 : i32
    return %arg1, %c0_i32, %c0_i32_0 : i32, i32, i32
  }
  func.func @transform_12(%arg0: i32, %arg1: i32) -> (i32, i32, i32) {
    %c0_i32 = arith.constant 0 : i32
    %c0_i32_0 = arith.constant 0 : i32
    %c0_i32_1 = arith.constant 0 : i32
    return %arg1, %c0_i32, %c0_i32_0 : i32, i32, i32
  }
  func.func @transform_13(%arg0: i32, %arg1: i32) -> (i32, i32, i32) {
    %c0_i32 = arith.constant 0 : i32
    %c0_i32_0 = arith.constant 0 : i32
    %c0_i32_1 = arith.constant 0 : i32
    return %arg1, %c0_i32, %c0_i32_0 : i32, i32, i32
  }
  func.func @transform_14(%arg0: i32, %arg1: i32) -> (i32, i32) {
    %c0_i32 = arith.constant 0 : i32
    %c0_i32_0 = arith.constant 0 : i32
    %c0_i32_1 = arith.constant 0 : i32
    return %c0_i32, %c0_i32_0 : i32, i32
  }
  func.func @transform_15(%arg0: i32, %arg1: i32) -> (i32, i32) {
    %c0_i32 = arith.constant 0 : i32
    %c0_i32_0 = arith.constant 0 : i32
    %c0_i32_1 = arith.constant 0 : i32
    return %c0_i32, %c0_i32_0 : i32, i32
  }
  func.func @transform_16(%arg0: i32, %arg1: i32) -> (i32, i32, i32) {
    %c0_i32 = arith.constant 0 : i32
    %c0_i32_0 = arith.constant 0 : i32
    %c0_i32_1 = arith.constant 0 : i32
    return %arg0, %c0_i32, %c0_i32_0 : i32, i32, i32
  }
}

</mosaic_0001>

<llo_original>
// kernel: inter_transformer_forward.1
$region0: #{inter_transformer_forward.1}
  #allocation0 [shape = 'u32[]', space=smem, size = 0x4, offset = 0x4, fixed_abs, tag = 'smem constant byte address 0x4 - core index']
  #allocation1 [shape = 'u32[144,128]{1,0:T(1,128)}', space=vmem, size = 0x12000, scoped, tag = 'internal scratch']
  #allocation2 [shape = 'f32[64,32]{1,0:T(8,128)}', space=vmem, size = 0x8000, scoped, tag = 'scratch operand']
  %s0 = inlined_call_operand.vmem [shape: f32[8,8,32], index: 0, kind: input, shape index: {}]
  %s1 = inlined_call_operand.vmem [shape: f32[8,32], index: 1, kind: input, shape index: {}]
  %s2 = inlined_call_operand.vmem [shape: f32[2,32,96], index: 2, kind: input, shape index: {}]
  %s3 = inlined_call_operand.vmem [shape: f32[2,1,96], index: 3, kind: input, shape index: {}]
  %s4 = inlined_call_operand.vmem [shape: f32[2,32,32], index: 4, kind: input, shape index: {}]
  %s5 = inlined_call_operand.vmem [shape: f32[2,1,32], index: 5, kind: input, shape index: {}]
  %s6 = inlined_call_operand.vmem [shape: f32[2,1,32], index: 6, kind: input, shape index: {}]
  %s7 = inlined_call_operand.vmem [shape: f32[2,1,32], index: 7, kind: input, shape index: {}]
  %s8 = inlined_call_operand.vmem [shape: f32[2,32,64], index: 8, kind: input, shape index: {}]
  %s9 = inlined_call_operand.vmem [shape: f32[2,1,64], index: 9, kind: input, shape index: {}]
  %s10 = inlined_call_operand.vmem [shape: f32[2,64,32], index: 10, kind: input, shape index: {}]
  %s11 = inlined_call_operand.vmem [shape: f32[2,1,32], index: 11, kind: input, shape index: {}]
  %s12 = inlined_call_operand.vmem [shape: f32[2,1,32], index: 12, kind: input, shape index: {}]
  %s13 = inlined_call_operand.vmem [shape: f32[2,1,32], index: 13, kind: input, shape index: {}]
  %s14 = inlined_call_operand.vmem [shape: f32[1,32], index: 14, kind: input, shape index: {}]
  %s15 = inlined_call_operand.vmem [shape: f32[1,32], index: 15, kind: input, shape index: {}]
  %s16 = inlined_call_operand.vmem [shape: f32[8,8,32], index: 16, kind: output, shape index: {}]
  %s17 = sld [smem:[#allocation0]]
  $region105: #{inter_transformer_forward.1} parent=0
    _
  %s19 = ssub.s32 1, %s17
  %s20 = scalar_select 0, %s19, %s17
  loop: start=0, step=1, limit=4
  $region2: #{inter_transformer_forward.1} parent=0 // loop_pre_header
    _
  $region3: #{inter_transformer_forward.1} parent=0 // loop_header
    %s22 = sphi 0, %s26
    %p23 = scmp.ge.s32.totalorder %s22, 4
    %s29 = sphi 0, %s41
    %s30 = sphi 0, %s37
    %s31 = sphi 0, %s29
    %s32 = sphi 0, %s30
    %s33 = sphi 0, %s31
    %s34 = sphi 0, %s32
    %s44 = sphi 0, %s46
    %s47 = sphi 0, %s44
    %s48 = sphi 0, %s47
    %s64 = sphi 0, %s48
    %s68 = sphi 0, %s68
    %s70 = sphi 0, %s68
    %s71 = sphi 0, %s70
    %s85 = sphi 0, %s71
    %s91 = sphi 0, %s93
    %s94 = sphi 0, %s91
    %s95 = sphi 0, %s94
    %s111 = sphi 0, %s95
    %s117 = sphi 0, %s119
    %s120 = sphi 0, %s117
    %s121 = sphi 0, %s120
    %s137 = sphi 0, %s121
    %s143 = sphi 0, %s145
    %s146 = sphi 0, %s143
    %s147 = sphi 0, %s146
    %s163 = sphi 0, %s147
    %s169 = sphi 0, %s171
    %s172 = sphi 0, %s169
    %s173 = sphi 0, %s172
    %s189 = sphi 0, %s173
    %s195 = sphi 0, %s197
    %s198 = sphi 0, %s195
    %s199 = sphi 0, %s198
    %s215 = sphi 0, %s199
    %s221 = sphi 0, %s223
    %s224 = sphi 0, %s221
    %s225 = sphi 0, %s224
    %s241 = sphi 0, %s225
    %s247 = sphi 0, %s249
    %s250 = sphi 0, %s247
    %s251 = sphi 0, %s250
    %s267 = sphi 0, %s251
    %s273 = sphi 0, %s275
    %s276 = sphi 0, %s273
    %s277 = sphi 0, %s276
    %s293 = sphi 0, %s277
    %s299 = sphi 0, %s301
    %s302 = sphi 0, %s299
    %s303 = sphi 0, %s302
    %s319 = sphi 0, %s303
    %s325 = sphi 0, %s327
    %s328 = sphi 0, %s325
    %s329 = sphi 0, %s328
    %s345 = sphi 0, %s329
    %s351 = sphi 0, %s353
    %s354 = sphi 0, %s351
    %s355 = sphi 0, %s354
    %s371 = sphi 0, %s355
    %s377 = sphi 0, %s379
    %s380 = sphi 0, %s377
    %s381 = sphi 0, %s380
    %s397 = sphi 0, %s381
    %s401 = sphi 0, %s401
    %s403 = sphi 0, %s401
    %s404 = sphi 0, %s403
    %s418 = sphi 0, %s404
    %s422 = sphi 0, %s422
    %s424 = sphi 0, %s422
    %s425 = sphi 0, %s424
    %s439 = sphi 0, %s425
    %s445 = sphi 0, %s447
    %s448 = sphi 0, %s445
    %s449 = sphi 0, %s448
    %s465 = sphi 0, %s449
  $region4: #{inter_transformer_forward.1} parent=0 // loop_header_branch
    %25 = sbr.rel (%p23) target = $region8
  $region5: #{inter_transformer_forward.1} parent=0 // loop_body
    %s27 = ssub.s32 %s22, 1
    %s28 = ssub.s32 %s22, 2
    %s35 = sadd.s32 1, %s30
    %p36 = scmp.ge.s32.totalorder %s35, 2
    %s37 = scalar_select %p36, 0, %s35
    %s38 = sadd.s32 1, %s29
    %s39 = scalar_select %p36, %s38, %s29
    %p40 = scmp.ge.s32.totalorder %s39, 1
    %s41 = scalar_select %p40, 0, %s39
    %s42 = ssub.s32 %s29, %s41
    %p43 = scmp.eq.s32.totalorder %s42, 0
    %s45 = sadd.s32 %s44, 1
    %s46 = scalar_select %p43, %s44, %s45
    %p49 = pneg %p43
    %p50 = scmp.eq.s32.totalorder %s22, 1
    %p51 = por %p49, %p50
    %p52 = scmp.ne.s32.totalorder %s44, %s47
    %p53 = scmp.eq.s32.totalorder %s22, 0
    %p54 = por %p52, %p53
    %p55 = scmp.ne.s32.totalorder %s44, %s47
    %p56 = scmp.eq.s32.totalorder %s27, 1
    %p57 = por %p55, %p56
    %p58 = scmp.ne.s32.totalorder %s47, %s48
    %p59 = scmp.eq.s32.totalorder %s27, 0
    %p60 = por %p58, %p59
    %p61 = scmp.ne.s32.totalorder %s47, %s48
    %p62 = scmp.eq.s32.totalorder %s28, 1
    %p63 = por %p61, %p62
    %p65 = scmp.ne.s32.totalorder %s48, %s64
    %p66 = scmp.eq.s32.totalorder %s28, 0
    %p67 = por %p65, %p66
    %s69 = sadd.s32 %s68, 1
    %p72 = scmp.eq.s32.totalorder %s22, 1
    %p73 = scmp.ne.s32.totalorder %s68, %s70
    %p74 = scmp.eq.s32.totalorder %s22, 0
    %p75 = por %p73, %p74
    %p76 = scmp.ne.s32.totalorder %s68, %s70
    %p77 = scmp.eq.s32.totalorder %s27, 1
    %p78 = por %p76, %p77
    %p79 = scmp.ne.s32.totalorder %s70, %s71
    %p80 = scmp.eq.s32.totalorder %s27, 0
    %p81 = por %p79, %p80
    %p82 = scmp.ne.s32.totalorder %s70, %s71
    %p83 = scmp.eq.s32.totalorder %s28, 1
    %p84 = por %p82, %p83
    %p86 = scmp.ne.s32.totalorder %s71, %s85
    %p87 = scmp.eq.s32.totalorder %s28, 0
    %p88 = por %p86, %p87
    %s89 = ssub.s32 %s30, %s37
    %p90 = scmp.eq.s32.totalorder %s89, 0
    %s92 = sadd.s32 %s91, 1
    %s93 = scalar_select %p90, %s91, %s92
    %p96 = pneg %p90
    %p97 = scmp.eq.s32.totalorder %s22, 1
    %p98 = por %p96, %p97
    %p99 = scmp.ne.s32.totalorder %s91, %s94
    %p100 = scmp.eq.s32.totalorder %s22, 0
    %p101 = por %p99, %p100
    %p102 = scmp.ne.s32.totalorder %s91, %s94
    %p103 = scmp.eq.s32.totalorder %s27, 1
    %p104 = por %p102, %p103
    %p105 = scmp.ne.s32.totalorder %s94, %s95
    %p106 = scmp.eq.s32.totalorder %s27, 0
    %p107 = por %p105, %p106
    %p108 = scmp.ne.s32.totalorder %s94, %s95
    %p109 = scmp.eq.s32.totalorder %s28, 1
    %p110 = por %p108, %p109
    %p112 = scmp.ne.s32.totalorder %s95, %s111
    %p113 = scmp.eq.s32.totalorder %s28, 0
    %p114 = por %p112, %p113
    %s115 = ssub.s32 %s30, %s37
    %p116 = scmp.eq.s32.totalorder %s115, 0
    %s118 = sadd.s32 %s117, 1
    %s119 = scalar_select %p116, %s117, %s118
    %p122 = pneg %p116
    %p123 = scmp.eq.s32.totalorder %s22, 1
    %p124 = por %p122, %p123
    %p125 = scmp.ne.s32.totalorder %s117, %s120
    %p126 = scmp.eq.s32.totalorder %s22, 0
    %p127 = por %p125, %p126
    %p128 = scmp.ne.s32.totalorder %s117, %s120
    %p129 = scmp.eq.s32.totalorder %s27, 1
    %p130 = por %p128, %p129
    %p131 = scmp.ne.s32.totalorder %s120, %s121
    %p132 = scmp.eq.s32.totalorder %s27, 0
    %p133 = por %p131, %p132
    %p134 = scmp.ne.s32.totalorder %s120, %s121
    %p135 = scmp.eq.s32.totalorder %s28, 1
    %p136 = por %p134, %p135
    %p138 = scmp.ne.s32.totalorder %s121, %s137
    %p139 = scmp.eq.s32.totalorder %s28, 0
    %p140 = por %p138, %p139
    %s141 = ssub.s32 %s30, %s37
    %p142 = scmp.eq.s32.totalorder %s141, 0
    %s144 = sadd.s32 %s143, 1
    %s145 = scalar_select %p142, %s143, %s144
    %p148 = pneg %p142
    %p149 = scmp.eq.s32.totalorder %s22, 1
    %p150 = por %p148, %p149
    %p151 = scmp.ne.s32.totalorder %s143, %s146
    %p152 = scmp.eq.s32.totalorder %s22, 0
    %p153 = por %p151, %p152
    %p154 = scmp.ne.s32.totalorder %s143, %s146
    %p155 = scmp.eq.s32.totalorder %s27, 1
    %p156 = por %p154, %p155
    %p157 = scmp.ne.s32.totalorder %s146, %s147
    %p158 = scmp.eq.s32.totalorder %s27, 0
    %p159 = por %p157, %p158
    %p160 = scmp.ne.s32.totalorder %s146, %s147
    %p161 = scmp.eq.s32.totalorder %s28, 1
    %p162 = por %p160, %p161
    %p164 = scmp.ne.s32.totalorder %s147, %s163
    %p165 = scmp.eq.s32.totalorder %s28, 0
    %p166 = por %p164, %p165
    %s167 = ssub.s32 %s30, %s37
    %p168 = scmp.eq.s32.totalorder %s167, 0
    %s170 = sadd.s32 %s169, 1
    %s171 = scalar_select %p168, %s169, %s170
    %p174 = pneg %p168
    %p175 = scmp.eq.s32.totalorder %s22, 1
    %p176 = por %p174, %p175
    %p177 = scmp.ne.s32.totalorder %s169, %s172
    %p178 = scmp.eq.s32.totalorder %s22, 0
    %p179 = por %p177, %p178
    %p180 = scmp.ne.s32.totalorder %s169, %s172
    %p181 = scmp.eq.s32.totalorder %s27, 1
    %p182 = por %p180, %p181
    %p183 = scmp.ne.s32.totalorder %s172, %s173
    %p184 = scmp.eq.s32.totalorder %s27, 0
    %p185 = por %p183, %p184
    %p186 = scmp.ne.s32.totalorder %s172, %s173
    %p187 = scmp.eq.s32.totalorder %s28, 1
    %p188 = por %p186, %p187
    %p190 = scmp.ne.s32.totalorder %s173, %s189
    %p191 = scmp.eq.s32.totalorder %s28, 0
    %p192 = por %p190, %p191
    %s193 = ssub.s32 %s30, %s37
    %p194 = scmp.eq.s32.totalorder %s193, 0
    %s196 = sadd.s32 %s195, 1
    %s197 = scalar_select %p194, %s195, %s196
    %p200 = pneg %p194
    %p201 = scmp.eq.s32.totalorder %s22, 1
    %p202 = por %p200, %p201
    %p203 = scmp.ne.s32.totalorder %s195, %s198
    %p204 = scmp.eq.s32.totalorder %s22, 0
    %p205 = por %p203, %p204
    %p206 = scmp.ne.s32.totalorder %s195, %s198
    %p207 = scmp.eq.s32.totalorder %s27, 1
    %p208 = por %p206, %p207
    %p209 = scmp.ne.s32.totalorder %s198, %s199
    %p210 = scmp.eq.s32.totalorder %s27, 0
    %p211 = por %p209, %p210
    %p212 = scmp.ne.s32.totalorder %s198, %s199
    %p213 = scmp.eq.s32.totalorder %s28, 1
    %p214 = por %p212, %p213
    %p216 = scmp.ne.s32.totalorder %s199, %s215
    %p217 = scmp.eq.s32.totalorder %s28, 0
    %p218 = por %p216, %p217
    %s219 = ssub.s32 %s30, %s37
    %p220 = scmp.eq.s32.totalorder %s219, 0
    %s222 = sadd.s32 %s221, 1
    %s223 = scalar_select %p220, %s221, %s222
    %p226 = pneg %p220
    %p227 = scmp.eq.s32.totalorder %s22, 1
    %p228 = por %p226, %p227
    %p229 = scmp.ne.s32.totalorder %s221, %s224
    %p230 = scmp.eq.s32.totalorder %s22, 0
    %p231 = por %p229, %p230
    %p232 = scmp.ne.s32.totalorder %s221, %s224
    %p233 = scmp.eq.s32.totalorder %s27, 1
    %p234 = por %p232, %p233
    %p235 = scmp.ne.s32.totalorder %s224, %s225
    %p236 = scmp.eq.s32.totalorder %s27, 0
    %p237 = por %p235, %p236
    %p238 = scmp.ne.s32.totalorder %s224, %s225
    %p239 = scmp.eq.s32.totalorder %s28, 1
    %p240 = por %p238, %p239
    %p242 = scmp.ne.s32.totalorder %s225, %s241
    %p243 = scmp.eq.s32.totalorder %s28, 0
    %p244 = por %p242, %p243
    %s245 = ssub.s32 %s30, %s37
    %p246 = scmp.eq.s32.totalorder %s245, 0
    %s248 = sadd.s32 %s247, 1
    %s249 = scalar_select %p246, %s247, %s248
    %p252 = pneg %p246
    %p253 = scmp.eq.s32.totalorder %s22, 1
    %p254 = por %p252, %p253
    %p255 = scmp.ne.s32.totalorder %s247, %s250
    %p256 = scmp.eq.s32.totalorder %s22, 0
    %p257 = por %p255, %p256
    %p258 = scmp.ne.s32.totalorder %s247, %s250
    %p259 = scmp.eq.s32.totalorder %s27, 1
    %p260 = por %p258, %p259
    %p261 = scmp.ne.s32.totalorder %s250, %s251
    %p262 = scmp.eq.s32.totalorder %s27, 0
    %p263 = por %p261, %p262
    %p264 = scmp.ne.s32.totalorder %s250, %s251
    %p265 = scmp.eq.s32.totalorder %s28, 1
    %p266 = por %p264, %p265
    %p268 = scmp.ne.s32.totalorder %s251, %s267
    %p269 = scmp.eq.s32.totalorder %s28, 0
    %p270 = por %p268, %p269
    %s271 = ssub.s32 %s30, %s37
    %p272 = scmp.eq.s32.totalorder %s271, 0
    %s274 = sadd.s32 %s273, 1
    %s275 = scalar_select %p272, %s273, %s274
    %p278 = pneg %p272
    %p279 = scmp.eq.s32.totalorder %s22, 1
    %p280 = por %p278, %p279
    %p281 = scmp.ne.s32.totalorder %s273, %s276
    %p282 = scmp.eq.s32.totalorder %s22, 0
    %p283 = por %p281, %p282
    %p284 = scmp.ne.s32.totalorder %s273, %s276
    %p285 = scmp.eq.s32.totalorder %s27, 1
    %p286 = por %p284, %p285
    %p287 = scmp.ne.s32.totalorder %s276, %s277
    %p288 = scmp.eq.s32.totalorder %s27, 0
    %p289 = por %p287, %p288
    %p290 = scmp.ne.s32.totalorder %s276, %s277
    %p291 = scmp.eq.s32.totalorder %s28, 1
    %p292 = por %p290, %p291
    %p294 = scmp.ne.s32.totalorder %s277, %s293
    %p295 = scmp.eq.s32.totalorder %s28, 0
    %p296 = por %p294, %p295
    %s297 = ssub.s32 %s30, %s37
    %p298 = scmp.eq.s32.totalorder %s297, 0
    %s300 = sadd.s32 %s299, 1
    %s301 = scalar_select %p298, %s299, %s300
    %p304 = pneg %p298
    %p305 = scmp.eq.s32.totalorder %s22, 1
    %p306 = por %p304, %p305
    %p307 = scmp.ne.s32.totalorder %s299, %s302
    %p308 = scmp.eq.s32.totalorder %s22, 0
    %p309 = por %p307, %p308
    %p310 = scmp.ne.s32.totalorder %s299, %s302
    %p311 = scmp.eq.s32.totalorder %s27, 1
    %p312 = por %p310, %p311
    %p313 = scmp.ne.s32.totalorder %s302, %s303
    %p314 = scmp.eq.s32.totalorder %s27, 0
    %p315 = por %p313, %p314
    %p316 = scmp.ne.s32.totalorder %s302, %s303
    %p317 = scmp.eq.s32.totalorder %s28, 1
    %p318 = por %p316, %p317
    %p320 = scmp.ne.s32.totalorder %s303, %s319
    %p321 = scmp.eq.s32.totalorder %s28, 0
    %p322 = por %p320, %p321
    %s323 = ssub.s32 %s30, %s37
    %p324 = scmp.eq.s32.totalorder %s323, 0
    %s326 = sadd.s32 %s325, 1
    %s327 = scalar_select %p324, %s325, %s326
    %p330 = pneg %p324
    %p331 = scmp.eq.s32.totalorder %s22, 1
    %p332 = por %p330, %p331
    %p333 = scmp.ne.s32.totalorder %s325, %s328
    %p334 = scmp.eq.s32.totalorder %s22, 0
    %p335 = por %p333, %p334
    %p336 = scmp.ne.s32.totalorder %s325, %s328
    %p337 = scmp.eq.s32.totalorder %s27, 1
    %p338 = por %p336, %p337
    %p339 = scmp.ne.s32.totalorder %s328, %s329
    %p340 = scmp.eq.s32.totalorder %s27, 0
    %p341 = por %p339, %p340
    %p342 = scmp.ne.s32.totalorder %s328, %s329
    %p343 = scmp.eq.s32.totalorder %s28, 1
    %p344 = por %p342, %p343
    %p346 = scmp.ne.s32.totalorder %s329, %s345
    %p347 = scmp.eq.s32.totalorder %s28, 0
    %p348 = por %p346, %p347
    %s349 = ssub.s32 %s30, %s37
    %p350 = scmp.eq.s32.totalorder %s349, 0
    %s352 = sadd.s32 %s351, 1
    %s353 = scalar_select %p350, %s351, %s352
    %p356 = pneg %p350
    %p357 = scmp.eq.s32.totalorder %s22, 1
    %p358 = por %p356, %p357
    %p359 = scmp.ne.s32.totalorder %s351, %s354
    %p360 = scmp.eq.s32.totalorder %s22, 0
    %p361 = por %p359, %p360
    %p362 = scmp.ne.s32.totalorder %s351, %s354
    %p363 = scmp.eq.s32.totalorder %s27, 1
    %p364 = por %p362, %p363
    %p365 = scmp.ne.s32.totalorder %s354, %s355
    %p366 = scmp.eq.s32.totalorder %s27, 0
    %p367 = por %p365, %p366
    %p368 = scmp.ne.s32.totalorder %s354, %s355
    %p369 = scmp.eq.s32.totalorder %s28, 1
    %p370 = por %p368, %p369
    %p372 = scmp.ne.s32.totalorder %s355, %s371
    %p373 = scmp.eq.s32.totalorder %s28, 0
    %p374 = por %p372, %p373
    %s375 = ssub.s32 %s30, %s37
    %p376 = scmp.eq.s32.totalorder %s375, 0
    %s378 = sadd.s32 %s377, 1
    %s379 = scalar_select %p376, %s377, %s378
    %p382 = pneg %p376
    %p383 = scmp.eq.s32.totalorder %s22, 1
    %p384 = por %p382, %p383
    %p385 = scmp.ne.s32.totalorder %s377, %s380
    %p386 = scmp.eq.s32.totalorder %s22, 0
    %p387 = por %p385, %p386
    %p388 = scmp.ne.s32.totalorder %s377, %s380
    %p389 = scmp.eq.s32.totalorder %s27, 1
    %p390 = por %p388, %p389
    %p391 = scmp.ne.s32.totalorder %s380, %s381
    %p392 = scmp.eq.s32.totalorder %s27, 0
    %p393 = por %p391, %p392
    %p394 = scmp.ne.s32.totalorder %s380, %s381
    %p395 = scmp.eq.s32.totalorder %s28, 1
    %p396 = por %p394, %p395
    %p398 = scmp.ne.s32.totalorder %s381, %s397
    %p399 = scmp.eq.s32.totalorder %s28, 0
    %p400 = por %p398, %p399
    %s402 = sadd.s32 %s401, 1
    %p405 = scmp.eq.s32.totalorder %s22, 1
    %p406 = scmp.ne.s32.totalorder %s401, %s403
    %p407 = scmp.eq.s32.totalorder %s22, 0
    %p408 = por %p406, %p407
    %p409 = scmp.ne.s32.totalorder %s401, %s403
    %p410 = scmp.eq.s32.totalorder %s27, 1
    %p411 = por %p409, %p410
    %p412 = scmp.ne.s32.totalorder %s403, %s404
    %p413 = scmp.eq.s32.totalorder %s27, 0
    %p414 = por %p412, %p413
    %p415 = scmp.ne.s32.totalorder %s403, %s404
    %p416 = scmp.eq.s32.totalorder %s28, 1
    %p417 = por %p415, %p416
    %p419 = scmp.ne.s32.totalorder %s404, %s418
    %p420 = scmp.eq.s32.totalorder %s28, 0
    %p421 = por %p419, %p420
    %s423 = sadd.s32 %s422, 1
    %p426 = scmp.eq.s32.totalorder %s22, 1
    %p427 = scmp.ne.s32.totalorder %s422, %s424
    %p428 = scmp.eq.s32.totalorder %s22, 0
    %p429 = por %p427, %p428
    %p430 = scmp.ne.s32.totalorder %s422, %s424
    %p431 = scmp.eq.s32.totalorder %s27, 1
    %p432 = por %p430, %p431
    %p433 = scmp.ne.s32.totalorder %s424, %s425
    %p434 = scmp.eq.s32.totalorder %s27, 0
    %p435 = por %p433, %p434
    %p436 = scmp.ne.s32.totalorder %s424, %s425
    %p437 = scmp.eq.s32.totalorder %s28, 1
    %p438 = por %p436, %p437
    %p440 = scmp.ne.s32.totalorder %s425, %s439
    %p441 = scmp.eq.s32.totalorder %s28, 0
    %p442 = por %p440, %p441
    %s443 = ssub.s32 %s29, %s41
    %p444 = scmp.eq.s32.totalorder %s443, 0
    %s446 = sadd.s32 %s445, 1
    %s447 = scalar_select %p444, %s445, %s446
    %p450 = pneg %p444
    %p451 = scmp.eq.s32.totalorder %s22, 1
    %p452 = por %p450, %p451
    %p453 = scmp.ne.s32.totalorder %s445, %s448
    %p454 = scmp.eq.s32.totalorder %s22, 0
    %p455 = por %p453, %p454
    %p456 = scmp.ne.s32.totalorder %s445, %s448
    %p457 = scmp.eq.s32.totalorder %s27, 1
    %p458 = por %p456, %p457
    %p459 = scmp.ne.s32.totalorder %s448, %s449
    %p460 = scmp.eq.s32.totalorder %s27, 0
    %p461 = por %p459, %p460
    %p462 = scmp.ne.s32.totalorder %s448, %s449
    %p463 = scmp.eq.s32.totalorder %s28, 1
    %p464 = por %p462, %p463
    %p466 = scmp.ne.s32.totalorder %s449, %s465
    %p467 = scmp.eq.s32.totalorder %s28, 0
    %p468 = por %p466, %p467
    %p469 = scmp.le.s32.totalorder 1, %s22
    %p470 = scmp.lt.s32.totalorder %s22, 3
    %p471 = pnand %p469, %p470
    %p472 = pneg %p471
    // Predicated region
    $region9: #{inter_transformer_forward.1} parent=5 // pred_check
      _
    $region10: #{inter_transformer_forward.1} parent=5 // pred_check_branch
      %474 = sbr.rel (%p471) target = $region12
    $region11: #{inter_transformer_forward.1} parent=5 // pred_region
      %s475 = ssub.s32 %s22, 1
      // Predicated region
      $region13: #{inter_transformer_forward.1} parent=11 // pred_check
        %p476 = pneg %p60
      $region14: #{inter_transformer_forward.1} parent=11 // pred_check_branch
        %478 = sbr.rel (%p476) target = $region16
      $region15: #{inter_transformer_forward.1} parent=11 // pred_region
        %s479 = smul.u32 8, %s31
        %p480 = scmp.lt.s32.totalorder %s479, 7
        %s481 = scalar_select %p480, %s479, 7
        %s482 = smul.addr %s481, 8
        %s483 = scalar_lea.vmem %s0, %s482
        %s484 = smul.u32 8, %s31
      $region16: #{inter_transformer_forward.1} parent=11 // pred_fallthru
        _
      // Predicated region
      $region17: #{inter_transformer_forward.1} parent=11 // pred_check
        %p485 = pneg %p81
      $region18: #{inter_transformer_forward.1} parent=11 // pred_check_branch
        %487 = sbr.rel (%p485) target = $region20
      $region19: #{inter_transformer_forward.1} parent=11 // pred_region
        _
      $region20: #{inter_transformer_forward.1} parent=11 // pred_fallthru
        _
      // Predicated region
      $region21: #{inter_transformer_forward.1} parent=11 // pred_check
        %p488 = pneg %p414
      $region22: #{inter_transformer_forward.1} parent=11 // pred_check_branch
        %490 = sbr.rel (%p488) target = $region24
      $region23: #{inter_transformer_forward.1} parent=11 // pred_region
        _
      $region24: #{inter_transformer_forward.1} parent=11 // pred_fallthru
        _
      // Predicated region
      $region25: #{inter_transformer_forward.1} parent=11 // pred_check
        %p491 = pneg %p435
      $region26: #{inter_transformer_forward.1} parent=11 // pred_check_branch
        %493 = sbr.rel (%p491) target = $region28
      $region27: #{inter_transformer_forward.1} parent=11 // pred_region
        _
      $region28: #{inter_transformer_forward.1} parent=11 // pred_fallthru
        _
    $region12: #{inter_transformer_forward.1} parent=5 // pred_fallthru
      _
    %p494 = scmp.lt.s32.totalorder %s22, 2
    // Predicated region
    $region29: #{inter_transformer_forward.1} parent=5 // pred_check
      %p495 = pneg %p494
    $region30: #{inter_transformer_forward.1} parent=5 // pred_check_branch
      %497 = sbr.rel (%p495) target = $region32
    $region31: #{inter_transformer_forward.1} parent=5 // pred_region
      // Predicated region
      $region33: #{inter_transformer_forward.1} parent=31 // pred_check
        %p498 = pneg %p101
      $region34: #{inter_transformer_forward.1} parent=31 // pred_check_branch
        %500 = sbr.rel (%p498) target = $region36
      $region35: #{inter_transformer_forward.1} parent=31 // pred_region
        %p501 = scmp.lt.s32.totalorder %s30, 1
        %s502 = scalar_select %p501, %s30, 1
        %s503 = smul.addr %s502, 4
        %s504 = smul.addr %s503, 8
        %s505 = scalar_lea.vmem %s2, %s504
      $region36: #{inter_transformer_forward.1} parent=31 // pred_fallthru
        _
      // Predicated region
      $region37: #{inter_transformer_forward.1} parent=31 // pred_check
        %p506 = pneg %p127
      $region38: #{inter_transformer_forward.1} parent=31 // pred_check_branch
        %508 = sbr.rel (%p506) target = $region40
      $region39: #{inter_transformer_forward.1} parent=31 // pred_region
        %p509 = scmp.lt.s32.totalorder %s30, 1
        %s510 = scalar_select %p509, %s30, 1
        %s511 = scalar_lea.vmem %s3, %s510
      $region40: #{inter_transformer_forward.1} parent=31 // pred_fallthru
        _
      // Predicated region
      $region41: #{inter_transformer_forward.1} parent=31 // pred_check
        %p512 = pneg %p153
      $region42: #{inter_transformer_forward.1} parent=31 // pred_check_branch
        %514 = sbr.rel (%p512) target = $region44
      $region43: #{inter_transformer_forward.1} parent=31 // pred_region
        %p515 = scmp.lt.s32.totalorder %s30, 1
        %s516 = scalar_select %p515, %s30, 1
        %s517 = smul.addr %s516, 4
        %s518 = smul.addr %s517, 8
        %s519 = scalar_lea.vmem %s4, %s518
      $region44: #{inter_transformer_forward.1} parent=31 // pred_fallthru
        _
      // Predicated region
      $region45: #{inter_transformer_forward.1} parent=31 // pred_check
        %p520 = pneg %p179
      $region46: #{inter_transformer_forward.1} parent=31 // pred_check_branch
        %522 = sbr.rel (%p520) target = $region48
      $region47: #{inter_transformer_forward.1} parent=31 // pred_region
        %p523 = scmp.lt.s32.totalorder %s30, 1
        %s524 = scalar_select %p523, %s30, 1
        %s525 = scalar_lea.vmem %s5, %s524
      $region48: #{inter_transformer_forward.1} parent=31 // pred_fallthru
        _
      // Predicated region
      $region49: #{inter_transformer_forward.1} parent=31 // pred_check
        %p526 = pneg %p205
      $region50: #{inter_transformer_forward.1} parent=31 // pred_check_branch
        %528 = sbr.rel (%p526) target = $region52
      $region51: #{inter_transformer_forward.1} parent=31 // pred_region
        %p529 = scmp.lt.s32.totalorder %s30, 1
        %s530 = scalar_select %p529, %s30, 1
        %s531 = scalar_lea.vmem %s6, %s530
      $region52: #{inter_transformer_forward.1} parent=31 // pred_fallthru
        _
      // Predicated region
      $region53: #{inter_transformer_forward.1} parent=31 // pred_check
        %p532 = pneg %p231
      $region54: #{inter_transformer_forward.1} parent=31 // pred_check_branch
        %534 = sbr.rel (%p532) target = $region56
      $region55: #{inter_transformer_forward.1} parent=31 // pred_region
        %p535 = scmp.lt.s32.totalorder %s30, 1
        %s536 = scalar_select %p535, %s30, 1
        %s537 = scalar_lea.vmem %s7, %s536
      $region56: #{inter_transformer_forward.1} parent=31 // pred_fallthru
        _
      // Predicated region
      $region57: #{inter_transformer_forward.1} parent=31 // pred_check
        %p538 = pneg %p257
      $region58: #{inter_transformer_forward.1} parent=31 // pred_check_branch
        %540 = sbr.rel (%p538) target = $region60
      $region59: #{inter_transformer_forward.1} parent=31 // pred_region
        %p541 = scmp.lt.s32.totalorder %s30, 1
        %s542 = scalar_select %p541, %s30, 1
        %s543 = smul.addr %s542, 4
        %s544 = smul.addr %s543, 8
        %s545 = scalar_lea.vmem %s8, %s544
      $region60: #{inter_transformer_forward.1} parent=31 // pred_fallthru
        _
      // Predicated region
      $region61: #{inter_transformer_forward.1} parent=31 // pred_check
        %p546 = pneg %p283
      $region62: #{inter_transformer_forward.1} parent=31 // pred_check_branch
        %548 = sbr.rel (%p546) target = $region64
      $region63: #{inter_transformer_forward.1} parent=31 // pred_region
        %p549 = scmp.lt.s32.totalorder %s30, 1
        %s550 = scalar_select %p549, %s30, 1
        %s551 = scalar_lea.vmem %s9, %s550
      $region64: #{inter_transformer_forward.1} parent=31 // pred_fallthru
        _
      // Predicated region
      $region65: #{inter_transformer_forward.1} parent=31 // pred_check
        %p552 = pneg %p309
      $region66: #{inter_transformer_forward.1} parent=31 // pred_check_branch
        %554 = sbr.rel (%p552) target = $region68
      $region67: #{inter_transformer_forward.1} parent=31 // pred_region
        %p555 = scmp.lt.s32.totalorder %s30, 1
        %s556 = scalar_select %p555, %s30, 1
        %s557 = smul.addr %s556, 8
        %s558 = smul.addr %s557, 8
        %s559 = scalar_lea.vmem %s10, %s558
      $region68: #{inter_transformer_forward.1} parent=31 // pred_fallthru
        _
      // Predicated region
      $region69: #{inter_transformer_forward.1} parent=31 // pred_check
        %p560 = pneg %p335
      $region70: #{inter_transformer_forward.1} parent=31 // pred_check_branch
        %562 = sbr.rel (%p560) target = $region72
      $region71: #{inter_transformer_forward.1} parent=31 // pred_region
        %p563 = scmp.lt.s32.totalorder %s30, 1
        %s564 = scalar_select %p563, %s30, 1
        %s565 = scalar_lea.vmem %s11, %s564
      $region72: #{inter_transformer_forward.1} parent=31 // pred_fallthru
        _
      // Predicated region
      $region73: #{inter_transformer_forward.1} parent=31 // pred_check
        %p566 = pneg %p361
      $region74: #{inter_transformer_forward.1} parent=31 // pred_check_branch
        %568 = sbr.rel (%p566) target = $region76
      $region75: #{inter_transformer_forward.1} parent=31 // pred_region
        %p569 = scmp.lt.s32.totalorder %s30, 1
        %s570 = scalar_select %p569, %s30, 1
        %s571 = scalar_lea.vmem %s12, %s570
      $region76: #{inter_transformer_forward.1} parent=31 // pred_fallthru
        _
      // Predicated region
      $region77: #{inter_transformer_forward.1} parent=31 // pred_check
        %p572 = pneg %p387
      $region78: #{inter_transformer_forward.1} parent=31 // pred_check_branch
        %574 = sbr.rel (%p572) target = $region80
      $region79: #{inter_transformer_forward.1} parent=31 // pred_region
        %p575 = scmp.lt.s32.totalorder %s30, 1
        %s576 = scalar_select %p575, %s30, 1
        %s577 = scalar_lea.vmem %s13, %s576
      $region80: #{inter_transformer_forward.1} parent=31 // pred_fallthru
        _
    $region32: #{inter_transformer_forward.1} parent=5 // pred_fallthru
      _
    %p578 = scmp.le.s32.totalorder 1, %s22
    %p579 = scmp.lt.s32.totalorder %s22, 3
    %p580 = pnand %p578, %p579
    %p581 = pneg %p580
    // Predicated region
    $region81: #{inter_transformer_forward.1} parent=5 // pred_check
      _
    $region82: #{inter_transformer_forward.1} parent=5 // pred_check_branch
      %583 = sbr.rel (%p580) target = $region84
    $region83: #{inter_transformer_forward.1} parent=5 // pred_region
      %s584 = ssub.s32 %s22, 1
      %s585 = smul.u32 8, %s31
      %p586 = scmp.lt.s32.totalorder %s585, 7
      %s587 = scalar_select %p586, %s585, 7
      %s588 = smul.addr %s587, 8
      %s589 = scalar_lea.vmem %s0, %s588
      %p590 = pneg %p60
      %p591 = pneg %p57
      %p592 = pneg %p81
      %p593 = pneg %p78
      %p594 = scmp.lt.s32.totalorder %s32, 1
      %s595 = scalar_select %p594, %s32, 1
      %s596 = smul.addr %s595, 4
      %s597 = smul.addr %s596, 8
      %s598 = scalar_lea.vmem %s2, %s597
      %p599 = pneg %p107
      %p600 = pneg %p104
      %p601 = scmp.lt.s32.totalorder %s32, 1
      %s602 = scalar_select %p601, %s32, 1
      %s603 = scalar_lea.vmem %s3, %s602
      %p604 = pneg %p133
      %p605 = pneg %p130
      %p606 = scmp.lt.s32.totalorder %s32, 1
      %s607 = scalar_select %p606, %s32, 1
      %s608 = smul.addr %s607, 4
      %s609 = smul.addr %s608, 8
      %s610 = scalar_lea.vmem %s4, %s609
      %p611 = pneg %p159
      %p612 = pneg %p156
      %p613 = scmp.lt.s32.totalorder %s32, 1
      %s614 = scalar_select %p613, %s32, 1
      %s615 = scalar_lea.vmem %s5, %s614
      %p616 = pneg %p185
      %p617 = pneg %p182
      %p618 = scmp.lt.s32.totalorder %s32, 1
      %s619 = scalar_select %p618, %s32, 1
      %s620 = scalar_lea.vmem %s6, %s619
      %p621 = pneg %p211
      %p622 = pneg %p208
      %p623 = scmp.lt.s32.totalorder %s32, 1
      %s624 = scalar_select %p623, %s32, 1
      %s625 = scalar_lea.vmem %s7, %s624
      %p626 = pneg %p237
      %p627 = pneg %p234
      %p628 = scmp.lt.s32.totalorder %s32, 1
      %s629 = scalar_select %p628, %s32, 1
      %s630 = smul.addr %s629, 4
      %s631 = smul.addr %s630, 8
      %s632 = scalar_lea.vmem %s8, %s631
      %p633 = pneg %p263
      %p634 = pneg %p260
      %p635 = scmp.lt.s32.totalorder %s32, 1
      %s636 = scalar_select %p635, %s32, 1
      %s637 = scalar_lea.vmem %s9, %s636
      %p638 = pneg %p289
      %p639 = pneg %p286
      %p640 = scmp.lt.s32.totalorder %s32, 1
      %s641 = scalar_select %p640, %s32, 1
      %s642 = smul.addr %s641, 8
      %s643 = smul.addr %s642, 8
      %s644 = scalar_lea.vmem %s10, %s643
      %p645 = pneg %p315
      %p646 = pneg %p312
      %p647 = scmp.lt.s32.totalorder %s32, 1
      %s648 = scalar_select %p647, %s32, 1
      %s649 = scalar_lea.vmem %s11, %s648
      %p650 = pneg %p341
      %p651 = pneg %p338
      %p652 = scmp.lt.s32.totalorder %s32, 1
      %s653 = scalar_select %p652, %s32, 1
      %s654 = scalar_lea.vmem %s12, %s653
      %p655 = pneg %p367
      %p656 = pneg %p364
      %p657 = scmp.lt.s32.totalorder %s32, 1
      %s658 = scalar_select %p657, %s32, 1
      %s659 = scalar_lea.vmem %s13, %s658
      %p660 = pneg %p393
      %p661 = pneg %p390
      %p662 = pneg %p414
      %p663 = pneg %p411
      %p664 = pneg %p435
      %p665 = pneg %p432
      %p666 = pneg %p461
      %p667 = pneg %p458
      %s668 = smul.u32 8, %s31
      %p669 = scmp.lt.s32.totalorder %s668, 7
      %s670 = scalar_select %p669, %s668, 7
      %s671 = smul.addr %s670, 8
      %s672 = scalar_lea.vmem %s16, %s671
      %s673 = smul.u32 8, %s31
      %p674 = scmp.lt.s32.totalorder %s673, 7
      %s675 = scalar_select %p674, %s673, 7
      %s676 = smul.addr %s675, 8
      %s677 = scalar_lea.vmem %s0, %s676
      %s678 = smul.u32 8, %s31
      %p679 = scmp.lt.s32.totalorder %s32, 1
      %s680 = scalar_select %p679, %s32, 1
      %s681 = smul.addr %s680, 4
      %s682 = smul.addr %s681, 8
      %s683 = scalar_lea.vmem %s2, %s682
      %p684 = scmp.lt.s32.totalorder %s32, 1
      %s685 = scalar_select %p684, %s32, 1
      %s686 = scalar_lea.vmem %s3, %s685
      %p687 = scmp.lt.s32.totalorder %s32, 1
      %s688 = scalar_select %p687, %s32, 1
      %s689 = smul.addr %s688, 4
      %s690 = smul.addr %s689, 8
      %s691 = scalar_lea.vmem %s4, %s690
      %p692 = scmp.lt.s32.totalorder %s32, 1
      %s693 = scalar_select %p692, %s32, 1
      %s694 = scalar_lea.vmem %s5, %s693
      %p695 = scmp.lt.s32.totalorder %s32, 1
      %s696 = scalar_select %p695, %s32, 1
      %s697 = scalar_lea.vmem %s6, %s696
      %p698 = scmp.lt.s32.totalorder %s32, 1
      %s699 = scalar_select %p698, %s32, 1
      %s700 = scalar_lea.vmem %s7, %s699
      %p701 = scmp.lt.s32.totalorder %s32, 1
      %s702 = scalar_select %p701, %s32, 1
      %s703 = smul.addr %s702, 4
      %s704 = smul.addr %s703, 8
      %s705 = scalar_lea.vmem %s8, %s704
      %p706 = scmp.lt.s32.totalorder %s32, 1
      %s707 = scalar_select %p706, %s32, 1
      %s708 = scalar_lea.vmem %s9, %s707
      %p709 = scmp.lt.s32.totalorder %s32, 1
      %s710 = scalar_select %p709, %s32, 1
      %s711 = smul.addr %s710, 8
      %s712 = smul.addr %s711, 8
      %s713 = scalar_lea.vmem %s10, %s712
      %p714 = scmp.lt.s32.totalorder %s32, 1
      %s715 = scalar_select %p714, %s32, 1
      %s716 = scalar_lea.vmem %s11, %s715
      %p717 = scmp.lt.s32.totalorder %s32, 1
      %s718 = scalar_select %p717, %s32, 1
      %s719 = scalar_lea.vmem %s12, %s718
      %p720 = scmp.lt.s32.totalorder %s32, 1
      %s721 = scalar_select %p720, %s32, 1
      %s722 = scalar_lea.vmem %s13, %s721
      %s723 = smul.u32 8, %s31
      %p724 = scmp.lt.s32.totalorder %s723, 7
      %s725 = scalar_select %p724, %s723, 7
      %s726 = smul.addr %s725, 8
      %s727 = scalar_lea.vmem %s16, %s726
      %s728 = smul.u32 8, %s31
      %p729 = scmp.eq.s32.totalorder %s32, 0
      // Predicated region
      $region85: #{inter_transformer_forward.1} parent=83 // pred_check
        %p730 = pneg %p729
      $region86: #{inter_transformer_forward.1} parent=83 // pred_check_branch
        %732 = sbr.rel (%p730) target = $region88
      $region87: #{inter_transformer_forward.1} parent=83 // pred_region
        %v733 = vld [vmem:[%s677] sm:$0xff]
        %v734 = vld [vmem:[%s677 + $0x8] sm:$0xff]
        %v735 = vld [vmem:[%s677 + $0x10] sm:$0xff]
        %v736 = vld [vmem:[%s677 + $0x18] sm:$0xff]
        %v737 = vld [vmem:[%s677 + $0x20] sm:$0xff]
        %v738 = vld [vmem:[%s677 + $0x28] sm:$0xff]
        %v739 = vld [vmem:[%s677 + $0x30] sm:$0xff]
        %v740 = vld [vmem:[%s677 + $0x38] sm:$0xff]
        %v741 = vld [vmem:[%s1] sm:$0xff]
        %v742 = vmul.f32 %v733, 2.0
        %v743 = vmul.f32 %v734, 2.0
        %v744 = vmul.f32 %v735, 2.0
        %v745 = vmul.f32 %v736, 2.0
        %v746 = vmul.f32 %v737, 2.0
        %v747 = vmul.f32 %v738, 2.0
        %v748 = vmul.f32 %v739, 2.0
        %v749 = vmul.f32 %v740, 2.0
        %v750 = vadd.f32 %v742, %v741
        %v751 = vadd.f32 %v743, %v741
        %v752 = vadd.f32 %v744, %v741
        %v753 = vadd.f32 %v745, %v741
        %v754 = vadd.f32 %v746, %v741
        %v755 = vadd.f32 %v747, %v741
        %v756 = vadd.f32 %v748, %v741
        %v757 = vadd.f32 %v749, %v741
        %vm758 = vcmask 261120
        %759 = vst.msk [vmem:[#allocation2] sm:$0xff] %vm758, %v750
        %760 = vst.msk [vmem:[#allocation2 + $0x8] sm:$0xff] %vm758, %v751
        %761 = vst.msk [vmem:[#allocation2 + $0x10] sm:$0xff] %vm758, %v752
        %762 = vst.msk [vmem:[#allocation2 + $0x18] sm:$0xff] %vm758, %v753
        %763 = vst.msk [vmem:[#allocation2 + $0x20] sm:$0xff] %vm758, %v754
        %764 = vst.msk [vmem:[#allocation2 + $0x28] sm:$0xff] %vm758, %v755
        %765 = vst.msk [vmem:[#allocation2 + $0x30] sm:$0xff] %vm758, %v756
        %766 = vst.msk [vmem:[#allocation2 + $0x38] sm:$0xff] %vm758, %v757
      $region88: #{inter_transformer_forward.1} parent=83 // pred_fallthru
        _
      %v767 = vld [vmem:[#allocation2] sm:$0xff]
      %v768 = vld [vmem:[#allocation2 + $0x8] sm:$0xff]
      %v769 = vld [vmem:[#allocation2 + $0x10] sm:$0xff]
      %v770 = vld [vmem:[#allocation2 + $0x18] sm:$0xff]
      %v771 = vld [vmem:[#allocation2 + $0x20] sm:$0xff]
      %v772 = vld [vmem:[#allocation2 + $0x28] sm:$0xff]
      %v773 = vld [vmem:[#allocation2 + $0x30] sm:$0xff]
      %v774 = vld [vmem:[#allocation2 + $0x38] sm:$0xff]
      %v775 = vld [vmem:[%s683] sm:$0xff]
      %v776 = vld [vmem:[%s683 + $0x8] sm:$0xff]
      %v777 = vld [vmem:[%s683 + $0x10] sm:$0xff]
      %v778 = vld [vmem:[%s683 + $0x18] sm:$0xff]
      %v779 = vld [vmem:[%s686] sm:$0x1]
      %v781 = vlaneseq
      %v782 = vshrl.u32 %v781, 7
      %v783 = vsub.s32 0, %v782
      %v784 = vrot.slane %v779, %v783
      %vm786 = vcmask 261120
      %v788 = vsel %vm786, %v767, 0
      %v791 = vsel %vm786, %v768, 0
      %v794 = vsel %vm786, %v769, 0
      %v797 = vsel %vm786, %v770, 0
      %v800 = vsel %vm786, %v771, 0
      %v803 = vsel %vm786, %v772, 0
      %v806 = vsel %vm786, %v773, 0
      %v809 = vsel %vm786, %v774, 0
      %811 = vmatprep.subr.mxu0 0.0
      %812 = vmatpush1.msra.mxu0 0.0
      %813 = vmatprep.subr.mxu0 0.0
      %814 = vmatpush1.msra.mxu0 0.0
      %815 = vmatprep.subr.mxu0 0.0
      %816 = vmatpush1.msra.mxu0 0.0
      %817 = vmatprep.subr.mxu0 0.0
      %818 = vmatpush1.msra.mxu0 0.0
      %819 = vmatprep.subr.mxu0 0.0
      %820 = vmatpush1.msra.mxu0 0.0
      %821 = vmatprep.subr.mxu0 0.0
      %822 = vmatpush1.msra.mxu0 0.0
      %823 = vmatprep.subr.mxu0 0.0
      %824 = vmatpush1.msra.mxu0 0.0
      %825 = vmatprep.subr.mxu0 0.0
      %826 = vmatpush1.msra.mxu0 0.0
      %827 = vmatprep.subr.mxu0 0.0
      %828 = vmatpush1.msra.mxu0 0.0
      %829 = vmatprep.subr.mxu0 0.0
      %830 = vmatpush1.msra.mxu0 0.0
      %831 = vmatprep.subr.mxu0 0.0
      %832 = vmatpush1.msra.mxu0 0.0
      %833 = vmatprep.subr.mxu0 0.0
      %834 = vmatpush1.msra.mxu0 0.0
      %835 = vmatprep.subr.mxu0 0.0
      %836 = vmatpush1.msra.mxu0 %v778
      %837 = vmatprep.subr.mxu0 0.0
      %838 = vmatpush1.msra.mxu0 %v777
      %839 = vmatprep.subr.mxu0 0.0
      %840 = vmatpush1.msra.mxu0 %v776
      %841 = vmatprep.subr.mxu0 0.0
      %842 = vmatpush1.msra.mxu0 %v775
      %843 = vmatprep.subr.mxu0 0.0
      %844 = vmatpush2.msra.mxu0 0.0
      %845 = vmatprep.subr.mxu0 0.0
      %846 = vmatpush2.msra.mxu0 0.0
      %847 = vmatprep.subr.mxu0 0.0
      %848 = vmatpush2.msra.mxu0 0.0
      %849 = vmatprep.subr.mxu0 0.0
      %850 = vmatpush2.msra.mxu0 0.0
      %851 = vmatprep.subr.mxu0 0.0
      %852 = vmatpush2.msra.mxu0 0.0
      %853 = vmatprep.subr.mxu0 0.0
      %854 = vmatpush2.msra.mxu0 0.0
      %855 = vmatprep.subr.mxu0 0.0
      %856 = vmatpush2.msra.mxu0 0.0
      %857 = vmatprep.subr.mxu0 0.0
      %858 = vmatpush2.msra.mxu0 0.0
      %859 = vmatprep.subr.mxu0 0.0
      %860 = vmatpush2.msra.mxu0 0.0
      %861 = vmatprep.subr.mxu0 0.0
      %862 = vmatpush2.msra.mxu0 0.0
      %863 = vmatprep.subr.mxu0 0.0
      %864 = vmatpush2.msra.mxu0 0.0
      %865 = vmatprep.subr.mxu0 0.0
      %866 = vmatpush2.msra.mxu0 0.0
      %867 = vmatprep.subr.mxu0 0.0
      %868 = vmatpush2.msra.mxu0 0.0
      %869 = vmatprep.subr.mxu0 0.0
      %870 = vmatpush2.msra.mxu0 0.0
      %871 = vmatprep.subr.mxu0 0.0
      %872 = vmatpush2.msra.mxu0 0.0
      %873 = vmatprep.subr.mxu0 0.0
      %874 = vmatpush2.msra.mxu0 0.0
      %875 = vmatprep.mubr.f32.mxu0 0.0
      %876 = vmatmul.mubr.f32.gmra.mxu0 %v788
      %v877 = vpop.f32.mrf.mxu0
      %v878 = vadd.f32 %v784, %v877
      %v879 = vpop.f32.mrf.mxu0
      %880 = vmatprep.mubr.f32.mxu0 0.0
      %881 = vmatmul.mubr.f32.gmra.mxu0 %v791
      %v882 = vpop.f32.mrf.mxu0
      %v883 = vadd.f32 %v784, %v882
      %v884 = vpop.f32.mrf.mxu0
      %885 = vmatprep.mubr.f32.mxu0 0.0
      %886 = vmatmul.mubr.f32.gmra.mxu0 %v794
      %v887 = vpop.f32.mrf.mxu0
      %v888 = vadd.f32 %v784, %v887
      %v889 = vpop.f32.mrf.mxu0
      %890 = vmatprep.mubr.f32.mxu0 0.0
      %891 = vmatmul.mubr.f32.gmra.mxu0 %v797
      %v892 = vpop.f32.mrf.mxu0
      %v893 = vadd.f32 %v784, %v892
      %v894 = vpop.f32.mrf.mxu0
      %895 = vmatprep.mubr.f32.mxu0 0.0
      %896 = vmatmul.mubr.f32.gmra.mxu0 %v800
      %v897 = vpop.f32.mrf.mxu0
      %v898 = vadd.f32 %v784, %v897
      %v899 = vpop.f32.mrf.mxu0
      %900 = vmatprep.mubr.f32.mxu0 0.0
      %901 = vmatmul.mubr.f32.gmra.mxu0 %v803
      %v902 = vpop.f32.mrf.mxu0
      %v903 = vadd.f32 %v784, %v902
      %v904 = vpop.f32.mrf.mxu0
      %905 = vmatprep.mubr.f32.mxu0 0.0
      %906 = vmatmul.mubr.f32.gmra.mxu0 %v806
      %v907 = vpop.f32.mrf.mxu0
      %v908 = vadd.f32 %v784, %v907
      %v909 = vpop.f32.mrf.mxu0
      %910 = vmatprep.mubr.f32.mxu0 0.0
      %911 = vmatmul.mubr.f32.gmra.mxu0 %v809
      %v912 = vpop.f32.mrf.mxu0
      %v913 = vadd.f32 %v784, %v912
      %v914 = vpop.f32.mrf.mxu0
      %915 = vdwg.mxu0
      %924 = vrot.lane.b32.xlu0 %v878, 104
      %v925 = vpop.permute.xlu0 %924
      %926 = vrot.lane.b32.xlu0 %v883, 104
      %v927 = vpop.permute.xlu0 %926
      %928 = vrot.lane.b32.xlu0 %v888, 104
      %v929 = vpop.permute.xlu0 %928
      %930 = vrot.lane.b32.xlu0 %v893, 104
      %v931 = vpop.permute.xlu0 %930
      %932 = vrot.lane.b32.xlu0 %v898, 104
      %v933 = vpop.permute.xlu0 %932
      %934 = vrot.lane.b32.xlu0 %v903, 104
      %v935 = vpop.permute.xlu0 %934
      %936 = vrot.lane.b32.xlu0 %v908, 104
      %v937 = vpop.permute.xlu0 %936
      %938 = vrot.lane.b32.xlu0 %v913, 104
      %v939 = vpop.permute.xlu0 %938
      %940 = vrot.lane.b32.xlu0 %v878, 80
      %v941 = vpop.permute.xlu0 %940
      %942 = vrot.lane.b32.xlu0 %v883, 80
      %v943 = vpop.permute.xlu0 %942
      %944 = vrot.lane.b32.xlu0 %v888, 80
      %v945 = vpop.permute.xlu0 %944
      %946 = vrot.lane.b32.xlu0 %v893, 80
      %v947 = vpop.permute.xlu0 %946
      %948 = vrot.lane.b32.xlu0 %v898, 80
      %v949 = vpop.permute.xlu0 %948
      %950 = vrot.lane.b32.xlu0 %v903, 80
      %v951 = vpop.permute.xlu0 %950
      %952 = vrot.lane.b32.xlu0 %v908, 80
      %v953 = vpop.permute.xlu0 %952
      %954 = vrot.lane.b32.xlu0 %v913, 80
      %v955 = vpop.permute.xlu0 %954
      %956 = vrot.lane.b32.xlu0 %v878, 56
      %v957 = vpop.permute.xlu0 %956
      %958 = vrot.lane.b32.xlu0 %v883, 56
      %v959 = vpop.permute.xlu0 %958
      %960 = vrot.lane.b32.xlu0 %v888, 56
      %v961 = vpop.permute.xlu0 %960
      %962 = vrot.lane.b32.xlu0 %v893, 56
      %v963 = vpop.permute.xlu0 %962
      %964 = vrot.lane.b32.xlu0 %v898, 56
      %v965 = vpop.permute.xlu0 %964
      %966 = vrot.lane.b32.xlu0 %v903, 56
      %v967 = vpop.permute.xlu0 %966
      %968 = vrot.lane.b32.xlu0 %v908, 56
      %v969 = vpop.permute.xlu0 %968
      %970 = vrot.lane.b32.xlu0 %v913, 56
      %v971 = vpop.permute.xlu0 %970
      %972 = vrot.lane.b32.xlu0 %v878, 120
      %v973 = vpop.permute.xlu0 %972
      %vm974 = vcmask 64512
      %v975 = vsel %vm974, %v878, 0
      %v977 = vsel %vm974, %v973, 0
      %979 = vmatprep.subr.mxu0 0.0
      %980 = vmatpush1.xpose.msra.mxu0 0.0
      %981 = vmatprep.subr.mxu0 0.0
      %982 = vmatpush1.xpose.msra.mxu0 0.0
      %983 = vmatprep.subr.mxu0 0.0
      %984 = vmatpush1.xpose.msra.mxu0 0.0
      %985 = vmatprep.subr.mxu0 0.0
      %986 = vmatpush1.xpose.msra.mxu0 0.0
      %987 = vmatprep.subr.mxu0 0.0
      %988 = vmatpush1.xpose.msra.mxu0 0.0
      %989 = vmatprep.subr.mxu0 0.0
      %990 = vmatpush1.xpose.msra.mxu0 0.0
      %991 = vmatprep.subr.mxu0 0.0
      %992 = vmatpush1.xpose.msra.mxu0 0.0
      %993 = vmatprep.subr.mxu0 0.0
      %994 = vmatpush1.xpose.msra.mxu0 0.0
      %995 = vmatprep.subr.mxu0 0.0
      %996 = vmatpush1.xpose.msra.mxu0 0.0
      %997 = vmatprep.subr.mxu0 0.0
      %998 = vmatpush1.xpose.msra.mxu0 0.0
      %999 = vmatprep.subr.mxu0 0.0
      %1000 = vmatpush1.xpose.msra.mxu0 0.0
      %1001 = vmatprep.subr.mxu0 0.0
      %1002 = vmatpush1.xpose.msra.mxu0 0.0
      %1003 = vmatprep.subr.mxu0 0.0
      %1004 = vmatpush1.xpose.msra.mxu0 0.0
      %1005 = vmatprep.subr.mxu0 0.0
      %1006 = vmatpush1.xpose.msra.mxu0 0.0
      %1007 = vmatprep.subr.mxu0 0.0
      %1008 = vmatpush1.xpose.msra.mxu0 0.0
      %1009 = vmatprep.subr.mxu0 0.0
      %1010 = vmatpush1.xpose.msra.mxu0 %v977
      %1011 = vmatprep.subr.mxu0 0.0
      %1012 = vmatpush2.xpose.msra.mxu0 0.0
      %1013 = vmatprep.subr.mxu0 0.0
      %1014 = vmatpush2.xpose.msra.mxu0 0.0
      %1015 = vmatprep.subr.mxu0 0.0
      %1016 = vmatpush2.xpose.msra.mxu0 0.0
      %1017 = vmatprep.subr.mxu0 0.0
      %1018 = vmatpush2.xpose.msra.mxu0 0.0
      %1019 = vmatprep.subr.mxu0 0.0
      %1020 = vmatpush2.xpose.msra.mxu0 0.0
      %1021 = vmatprep.subr.mxu0 0.0
      %1022 = vmatpush2.xpose.msra.mxu0 0.0
      %1023 = vmatprep.subr.mxu0 0.0
      %1024 = vmatpush2.xpose.msra.mxu0 0.0
      %1025 = vmatprep.subr.mxu0 0.0
      %1026 = vmatpush2.xpose.msra.mxu0 0.0
      %1027 = vmatprep.subr.mxu0 0.0
      %1028 = vmatpush2.xpose.msra.mxu0 0.0
      %1029 = vmatprep.subr.mxu0 0.0
      %1030 = vmatpush2.xpose.msra.mxu0 0.0
      %1031 = vmatprep.subr.mxu0 0.0
      %1032 = vmatpush2.xpose.msra.mxu0 0.0
      %1033 = vmatprep.subr.mxu0 0.0
      %1034 = vmatpush2.xpose.msra.mxu0 0.0
      %1035 = vmatprep.subr.mxu0 0.0
      %1036 = vmatpush2.xpose.msra.mxu0 0.0
      %1037 = vmatprep.subr.mxu0 0.0
      %1038 = vmatpush2.xpose.msra.mxu0 0.0
      %1039 = vmatprep.subr.mxu0 0.0
      %1040 = vmatpush2.xpose.msra.mxu0 0.0
      %1041 = vmatprep.subr.mxu0 0.0
      %1042 = vmatpush2.xpose.msra.mxu0 0.0
      %1043 = vmatprep.mubr.f32.mxu0 0.0
      %1044 = vmatmul.mubr.f32.gmra.mxu0 %v975
      %v1045 = vpop.f32.mrf.mxu0
      %v1046 = vadd.f32 0.0, %v1045
      %v1047 = vpop.f32.mrf.mxu0
      %1048 = vdwg.mxu0
      %1049 = vrot.lane.b32.xlu0 %v883, 120
      %v1050 = vpop.permute.xlu0 %1049
      %v1051 = vsel %vm974, %v883, 0
      %v1053 = vsel %vm974, %v1050, 0
      %1055 = vmatprep.subr.mxu0 0.0
      %1056 = vmatpush1.xpose.msra.mxu0 0.0
      %1057 = vmatprep.subr.mxu0 0.0
      %1058 = vmatpush1.xpose.msra.mxu0 0.0
      %1059 = vmatprep.subr.mxu0 0.0
      %1060 = vmatpush1.xpose.msra.mxu0 0.0
      %1061 = vmatprep.subr.mxu0 0.0
      %1062 = vmatpush1.xpose.msra.mxu0 0.0
      %1063 = vmatprep.subr.mxu0 0.0
      %1064 = vmatpush1.xpose.msra.mxu0 0.0
      %1065 = vmatprep.subr.mxu0 0.0
      %1066 = vmatpush1.xpose.msra.mxu0 0.0
      %1067 = vmatprep.subr.mxu0 0.0
      %1068 = vmatpush1.xpose.msra.mxu0 0.0
      %1069 = vmatprep.subr.mxu0 0.0
      %1070 = vmatpush1.xpose.msra.mxu0 0.0
      %1071 = vmatprep.subr.mxu0 0.0
      %1072 = vmatpush1.xpose.msra.mxu0 0.0
      %1073 = vmatprep.subr.mxu0 0.0
      %1074 = vmatpush1.xpose.msra.mxu0 0.0
      %1075 = vmatprep.subr.mxu0 0.0
      %1076 = vmatpush1.xpose.msra.mxu0 0.0
      %1077 = vmatprep.subr.mxu0 0.0
      %1078 = vmatpush1.xpose.msra.mxu0 0.0
      %1079 = vmatprep.subr.mxu0 0.0
      %1080 = vmatpush1.xpose.msra.mxu0 0.0
      %1081 = vmatprep.subr.mxu0 0.0
      %1082 = vmatpush1.xpose.msra.mxu0 0.0
      %1083 = vmatprep.subr.mxu0 0.0
      %1084 = vmatpush1.xpose.msra.mxu0 0.0
      %1085 = vmatprep.subr.mxu0 0.0
      %1086 = vmatpush1.xpose.msra.mxu0 %v1053
      %1087 = vmatprep.subr.mxu0 0.0
      %1088 = vmatpush2.xpose.msra.mxu0 0.0
      %1089 = vmatprep.subr.mxu0 0.0
      %1090 = vmatpush2.xpose.msra.mxu0 0.0
      %1091 = vmatprep.subr.mxu0 0.0
      %1092 = vmatpush2.xpose.msra.mxu0 0.0
      %1093 = vmatprep.subr.mxu0 0.0
      %1094 = vmatpush2.xpose.msra.mxu0 0.0
      %1095 = vmatprep.subr.mxu0 0.0
      %1096 = vmatpush2.xpose.msra.mxu0 0.0
      %1097 = vmatprep.subr.mxu0 0.0
      %1098 = vmatpush2.xpose.msra.mxu0 0.0
      %1099 = vmatprep.subr.mxu0 0.0
      %1100 = vmatpush2.xpose.msra.mxu0 0.0
      %1101 = vmatprep.subr.mxu0 0.0
      %1102 = vmatpush2.xpose.msra.mxu0 0.0
      %1103 = vmatprep.subr.mxu0 0.0
      %1104 = vmatpush2.xpose.msra.mxu0 0.0
      %1105 = vmatprep.subr.mxu0 0.0
      %1106 = vmatpush2.xpose.msra.mxu0 0.0
      %1107 = vmatprep.subr.mxu0 0.0
      %1108 = vmatpush2.xpose.msra.mxu0 0.0
      %1109 = vmatprep.subr.mxu0 0.0
      %1110 = vmatpush2.xpose.msra.mxu0 0.0
      %1111 = vmatprep.subr.mxu0 0.0
      %1112 = vmatpush2.xpose.msra.mxu0 0.0
      %1113 = vmatprep.subr.mxu0 0.0
      %1114 = vmatpush2.xpose.msra.mxu0 0.0
      %1115 = vmatprep.subr.mxu0 0.0
      %1116 = vmatpush2.xpose.msra.mxu0 0.0
      %1117 = vmatprep.subr.mxu0 0.0
      %1118 = vmatpush2.xpose.msra.mxu0 0.0
      %1119 = vmatprep.mubr.f32.mxu0 0.0
      %1120 = vmatmul.mubr.f32.gmra.mxu0 %v1051
      %v1121 = vpop.f32.mrf.mxu0
      %v1122 = vadd.f32 0.0, %v1121
      %v1123 = vpop.f32.mrf.mxu0
      %1124 = vdwg.mxu0
      %1125 = vrot.lane.b32.xlu0 %v888, 120
      %v1126 = vpop.permute.xlu0 %1125
      %v1127 = vsel %vm974, %v888, 0
      %v1129 = vsel %vm974, %v1126, 0
      %1131 = vmatprep.subr.mxu0 0.0
      %1132 = vmatpush1.xpose.msra.mxu0 0.0
      %1133 = vmatprep.subr.mxu0 0.0
      %1134 = vmatpush1.xpose.msra.mxu0 0.0
      %1135 = vmatprep.subr.mxu0 0.0
      %1136 = vmatpush1.xpose.msra.mxu0 0.0
      %1137 = vmatprep.subr.mxu0 0.0
      %1138 = vmatpush1.xpose.msra.mxu0 0.0
      %1139 = vmatprep.subr.mxu0 0.0
      %1140 = vmatpush1.xpose.msra.mxu0 0.0
      %1141 = vmatprep.subr.mxu0 0.0
      %1142 = vmatpush1.xpose.msra.mxu0 0.0
      %1143 = vmatprep.subr.mxu0 0.0
      %1144 = vmatpush1.xpose.msra.mxu0 0.0
      %1145 = vmatprep.subr.mxu0 0.0
      %1146 = vmatpush1.xpose.msra.mxu0 0.0
      %1147 = vmatprep.subr.mxu0 0.0
      %1148 = vmatpush1.xpose.msra.mxu0 0.0
      %1149 = vmatprep.subr.mxu0 0.0
      %1150 = vmatpush1.xpose.msra.mxu0 0.0
      %1151 = vmatprep.subr.mxu0 0.0
      %1152 = vmatpush1.xpose.msra.mxu0 0.0
      %1153 = vmatprep.subr.mxu0 0.0
      %1154 = vmatpush1.xpose.msra.mxu0 0.0
      %1155 = vmatprep.subr.mxu0 0.0
      %1156 = vmatpush1.xpose.msra.mxu0 0.0
      %1157 = vmatprep.subr.mxu0 0.0
      %1158 = vmatpush1.xpose.msra.mxu0 0.0
      %1159 = vmatprep.subr.mxu0 0.0
      %1160 = vmatpush1.xpose.msra.mxu0 0.0
      %1161 = vmatprep.subr.mxu0 0.0
      %1162 = vmatpush1.xpose.msra.mxu0 %v1129
      %1163 = vmatprep.subr.mxu0 0.0
      %1164 = vmatpush2.xpose.msra.mxu0 0.0
      %1165 = vmatprep.subr.mxu0 0.0
      %1166 = vmatpush2.xpose.msra.mxu0 0.0
      %1167 = vmatprep.subr.mxu0 0.0
      %1168 = vmatpush2.xpose.msra.mxu0 0.0
      %1169 = vmatprep.subr.mxu0 0.0
      %1170 = vmatpush2.xpose.msra.mxu0 0.0
      %1171 = vmatprep.subr.mxu0 0.0
      %1172 = vmatpush2.xpose.msra.mxu0 0.0
      %1173 = vmatprep.subr.mxu0 0.0
      %1174 = vmatpush2.xpose.msra.mxu0 0.0
      %1175 = vmatprep.subr.mxu0 0.0
      %1176 = vmatpush2.xpose.msra.mxu0 0.0
      %1177 = vmatprep.subr.mxu0 0.0
      %1178 = vmatpush2.xpose.msra.mxu0 0.0
      %1179 = vmatprep.subr.mxu0 0.0
      %1180 = vmatpush2.xpose.msra.mxu0 0.0
      %1181 = vmatprep.subr.mxu0 0.0
      %1182 = vmatpush2.xpose.msra.mxu0 0.0
      %1183 = vmatprep.subr.mxu0 0.0
      %1184 = vmatpush2.xpose.msra.mxu0 0.0
      %1185 = vmatprep.subr.mxu0 0.0
      %1186 = vmatpush2.xpose.msra.mxu0 0.0
      %1187 = vmatprep.subr.mxu0 0.0
      %1188 = vmatpush2.xpose.msra.mxu0 0.0
      %1189 = vmatprep.subr.mxu0 0.0
      %1190 = vmatpush2.xpose.msra.mxu0 0.0
      %1191 = vmatprep.subr.mxu0 0.0
      %1192 = vmatpush2.xpose.msra.mxu0 0.0
      %1193 = vmatprep.subr.mxu0 0.0
      %1194 = vmatpush2.xpose.msra.mxu0 0.0
      %1195 = vmatprep.mubr.f32.mxu0 0.0
      %1196 = vmatmul.mubr.f32.gmra.mxu0 %v1127
      %v1197 = vpop.f32.mrf.mxu0
      %v1198 = vadd.f32 0.0, %v1197
      %v1199 = vpop.f32.mrf.mxu0
      %1200 = vdwg.mxu0
      %1201 = vrot.lane.b32.xlu0 %v893, 120
      %v1202 = vpop.permute.xlu0 %1201
      %v1203 = vsel %vm974, %v893, 0
      %v1205 = vsel %vm974, %v1202, 0
      %1207 = vmatprep.subr.mxu0 0.0
      %1208 = vmatpush1.xpose.msra.mxu0 0.0
      %1209 = vmatprep.subr.mxu0 0.0
      %1210 = vmatpush1.xpose.msra.mxu0 0.0
      %1211 = vmatprep.subr.mxu0 0.0
      %1212 = vmatpush1.xpose.msra.mxu0 0.0
      %1213 = vmatprep.subr.mxu0 0.0
      %1214 = vmatpush1.xpose.msra.mxu0 0.0
      %1215 = vmatprep.subr.mxu0 0.0
      %1216 = vmatpush1.xpose.msra.mxu0 0.0
      %1217 = vmatprep.subr.mxu0 0.0
      %1218 = vmatpush1.xpose.msra.mxu0 0.0
      %1219 = vmatprep.subr.mxu0 0.0
      %1220 = vmatpush1.xpose.msra.mxu0 0.0
      %1221 = vmatprep.subr.mxu0 0.0
      %1222 = vmatpush1.xpose.msra.mxu0 0.0
      %1223 = vmatprep.subr.mxu0 0.0
      %1224 = vmatpush1.xpose.msra.mxu0 0.0
      %1225 = vmatprep.subr.mxu0 0.0
      %1226 = vmatpush1.xpose.msra.mxu0 0.0
      %1227 = vmatprep.subr.mxu0 0.0
      %1228 = vmatpush1.xpose.msra.mxu0 0.0
      %1229 = vmatprep.subr.mxu0 0.0
      %1230 = vmatpush1.xpose.msra.mxu0 0.0
      %1231 = vmatprep.subr.mxu0 0.0
      %1232 = vmatpush1.xpose.msra.mxu0 0.0
      %1233 = vmatprep.subr.mxu0 0.0
      %1234 = vmatpush1.xpose.msra.mxu0 0.0
      %1235 = vmatprep.subr.mxu0 0.0
      %1236 = vmatpush1.xpose.msra.mxu0 0.0
      %1237 = vmatprep.subr.mxu0 0.0
      %1238 = vmatpush1.xpose.msra.mxu0 %v1205
      %1239 = vmatprep.subr.mxu0 0.0
      %1240 = vmatpush2.xpose.msra.mxu0 0.0
      %1241 = vmatprep.subr.mxu0 0.0
      %1242 = vmatpush2.xpose.msra.mxu0 0.0
      %1243 = vmatprep.subr.mxu0 0.0
      %1244 = vmatpush2.xpose.msra.mxu0 0.0
      %1245 = vmatprep.subr.mxu0 0.0
      %1246 = vmatpush2.xpose.msra.mxu0 0.0
      %1247 = vmatprep.subr.mxu0 0.0
      %1248 = vmatpush2.xpose.msra.mxu0 0.0
      %1249 = vmatprep.subr.mxu0 0.0
      %1250 = vmatpush2.xpose.msra.mxu0 0.0
      %1251 = vmatprep.subr.mxu0 0.0
      %1252 = vmatpush2.xpose.msra.mxu0 0.0
      %1253 = vmatprep.subr.mxu0 0.0
      %1254 = vmatpush2.xpose.msra.mxu0 0.0
      %1255 = vmatprep.subr.mxu0 0.0
      %1256 = vmatpush2.xpose.msra.mxu0 0.0
      %1257 = vmatprep.subr.mxu0 0.0
      %1258 = vmatpush2.xpose.msra.mxu0 0.0
      %1259 = vmatprep.subr.mxu0 0.0
      %1260 = vmatpush2.xpose.msra.mxu0 0.0
      %1261 = vmatprep.subr.mxu0 0.0
      %1262 = vmatpush2.xpose.msra.mxu0 0.0
      %1263 = vmatprep.subr.mxu0 0.0
      %1264 = vmatpush2.xpose.msra.mxu0 0.0
      %1265 = vmatprep.subr.mxu0 0.0
      %1266 = vmatpush2.xpose.msra.mxu0 0.0
      %1267 = vmatprep.subr.mxu0 0.0
      %1268 = vmatpush2.xpose.msra.mxu0 0.0
      %1269 = vmatprep.subr.mxu0 0.0
      %1270 = vmatpush2.xpose.msra.mxu0 0.0
      %1271 = vmatprep.mubr.f32.mxu0 0.0
      %1272 = vmatmul.mubr.f32.gmra.mxu0 %v1203
      %v1273 = vpop.f32.mrf.mxu0
      %v1274 = vadd.f32 0.0, %v1273
      %v1275 = vpop.f32.mrf.mxu0
      %1276 = vdwg.mxu0
      %1277 = vrot.lane.b32.xlu0 %v898, 120
      %v1278 = vpop.permute.xlu0 %1277
      %v1279 = vsel %vm974, %v898, 0
      %v1281 = vsel %vm974, %v1278, 0
      %1283 = vmatprep.subr.mxu0 0.0
      %1284 = vmatpush1.xpose.msra.mxu0 0.0
      %1285 = vmatprep.subr.mxu0 0.0
      %1286 = vmatpush1.xpose.msra.mxu0 0.0
      %1287 = vmatprep.subr.mxu0 0.0
      %1288 = vmatpush1.xpose.msra.mxu0 0.0
      %1289 = vmatprep.subr.mxu0 0.0
      %1290 = vmatpush1.xpose.msra.mxu0 0.0
      %1291 = vmatprep.subr.mxu0 0.0
      %1292 = vmatpush1.xpose.msra.mxu0 0.0
      %1293 = vmatprep.subr.mxu0 0.0
      %1294 = vmatpush1.xpose.msra.mxu0 0.0
      %1295 = vmatprep.subr.mxu0 0.0
      %1296 = vmatpush1.xpose.msra.mxu0 0.0
      %1297 = vmatprep.subr.mxu0 0.0
      %1298 = vmatpush1.xpose.msra.mxu0 0.0
      %1299 = vmatprep.subr.mxu0 0.0
      %1300 = vmatpush1.xpose.msra.mxu0 0.0
      %1301 = vmatprep.subr.mxu0 0.0
      %1302 = vmatpush1.xpose.msra.mxu0 0.0
      %1303 = vmatprep.subr.mxu0 0.0
      %1304 = vmatpush1.xpose.msra.mxu0 0.0
      %1305 = vmatprep.subr.mxu0 0.0
      %1306 = vmatpush1.xpose.msra.mxu0 0.0
      %1307 = vmatprep.subr.mxu0 0.0
      %1308 = vmatpush1.xpose.msra.mxu0 0.0
      %1309 = vmatprep.subr.mxu0 0.0
      %1310 = vmatpush1.xpose.msra.mxu0 0.0
      %1311 = vmatprep.subr.mxu0 0.0
      %1312 = vmatpush1.xpose.msra.mxu0 0.0
      %1313 = vmatprep.subr.mxu0 0.0
      %1314 = vmatpush1.xpose.msra.mxu0 %v1281
      %1315 = vmatprep.subr.mxu0 0.0
      %1316 = vmatpush2.xpose.msra.mxu0 0.0
      %1317 = vmatprep.subr.mxu0 0.0
      %1318 = vmatpush2.xpose.msra.mxu0 0.0
      %1319 = vmatprep.subr.mxu0 0.0
      %1320 = vmatpush2.xpose.msra.mxu0 0.0
      %1321 = vmatprep.subr.mxu0 0.0
      %1322 = vmatpush2.xpose.msra.mxu0 0.0
      %1323 = vmatprep.subr.mxu0 0.0
      %1324 = vmatpush2.xpose.msra.mxu0 0.0
      %1325 = vmatprep.subr.mxu0 0.0
      %1326 = vmatpush2.xpose.msra.mxu0 0.0
      %1327 = vmatprep.subr.mxu0 0.0
      %1328 = vmatpush2.xpose.msra.mxu0 0.0
      %1329 = vmatprep.subr.mxu0 0.0
      %1330 = vmatpush2.xpose.msra.mxu0 0.0
      %1331 = vmatprep.subr.mxu0 0.0
      %1332 = vmatpush2.xpose.msra.mxu0 0.0
      %1333 = vmatprep.subr.mxu0 0.0
      %1334 = vmatpush2.xpose.msra.mxu0 0.0
      %1335 = vmatprep.subr.mxu0 0.0
      %1336 = vmatpush2.xpose.msra.mxu0 0.0
      %1337 = vmatprep.subr.mxu0 0.0
      %1338 = vmatpush2.xpose.msra.mxu0 0.0
      %1339 = vmatprep.subr.mxu0 0.0
      %1340 = vmatpush2.xpose.msra.mxu0 0.0
      %1341 = vmatprep.subr.mxu0 0.0
      %1342 = vmatpush2.xpose.msra.mxu0 0.0
      %1343 = vmatprep.subr.mxu0 0.0
      %1344 = vmatpush2.xpose.msra.mxu0 0.0
      %1345 = vmatprep.subr.mxu0 0.0
      %1346 = vmatpush2.xpose.msra.mxu0 0.0
      %1347 = vmatprep.mubr.f32.mxu0 0.0
      %1348 = vmatmul.mubr.f32.gmra.mxu0 %v1279
      %v1349 = vpop.f32.mrf.mxu0
      %v1350 = vadd.f32 0.0, %v1349
      %v1351 = vpop.f32.mrf.mxu0
      %1352 = vdwg.mxu0
      %1353 = vrot.lane.b32.xlu0 %v903, 120
      %v1354 = vpop.permute.xlu0 %1353
      %v1355 = vsel %vm974, %v903, 0
      %v1357 = vsel %vm974, %v1354, 0
      %1359 = vmatprep.subr.mxu0 0.0
      %1360 = vmatpush1.xpose.msra.mxu0 0.0
      %1361 = vmatprep.subr.mxu0 0.0
      %1362 = vmatpush1.xpose.msra.mxu0 0.0
      %1363 = vmatprep.subr.mxu0 0.0
      %1364 = vmatpush1.xpose.msra.mxu0 0.0
      %1365 = vmatprep.subr.mxu0 0.0
      %1366 = vmatpush1.xpose.msra.mxu0 0.0
      %1367 = vmatprep.subr.mxu0 0.0
      %1368 = vmatpush1.xpose.msra.mxu0 0.0
      %1369 = vmatprep.subr.mxu0 0.0
      %1370 = vmatpush1.xpose.msra.mxu0 0.0
      %1371 = vmatprep.subr.mxu0 0.0
      %1372 = vmatpush1.xpose.msra.mxu0 0.0
      %1373 = vmatprep.subr.mxu0 0.0
      %1374 = vmatpush1.xpose.msra.mxu0 0.0
      %1375 = vmatprep.subr.mxu0 0.0
      %1376 = vmatpush1.xpose.msra.mxu0 0.0
      %1377 = vmatprep.subr.mxu0 0.0
      %1378 = vmatpush1.xpose.msra.mxu0 0.0
      %1379 = vmatprep.subr.mxu0 0.0
      %1380 = vmatpush1.xpose.msra.mxu0 0.0
      %1381 = vmatprep.subr.mxu0 0.0
      %1382 = vmatpush1.xpose.msra.mxu0 0.0
      %1383 = vmatprep.subr.mxu0 0.0
      %1384 = vmatpush1.xpose.msra.mxu0 0.0
      %1385 = vmatprep.subr.mxu0 0.0
      %1386 = vmatpush1.xpose.msra.mxu0 0.0
      %1387 = vmatprep.subr.mxu0 0.0
      %1388 = vmatpush1.xpose.msra.mxu0 0.0
      %1389 = vmatprep.subr.mxu0 0.0
      %1390 = vmatpush1.xpose.msra.mxu0 %v1357
      %1391 = vmatprep.subr.mxu0 0.0
      %1392 = vmatpush2.xpose.msra.mxu0 0.0
      %1393 = vmatprep.subr.mxu0 0.0
      %1394 = vmatpush2.xpose.msra.mxu0 0.0
      %1395 = vmatprep.subr.mxu0 0.0
      %1396 = vmatpush2.xpose.msra.mxu0 0.0
      %1397 = vmatprep.subr.mxu0 0.0
      %1398 = vmatpush2.xpose.msra.mxu0 0.0
      %1399 = vmatprep.subr.mxu0 0.0
      %1400 = vmatpush2.xpose.msra.mxu0 0.0
      %1401 = vmatprep.subr.mxu0 0.0
      %1402 = vmatpush2.xpose.msra.mxu0 0.0
      %1403 = vmatprep.subr.mxu0 0.0
      %1404 = vmatpush2.xpose.msra.mxu0 0.0
      %1405 = vmatprep.subr.mxu0 0.0
      %1406 = vmatpush2.xpose.msra.mxu0 0.0
      %1407 = vmatprep.subr.mxu0 0.0
      %1408 = vmatpush2.xpose.msra.mxu0 0.0
      %1409 = vmatprep.subr.mxu0 0.0
      %1410 = vmatpush2.xpose.msra.mxu0 0.0
      %1411 = vmatprep.subr.mxu0 0.0
      %1412 = vmatpush2.xpose.msra.mxu0 0.0
      %1413 = vmatprep.subr.mxu0 0.0
      %1414 = vmatpush2.xpose.msra.mxu0 0.0
      %1415 = vmatprep.subr.mxu0 0.0
      %1416 = vmatpush2.xpose.msra.mxu0 0.0
      %1417 = vmatprep.subr.mxu0 0.0
      %1418 = vmatpush2.xpose.msra.mxu0 0.0
      %1419 = vmatprep.subr.mxu0 0.0
      %1420 = vmatpush2.xpose.msra.mxu0 0.0
      %1421 = vmatprep.subr.mxu0 0.0
      %1422 = vmatpush2.xpose.msra.mxu0 0.0
      %1423 = vmatprep.mubr.f32.mxu0 0.0
      %1424 = vmatmul.mubr.f32.gmra.mxu0 %v1355
      %v1425 = vpop.f32.mrf.mxu0
      %v1426 = vadd.f32 0.0, %v1425
      %v1427 = vpop.f32.mrf.mxu0
      %1428 = vdwg.mxu0
      %1429 = vrot.lane.b32.xlu0 %v908, 120
      %v1430 = vpop.permute.xlu0 %1429
      %v1431 = vsel %vm974, %v908, 0
      %v1433 = vsel %vm974, %v1430, 0
      %1435 = vmatprep.subr.mxu0 0.0
      %1436 = vmatpush1.xpose.msra.mxu0 0.0
      %1437 = vmatprep.subr.mxu0 0.0
      %1438 = vmatpush1.xpose.msra.mxu0 0.0
      %1439 = vmatprep.subr.mxu0 0.0
      %1440 = vmatpush1.xpose.msra.mxu0 0.0
      %1441 = vmatprep.subr.mxu0 0.0
      %1442 = vmatpush1.xpose.msra.mxu0 0.0
      %1443 = vmatprep.subr.mxu0 0.0
      %1444 = vmatpush1.xpose.msra.mxu0 0.0
      %1445 = vmatprep.subr.mxu0 0.0
      %1446 = vmatpush1.xpose.msra.mxu0 0.0
      %1447 = vmatprep.subr.mxu0 0.0
      %1448 = vmatpush1.xpose.msra.mxu0 0.0
      %1449 = vmatprep.subr.mxu0 0.0
      %1450 = vmatpush1.xpose.msra.mxu0 0.0
      %1451 = vmatprep.subr.mxu0 0.0
      %1452 = vmatpush1.xpose.msra.mxu0 0.0
      %1453 = vmatprep.subr.mxu0 0.0
      %1454 = vmatpush1.xpose.msra.mxu0 0.0
      %1455 = vmatprep.subr.mxu0 0.0
      %1456 = vmatpush1.xpose.msra.mxu0 0.0
      %1457 = vmatprep.subr.mxu0 0.0
      %1458 = vmatpush1.xpose.msra.mxu0 0.0
      %1459 = vmatprep.subr.mxu0 0.0
      %1460 = vmatpush1.xpose.msra.mxu0 0.0
      %1461 = vmatprep.subr.mxu0 0.0
      %1462 = vmatpush1.xpose.msra.mxu0 0.0
      %1463 = vmatprep.subr.mxu0 0.0
      %1464 = vmatpush1.xpose.msra.mxu0 0.0
      %1465 = vmatprep.subr.mxu0 0.0
      %1466 = vmatpush1.xpose.msra.mxu0 %v1433
      %1467 = vmatprep.subr.mxu0 0.0
      %1468 = vmatpush2.xpose.msra.mxu0 0.0
      %1469 = vmatprep.subr.mxu0 0.0
      %1470 = vmatpush2.xpose.msra.mxu0 0.0
      %1471 = vmatprep.subr.mxu0 0.0
      %1472 = vmatpush2.xpose.msra.mxu0 0.0
      %1473 = vmatprep.subr.mxu0 0.0
      %1474 = vmatpush2.xpose.msra.mxu0 0.0
      %1475 = vmatprep.subr.mxu0 0.0
      %1476 = vmatpush2.xpose.msra.mxu0 0.0
      %1477 = vmatprep.subr.mxu0 0.0
      %1478 = vmatpush2.xpose.msra.mxu0 0.0
      %1479 = vmatprep.subr.mxu0 0.0
      %1480 = vmatpush2.xpose.msra.mxu0 0.0
      %1481 = vmatprep.subr.mxu0 0.0
      %1482 = vmatpush2.xpose.msra.mxu0 0.0
      %1483 = vmatprep.subr.mxu0 0.0
      %1484 = vmatpush2.xpose.msra.mxu0 0.0
      %1485 = vmatprep.subr.mxu0 0.0
      %1486 = vmatpush2.xpose.msra.mxu0 0.0
      %1487 = vmatprep.subr.mxu0 0.0
      %1488 = vmatpush2.xpose.msra.mxu0 0.0
      %1489 = vmatprep.subr.mxu0 0.0
      %1490 = vmatpush2.xpose.msra.mxu0 0.0
      %1491 = vmatprep.subr.mxu0 0.0
      %1492 = vmatpush2.xpose.msra.mxu0 0.0
      %1493 = vmatprep.subr.mxu0 0.0
      %1494 = vmatpush2.xpose.msra.mxu0 0.0
      %1495 = vmatprep.subr.mxu0 0.0
      %1496 = vmatpush2.xpose.msra.mxu0 0.0
      %1497 = vmatprep.subr.mxu0 0.0
      %1498 = vmatpush2.xpose.msra.mxu0 0.0
      %1499 = vmatprep.mubr.f32.mxu0 0.0
      %1500 = vmatmul.mubr.f32.gmra.mxu0 %v1431
      %v1501 = vpop.f32.mrf.mxu0
      %v1502 = vadd.f32 0.0, %v1501
      %v1503 = vpop.f32.mrf.mxu0
      %1504 = vdwg.mxu0
      %1505 = vrot.lane.b32.xlu0 %v913, 120
      %v1506 = vpop.permute.xlu0 %1505
      %v1507 = vsel %vm974, %v913, 0
      %v1509 = vsel %vm974, %v1506, 0
      %1511 = vmatprep.subr.mxu0 0.0
      %1512 = vmatpush1.xpose.msra.mxu0 0.0
      %1513 = vmatprep.subr.mxu0 0.0
      %1514 = vmatpush1.xpose.msra.mxu0 0.0
      %1515 = vmatprep.subr.mxu0 0.0
      %1516 = vmatpush1.xpose.msra.mxu0 0.0
      %1517 = vmatprep.subr.mxu0 0.0
      %1518 = vmatpush1.xpose.msra.mxu0 0.0
      %1519 = vmatprep.subr.mxu0 0.0
      %1520 = vmatpush1.xpose.msra.mxu0 0.0
      %1521 = vmatprep.subr.mxu0 0.0
      %1522 = vmatpush1.xpose.msra.mxu0 0.0
      %1523 = vmatprep.subr.mxu0 0.0
      %1524 = vmatpush1.xpose.msra.mxu0 0.0
      %1525 = vmatprep.subr.mxu0 0.0
      %1526 = vmatpush1.xpose.msra.mxu0 0.0
      %1527 = vmatprep.subr.mxu0 0.0
      %1528 = vmatpush1.xpose.msra.mxu0 0.0
      %1529 = vmatprep.subr.mxu0 0.0
      %1530 = vmatpush1.xpose.msra.mxu0 0.0
      %1531 = vmatprep.subr.mxu0 0.0
      %1532 = vmatpush1.xpose.msra.mxu0 0.0
      %1533 = vmatprep.subr.mxu0 0.0
      %1534 = vmatpush1.xpose.msra.mxu0 0.0
      %1535 = vmatprep.subr.mxu0 0.0
      %1536 = vmatpush1.xpose.msra.mxu0 0.0
      %1537 = vmatprep.subr.mxu0 0.0
      %1538 = vmatpush1.xpose.msra.mxu0 0.0
      %1539 = vmatprep.subr.mxu0 0.0
      %1540 = vmatpush1.xpose.msra.mxu0 0.0
      %1541 = vmatprep.subr.mxu0 0.0
      %1542 = vmatpush1.xpose.msra.mxu0 %v1509
      %1543 = vmatprep.subr.mxu0 0.0
      %1544 = vmatpush2.xpose.msra.mxu0 0.0
      %1545 = vmatprep.subr.mxu0 0.0
      %1546 = vmatpush2.xpose.msra.mxu0 0.0
      %1547 = vmatprep.subr.mxu0 0.0
      %1548 = vmatpush2.xpose.msra.mxu0 0.0
      %1549 = vmatprep.subr.mxu0 0.0
      %1550 = vmatpush2.xpose.msra.mxu0 0.0
      %1551 = vmatprep.subr.mxu0 0.0
      %1552 = vmatpush2.xpose.msra.mxu0 0.0
      %1553 = vmatprep.subr.mxu0 0.0
      %1554 = vmatpush2.xpose.msra.mxu0 0.0
      %1555 = vmatprep.subr.mxu0 0.0
      %1556 = vmatpush2.xpose.msra.mxu0 0.0
      %1557 = vmatprep.subr.mxu0 0.0
      %1558 = vmatpush2.xpose.msra.mxu0 0.0
      %1559 = vmatprep.subr.mxu0 0.0
      %1560 = vmatpush2.xpose.msra.mxu0 0.0
      %1561 = vmatprep.subr.mxu0 0.0
      %1562 = vmatpush2.xpose.msra.mxu0 0.0
      %1563 = vmatprep.subr.mxu0 0.0
      %1564 = vmatpush2.xpose.msra.mxu0 0.0
      %1565 = vmatprep.subr.mxu0 0.0
      %1566 = vmatpush2.xpose.msra.mxu0 0.0
      %1567 = vmatprep.subr.mxu0 0.0
      %1568 = vmatpush2.xpose.msra.mxu0 0.0
      %1569 = vmatprep.subr.mxu0 0.0
      %1570 = vmatpush2.xpose.msra.mxu0 0.0
      %1571 = vmatprep.subr.mxu0 0.0
      %1572 = vmatpush2.xpose.msra.mxu0 0.0
      %1573 = vmatprep.subr.mxu0 0.0
      %1574 = vmatpush2.xpose.msra.mxu0 0.0
      %1575 = vmatprep.mubr.f32.mxu0 0.0
      %1576 = vmatmul.mubr.f32.gmra.mxu0 %v1507
      %v1577 = vpop.f32.mrf.mxu0
      %v1578 = vadd.f32 0.0, %v1577
      %v1579 = vpop.f32.mrf.mxu0
      %1580 = vdwg.mxu0
      %1581 = vrot.lane.b32.xlu0 %v925, 120
      %v1582 = vpop.permute.xlu0 %1581
      %v1583 = vsel %vm974, %v925, 0
      %v1585 = vsel %vm974, %v1582, 0
      %1587 = vmatprep.subr.mxu0 0.0
      %1588 = vmatpush1.xpose.msra.mxu0 0.0
      %1589 = vmatprep.subr.mxu0 0.0
      %1590 = vmatpush1.xpose.msra.mxu0 0.0
      %1591 = vmatprep.subr.mxu0 0.0
      %1592 = vmatpush1.xpose.msra.mxu0 0.0
      %1593 = vmatprep.subr.mxu0 0.0
      %1594 = vmatpush1.xpose.msra.mxu0 0.0
      %1595 = vmatprep.subr.mxu0 0.0
      %1596 = vmatpush1.xpose.msra.mxu0 0.0
      %1597 = vmatprep.subr.mxu0 0.0
      %1598 = vmatpush1.xpose.msra.mxu0 0.0
      %1599 = vmatprep.subr.mxu0 0.0
      %1600 = vmatpush1.xpose.msra.mxu0 0.0
      %1601 = vmatprep.subr.mxu0 0.0
      %1602 = vmatpush1.xpose.msra.mxu0 0.0
      %1603 = vmatprep.subr.mxu0 0.0
      %1604 = vmatpush1.xpose.msra.mxu0 0.0
      %1605 = vmatprep.subr.mxu0 0.0
      %1606 = vmatpush1.xpose.msra.mxu0 0.0
      %1607 = vmatprep.subr.mxu0 0.0
      %1608 = vmatpush1.xpose.msra.mxu0 0.0
      %1609 = vmatprep.subr.mxu0 0.0
      %1610 = vmatpush1.xpose.msra.mxu0 0.0
      %1611 = vmatprep.subr.mxu0 0.0
      %1612 = vmatpush1.xpose.msra.mxu0 0.0
      %1613 = vmatprep.subr.mxu0 0.0
      %1614 = vmatpush1.xpose.msra.mxu0 0.0
      %1615 = vmatprep.subr.mxu0 0.0
      %1616 = vmatpush1.xpose.msra.mxu0 0.0
      %1617 = vmatprep.subr.mxu0 0.0
      %1618 = vmatpush1.xpose.msra.mxu0 %v1585
      %1619 = vmatprep.subr.mxu0 0.0
      %1620 = vmatpush2.xpose.msra.mxu0 0.0
      %1621 = vmatprep.subr.mxu0 0.0
      %1622 = vmatpush2.xpose.msra.mxu0 0.0
      %1623 = vmatprep.subr.mxu0 0.0
      %1624 = vmatpush2.xpose.msra.mxu0 0.0
      %1625 = vmatprep.subr.mxu0 0.0
      %1626 = vmatpush2.xpose.msra.mxu0 0.0
      %1627 = vmatprep.subr.mxu0 0.0
      %1628 = vmatpush2.xpose.msra.mxu0 0.0
      %1629 = vmatprep.subr.mxu0 0.0
      %1630 = vmatpush2.xpose.msra.mxu0 0.0
      %1631 = vmatprep.subr.mxu0 0.0
      %1632 = vmatpush2.xpose.msra.mxu0 0.0
      %1633 = vmatprep.subr.mxu0 0.0
      %1634 = vmatpush2.xpose.msra.mxu0 0.0
      %1635 = vmatprep.subr.mxu0 0.0
      %1636 = vmatpush2.xpose.msra.mxu0 0.0
      %1637 = vmatprep.subr.mxu0 0.0
      %1638 = vmatpush2.xpose.msra.mxu0 0.0
      %1639 = vmatprep.subr.mxu0 0.0
      %1640 = vmatpush2.xpose.msra.mxu0 0.0
      %1641 = vmatprep.subr.mxu0 0.0
      %1642 = vmatpush2.xpose.msra.mxu0 0.0
      %1643 = vmatprep.subr.mxu0 0.0
      %1644 = vmatpush2.xpose.msra.mxu0 0.0
      %1645 = vmatprep.subr.mxu0 0.0
      %1646 = vmatpush2.xpose.msra.mxu0 0.0
      %1647 = vmatprep.subr.mxu0 0.0
      %1648 = vmatpush2.xpose.msra.mxu0 0.0
      %1649 = vmatprep.subr.mxu0 0.0
      %1650 = vmatpush2.xpose.msra.mxu0 0.0
      %1651 = vmatprep.mubr.f32.mxu0 0.0
      %1652 = vmatmul.mubr.f32.gmra.mxu0 %v1583
      %v1653 = vpop.f32.mrf.mxu0
      %v1654 = vadd.f32 0.0, %v1653
      %v1655 = vpop.f32.mrf.mxu0
      %1656 = vdwg.mxu0
      %1657 = vrot.lane.b32.xlu0 %v927, 120
      %v1658 = vpop.permute.xlu0 %1657
      %v1659 = vsel %vm974, %v927, 0
      %v1661 = vsel %vm974, %v1658, 0
      %1663 = vmatprep.subr.mxu0 0.0
      %1664 = vmatpush1.xpose.msra.mxu0 0.0
      %1665 = vmatprep.subr.mxu0 0.0
      %1666 = vmatpush1.xpose.msra.mxu0 0.0
      %1667 = vmatprep.subr.mxu0 0.0
      %1668 = vmatpush1.xpose.msra.mxu0 0.0
      %1669 = vmatprep.subr.mxu0 0.0
      %1670 = vmatpush1.xpose.msra.mxu0 0.0
      %1671 = vmatprep.subr.mxu0 0.0
      %1672 = vmatpush1.xpose.msra.mxu0 0.0
      %1673 = vmatprep.subr.mxu0 0.0
      %1674 = vmatpush1.xpose.msra.mxu0 0.0
      %1675 = vmatprep.subr.mxu0 0.0
      %1676 = vmatpush1.xpose.msra.mxu0 0.0
      %1677 = vmatprep.subr.mxu0 0.0
      %1678 = vmatpush1.xpose.msra.mxu0 0.0
      %1679 = vmatprep.subr.mxu0 0.0
      %1680 = vmatpush1.xpose.msra.mxu0 0.0
      %1681 = vmatprep.subr.mxu0 0.0
      %1682 = vmatpush1.xpose.msra.mxu0 0.0
      %1683 = vmatprep.subr.mxu0 0.0
      %1684 = vmatpush1.xpose.msra.mxu0 0.0
      %1685 = vmatprep.subr.mxu0 0.0
      %1686 = vmatpush1.xpose.msra.mxu0 0.0
      %1687 = vmatprep.subr.mxu0 0.0
      %1688 = vmatpush1.xpose.msra.mxu0 0.0
      %1689 = vmatprep.subr.mxu0 0.0
      %1690 = vmatpush1.xpose.msra.mxu0 0.0
      %1691 = vmatprep.subr.mxu0 0.0
      %1692 = vmatpush1.xpose.msra.mxu0 0.0
      %1693 = vmatprep.subr.mxu0 0.0
      %1694 = vmatpush1.xpose.msra.mxu0 %v1661
      %1695 = vmatprep.subr.mxu0 0.0
      %1696 = vmatpush2.xpose.msra.mxu0 0.0
      %1697 = vmatprep.subr.mxu0 0.0
      %1698 = vmatpush2.xpose.msra.mxu0 0.0
      %1699 = vmatprep.subr.mxu0 0.0
      %1700 = vmatpush2.xpose.msra.mxu0 0.0
      %1701 = vmatprep.subr.mxu0 0.0
      %1702 = vmatpush2.xpose.msra.mxu0 0.0
      %1703 = vmatprep.subr.mxu0 0.0
      %1704 = vmatpush2.xpose.msra.mxu0 0.0
      %1705 = vmatprep.subr.mxu0 0.0
      %1706 = vmatpush2.xpose.msra.mxu0 0.0
      %1707 = vmatprep.subr.mxu0 0.0
      %1708 = vmatpush2.xpose.msra.mxu0 0.0
      %1709 = vmatprep.subr.mxu0 0.0
      %1710 = vmatpush2.xpose.msra.mxu0 0.0
      %1711 = vmatprep.subr.mxu0 0.0
      %1712 = vmatpush2.xpose.msra.mxu0 0.0
      %1713 = vmatprep.subr.mxu0 0.0
      %1714 = vmatpush2.xpose.msra.mxu0 0.0
      %1715 = vmatprep.subr.mxu0 0.0
      %1716 = vmatpush2.xpose.msra.mxu0 0.0
      %1717 = vmatprep.subr.mxu0 0.0
      %1718 = vmatpush2.xpose.msra.mxu0 0.0
      %1719 = vmatprep.subr.mxu0 0.0
      %1720 = vmatpush2.xpose.msra.mxu0 0.0
      %1721 = vmatprep.subr.mxu0 0.0
      %1722 = vmatpush2.xpose.msra.mxu0 0.0
      %1723 = vmatprep.subr.mxu0 0.0
      %1724 = vmatpush2.xpose.msra.mxu0 0.0
      %1725 = vmatprep.subr.mxu0 0.0
      %1726 = vmatpush2.xpose.msra.mxu0 0.0
      %1727 = vmatprep.mubr.f32.mxu0 0.0
      %1728 = vmatmul.mubr.f32.gmra.mxu0 %v1659
      %v1729 = vpop.f32.mrf.mxu0
      %v1730 = vadd.f32 0.0, %v1729
      %v1731 = vpop.f32.mrf.mxu0
      %1732 = vdwg.mxu0
      %1733 = vrot.lane.b32.xlu0 %v929, 120
      %v1734 = vpop.permute.xlu0 %1733
      %v1735 = vsel %vm974, %v929, 0
      %v1737 = vsel %vm974, %v1734, 0
      %1739 = vmatprep.subr.mxu0 0.0
      %1740 = vmatpush1.xpose.msra.mxu0 0.0
      %1741 = vmatprep.subr.mxu0 0.0
      %1742 = vmatpush1.xpose.msra.mxu0 0.0
      %1743 = vmatprep.subr.mxu0 0.0
      %1744 = vmatpush1.xpose.msra.mxu0 0.0
      %1745 = vmatprep.subr.mxu0 0.0
      %1746 = vmatpush1.xpose.msra.mxu0 0.0
      %1747 = vmatprep.subr.mxu0 0.0
      %1748 = vmatpush1.xpose.msra.mxu0 0.0
      %1749 = vmatprep.subr.mxu0 0.0
      %1750 = vmatpush1.xpose.msra.mxu0 0.0
      %1751 = vmatprep.subr.mxu0 0.0
      %1752 = vmatpush1.xpose.msra.mxu0 0.0
      %1753 = vmatprep.subr.mxu0 0.0
      %1754 = vmatpush1.xpose.msra.mxu0 0.0
      %1755 = vmatprep.subr.mxu0 0.0
      %1756 = vmatpush1.xpose.msra.mxu0 0.0
      %1757 = vmatprep.subr.mxu0 0.0
      %1758 = vmatpush1.xpose.msra.mxu0 0.0
      %1759 = vmatprep.subr.mxu0 0.0
      %1760 = vmatpush1.xpose.msra.mxu0 0.0
      %1761 = vmatprep.subr.mxu0 0.0
      %1762 = vmatpush1.xpose.msra.mxu0 0.0
      %1763 = vmatprep.subr.mxu0 0.0
      %1764 = vmatpush1.xpose.msra.mxu0 0.0
      %1765 = vmatprep.subr.mxu0 0.0
      %1766 = vmatpush1.xpose.msra.mxu0 0.0
      %1767 = vmatprep.subr.mxu0 0.0
      %1768 = vmatpush1.xpose.msra.mxu0 0.0
      %1769 = vmatprep.subr.mxu0 0.0
      %1770 = vmatpush1.xpose.msra.mxu0 %v1737
      %1771 = vmatprep.subr.mxu0 0.0
      %1772 = vmatpush2.xpose.msra.mxu0 0.0
      %1773 = vmatprep.subr.mxu0 0.0
      %1774 = vmatpush2.xpose.msra.mxu0 0.0
      %1775 = vmatprep.subr.mxu0 0.0
      %1776 = vmatpush2.xpose.msra.mxu0 0.0
      %1777 = vmatprep.subr.mxu0 0.0
      %1778 = vmatpush2.xpose.msra.mxu0 0.0
      %1779 = vmatprep.subr.mxu0 0.0
      %1780 = vmatpush2.xpose.msra.mxu0 0.0
      %1781 = vmatprep.subr.mxu0 0.0
      %1782 = vmatpush2.xpose.msra.mxu0 0.0
      %1783 = vmatprep.subr.mxu0 0.0
      %1784 = vmatpush2.xpose.msra.mxu0 0.0
      %1785 = vmatprep.subr.mxu0 0.0
      %1786 = vmatpush2.xpose.msra.mxu0 0.0
      %1787 = vmatprep.subr.mxu0 0.0
      %1788 = vmatpush2.xpose.msra.mxu0 0.0
      %1789 = vmatprep.subr.mxu0 0.0
      %1790 = vmatpush2.xpose.msra.mxu0 0.0
      %1791 = vmatprep.subr.mxu0 0.0
      %1792 = vmatpush2.xpose.msra.mxu0 0.0
      %1793 = vmatprep.subr.mxu0 0.0
      %1794 = vmatpush2.xpose.msra.mxu0 0.0
      %1795 = vmatprep.subr.mxu0 0.0
      %1796 = vmatpush2.xpose.msra.mxu0 0.0
      %1797 = vmatprep.subr.mxu0 0.0
      %1798 = vmatpush2.xpose.msra.mxu0 0.0
      %1799 = vmatprep.subr.mxu0 0.0
      %1800 = vmatpush2.xpose.msra.mxu0 0.0
      %1801 = vmatprep.subr.mxu0 0.0
      %1802 = vmatpush2.xpose.msra.mxu0 0.0
      %1803 = vmatprep.mubr.f32.mxu0 0.0
      %1804 = vmatmul.mubr.f32.gmra.mxu0 %v1735
      %v1805 = vpop.f32.mrf.mxu0
      %v1806 = vadd.f32 0.0, %v1805
      %v1807 = vpop.f32.mrf.mxu0
      %1808 = vdwg.mxu0
      %1809 = vrot.lane.b32.xlu0 %v931, 120
      %v1810 = vpop.permute.xlu0 %1809
      %v1811 = vsel %vm974, %v931, 0
      %v1813 = vsel %vm974, %v1810, 0
      %1815 = vmatprep.subr.mxu0 0.0
      %1816 = vmatpush1.xpose.msra.mxu0 0.0
      %1817 = vmatprep.subr.mxu0 0.0
      %1818 = vmatpush1.xpose.msra.mxu0 0.0
      %1819 = vmatprep.subr.mxu0 0.0
      %1820 = vmatpush1.xpose.msra.mxu0 0.0
      %1821 = vmatprep.subr.mxu0 0.0
      %1822 = vmatpush1.xpose.msra.mxu0 0.0
      %1823 = vmatprep.subr.mxu0 0.0
      %1824 = vmatpush1.xpose.msra.mxu0 0.0
      %1825 = vmatprep.subr.mxu0 0.0
      %1826 = vmatpush1.xpose.msra.mxu0 0.0
      %1827 = vmatprep.subr.mxu0 0.0
      %1828 = vmatpush1.xpose.msra.mxu0 0.0
      %1829 = vmatprep.subr.mxu0 0.0
      %1830 = vmatpush1.xpose.msra.mxu0 0.0
      %1831 = vmatprep.subr.mxu0 0.0
      %1832 = vmatpush1.xpose.msra.mxu0 0.0
      %1833 = vmatprep.subr.mxu0 0.0
      %1834 = vmatpush1.xpose.msra.mxu0 0.0
      %1835 = vmatprep.subr.mxu0 0.0
      %1836 = vmatpush1.xpose.msra.mxu0 0.0
      %1837 = vmatprep.subr.mxu0 0.0
      %1838 = vmatpush1.xpose.msra.mxu0 0.0
      %1839 = vmatprep.subr.mxu0 0.0
      %1840 = vmatpush1.xpose.msra.mxu0 0.0
      %1841 = vmatprep.subr.mxu0 0.0
      %1842 = vmatpush1.xpose.msra.mxu0 0.0
      %1843 = vmatprep.subr.mxu0 0.0
      %1844 = vmatpush1.xpose.msra.mxu0 0.0
      %1845 = vmatprep.subr.mxu0 0.0
      %1846 = vmatpush1.xpose.msra.mxu0 %v1813
      %1847 = vmatprep.subr.mxu0 0.0
      %1848 = vmatpush2.xpose.msra.mxu0 0.0
      %1849 = vmatprep.subr.mxu0 0.0
      %1850 = vmatpush2.xpose.msra.mxu0 0.0
      %1851 = vmatprep.subr.mxu0 0.0
      %1852 = vmatpush2.xpose.msra.mxu0 0.0
      %1853 = vmatprep.subr.mxu0 0.0
      %1854 = vmatpush2.xpose.msra.mxu0 0.0
      %1855 = vmatprep.subr.mxu0 0.0
      %1856 = vmatpush2.xpose.msra.mxu0 0.0
      %1857 = vmatprep.subr.mxu0 0.0
      %1858 = vmatpush2.xpose.msra.mxu0 0.0
      %1859 = vmatprep.subr.mxu0 0.0
      %1860 = vmatpush2.xpose.msra.mxu0 0.0
      %1861 = vmatprep.subr.mxu0 0.0
      %1862 = vmatpush2.xpose.msra.mxu0 0.0
      %1863 = vmatprep.subr.mxu0 0.0
      %1864 = vmatpush2.xpose.msra.mxu0 0.0
      %1865 = vmatprep.subr.mxu0 0.0
      %1866 = vmatpush2.xpose.msra.mxu0 0.0
      %1867 = vmatprep.subr.mxu0 0.0
      %1868 = vmatpush2.xpose.msra.mxu0 0.0
      %1869 = vmatprep.subr.mxu0 0.0
      %1870 = vmatpush2.xpose.msra.mxu0 0.0
      %1871 = vmatprep.subr.mxu0 0.0
      %1872 = vmatpush2.xpose.msra.mxu0 0.0
      %1873 = vmatprep.subr.mxu0 0.0
      %1874 = vmatpush2.xpose.msra.mxu0 0.0
      %1875 = vmatprep.subr.mxu0 0.0
      %1876 = vmatpush2.xpose.msra.mxu0 0.0
      %1877 = vmatprep.subr.mxu0 0.0
      %1878 = vmatpush2.xpose.msra.mxu0 0.0
      %1879 = vmatprep.mubr.f32.mxu0 0.0
      %1880 = vmatmul.mubr.f32.gmra.mxu0 %v1811
      %v1881 = vpop.f32.mrf.mxu0
      %v1882 = vadd.f32 0.0, %v1881
      %v1883 = vpop.f32.mrf.mxu0
      %1884 = vdwg.mxu0
      %1885 = vrot.lane.b32.xlu0 %v933, 120
      %v1886 = vpop.permute.xlu0 %1885
      %v1887 = vsel %vm974, %v933, 0
      %v1889 = vsel %vm974, %v1886, 0
      %1891 = vmatprep.subr.mxu0 0.0
      %1892 = vmatpush1.xpose.msra.mxu0 0.0
      %1893 = vmatprep.subr.mxu0 0.0
      %1894 = vmatpush1.xpose.msra.mxu0 0.0
      %1895 = vmatprep.subr.mxu0 0.0
      %1896 = vmatpush1.xpose.msra.mxu0 0.0
      %1897 = vmatprep.subr.mxu0 0.0
      %1898 = vmatpush1.xpose.msra.mxu0 0.0
      %1899 = vmatprep.subr.mxu0 0.0
      %1900 = vmatpush1.xpose.msra.mxu0 0.0
      %1901 = vmatprep.subr.mxu0 0.0
      %1902 = vmatpush1.xpose.msra.mxu0 0.0
      %1903 = vmatprep.subr.mxu0 0.0
      %1904 = vmatpush1.xpose.msra.mxu0 0.0
      %1905 = vmatprep.subr.mxu0 0.0
      %1906 = vmatpush1.xpose.msra.mxu0 0.0
      %1907 = vmatprep.subr.mxu0 0.0
      %1908 = vmatpush1.xpose.msra.mxu0 0.0
      %1909 = vmatprep.subr.mxu0 0.0
      %1910 = vmatpush1.xpose.msra.mxu0 0.0
      %1911 = vmatprep.subr.mxu0 0.0
      %1912 = vmatpush1.xpose.msra.mxu0 0.0
      %1913 = vmatprep.subr.mxu0 0.0
      %1914 = vmatpush1.xpose.msra.mxu0 0.0
      %1915 = vmatprep.subr.mxu0 0.0
      %1916 = vmatpush1.xpose.msra.mxu0 0.0
      %1917 = vmatprep.subr.mxu0 0.0
      %1918 = vmatpush1.xpose.msra.mxu0 0.0
      %1919 = vmatprep.subr.mxu0 0.0
      %1920 = vmatpush1.xpose.msra.mxu0 0.0
      %1921 = vmatprep.subr.mxu0 0.0
      %1922 = vmatpush1.xpose.msra.mxu0 %v1889
      %1923 = vmatprep.subr.mxu0 0.0
      %1924 = vmatpush2.xpose.msra.mxu0 0.0
      %1925 = vmatprep.subr.mxu0 0.0
      %1926 = vmatpush2.xpose.msra.mxu0 0.0
      %1927 = vmatprep.subr.mxu0 0.0
      %1928 = vmatpush2.xpose.msra.mxu0 0.0
      %1929 = vmatprep.subr.mxu0 0.0
      %1930 = vmatpush2.xpose.msra.mxu0 0.0
      %1931 = vmatprep.subr.mxu0 0.0
      %1932 = vmatpush2.xpose.msra.mxu0 0.0
      %1933 = vmatprep.subr.mxu0 0.0
      %1934 = vmatpush2.xpose.msra.mxu0 0.0
      %1935 = vmatprep.subr.mxu0 0.0
      %1936 = vmatpush2.xpose.msra.mxu0 0.0
      %1937 = vmatprep.subr.mxu0 0.0
      %1938 = vmatpush2.xpose.msra.mxu0 0.0
      %1939 = vmatprep.subr.mxu0 0.0
      %1940 = vmatpush2.xpose.msra.mxu0 0.0
      %1941 = vmatprep.subr.mxu0 0.0
      %1942 = vmatpush2.xpose.msra.mxu0 0.0
      %1943 = vmatprep.subr.mxu0 0.0
      %1944 = vmatpush2.xpose.msra.mxu0 0.0
      %1945 = vmatprep.subr.mxu0 0.0
      %1946 = vmatpush2.xpose.msra.mxu0 0.0
      %1947 = vmatprep.subr.mxu0 0.0
      %1948 = vmatpush2.xpose.msra.mxu0 0.0
      %1949 = vmatprep.subr.mxu0 0.0
      %1950 = vmatpush2.xpose.msra.mxu0 0.0
      %1951 = vmatprep.subr.mxu0 0.0
      %1952 = vmatpush2.xpose.msra.mxu0 0.0
      %1953 = vmatprep.subr.mxu0 0.0
      %1954 = vmatpush2.xpose.msra.mxu0 0.0
      %1955 = vmatprep.mubr.f32.mxu0 0.0
      %1956 = vmatmul.mubr.f32.gmra.mxu0 %v1887
      %v1957 = vpop.f32.mrf.mxu0
      %v1958 = vadd.f32 0.0, %v1957
      %v1959 = vpop.f32.mrf.mxu0
      %1960 = vdwg.mxu0
      %1961 = vrot.lane.b32.xlu0 %v935, 120
      %v1962 = vpop.permute.xlu0 %1961
      %v1963 = vsel %vm974, %v935, 0
      %v1965 = vsel %vm974, %v1962, 0
      %1967 = vmatprep.subr.mxu0 0.0
      %1968 = vmatpush1.xpose.msra.mxu0 0.0
      %1969 = vmatprep.subr.mxu0 0.0
      %1970 = vmatpush1.xpose.msra.mxu0 0.0
      %1971 = vmatprep.subr.mxu0 0.0
      %1972 = vmatpush1.xpose.msra.mxu0 0.0
      %1973 = vmatprep.subr.mxu0 0.0
      %1974 = vmatpush1.xpose.msra.mxu0 0.0
      %1975 = vmatprep.subr.mxu0 0.0
      %1976 = vmatpush1.xpose.msra.mxu0 0.0
      %1977 = vmatprep.subr.mxu0 0.0
      %1978 = vmatpush1.xpose.msra.mxu0 0.0
      %1979 = vmatprep.subr.mxu0 0.0
      %1980 = vmatpush1.xpose.msra.mxu0 0.0
      %1981 = vmatprep.subr.mxu0 0.0
      %1982 = vmatpush1.xpose.msra.mxu0 0.0
      %1983 = vmatprep.subr.mxu0 0.0
      %1984 = vmatpush1.xpose.msra.mxu0 0.0
      %1985 = vmatprep.subr.mxu0 0.0
      %1986 = vmatpush1.xpose.msra.mxu0 0.0
      %1987 = vmatprep.subr.mxu0 0.0
      %1988 = vmatpush1.xpose.msra.mxu0 0.0
      %1989 = vmatprep.subr.mxu0 0.0
      %1990 = vmatpush1.xpose.msra.mxu0 0.0
      %1991 = vmatprep.subr.mxu0 0.0
      %1992 = vmatpush1.xpose.msra.mxu0 0.0
      %1993 = vmatprep.subr.mxu0 0.0
      %1994 = vmatpush1.xpose.msra.mxu0 0.0
      %1995 = vmatprep.subr.mxu0 0.0
      %1996 = vmatpush1.xpose.msra.mxu0 0.0
      %1997 = vmatprep.subr.mxu0 0.0
      %1998 = vmatpush1.xpose.msra.mxu0 %v1965
      %1999 = vmatprep.subr.mxu0 0.0
      %2000 = vmatpush2.xpose.msra.mxu0 0.0
      %2001 = vmatprep.subr.mxu0 0.0
      %2002 = vmatpush2.xpose.msra.mxu0 0.0
      %2003 = vmatprep.subr.mxu0 0.0
      %2004 = vmatpush2.xpose.msra.mxu0 0.0
      %2005 = vmatprep.subr.mxu0 0.0
      %2006 = vmatpush2.xpose.msra.mxu0 0.0
      %2007 = vmatprep.subr.mxu0 0.0
      %2008 = vmatpush2.xpose.msra.mxu0 0.0
      %2009 = vmatprep.subr.mxu0 0.0
      %2010 = vmatpush2.xpose.msra.mxu0 0.0
      %2011 = vmatprep.subr.mxu0 0.0
      %2012 = vmatpush2.xpose.msra.mxu0 0.0
      %2013 = vmatprep.subr.mxu0 0.0
      %2014 = vmatpush2.xpose.msra.mxu0 0.0
      %2015 = vmatprep.subr.mxu0 0.0
      %2016 = vmatpush2.xpose.msra.mxu0 0.0
      %2017 = vmatprep.subr.mxu0 0.0
      %2018 = vmatpush2.xpose.msra.mxu0 0.0
      %2019 = vmatprep.subr.mxu0 0.0
      %2020 = vmatpush2.xpose.msra.mxu0 0.0
      %2021 = vmatprep.subr.mxu0 0.0
      %2022 = vmatpush2.xpose.msra.mxu0 0.0
      %2023 = vmatprep.subr.mxu0 0.0
      %2024 = vmatpush2.xpose.msra.mxu0 0.0
      %2025 = vmatprep.subr.mxu0 0.0
      %2026 = vmatpush2.xpose.msra.mxu0 0.0
      %2027 = vmatprep.subr.mxu0 0.0
      %2028 = vmatpush2.xpose.msra.mxu0 0.0
      %2029 = vmatprep.subr.mxu0 0.0
      %2030 = vmatpush2.xpose.msra.mxu0 0.0
      %2031 = vmatprep.mubr.f32.mxu0 0.0
      %2032 = vmatmul.mubr.f32.gmra.mxu0 %v1963
      %v2033 = vpop.f32.mrf.mxu0
      %v2034 = vadd.f32 0.0, %v2033
      %v2035 = vpop.f32.mrf.mxu0
      %2036 = vdwg.mxu0
      %2037 = vrot.lane.b32.xlu0 %v937, 120
      %v2038 = vpop.permute.xlu0 %2037
      %v2039 = vsel %vm974, %v937, 0
      %v2041 = vsel %vm974, %v2038, 0
      %2043 = vmatprep.subr.mxu0 0.0
      %2044 = vmatpush1.xpose.msra.mxu0 0.0
      %2045 = vmatprep.subr.mxu0 0.0
      %2046 = vmatpush1.xpose.msra.mxu0 0.0
      %2047 = vmatprep.subr.mxu0 0.0
      %2048 = vmatpush1.xpose.msra.mxu0 0.0
      %2049 = vmatprep.subr.mxu0 0.0
      %2050 = vmatpush1.xpose.msra.mxu0 0.0
      %2051 = vmatprep.subr.mxu0 0.0
      %2052 = vmatpush1.xpose.msra.mxu0 0.0
      %2053 = vmatprep.subr.mxu0 0.0
      %2054 = vmatpush1.xpose.msra.mxu0 0.0
      %2055 = vmatprep.subr.mxu0 0.0
      %2056 = vmatpush1.xpose.msra.mxu0 0.0
      %2057 = vmatprep.subr.mxu0 0.0
      %2058 = vmatpush1.xpose.msra.mxu0 0.0
      %2059 = vmatprep.subr.mxu0 0.0
      %2060 = vmatpush1.xpose.msra.mxu0 0.0
      %2061 = vmatprep.subr.mxu0 0.0
      %2062 = vmatpush1.xpose.msra.mxu0 0.0
      %2063 = vmatprep.subr.mxu0 0.0
      %2064 = vmatpush1.xpose.msra.mxu0 0.0
      %2065 = vmatprep.subr.mxu0 0.0
      %2066 = vmatpush1.xpose.msra.mxu0 0.0
      %2067 = vmatprep.subr.mxu0 0.0
      %2068 = vmatpush1.xpose.msra.mxu0 0.0
      %2069 = vmatprep.subr.mxu0 0.0
      %2070 = vmatpush1.xpose.msra.mxu0 0.0
      %2071 = vmatprep.subr.mxu0 0.0
      %2072 = vmatpush1.xpose.msra.mxu0 0.0
      %2073 = vmatprep.subr.mxu0 0.0
      %2074 = vmatpush1.xpose.msra.mxu0 %v2041
      %2075 = vmatprep.subr.mxu0 0.0
      %2076 = vmatpush2.xpose.msra.mxu0 0.0
      %2077 = vmatprep.subr.mxu0 0.0
      %2078 = vmatpush2.xpose.msra.mxu0 0.0
      %2079 = vmatprep.subr.mxu0 0.0
      %2080 = vmatpush2.xpose.msra.mxu0 0.0
      %2081 = vmatprep.subr.mxu0 0.0
      %2082 = vmatpush2.xpose.msra.mxu0 0.0
      %2083 = vmatprep.subr.mxu0 0.0
      %2084 = vmatpush2.xpose.msra.mxu0 0.0
      %2085 = vmatprep.subr.mxu0 0.0
      %2086 = vmatpush2.xpose.msra.mxu0 0.0
      %2087 = vmatprep.subr.mxu0 0.0
      %2088 = vmatpush2.xpose.msra.mxu0 0.0
      %2089 = vmatprep.subr.mxu0 0.0
      %2090 = vmatpush2.xpose.msra.mxu0 0.0
      %2091 = vmatprep.subr.mxu0 0.0
      %2092 = vmatpush2.xpose.msra.mxu0 0.0
      %2093 = vmatprep.subr.mxu0 0.0
      %2094 = vmatpush2.xpose.msra.mxu0 0.0
      %2095 = vmatprep.subr.mxu0 0.0
      %2096 = vmatpush2.xpose.msra.mxu0 0.0
      %2097 = vmatprep.subr.mxu0 0.0
      %2098 = vmatpush2.xpose.msra.mxu0 0.0
      %2099 = vmatprep.subr.mxu0 0.0
      %2100 = vmatpush2.xpose.msra.mxu0 0.0
      %2101 = vmatprep.subr.mxu0 0.0
      %2102 = vmatpush2.xpose.msra.mxu0 0.0
      %2103 = vmatprep.subr.mxu0 0.0
      %2104 = vmatpush2.xpose.msra.mxu0 0.0
      %2105 = vmatprep.subr.mxu0 0.0
      %2106 = vmatpush2.xpose.msra.mxu0 0.0
      %2107 = vmatprep.mubr.f32.mxu0 0.0
      %2108 = vmatmul.mubr.f32.gmra.mxu0 %v2039
      %v2109 = vpop.f32.mrf.mxu0
      %v2110 = vadd.f32 0.0, %v2109
      %v2111 = vpop.f32.mrf.mxu0
      %2112 = vdwg.mxu0
      %2113 = vrot.lane.b32.xlu0 %v939, 120
      %v2114 = vpop.permute.xlu0 %2113
      %v2115 = vsel %vm974, %v939, 0
      %v2117 = vsel %vm974, %v2114, 0
      %2119 = vmatprep.subr.mxu0 0.0
      %2120 = vmatpush1.xpose.msra.mxu0 0.0
      %2121 = vmatprep.subr.mxu0 0.0
      %2122 = vmatpush1.xpose.msra.mxu0 0.0
      %2123 = vmatprep.subr.mxu0 0.0
      %2124 = vmatpush1.xpose.msra.mxu0 0.0
      %2125 = vmatprep.subr.mxu0 0.0
      %2126 = vmatpush1.xpose.msra.mxu0 0.0
      %2127 = vmatprep.subr.mxu0 0.0
      %2128 = vmatpush1.xpose.msra.mxu0 0.0
      %2129 = vmatprep.subr.mxu0 0.0
      %2130 = vmatpush1.xpose.msra.mxu0 0.0
      %2131 = vmatprep.subr.mxu0 0.0
      %2132 = vmatpush1.xpose.msra.mxu0 0.0
      %2133 = vmatprep.subr.mxu0 0.0
      %2134 = vmatpush1.xpose.msra.mxu0 0.0
      %2135 = vmatprep.subr.mxu0 0.0
      %2136 = vmatpush1.xpose.msra.mxu0 0.0
      %2137 = vmatprep.subr.mxu0 0.0
      %2138 = vmatpush1.xpose.msra.mxu0 0.0
      %2139 = vmatprep.subr.mxu0 0.0
      %2140 = vmatpush1.xpose.msra.mxu0 0.0
      %2141 = vmatprep.subr.mxu0 0.0
      %2142 = vmatpush1.xpose.msra.mxu0 0.0
      %2143 = vmatprep.subr.mxu0 0.0
      %2144 = vmatpush1.xpose.msra.mxu0 0.0
      %2145 = vmatprep.subr.mxu0 0.0
      %2146 = vmatpush1.xpose.msra.mxu0 0.0
      %2147 = vmatprep.subr.mxu0 0.0
      %2148 = vmatpush1.xpose.msra.mxu0 0.0
      %2149 = vmatprep.subr.mxu0 0.0
      %2150 = vmatpush1.xpose.msra.mxu0 %v2117
      %2151 = vmatprep.subr.mxu0 0.0
      %2152 = vmatpush2.xpose.msra.mxu0 0.0
      %2153 = vmatprep.subr.mxu0 0.0
      %2154 = vmatpush2.xpose.msra.mxu0 0.0
      %2155 = vmatprep.subr.mxu0 0.0
      %2156 = vmatpush2.xpose.msra.mxu0 0.0
      %2157 = vmatprep.subr.mxu0 0.0
      %2158 = vmatpush2.xpose.msra.mxu0 0.0
      %2159 = vmatprep.subr.mxu0 0.0
      %2160 = vmatpush2.xpose.msra.mxu0 0.0
      %2161 = vmatprep.subr.mxu0 0.0
      %2162 = vmatpush2.xpose.msra.mxu0 0.0
      %2163 = vmatprep.subr.mxu0 0.0
      %2164 = vmatpush2.xpose.msra.mxu0 0.0
      %2165 = vmatprep.subr.mxu0 0.0
      %2166 = vmatpush2.xpose.msra.mxu0 0.0
      %2167 = vmatprep.subr.mxu0 0.0
      %2168 = vmatpush2.xpose.msra.mxu0 0.0
      %2169 = vmatprep.subr.mxu0 0.0
      %2170 = vmatpush2.xpose.msra.mxu0 0.0
      %2171 = vmatprep.subr.mxu0 0.0
      %2172 = vmatpush2.xpose.msra.mxu0 0.0
      %2173 = vmatprep.subr.mxu0 0.0
      %2174 = vmatpush2.xpose.msra.mxu0 0.0
      %2175 = vmatprep.subr.mxu0 0.0
      %2176 = vmatpush2.xpose.msra.mxu0 0.0
      %2177 = vmatprep.subr.mxu0 0.0
      %2178 = vmatpush2.xpose.msra.mxu0 0.0
      %2179 = vmatprep.subr.mxu0 0.0
      %2180 = vmatpush2.xpose.msra.mxu0 0.0
      %2181 = vmatprep.subr.mxu0 0.0
      %2182 = vmatpush2.xpose.msra.mxu0 0.0
      %2183 = vmatprep.mubr.f32.mxu0 0.0
      %2184 = vmatmul.mubr.f32.gmra.mxu0 %v2115
      %v2185 = vpop.f32.mrf.mxu0
      %v2186 = vadd.f32 0.0, %v2185
      %v2187 = vpop.f32.mrf.mxu0
      %2188 = vdwg.mxu0
      %2189 = vrot.lane.b32.xlu0 %v941, 120
      %v2190 = vpop.permute.xlu0 %2189
      %v2191 = vsel %vm974, %v941, 0
      %v2193 = vsel %vm974, %v2190, 0
      %2195 = vmatprep.subr.mxu0 0.0
      %2196 = vmatpush1.xpose.msra.mxu0 0.0
      %2197 = vmatprep.subr.mxu0 0.0
      %2198 = vmatpush1.xpose.msra.mxu0 0.0
      %2199 = vmatprep.subr.mxu0 0.0
      %2200 = vmatpush1.xpose.msra.mxu0 0.0
      %2201 = vmatprep.subr.mxu0 0.0
      %2202 = vmatpush1.xpose.msra.mxu0 0.0
      %2203 = vmatprep.subr.mxu0 0.0
      %2204 = vmatpush1.xpose.msra.mxu0 0.0
      %2205 = vmatprep.subr.mxu0 0.0
      %2206 = vmatpush1.xpose.msra.mxu0 0.0
      %2207 = vmatprep.subr.mxu0 0.0
      %2208 = vmatpush1.xpose.msra.mxu0 0.0
      %2209 = vmatprep.subr.mxu0 0.0
      %2210 = vmatpush1.xpose.msra.mxu0 0.0
      %2211 = vmatprep.subr.mxu0 0.0
      %2212 = vmatpush1.xpose.msra.mxu0 0.0
      %2213 = vmatprep.subr.mxu0 0.0
      %2214 = vmatpush1.xpose.msra.mxu0 0.0
      %2215 = vmatprep.subr.mxu0 0.0
      %2216 = vmatpush1.xpose.msra.mxu0 0.0
      %2217 = vmatprep.subr.mxu0 0.0
      %2218 = vmatpush1.xpose.msra.mxu0 0.0
      %2219 = vmatprep.subr.mxu0 0.0
      %2220 = vmatpush1.xpose.msra.mxu0 0.0
      %2221 = vmatprep.subr.mxu0 0.0
      %2222 = vmatpush1.xpose.msra.mxu0 0.0
      %2223 = vmatprep.subr.mxu0 0.0
      %2224 = vmatpush1.xpose.msra.mxu0 0.0
      %2225 = vmatprep.subr.mxu0 0.0
      %2226 = vmatpush1.xpose.msra.mxu0 %v2193
      %2227 = vmatprep.subr.mxu0 0.0
      %2228 = vmatpush2.xpose.msra.mxu0 0.0
      %2229 = vmatprep.subr.mxu0 0.0
      %2230 = vmatpush2.xpose.msra.mxu0 0.0
      %2231 = vmatprep.subr.mxu0 0.0
      %2232 = vmatpush2.xpose.msra.mxu0 0.0
      %2233 = vmatprep.subr.mxu0 0.0
      %2234 = vmatpush2.xpose.msra.mxu0 0.0
      %2235 = vmatprep.subr.mxu0 0.0
      %2236 = vmatpush2.xpose.msra.mxu0 0.0
      %2237 = vmatprep.subr.mxu0 0.0
      %2238 = vmatpush2.xpose.msra.mxu0 0.0
      %2239 = vmatprep.subr.mxu0 0.0
      %2240 = vmatpush2.xpose.msra.mxu0 0.0
      %2241 = vmatprep.subr.mxu0 0.0
      %2242 = vmatpush2.xpose.msra.mxu0 0.0
      %2243 = vmatprep.subr.mxu0 0.0
      %2244 = vmatpush2.xpose.msra.mxu0 0.0
      %2245 = vmatprep.subr.mxu0 0.0
      %2246 = vmatpush2.xpose.msra.mxu0 0.0
      %2247 = vmatprep.subr.mxu0 0.0
      %2248 = vmatpush2.xpose.msra.mxu0 0.0
      %2249 = vmatprep.subr.mxu0 0.0
      %2250 = vmatpush2.xpose.msra.mxu0 0.0
      %2251 = vmatprep.subr.mxu0 0.0
      %2252 = vmatpush2.xpose.msra.mxu0 0.0
      %2253 = vmatprep.subr.mxu0 0.0
      %2254 = vmatpush2.xpose.msra.mxu0 0.0
      %2255 = vmatprep.subr.mxu0 0.0
      %2256 = vmatpush2.xpose.msra.mxu0 0.0
      %2257 = vmatprep.subr.mxu0 0.0
      %2258 = vmatpush2.xpose.msra.mxu0 0.0
      %2259 = vmatprep.mubr.f32.mxu0 0.0
      %2260 = vmatmul.mubr.f32.gmra.mxu0 %v2191
      %v2261 = vpop.f32.mrf.mxu0
      %v2262 = vadd.f32 0.0, %v2261
      %v2263 = vpop.f32.mrf.mxu0
      %2264 = vdwg.mxu0
      %2265 = vrot.lane.b32.xlu0 %v943, 120
      %v2266 = vpop.permute.xlu0 %2265
      %v2267 = vsel %vm974, %v943, 0
      %v2269 = vsel %vm974, %v2266, 0
      %2271 = vmatprep.subr.mxu0 0.0
      %2272 = vmatpush1.xpose.msra.mxu0 0.0
      %2273 = vmatprep.subr.mxu0 0.0
      %2274 = vmatpush1.xpose.msra.mxu0 0.0
      %2275 = vmatprep.subr.mxu0 0.0
      %2276 = vmatpush1.xpose.msra.mxu0 0.0
      %2277 = vmatprep.subr.mxu0 0.0
      %2278 = vmatpush1.xpose.msra.mxu0 0.0
      %2279 = vmatprep.subr.mxu0 0.0
      %2280 = vmatpush1.xpose.msra.mxu0 0.0
      %2281 = vmatprep.subr.mxu0 0.0
      %2282 = vmatpush1.xpose.msra.mxu0 0.0
      %2283 = vmatprep.subr.mxu0 0.0
      %2284 = vmatpush1.xpose.msra.mxu0 0.0
      %2285 = vmatprep.subr.mxu0 0.0
      %2286 = vmatpush1.xpose.msra.mxu0 0.0
      %2287 = vmatprep.subr.mxu0 0.0
      %2288 = vmatpush1.xpose.msra.mxu0 0.0
      %2289 = vmatprep.subr.mxu0 0.0
      %2290 = vmatpush1.xpose.msra.mxu0 0.0
      %2291 = vmatprep.subr.mxu0 0.0
      %2292 = vmatpush1.xpose.msra.mxu0 0.0
      %2293 = vmatprep.subr.mxu0 0.0
      %2294 = vmatpush1.xpose.msra.mxu0 0.0
      %2295 = vmatprep.subr.mxu0 0.0
      %2296 = vmatpush1.xpose.msra.mxu0 0.0
      %2297 = vmatprep.subr.mxu0 0.0
      %2298 = vmatpush1.xpose.msra.mxu0 0.0
      %2299 = vmatprep.subr.mxu0 0.0
      %2300 = vmatpush1.xpose.msra.mxu0 0.0
      %2301 = vmatprep.subr.mxu0 0.0
      %2302 = vmatpush1.xpose.msra.mxu0 %v2269
      %2303 = vmatprep.subr.mxu0 0.0
      %2304 = vmatpush2.xpose.msra.mxu0 0.0
      %2305 = vmatprep.subr.mxu0 0.0
      %2306 = vmatpush2.xpose.msra.mxu0 0.0
      %2307 = vmatprep.subr.mxu0 0.0
      %2308 = vmatpush2.xpose.msra.mxu0 0.0
      %2309 = vmatprep.subr.mxu0 0.0
      %2310 = vmatpush2.xpose.msra.mxu0 0.0
      %2311 = vmatprep.subr.mxu0 0.0
      %2312 = vmatpush2.xpose.msra.mxu0 0.0
      %2313 = vmatprep.subr.mxu0 0.0
      %2314 = vmatpush2.xpose.msra.mxu0 0.0
      %2315 = vmatprep.subr.mxu0 0.0
      %2316 = vmatpush2.xpose.msra.mxu0 0.0
      %2317 = vmatprep.subr.mxu0 0.0
      %2318 = vmatpush2.xpose.msra.mxu0 0.0
      %2319 = vmatprep.subr.mxu0 0.0
      %2320 = vmatpush2.xpose.msra.mxu0 0.0
      %2321 = vmatprep.subr.mxu0 0.0
      %2322 = vmatpush2.xpose.msra.mxu0 0.0
      %2323 = vmatprep.subr.mxu0 0.0
      %2324 = vmatpush2.xpose.msra.mxu0 0.0
      %2325 = vmatprep.subr.mxu0 0.0
      %2326 = vmatpush2.xpose.msra.mxu0 0.0
      %2327 = vmatprep.subr.mxu0 0.0
      %2328 = vmatpush2.xpose.msra.mxu0 0.0
      %2329 = vmatprep.subr.mxu0 0.0
      %2330 = vmatpush2.xpose.msra.mxu0 0.0
      %2331 = vmatprep.subr.mxu0 0.0
      %2332 = vmatpush2.xpose.msra.mxu0 0.0
      %2333 = vmatprep.subr.mxu0 0.0
      %2334 = vmatpush2.xpose.msra.mxu0 0.0
      %2335 = vmatprep.mubr.f32.mxu0 0.0
      %2336 = vmatmul.mubr.f32.gmra.mxu0 %v2267
      %v2337 = vpop.f32.mrf.mxu0
      %v2338 = vadd.f32 0.0, %v2337
      %v2339 = vpop.f32.mrf.mxu0
      %2340 = vdwg.mxu0
      %2341 = vrot.lane.b32.xlu0 %v945, 120
      %v2342 = vpop.permute.xlu0 %2341
      %v2343 = vsel %vm974, %v945, 0
      %v2345 = vsel %vm974, %v2342, 0
      %2347 = vmatprep.subr.mxu0 0.0
      %2348 = vmatpush1.xpose.msra.mxu0 0.0
      %2349 = vmatprep.subr.mxu0 0.0
      %2350 = vmatpush1.xpose.msra.mxu0 0.0
      %2351 = vmatprep.subr.mxu0 0.0
      %2352 = vmatpush1.xpose.msra.mxu0 0.0
      %2353 = vmatprep.subr.mxu0 0.0
      %2354 = vmatpush1.xpose.msra.mxu0 0.0
      %2355 = vmatprep.subr.mxu0 0.0
      %2356 = vmatpush1.xpose.msra.mxu0 0.0
      %2357 = vmatprep.subr.mxu0 0.0
      %2358 = vmatpush1.xpose.msra.mxu0 0.0
      %2359 = vmatprep.subr.mxu0 0.0
      %2360 = vmatpush1.xpose.msra.mxu0 0.0
      %2361 = vmatprep.subr.mxu0 0.0
      %2362 = vmatpush1.xpose.msra.mxu0 0.0
      %2363 = vmatprep.subr.mxu0 0.0
      %2364 = vmatpush1.xpose.msra.mxu0 0.0
      %2365 = vmatprep.subr.mxu0 0.0
      %2366 = vmatpush1.xpose.msra.mxu0 0.0
      %2367 = vmatprep.subr.mxu0 0.0
      %2368 = vmatpush1.xpose.msra.mxu0 0.0
      %2369 = vmatprep.subr.mxu0 0.0
      %2370 = vmatpush1.xpose.msra.mxu0 0.0
      %2371 = vmatprep.subr.mxu0 0.0
      %2372 = vmatpush1.xpose.msra.mxu0 0.0
      %2373 = vmatprep.subr.mxu0 0.0
      %2374 = vmatpush1.xpose.msra.mxu0 0.0
      %2375 = vmatprep.subr.mxu0 0.0
      %2376 = vmatpush1.xpose.msra.mxu0 0.0
      %2377 = vmatprep.subr.mxu0 0.0
      %2378 = vmatpush1.xpose.msra.mxu0 %v2345
      %2379 = vmatprep.subr.mxu0 0.0
      %2380 = vmatpush2.xpose.msra.mxu0 0.0
      %2381 = vmatprep.subr.mxu0 0.0
      %2382 = vmatpush2.xpose.msra.mxu0 0.0
      %2383 = vmatprep.subr.mxu0 0.0
      %2384 = vmatpush2.xpose.msra.mxu0 0.0
      %2385 = vmatprep.subr.mxu0 0.0
      %2386 = vmatpush2.xpose.msra.mxu0 0.0
      %2387 = vmatprep.subr.mxu0 0.0
      %2388 = vmatpush2.xpose.msra.mxu0 0.0
      %2389 = vmatprep.subr.mxu0 0.0
      %2390 = vmatpush2.xpose.msra.mxu0 0.0
      %2391 = vmatprep.subr.mxu0 0.0
      %2392 = vmatpush2.xpose.msra.mxu0 0.0
      %2393 = vmatprep.subr.mxu0 0.0
      %2394 = vmatpush2.xpose.msra.mxu0 0.0
      %2395 = vmatprep.subr.mxu0 0.0
      %2396 = vmatpush2.xpose.msra.mxu0 0.0
      %2397 = vmatprep.subr.mxu0 0.0
      %2398 = vmatpush2.xpose.msra.mxu0 0.0
      %2399 = vmatprep.subr.mxu0 0.0
      %2400 = vmatpush2.xpose.msra.mxu0 0.0
      %2401 = vmatprep.subr.mxu0 0.0
      %2402 = vmatpush2.xpose.msra.mxu0 0.0
      %2403 = vmatprep.subr.mxu0 0.0
      %2404 = vmatpush2.xpose.msra.mxu0 0.0
      %2405 = vmatprep.subr.mxu0 0.0
      %2406 = vmatpush2.xpose.msra.mxu0 0.0
      %2407 = vmatprep.subr.mxu0 0.0
      %2408 = vmatpush2.xpose.msra.mxu0 0.0
      %2409 = vmatprep.subr.mxu0 0.0
      %2410 = vmatpush2.xpose.msra.mxu0 0.0
      %2411 = vmatprep.mubr.f32.mxu0 0.0
      %2412 = vmatmul.mubr.f32.gmra.mxu0 %v2343
      %v2413 = vpop.f32.mrf.mxu0
      %v2414 = vadd.f32 0.0, %v2413
      %v2415 = vpop.f32.mrf.mxu0
      %2416 = vdwg.mxu0
      %2417 = vrot.lane.b32.xlu0 %v947, 120
      %v2418 = vpop.permute.xlu0 %2417
      %v2419 = vsel %vm974, %v947, 0
      %v2421 = vsel %vm974, %v2418, 0
      %2423 = vmatprep.subr.mxu0 0.0
      %2424 = vmatpush1.xpose.msra.mxu0 0.0
      %2425 = vmatprep.subr.mxu0 0.0
      %2426 = vmatpush1.xpose.msra.mxu0 0.0
      %2427 = vmatprep.subr.mxu0 0.0
      %2428 = vmatpush1.xpose.msra.mxu0 0.0
      %2429 = vmatprep.subr.mxu0 0.0
      %2430 = vmatpush1.xpose.msra.mxu0 0.0
      %2431 = vmatprep.subr.mxu0 0.0
      %2432 = vmatpush1.xpose.msra.mxu0 0.0
      %2433 = vmatprep.subr.mxu0 0.0
      %2434 = vmatpush1.xpose.msra.mxu0 0.0
      %2435 = vmatprep.subr.mxu0 0.0
      %2436 = vmatpush1.xpose.msra.mxu0 0.0
      %2437 = vmatprep.subr.mxu0 0.0
      %2438 = vmatpush1.xpose.msra.mxu0 0.0
      %2439 = vmatprep.subr.mxu0 0.0
      %2440 = vmatpush1.xpose.msra.mxu0 0.0
      %2441 = vmatprep.subr.mxu0 0.0
      %2442 = vmatpush1.xpose.msra.mxu0 0.0
      %2443 = vmatprep.subr.mxu0 0.0
      %2444 = vmatpush1.xpose.msra.mxu0 0.0
      %2445 = vmatprep.subr.mxu0 0.0
      %2446 = vmatpush1.xpose.msra.mxu0 0.0
      %2447 = vmatprep.subr.mxu0 0.0
      %2448 = vmatpush1.xpose.msra.mxu0 0.0
      %2449 = vmatprep.subr.mxu0 0.0
      %2450 = vmatpush1.xpose.msra.mxu0 0.0
      %2451 = vmatprep.subr.mxu0 0.0
      %2452 = vmatpush1.xpose.msra.mxu0 0.0
      %2453 = vmatprep.subr.mxu0 0.0
      %2454 = vmatpush1.xpose.msra.mxu0 %v2421
      %2455 = vmatprep.subr.mxu0 0.0
      %2456 = vmatpush2.xpose.msra.mxu0 0.0
      %2457 = vmatprep.subr.mxu0 0.0
      %2458 = vmatpush2.xpose.msra.mxu0 0.0
      %2459 = vmatprep.subr.mxu0 0.0
      %2460 = vmatpush2.xpose.msra.mxu0 0.0
      %2461 = vmatprep.subr.mxu0 0.0
      %2462 = vmatpush2.xpose.msra.mxu0 0.0
      %2463 = vmatprep.subr.mxu0 0.0
      %2464 = vmatpush2.xpose.msra.mxu0 0.0
      %2465 = vmatprep.subr.mxu0 0.0
      %2466 = vmatpush2.xpose.msra.mxu0 0.0
      %2467 = vmatprep.subr.mxu0 0.0
      %2468 = vmatpush2.xpose.msra.mxu0 0.0
      %2469 = vmatprep.subr.mxu0 0.0
      %2470 = vmatpush2.xpose.msra.mxu0 0.0
      %2471 = vmatprep.subr.mxu0 0.0
      %2472 = vmatpush2.xpose.msra.mxu0 0.0
      %2473 = vmatprep.subr.mxu0 0.0
      %2474 = vmatpush2.xpose.msra.mxu0 0.0
      %2475 = vmatprep.subr.mxu0 0.0
      %2476 = vmatpush2.xpose.msra.mxu0 0.0
      %2477 = vmatprep.subr.mxu0 0.0
      %2478 = vmatpush2.xpose.msra.mxu0 0.0
      %2479 = vmatprep.subr.mxu0 0.0
      %2480 = vmatpush2.xpose.msra.mxu0 0.0
      %2481 = vmatprep.subr.mxu0 0.0
      %2482 = vmatpush2.xpose.msra.mxu0 0.0
      %2483 = vmatprep.subr.mxu0 0.0
      %2484 = vmatpush2.xpose.msra.mxu0 0.0
      %2485 = vmatprep.subr.mxu0 0.0
      %2486 = vmatpush2.xpose.msra.mxu0 0.0
      %2487 = vmatprep.mubr.f32.mxu0 0.0
      %2488 = vmatmul.mubr.f32.gmra.mxu0 %v2419
      %v2489 = vpop.f32.mrf.mxu0
      %v2490 = vadd.f32 0.0, %v2489
      %v2491 = vpop.f32.mrf.mxu0
      %2492 = vdwg.mxu0
      %2493 = vrot.lane.b32.xlu0 %v949, 120
      %v2494 = vpop.permute.xlu0 %2493
      %v2495 = vsel %vm974, %v949, 0
      %v2497 = vsel %vm974, %v2494, 0
      %2499 = vmatprep.subr.mxu0 0.0
      %2500 = vmatpush1.xpose.msra.mxu0 0.0
      %2501 = vmatprep.subr.mxu0 0.0
      %2502 = vmatpush1.xpose.msra.mxu0 0.0
      %2503 = vmatprep.subr.mxu0 0.0
      %2504 = vmatpush1.xpose.msra.mxu0 0.0
      %2505 = vmatprep.subr.mxu0 0.0
      %2506 = vmatpush1.xpose.msra.mxu0 0.0
      %2507 = vmatprep.subr.mxu0 0.0
      %2508 = vmatpush1.xpose.msra.mxu0 0.0
      %2509 = vmatprep.subr.mxu0 0.0
      %2510 = vmatpush1.xpose.msra.mxu0 0.0
      %2511 = vmatprep.subr.mxu0 0.0
      %2512 = vmatpush1.xpose.msra.mxu0 0.0
      %2513 = vmatprep.subr.mxu0 0.0
      %2514 = vmatpush1.xpose.msra.mxu0 0.0
      %2515 = vmatprep.subr.mxu0 0.0
      %2516 = vmatpush1.xpose.msra.mxu0 0.0
      %2517 = vmatprep.subr.mxu0 0.0
      %2518 = vmatpush1.xpose.msra.mxu0 0.0
      %2519 = vmatprep.subr.mxu0 0.0
      %2520 = vmatpush1.xpose.msra.mxu0 0.0
      %2521 = vmatprep.subr.mxu0 0.0
      %2522 = vmatpush1.xpose.msra.mxu0 0.0
      %2523 = vmatprep.subr.mxu0 0.0
      %2524 = vmatpush1.xpose.msra.mxu0 0.0
      %2525 = vmatprep.subr.mxu0 0.0
      %2526 = vmatpush1.xpose.msra.mxu0 0.0
      %2527 = vmatprep.subr.mxu0 0.0
      %2528 = vmatpush1.xpose.msra.mxu0 0.0
      %2529 = vmatprep.subr.mxu0 0.0
      %2530 = vmatpush1.xpose.msra.mxu0 %v2497
      %2531 = vmatprep.subr.mxu0 0.0
      %2532 = vmatpush2.xpose.msra.mxu0 0.0
      %2533 = vmatprep.subr.mxu0 0.0
      %2534 = vmatpush2.xpose.msra.mxu0 0.0
      %2535 = vmatprep.subr.mxu0 0.0
      %2536 = vmatpush2.xpose.msra.mxu0 0.0
      %2537 = vmatprep.subr.mxu0 0.0
      %2538 = vmatpush2.xpose.msra.mxu0 0.0
      %2539 = vmatprep.subr.mxu0 0.0
      %2540 = vmatpush2.xpose.msra.mxu0 0.0
      %2541 = vmatprep.subr.mxu0 0.0
      %2542 = vmatpush2.xpose.msra.mxu0 0.0
      %2543 = vmatprep.subr.mxu0 0.0
      %2544 = vmatpush2.xpose.msra.mxu0 0.0
      %2545 = vmatprep.subr.mxu0 0.0
      %2546 = vmatpush2.xpose.msra.mxu0 0.0
      %2547 = vmatprep.subr.mxu0 0.0
      %2548 = vmatpush2.xpose.msra.mxu0 0.0
      %2549 = vmatprep.subr.mxu0 0.0
      %2550 = vmatpush2.xpose.msra.mxu0 0.0
      %2551 = vmatprep.subr.mxu0 0.0
      %2552 = vmatpush2.xpose.msra.mxu0 0.0
      %2553 = vmatprep.subr.mxu0 0.0
      %2554 = vmatpush2.xpose.msra.mxu0 0.0
      %2555 = vmatprep.subr.mxu0 0.0
      %2556 = vmatpush2.xpose.msra.mxu0 0.0
      %2557 = vmatprep.subr.mxu0 0.0
      %2558 = vmatpush2.xpose.msra.mxu0 0.0
      %2559 = vmatprep.subr.mxu0 0.0
      %2560 = vmatpush2.xpose.msra.mxu0 0.0
      %2561 = vmatprep.subr.mxu0 0.0
      %2562 = vmatpush2.xpose.msra.mxu0 0.0
      %2563 = vmatprep.mubr.f32.mxu0 0.0
      %2564 = vmatmul.mubr.f32.gmra.mxu0 %v2495
      %v2565 = vpop.f32.mrf.mxu0
      %v2566 = vadd.f32 0.0, %v2565
      %v2567 = vpop.f32.mrf.mxu0
      %2568 = vdwg.mxu0
      %2569 = vrot.lane.b32.xlu0 %v951, 120
      %v2570 = vpop.permute.xlu0 %2569
      %v2571 = vsel %vm974, %v951, 0
      %v2573 = vsel %vm974, %v2570, 0
      %2575 = vmatprep.subr.mxu0 0.0
      %2576 = vmatpush1.xpose.msra.mxu0 0.0
      %2577 = vmatprep.subr.mxu0 0.0
      %2578 = vmatpush1.xpose.msra.mxu0 0.0
      %2579 = vmatprep.subr.mxu0 0.0
      %2580 = vmatpush1.xpose.msra.mxu0 0.0
      %2581 = vmatprep.subr.mxu0 0.0
      %2582 = vmatpush1.xpose.msra.mxu0 0.0
      %2583 = vmatprep.subr.mxu0 0.0
      %2584 = vmatpush1.xpose.msra.mxu0 0.0
      %2585 = vmatprep.subr.mxu0 0.0
      %2586 = vmatpush1.xpose.msra.mxu0 0.0
      %2587 = vmatprep.subr.mxu0 0.0
      %2588 = vmatpush1.xpose.msra.mxu0 0.0
      %2589 = vmatprep.subr.mxu0 0.0
      %2590 = vmatpush1.xpose.msra.mxu0 0.0
      %2591 = vmatprep.subr.mxu0 0.0
      %2592 = vmatpush1.xpose.msra.mxu0 0.0
      %2593 = vmatprep.subr.mxu0 0.0
      %2594 = vmatpush1.xpose.msra.mxu0 0.0
      %2595 = vmatprep.subr.mxu0 0.0
      %2596 = vmatpush1.xpose.msra.mxu0 0.0
      %2597 = vmatprep.subr.mxu0 0.0
      %2598 = vmatpush1.xpose.msra.mxu0 0.0
      %2599 = vmatprep.subr.mxu0 0.0
      %2600 = vmatpush1.xpose.msra.mxu0 0.0
      %2601 = vmatprep.subr.mxu0 0.0
      %2602 = vmatpush1.xpose.msra.mxu0 0.0
      %2603 = vmatprep.subr.mxu0 0.0
      %2604 = vmatpush1.xpose.msra.mxu0 0.0
      %2605 = vmatprep.subr.mxu0 0.0
      %2606 = vmatpush1.xpose.msra.mxu0 %v2573
      %2607 = vmatprep.subr.mxu0 0.0
      %2608 = vmatpush2.xpose.msra.mxu0 0.0
      %2609 = vmatprep.subr.mxu0 0.0
      %2610 = vmatpush2.xpose.msra.mxu0 0.0
      %2611 = vmatprep.subr.mxu0 0.0
      %2612 = vmatpush2.xpose.msra.mxu0 0.0
      %2613 = vmatprep.subr.mxu0 0.0
      %2614 = vmatpush2.xpose.msra.mxu0 0.0
      %2615 = vmatprep.subr.mxu0 0.0
      %2616 = vmatpush2.xpose.msra.mxu0 0.0
      %2617 = vmatprep.subr.mxu0 0.0
      %2618 = vmatpush2.xpose.msra.mxu0 0.0
      %2619 = vmatprep.subr.mxu0 0.0
      %2620 = vmatpush2.xpose.msra.mxu0 0.0
      %2621 = vmatprep.subr.mxu0 0.0
      %2622 = vmatpush2.xpose.msra.mxu0 0.0
      %2623 = vmatprep.subr.mxu0 0.0
      %2624 = vmatpush2.xpose.msra.mxu0 0.0
      %2625 = vmatprep.subr.mxu0 0.0
      %2626 = vmatpush2.xpose.msra.mxu0 0.0
      %2627 = vmatprep.subr.mxu0 0.0
      %2628 = vmatpush2.xpose.msra.mxu0 0.0
      %2629 = vmatprep.subr.mxu0 0.0
      %2630 = vmatpush2.xpose.msra.mxu0 0.0
      %2631 = vmatprep.subr.mxu0 0.0
      %2632 = vmatpush2.xpose.msra.mxu0 0.0
      %2633 = vmatprep.subr.mxu0 0.0
      %2634 = vmatpush2.xpose.msra.mxu0 0.0
      %2635 = vmatprep.subr.mxu0 0.0
      %2636 = vmatpush2.xpose.msra.mxu0 0.0
      %2637 = vmatprep.subr.mxu0 0.0
      %2638 = vmatpush2.xpose.msra.mxu0 0.0
      %2639 = vmatprep.mubr.f32.mxu0 0.0
      %2640 = vmatmul.mubr.f32.gmra.mxu0 %v2571
      %v2641 = vpop.f32.mrf.mxu0
      %v2642 = vadd.f32 0.0, %v2641
      %v2643 = vpop.f32.mrf.mxu0
      %2644 = vdwg.mxu0
      %2645 = vrot.lane.b32.xlu0 %v953, 120
      %v2646 = vpop.permute.xlu0 %2645
      %v2647 = vsel %vm974, %v953, 0
      %v2649 = vsel %vm974, %v2646, 0
      %2651 = vmatprep.subr.mxu0 0.0
      %2652 = vmatpush1.xpose.msra.mxu0 0.0
      %2653 = vmatprep.subr.mxu0 0.0
      %2654 = vmatpush1.xpose.msra.mxu0 0.0
      %2655 = vmatprep.subr.mxu0 0.0
      %2656 = vmatpush1.xpose.msra.mxu0 0.0
      %2657 = vmatprep.subr.mxu0 0.0
      %2658 = vmatpush1.xpose.msra.mxu0 0.0
      %2659 = vmatprep.subr.mxu0 0.0
      %2660 = vmatpush1.xpose.msra.mxu0 0.0
      %2661 = vmatprep.subr.mxu0 0.0
      %2662 = vmatpush1.xpose.msra.mxu0 0.0
      %2663 = vmatprep.subr.mxu0 0.0
      %2664 = vmatpush1.xpose.msra.mxu0 0.0
      %2665 = vmatprep.subr.mxu0 0.0
      %2666 = vmatpush1.xpose.msra.mxu0 0.0
      %2667 = vmatprep.subr.mxu0 0.0
      %2668 = vmatpush1.xpose.msra.mxu0 0.0
      %2669 = vmatprep.subr.mxu0 0.0
      %2670 = vmatpush1.xpose.msra.mxu0 0.0
      %2671 = vmatprep.subr.mxu0 0.0
      %2672 = vmatpush1.xpose.msra.mxu0 0.0
      %2673 = vmatprep.subr.mxu0 0.0
      %2674 = vmatpush1.xpose.msra.mxu0 0.0
      %2675 = vmatprep.subr.mxu0 0.0
      %2676 = vmatpush1.xpose.msra.mxu0 0.0
      %2677 = vmatprep.subr.mxu0 0.0
      %2678 = vmatpush1.xpose.msra.mxu0 0.0
      %2679 = vmatprep.subr.mxu0 0.0
      %2680 = vmatpush1.xpose.msra.mxu0 0.0
      %2681 = vmatprep.subr.mxu0 0.0
      %2682 = vmatpush1.xpose.msra.mxu0 %v2649
      %2683 = vmatprep.subr.mxu0 0.0
      %2684 = vmatpush2.xpose.msra.mxu0 0.0
      %2685 = vmatprep.subr.mxu0 0.0
      %2686 = vmatpush2.xpose.msra.mxu0 0.0
      %2687 = vmatprep.subr.mxu0 0.0
      %2688 = vmatpush2.xpose.msra.mxu0 0.0
      %2689 = vmatprep.subr.mxu0 0.0
      %2690 = vmatpush2.xpose.msra.mxu0 0.0
      %2691 = vmatprep.subr.mxu0 0.0
      %2692 = vmatpush2.xpose.msra.mxu0 0.0
      %2693 = vmatprep.subr.mxu0 0.0
      %2694 = vmatpush2.xpose.msra.mxu0 0.0
      %2695 = vmatprep.subr.mxu0 0.0
      %2696 = vmatpush2.xpose.msra.mxu0 0.0
      %2697 = vmatprep.subr.mxu0 0.0
      %2698 = vmatpush2.xpose.msra.mxu0 0.0
      %2699 = vmatprep.subr.mxu0 0.0
      %2700 = vmatpush2.xpose.msra.mxu0 0.0
      %2701 = vmatprep.subr.mxu0 0.0
      %2702 = vmatpush2.xpose.msra.mxu0 0.0
      %2703 = vmatprep.subr.mxu0 0.0
      %2704 = vmatpush2.xpose.msra.mxu0 0.0
      %2705 = vmatprep.subr.mxu0 0.0
      %2706 = vmatpush2.xpose.msra.mxu0 0.0
      %2707 = vmatprep.subr.mxu0 0.0
      %2708 = vmatpush2.xpose.msra.mxu0 0.0
      %2709 = vmatprep.subr.mxu0 0.0
      %2710 = vmatpush2.xpose.msra.mxu0 0.0
      %2711 = vmatprep.subr.mxu0 0.0
      %2712 = vmatpush2.xpose.msra.mxu0 0.0
      %2713 = vmatprep.subr.mxu0 0.0
      %2714 = vmatpush2.xpose.msra.mxu0 0.0
      %2715 = vmatprep.mubr.f32.mxu0 0.0
      %2716 = vmatmul.mubr.f32.gmra.mxu0 %v2647
      %v2717 = vpop.f32.mrf.mxu0
      %v2718 = vadd.f32 0.0, %v2717
      %v2719 = vpop.f32.mrf.mxu0
      %2720 = vdwg.mxu0
      %2721 = vrot.lane.b32.xlu0 %v955, 120
      %v2722 = vpop.permute.xlu0 %2721
      %v2723 = vsel %vm974, %v955, 0
      %v2725 = vsel %vm974, %v2722, 0
      %2727 = vmatprep.subr.mxu0 0.0
      %2728 = vmatpush1.xpose.msra.mxu0 0.0
      %2729 = vmatprep.subr.mxu0 0.0
      %2730 = vmatpush1.xpose.msra.mxu0 0.0
      %2731 = vmatprep.subr.mxu0 0.0
      %2732 = vmatpush1.xpose.msra.mxu0 0.0
      %2733 = vmatprep.subr.mxu0 0.0
      %2734 = vmatpush1.xpose.msra.mxu0 0.0
      %2735 = vmatprep.subr.mxu0 0.0
      %2736 = vmatpush1.xpose.msra.mxu0 0.0
      %2737 = vmatprep.subr.mxu0 0.0
      %2738 = vmatpush1.xpose.msra.mxu0 0.0
      %2739 = vmatprep.subr.mxu0 0.0
      %2740 = vmatpush1.xpose.msra.mxu0 0.0
      %2741 = vmatprep.subr.mxu0 0.0
      %2742 = vmatpush1.xpose.msra.mxu0 0.0
      %2743 = vmatprep.subr.mxu0 0.0
      %2744 = vmatpush1.xpose.msra.mxu0 0.0
      %2745 = vmatprep.subr.mxu0 0.0
      %2746 = vmatpush1.xpose.msra.mxu0 0.0
      %2747 = vmatprep.subr.mxu0 0.0
      %2748 = vmatpush1.xpose.msra.mxu0 0.0
      %2749 = vmatprep.subr.mxu0 0.0
      %2750 = vmatpush1.xpose.msra.mxu0 0.0
      %2751 = vmatprep.subr.mxu0 0.0
      %2752 = vmatpush1.xpose.msra.mxu0 0.0
      %2753 = vmatprep.subr.mxu0 0.0
      %2754 = vmatpush1.xpose.msra.mxu0 0.0
      %2755 = vmatprep.subr.mxu0 0.0
      %2756 = vmatpush1.xpose.msra.mxu0 0.0
      %2757 = vmatprep.subr.mxu0 0.0
      %2758 = vmatpush1.xpose.msra.mxu0 %v2725
      %2759 = vmatprep.subr.mxu0 0.0
      %2760 = vmatpush2.xpose.msra.mxu0 0.0
      %2761 = vmatprep.subr.mxu0 0.0
      %2762 = vmatpush2.xpose.msra.mxu0 0.0
      %2763 = vmatprep.subr.mxu0 0.0
      %2764 = vmatpush2.xpose.msra.mxu0 0.0
      %2765 = vmatprep.subr.mxu0 0.0
      %2766 = vmatpush2.xpose.msra.mxu0 0.0
      %2767 = vmatprep.subr.mxu0 0.0
      %2768 = vmatpush2.xpose.msra.mxu0 0.0
      %2769 = vmatprep.subr.mxu0 0.0
      %2770 = vmatpush2.xpose.msra.mxu0 0.0
      %2771 = vmatprep.subr.mxu0 0.0
      %2772 = vmatpush2.xpose.msra.mxu0 0.0
      %2773 = vmatprep.subr.mxu0 0.0
      %2774 = vmatpush2.xpose.msra.mxu0 0.0
      %2775 = vmatprep.subr.mxu0 0.0
      %2776 = vmatpush2.xpose.msra.mxu0 0.0
      %2777 = vmatprep.subr.mxu0 0.0
      %2778 = vmatpush2.xpose.msra.mxu0 0.0
      %2779 = vmatprep.subr.mxu0 0.0
      %2780 = vmatpush2.xpose.msra.mxu0 0.0
      %2781 = vmatprep.subr.mxu0 0.0
      %2782 = vmatpush2.xpose.msra.mxu0 0.0
      %2783 = vmatprep.subr.mxu0 0.0
      %2784 = vmatpush2.xpose.msra.mxu0 0.0
      %2785 = vmatprep.subr.mxu0 0.0
      %2786 = vmatpush2.xpose.msra.mxu0 0.0
      %2787 = vmatprep.subr.mxu0 0.0
      %2788 = vmatpush2.xpose.msra.mxu0 0.0
      %2789 = vmatprep.subr.mxu0 0.0
      %2790 = vmatpush2.xpose.msra.mxu0 0.0
      %2791 = vmatprep.mubr.f32.mxu0 0.0
      %2792 = vmatmul.mubr.f32.gmra.mxu0 %v2723
      %v2793 = vpop.f32.mrf.mxu0
      %v2794 = vadd.f32 0.0, %v2793
      %v2795 = vpop.f32.mrf.mxu0
      %2796 = vdwg.mxu0
      %2797 = vrot.lane.b32.xlu0 %v957, 120
      %v2798 = vpop.permute.xlu0 %2797
      %v2799 = vsel %vm974, %v957, 0
      %v2801 = vsel %vm974, %v2798, 0
      %2803 = vmatprep.subr.mxu0 0.0
      %2804 = vmatpush1.xpose.msra.mxu0 0.0
      %2805 = vmatprep.subr.mxu0 0.0
      %2806 = vmatpush1.xpose.msra.mxu0 0.0
      %2807 = vmatprep.subr.mxu0 0.0
      %2808 = vmatpush1.xpose.msra.mxu0 0.0
      %2809 = vmatprep.subr.mxu0 0.0
      %2810 = vmatpush1.xpose.msra.mxu0 0.0
      %2811 = vmatprep.subr.mxu0 0.0
      %2812 = vmatpush1.xpose.msra.mxu0 0.0
      %2813 = vmatprep.subr.mxu0 0.0
      %2814 = vmatpush1.xpose.msra.mxu0 0.0
      %2815 = vmatprep.subr.mxu0 0.0
      %2816 = vmatpush1.xpose.msra.mxu0 0.0
      %2817 = vmatprep.subr.mxu0 0.0
      %2818 = vmatpush1.xpose.msra.mxu0 0.0
      %2819 = vmatprep.subr.mxu0 0.0
      %2820 = vmatpush1.xpose.msra.mxu0 0.0
      %2821 = vmatprep.subr.mxu0 0.0
      %2822 = vmatpush1.xpose.msra.mxu0 0.0
      %2823 = vmatprep.subr.mxu0 0.0
      %2824 = vmatpush1.xpose.msra.mxu0 0.0
      %2825 = vmatprep.subr.mxu0 0.0
      %2826 = vmatpush1.xpose.msra.mxu0 0.0
      %2827 = vmatprep.subr.mxu0 0.0
      %2828 = vmatpush1.xpose.msra.mxu0 0.0
      %2829 = vmatprep.subr.mxu0 0.0
      %2830 = vmatpush1.xpose.msra.mxu0 0.0
      %2831 = vmatprep.subr.mxu0 0.0
      %2832 = vmatpush1.xpose.msra.mxu0 0.0
      %2833 = vmatprep.subr.mxu0 0.0
      %2834 = vmatpush1.xpose.msra.mxu0 %v2801
      %2835 = vmatprep.subr.mxu0 0.0
      %2836 = vmatpush2.xpose.msra.mxu0 0.0
      %2837 = vmatprep.subr.mxu0 0.0
      %2838 = vmatpush2.xpose.msra.mxu0 0.0
      %2839 = vmatprep.subr.mxu0 0.0
      %2840 = vmatpush2.xpose.msra.mxu0 0.0
      %2841 = vmatprep.subr.mxu0 0.0
      %2842 = vmatpush2.xpose.msra.mxu0 0.0
      %2843 = vmatprep.subr.mxu0 0.0
      %2844 = vmatpush2.xpose.msra.mxu0 0.0
      %2845 = vmatprep.subr.mxu0 0.0
      %2846 = vmatpush2.xpose.msra.mxu0 0.0
      %2847 = vmatprep.subr.mxu0 0.0
      %2848 = vmatpush2.xpose.msra.mxu0 0.0
      %2849 = vmatprep.subr.mxu0 0.0
      %2850 = vmatpush2.xpose.msra.mxu0 0.0
      %2851 = vmatprep.subr.mxu0 0.0
      %2852 = vmatpush2.xpose.msra.mxu0 0.0
      %2853 = vmatprep.subr.mxu0 0.0
      %2854 = vmatpush2.xpose.msra.mxu0 0.0
      %2855 = vmatprep.subr.mxu0 0.0
      %2856 = vmatpush2.xpose.msra.mxu0 0.0
      %2857 = vmatprep.subr.mxu0 0.0
      %2858 = vmatpush2.xpose.msra.mxu0 0.0
      %2859 = vmatprep.subr.mxu0 0.0
      %2860 = vmatpush2.xpose.msra.mxu0 0.0
      %2861 = vmatprep.subr.mxu0 0.0
      %2862 = vmatpush2.xpose.msra.mxu0 0.0
      %2863 = vmatprep.subr.mxu0 0.0
      %2864 = vmatpush2.xpose.msra.mxu0 0.0
      %2865 = vmatprep.subr.mxu0 0.0
      %2866 = vmatpush2.xpose.msra.mxu0 0.0
      %2867 = vmatprep.mubr.f32.mxu0 0.0
      %2868 = vmatmul.mubr.f32.gmra.mxu0 %v2799
      %v2869 = vpop.f32.mrf.mxu0
      %v2870 = vadd.f32 0.0, %v2869
      %v2871 = vpop.f32.mrf.mxu0
      %2872 = vdwg.mxu0
      %2873 = vrot.lane.b32.xlu0 %v959, 120
      %v2874 = vpop.permute.xlu0 %2873
      %v2875 = vsel %vm974, %v959, 0
      %v2877 = vsel %vm974, %v2874, 0
      %2879 = vmatprep.subr.mxu0 0.0
      %2880 = vmatpush1.xpose.msra.mxu0 0.0
      %2881 = vmatprep.subr.mxu0 0.0
      %2882 = vmatpush1.xpose.msra.mxu0 0.0
      %2883 = vmatprep.subr.mxu0 0.0
      %2884 = vmatpush1.xpose.msra.mxu0 0.0
      %2885 = vmatprep.subr.mxu0 0.0
      %2886 = vmatpush1.xpose.msra.mxu0 0.0
      %2887 = vmatprep.subr.mxu0 0.0
      %2888 = vmatpush1.xpose.msra.mxu0 0.0
      %2889 = vmatprep.subr.mxu0 0.0
      %2890 = vmatpush1.xpose.msra.mxu0 0.0
      %2891 = vmatprep.subr.mxu0 0.0
      %2892 = vmatpush1.xpose.msra.mxu0 0.0
      %2893 = vmatprep.subr.mxu0 0.0
      %2894 = vmatpush1.xpose.msra.mxu0 0.0
      %2895 = vmatprep.subr.mxu0 0.0
      %2896 = vmatpush1.xpose.msra.mxu0 0.0
      %2897 = vmatprep.subr.mxu0 0.0
      %2898 = vmatpush1.xpose.msra.mxu0 0.0
      %2899 = vmatprep.subr.mxu0 0.0
      %2900 = vmatpush1.xpose.msra.mxu0 0.0
      %2901 = vmatprep.subr.mxu0 0.0
      %2902 = vmatpush1.xpose.msra.mxu0 0.0
      %2903 = vmatprep.subr.mxu0 0.0
      %2904 = vmatpush1.xpose.msra.mxu0 0.0
      %2905 = vmatprep.subr.mxu0 0.0
      %2906 = vmatpush1.xpose.msra.mxu0 0.0
      %2907 = vmatprep.subr.mxu0 0.0
      %2908 = vmatpush1.xpose.msra.mxu0 0.0
      %2909 = vmatprep.subr.mxu0 0.0
      %2910 = vmatpush1.xpose.msra.mxu0 %v2877
      %2911 = vmatprep.subr.mxu0 0.0
      %2912 = vmatpush2.xpose.msra.mxu0 0.0
      %2913 = vmatprep.subr.mxu0 0.0
      %2914 = vmatpush2.xpose.msra.mxu0 0.0
      %2915 = vmatprep.subr.mxu0 0.0
      %2916 = vmatpush2.xpose.msra.mxu0 0.0
      %2917 = vmatprep.subr.mxu0 0.0
      %2918 = vmatpush2.xpose.msra.mxu0 0.0
      %2919 = vmatprep.subr.mxu0 0.0
      %2920 = vmatpush2.xpose.msra.mxu0 0.0
      %2921 = vmatprep.subr.mxu0 0.0
      %2922 = vmatpush2.xpose.msra.mxu0 0.0
      %2923 = vmatprep.subr.mxu0 0.0
      %2924 = vmatpush2.xpose.msra.mxu0 0.0
      %2925 = vmatprep.subr.mxu0 0.0
      %2926 = vmatpush2.xpose.msra.mxu0 0.0
      %2927 = vmatprep.subr.mxu0 0.0
      %2928 = vmatpush2.xpose.msra.mxu0 0.0
      %2929 = vmatprep.subr.mxu0 0.0
      %2930 = vmatpush2.xpose.msra.mxu0 0.0
      %2931 = vmatprep.subr.mxu0 0.0
      %2932 = vmatpush2.xpose.msra.mxu0 0.0
      %2933 = vmatprep.subr.mxu0 0.0
      %2934 = vmatpush2.xpose.msra.mxu0 0.0
      %2935 = vmatprep.subr.mxu0 0.0
      %2936 = vmatpush2.xpose.msra.mxu0 0.0
      %2937 = vmatprep.subr.mxu0 0.0
      %2938 = vmatpush2.xpose.msra.mxu0 0.0
      %2939 = vmatprep.subr.mxu0 0.0
      %2940 = vmatpush2.xpose.msra.mxu0 0.0
      %2941 = vmatprep.subr.mxu0 0.0
      %2942 = vmatpush2.xpose.msra.mxu0 0.0
      %2943 = vmatprep.mubr.f32.mxu0 0.0
      %2944 = vmatmul.mubr.f32.gmra.mxu0 %v2875
      %v2945 = vpop.f32.mrf.mxu0
      %v2946 = vadd.f32 0.0, %v2945
      %v2947 = vpop.f32.mrf.mxu0
      %2948 = vdwg.mxu0
      %2949 = vrot.lane.b32.xlu0 %v961, 120
      %v2950 = vpop.permute.xlu0 %2949
      %v2951 = vsel %vm974, %v961, 0
      %v2953 = vsel %vm974, %v2950, 0
      %2955 = vmatprep.subr.mxu0 0.0
      %2956 = vmatpush1.xpose.msra.mxu0 0.0
      %2957 = vmatprep.subr.mxu0 0.0
      %2958 = vmatpush1.xpose.msra.mxu0 0.0
      %2959 = vmatprep.subr.mxu0 0.0
      %2960 = vmatpush1.xpose.msra.mxu0 0.0
      %2961 = vmatprep.subr.mxu0 0.0
      %2962 = vmatpush1.xpose.msra.mxu0 0.0
      %2963 = vmatprep.subr.mxu0 0.0
      %2964 = vmatpush1.xpose.msra.mxu0 0.0
      %2965 = vmatprep.subr.mxu0 0.0
      %2966 = vmatpush1.xpose.msra.mxu0 0.0
      %2967 = vmatprep.subr.mxu0 0.0
      %2968 = vmatpush1.xpose.msra.mxu0 0.0
      %2969 = vmatprep.subr.mxu0 0.0
      %2970 = vmatpush1.xpose.msra.mxu0 0.0
      %2971 = vmatprep.subr.mxu0 0.0
      %2972 = vmatpush1.xpose.msra.mxu0 0.0
      %2973 = vmatprep.subr.mxu0 0.0
      %2974 = vmatpush1.xpose.msra.mxu0 0.0
      %2975 = vmatprep.subr.mxu0 0.0
      %2976 = vmatpush1.xpose.msra.mxu0 0.0
      %2977 = vmatprep.subr.mxu0 0.0
      %2978 = vmatpush1.xpose.msra.mxu0 0.0
      %2979 = vmatprep.subr.mxu0 0.0
      %2980 = vmatpush1.xpose.msra.mxu0 0.0
      %2981 = vmatprep.subr.mxu0 0.0
      %2982 = vmatpush1.xpose.msra.mxu0 0.0
      %2983 = vmatprep.subr.mxu0 0.0
      %2984 = vmatpush1.xpose.msra.mxu0 0.0
      %2985 = vmatprep.subr.mxu0 0.0
      %2986 = vmatpush1.xpose.msra.mxu0 %v2953
      %2987 = vmatprep.subr.mxu0 0.0
      %2988 = vmatpush2.xpose.msra.mxu0 0.0
      %2989 = vmatprep.subr.mxu0 0.0
      %2990 = vmatpush2.xpose.msra.mxu0 0.0
      %2991 = vmatprep.subr.mxu0 0.0
      %2992 = vmatpush2.xpose.msra.mxu0 0.0
      %2993 = vmatprep.subr.mxu0 0.0
      %2994 = vmatpush2.xpose.msra.mxu0 0.0
      %2995 = vmatprep.subr.mxu0 0.0
      %2996 = vmatpush2.xpose.msra.mxu0 0.0
      %2997 = vmatprep.subr.mxu0 0.0
      %2998 = vmatpush2.xpose.msra.mxu0 0.0
      %2999 = vmatprep.subr.mxu0 0.0
      %3000 = vmatpush2.xpose.msra.mxu0 0.0
      %3001 = vmatprep.subr.mxu0 0.0
      %3002 = vmatpush2.xpose.msra.mxu0 0.0
      %3003 = vmatprep.subr.mxu0 0.0
      %3004 = vmatpush2.xpose.msra.mxu0 0.0
      %3005 = vmatprep.subr.mxu0 0.0
      %3006 = vmatpush2.xpose.msra.mxu0 0.0
      %3007 = vmatprep.subr.mxu0 0.0
      %3008 = vmatpush2.xpose.msra.mxu0 0.0
      %3009 = vmatprep.subr.mxu0 0.0
      %3010 = vmatpush2.xpose.msra.mxu0 0.0
      %3011 = vmatprep.subr.mxu0 0.0
      %3012 = vmatpush2.xpose.msra.mxu0 0.0
      %3013 = vmatprep.subr.mxu0 0.0
      %3014 = vmatpush2.xpose.msra.mxu0 0.0
      %3015 = vmatprep.subr.mxu0 0.0
      %3016 = vmatpush2.xpose.msra.mxu0 0.0
      %3017 = vmatprep.subr.mxu0 0.0
      %3018 = vmatpush2.xpose.msra.mxu0 0.0
      %3019 = vmatprep.mubr.f32.mxu0 0.0
      %3020 = vmatmul.mubr.f32.gmra.mxu0 %v2951
      %v3021 = vpop.f32.mrf.mxu0
      %v3022 = vadd.f32 0.0, %v3021
      %v3023 = vpop.f32.mrf.mxu0
      %3024 = vdwg.mxu0
      %3025 = vrot.lane.b32.xlu0 %v963, 120
      %v3026 = vpop.permute.xlu0 %3025
      %v3027 = vsel %vm974, %v963, 0
      %v3029 = vsel %vm974, %v3026, 0
      %3031 = vmatprep.subr.mxu0 0.0
      %3032 = vmatpush1.xpose.msra.mxu0 0.0
      %3033 = vmatprep.subr.mxu0 0.0
      %3034 = vmatpush1.xpose.msra.mxu0 0.0
      %3035 = vmatprep.subr.mxu0 0.0
      %3036 = vmatpush1.xpose.msra.mxu0 0.0
      %3037 = vmatprep.subr.mxu0 0.0
      %3038 = vmatpush1.xpose.msra.mxu0 0.0
      %3039 = vmatprep.subr.mxu0 0.0
      %3040 = vmatpush1.xpose.msra.mxu0 0.0
      %3041 = vmatprep.subr.mxu0 0.0
      %3042 = vmatpush1.xpose.msra.mxu0 0.0
      %3043 = vmatprep.subr.mxu0 0.0
      %3044 = vmatpush1.xpose.msra.mxu0 0.0
      %3045 = vmatprep.subr.mxu0 0.0
      %3046 = vmatpush1.xpose.msra.mxu0 0.0
      %3047 = vmatprep.subr.mxu0 0.0
      %3048 = vmatpush1.xpose.msra.mxu0 0.0
      %3049 = vmatprep.subr.mxu0 0.0
      %3050 = vmatpush1.xpose.msra.mxu0 0.0
      %3051 = vmatprep.subr.mxu0 0.0
      %3052 = vmatpush1.xpose.msra.mxu0 0.0
      %3053 = vmatprep.subr.mxu0 0.0
      %3054 = vmatpush1.xpose.msra.mxu0 0.0
      %3055 = vmatprep.subr.mxu0 0.0
      %3056 = vmatpush1.xpose.msra.mxu0 0.0
      %3057 = vmatprep.subr.mxu0 0.0
      %3058 = vmatpush1.xpose.msra.mxu0 0.0
      %3059 = vmatprep.subr.mxu0 0.0
      %3060 = vmatpush1.xpose.msra.mxu0 0.0
      %3061 = vmatprep.subr.mxu0 0.0
      %3062 = vmatpush1.xpose.msra.mxu0 %v3029
      %3063 = vmatprep.subr.mxu0 0.0
      %3064 = vmatpush2.xpose.msra.mxu0 0.0
      %3065 = vmatprep.subr.mxu0 0.0
      %3066 = vmatpush2.xpose.msra.mxu0 0.0
      %3067 = vmatprep.subr.mxu0 0.0
      %3068 = vmatpush2.xpose.msra.mxu0 0.0
      %3069 = vmatprep.subr.mxu0 0.0
      %3070 = vmatpush2.xpose.msra.mxu0 0.0
      %3071 = vmatprep.subr.mxu0 0.0
      %3072 = vmatpush2.xpose.msra.mxu0 0.0
      %3073 = vmatprep.subr.mxu0 0.0
      %3074 = vmatpush2.xpose.msra.mxu0 0.0
      %3075 = vmatprep.subr.mxu0 0.0
      %3076 = vmatpush2.xpose.msra.mxu0 0.0
      %3077 = vmatprep.subr.mxu0 0.0
      %3078 = vmatpush2.xpose.msra.mxu0 0.0
      %3079 = vmatprep.subr.mxu0 0.0
      %3080 = vmatpush2.xpose.msra.mxu0 0.0
      %3081 = vmatprep.subr.mxu0 0.0
      %3082 = vmatpush2.xpose.msra.mxu0 0.0
      %3083 = vmatprep.subr.mxu0 0.0
      %3084 = vmatpush2.xpose.msra.mxu0 0.0
      %3085 = vmatprep.subr.mxu0 0.0
      %3086 = vmatpush2.xpose.msra.mxu0 0.0
      %3087 = vmatprep.subr.mxu0 0.0
      %3088 = vmatpush2.xpose.msra.mxu0 0.0
      %3089 = vmatprep.subr.mxu0 0.0
      %3090 = vmatpush2.xpose.msra.mxu0 0.0
      %3091 = vmatprep.subr.mxu0 0.0
      %3092 = vmatpush2.xpose.msra.mxu0 0.0
      %3093 = vmatprep.subr.mxu0 0.0
      %3094 = vmatpush2.xpose.msra.mxu0 0.0
      %3095 = vmatprep.mubr.f32.mxu0 0.0
      %3096 = vmatmul.mubr.f32.gmra.mxu0 %v3027
      %v3097 = vpop.f32.mrf.mxu0
      %v3098 = vadd.f32 0.0, %v3097
      %v3099 = vpop.f32.mrf.mxu0
      %3100 = vdwg.mxu0
      %3101 = vrot.lane.b32.xlu0 %v965, 120
      %v3102 = vpop.permute.xlu0 %3101
      %v3103 = vsel %vm974, %v965, 0
      %v3105 = vsel %vm974, %v3102, 0
      %3107 = vmatprep.subr.mxu0 0.0
      %3108 = vmatpush1.xpose.msra.mxu0 0.0
      %3109 = vmatprep.subr.mxu0 0.0
      %3110 = vmatpush1.xpose.msra.mxu0 0.0
      %3111 = vmatprep.subr.mxu0 0.0
      %3112 = vmatpush1.xpose.msra.mxu0 0.0
      %3113 = vmatprep.subr.mxu0 0.0
      %3114 = vmatpush1.xpose.msra.mxu0 0.0
      %3115 = vmatprep.subr.mxu0 0.0
      %3116 = vmatpush1.xpose.msra.mxu0 0.0
      %3117 = vmatprep.subr.mxu0 0.0
      %3118 = vmatpush1.xpose.msra.mxu0 0.0
      %3119 = vmatprep.subr.mxu0 0.0
      %3120 = vmatpush1.xpose.msra.mxu0 0.0
      %3121 = vmatprep.subr.mxu0 0.0
      %3122 = vmatpush1.xpose.msra.mxu0 0.0
      %3123 = vmatprep.subr.mxu0 0.0
      %3124 = vmatpush1.xpose.msra.mxu0 0.0
      %3125 = vmatprep.subr.mxu0 0.0
      %3126 = vmatpush1.xpose.msra.mxu0 0.0
      %3127 = vmatprep.subr.mxu0 0.0
      %3128 = vmatpush1.xpose.msra.mxu0 0.0
      %3129 = vmatprep.subr.mxu0 0.0
      %3130 = vmatpush1.xpose.msra.mxu0 0.0
      %3131 = vmatprep.subr.mxu0 0.0
      %3132 = vmatpush1.xpose.msra.mxu0 0.0
      %3133 = vmatprep.subr.mxu0 0.0
      %3134 = vmatpush1.xpose.msra.mxu0 0.0
      %3135 = vmatprep.subr.mxu0 0.0
      %3136 = vmatpush1.xpose.msra.mxu0 0.0
      %3137 = vmatprep.subr.mxu0 0.0
      %3138 = vmatpush1.xpose.msra.mxu0 %v3105
      %3139 = vmatprep.subr.mxu0 0.0
      %3140 = vmatpush2.xpose.msra.mxu0 0.0
      %3141 = vmatprep.subr.mxu0 0.0
      %3142 = vmatpush2.xpose.msra.mxu0 0.0
      %3143 = vmatprep.subr.mxu0 0.0
      %3144 = vmatpush2.xpose.msra.mxu0 0.0
      %3145 = vmatprep.subr.mxu0 0.0
      %3146 = vmatpush2.xpose.msra.mxu0 0.0
      %3147 = vmatprep.subr.mxu0 0.0
      %3148 = vmatpush2.xpose.msra.mxu0 0.0
      %3149 = vmatprep.subr.mxu0 0.0
      %3150 = vmatpush2.xpose.msra.mxu0 0.0
      %3151 = vmatprep.subr.mxu0 0.0
      %3152 = vmatpush2.xpose.msra.mxu0 0.0
      %3153 = vmatprep.subr.mxu0 0.0
      %3154 = vmatpush2.xpose.msra.mxu0 0.0
      %3155 = vmatprep.subr.mxu0 0.0
      %3156 = vmatpush2.xpose.msra.mxu0 0.0
      %3157 = vmatprep.subr.mxu0 0.0
      %3158 = vmatpush2.xpose.msra.mxu0 0.0
      %3159 = vmatprep.subr.mxu0 0.0
      %3160 = vmatpush2.xpose.msra.mxu0 0.0
      %3161 = vmatprep.subr.mxu0 0.0
      %3162 = vmatpush2.xpose.msra.mxu0 0.0
      %3163 = vmatprep.subr.mxu0 0.0
      %3164 = vmatpush2.xpose.msra.mxu0 0.0
      %3165 = vmatprep.subr.mxu0 0.0
      %3166 = vmatpush2.xpose.msra.mxu0 0.0
      %3167 = vmatprep.subr.mxu0 0.0
      %3168 = vmatpush2.xpose.msra.mxu0 0.0
      %3169 = vmatprep.subr.mxu0 0.0
      %3170 = vmatpush2.xpose.msra.mxu0 0.0
      %3171 = vmatprep.mubr.f32.mxu0 0.0
      %3172 = vmatmul.mubr.f32.gmra.mxu0 %v3103
      %v3173 = vpop.f32.mrf.mxu0
      %v3174 = vadd.f32 0.0, %v3173
      %v3175 = vpop.f32.mrf.mxu0
      %3176 = vdwg.mxu0
      %3177 = vrot.lane.b32.xlu0 %v967, 120
      %v3178 = vpop.permute.xlu0 %3177
      %v3179 = vsel %vm974, %v967, 0
      %v3181 = vsel %vm974, %v3178, 0
      %3183 = vmatprep.subr.mxu0 0.0
      %3184 = vmatpush1.xpose.msra.mxu0 0.0
      %3185 = vmatprep.subr.mxu0 0.0
      %3186 = vmatpush1.xpose.msra.mxu0 0.0
      %3187 = vmatprep.subr.mxu0 0.0
      %3188 = vmatpush1.xpose.msra.mxu0 0.0
      %3189 = vmatprep.subr.mxu0 0.0
      %3190 = vmatpush1.xpose.msra.mxu0 0.0
      %3191 = vmatprep.subr.mxu0 0.0
      %3192 = vmatpush1.xpose.msra.mxu0 0.0
      %3193 = vmatprep.subr.mxu0 0.0
      %3194 = vmatpush1.xpose.msra.mxu0 0.0
      %3195 = vmatprep.subr.mxu0 0.0
      %3196 = vmatpush1.xpose.msra.mxu0 0.0
      %3197 = vmatprep.subr.mxu0 0.0
      %3198 = vmatpush1.xpose.msra.mxu0 0.0
      %3199 = vmatprep.subr.mxu0 0.0
      %3200 = vmatpush1.xpose.msra.mxu0 0.0
      %3201 = vmatprep.subr.mxu0 0.0
      %3202 = vmatpush1.xpose.msra.mxu0 0.0
      %3203 = vmatprep.subr.mxu0 0.0
      %3204 = vmatpush1.xpose.msra.mxu0 0.0
      %3205 = vmatprep.subr.mxu0 0.0
      %3206 = vmatpush1.xpose.msra.mxu0 0.0
      %3207 = vmatprep.subr.mxu0 0.0
      %3208 = vmatpush1.xpose.msra.mxu0 0.0
      %3209 = vmatprep.subr.mxu0 0.0
      %3210 = vmatpush1.xpose.msra.mxu0 0.0
      %3211 = vmatprep.subr.mxu0 0.0
      %3212 = vmatpush1.xpose.msra.mxu0 0.0
      %3213 = vmatprep.subr.mxu0 0.0
      %3214 = vmatpush1.xpose.msra.mxu0 %v3181
      %3215 = vmatprep.subr.mxu0 0.0
      %3216 = vmatpush2.xpose.msra.mxu0 0.0
      %3217 = vmatprep.subr.mxu0 0.0
      %3218 = vmatpush2.xpose.msra.mxu0 0.0
      %3219 = vmatprep.subr.mxu0 0.0
      %3220 = vmatpush2.xpose.msra.mxu0 0.0
      %3221 = vmatprep.subr.mxu0 0.0
      %3222 = vmatpush2.xpose.msra.mxu0 0.0
      %3223 = vmatprep.subr.mxu0 0.0
      %3224 = vmatpush2.xpose.msra.mxu0 0.0
      %3225 = vmatprep.subr.mxu0 0.0
      %3226 = vmatpush2.xpose.msra.mxu0 0.0
      %3227 = vmatprep.subr.mxu0 0.0
      %3228 = vmatpush2.xpose.msra.mxu0 0.0
      %3229 = vmatprep.subr.mxu0 0.0
      %3230 = vmatpush2.xpose.msra.mxu0 0.0
      %3231 = vmatprep.subr.mxu0 0.0
      %3232 = vmatpush2.xpose.msra.mxu0 0.0
      %3233 = vmatprep.subr.mxu0 0.0
      %3234 = vmatpush2.xpose.msra.mxu0 0.0
      %3235 = vmatprep.subr.mxu0 0.0
      %3236 = vmatpush2.xpose.msra.mxu0 0.0
      %3237 = vmatprep.subr.mxu0 0.0
      %3238 = vmatpush2.xpose.msra.mxu0 0.0
      %3239 = vmatprep.subr.mxu0 0.0
      %3240 = vmatpush2.xpose.msra.mxu0 0.0
      %3241 = vmatprep.subr.mxu0 0.0
      %3242 = vmatpush2.xpose.msra.mxu0 0.0
      %3243 = vmatprep.subr.mxu0 0.0
      %3244 = vmatpush2.xpose.msra.mxu0 0.0
      %3245 = vmatprep.subr.mxu0 0.0
      %3246 = vmatpush2.xpose.msra.mxu0 0.0
      %3247 = vmatprep.mubr.f32.mxu0 0.0
      %3248 = vmatmul.mubr.f32.gmra.mxu0 %v3179
      %v3249 = vpop.f32.mrf.mxu0
      %v3250 = vadd.f32 0.0, %v3249
      %v3251 = vpop.f32.mrf.mxu0
      %3252 = vdwg.mxu0
      %3253 = vrot.lane.b32.xlu0 %v969, 120
      %v3254 = vpop.permute.xlu0 %3253
      %v3255 = vsel %vm974, %v969, 0
      %v3257 = vsel %vm974, %v3254, 0
      %3259 = vmatprep.subr.mxu0 0.0
      %3260 = vmatpush1.xpose.msra.mxu0 0.0
      %3261 = vmatprep.subr.mxu0 0.0
      %3262 = vmatpush1.xpose.msra.mxu0 0.0
      %3263 = vmatprep.subr.mxu0 0.0
      %3264 = vmatpush1.xpose.msra.mxu0 0.0
      %3265 = vmatprep.subr.mxu0 0.0
      %3266 = vmatpush1.xpose.msra.mxu0 0.0
      %3267 = vmatprep.subr.mxu0 0.0
      %3268 = vmatpush1.xpose.msra.mxu0 0.0
      %3269 = vmatprep.subr.mxu0 0.0
      %3270 = vmatpush1.xpose.msra.mxu0 0.0
      %3271 = vmatprep.subr.mxu0 0.0
      %3272 = vmatpush1.xpose.msra.mxu0 0.0
      %3273 = vmatprep.subr.mxu0 0.0
      %3274 = vmatpush1.xpose.msra.mxu0 0.0
      %3275 = vmatprep.subr.mxu0 0.0
      %3276 = vmatpush1.xpose.msra.mxu0 0.0
      %3277 = vmatprep.subr.mxu0 0.0
      %3278 = vmatpush1.xpose.msra.mxu0 0.0
      %3279 = vmatprep.subr.mxu0 0.0
      %3280 = vmatpush1.xpose.msra.mxu0 0.0
      %3281 = vmatprep.subr.mxu0 0.0
      %3282 = vmatpush1.xpose.msra.mxu0 0.0
      %3283 = vmatprep.subr.mxu0 0.0
      %3284 = vmatpush1.xpose.msra.mxu0 0.0
      %3285 = vmatprep.subr.mxu0 0.0
      %3286 = vmatpush1.xpose.msra.mxu0 0.0
      %3287 = vmatprep.subr.mxu0 0.0
      %3288 = vmatpush1.xpose.msra.mxu0 0.0
      %3289 = vmatprep.subr.mxu0 0.0
      %3290 = vmatpush1.xpose.msra.mxu0 %v3257
      %3291 = vmatprep.subr.mxu0 0.0
      %3292 = vmatpush2.xpose.msra.mxu0 0.0
      %3293 = vmatprep.subr.mxu0 0.0
      %3294 = vmatpush2.xpose.msra.mxu0 0.0
      %3295 = vmatprep.subr.mxu0 0.0
      %3296 = vmatpush2.xpose.msra.mxu0 0.0
      %3297 = vmatprep.subr.mxu0 0.0
      %3298 = vmatpush2.xpose.msra.mxu0 0.0
      %3299 = vmatprep.subr.mxu0 0.0
      %3300 = vmatpush2.xpose.msra.mxu0 0.0
      %3301 = vmatprep.subr.mxu0 0.0
      %3302 = vmatpush2.xpose.msra.mxu0 0.0
      %3303 = vmatprep.subr.mxu0 0.0
      %3304 = vmatpush2.xpose.msra.mxu0 0.0
      %3305 = vmatprep.subr.mxu0 0.0
      %3306 = vmatpush2.xpose.msra.mxu0 0.0
      %3307 = vmatprep.subr.mxu0 0.0
      %3308 = vmatpush2.xpose.msra.mxu0 0.0
      %3309 = vmatprep.subr.mxu0 0.0
      %3310 = vmatpush2.xpose.msra.mxu0 0.0
      %3311 = vmatprep.subr.mxu0 0.0
      %3312 = vmatpush2.xpose.msra.mxu0 0.0
      %3313 = vmatprep.subr.mxu0 0.0
      %3314 = vmatpush2.xpose.msra.mxu0 0.0
      %3315 = vmatprep.subr.mxu0 0.0
      %3316 = vmatpush2.xpose.msra.mxu0 0.0
      %3317 = vmatprep.subr.mxu0 0.0
      %3318 = vmatpush2.xpose.msra.mxu0 0.0
      %3319 = vmatprep.subr.mxu0 0.0
      %3320 = vmatpush2.xpose.msra.mxu0 0.0
      %3321 = vmatprep.subr.mxu0 0.0
      %3322 = vmatpush2.xpose.msra.mxu0 0.0
      %3323 = vmatprep.mubr.f32.mxu0 0.0
      %3324 = vmatmul.mubr.f32.gmra.mxu0 %v3255
      %v3325 = vpop.f32.mrf.mxu0
      %v3326 = vadd.f32 0.0, %v3325
      %v3327 = vpop.f32.mrf.mxu0
      %3328 = vdwg.mxu0
      %3329 = vrot.lane.b32.xlu0 %v971, 120
      %v3330 = vpop.permute.xlu0 %3329
      %v3331 = vsel %vm974, %v971, 0
      %v3333 = vsel %vm974, %v3330, 0
      %3335 = vmatprep.subr.mxu0 0.0
      %3336 = vmatpush1.xpose.msra.mxu0 0.0
      %3337 = vmatprep.subr.mxu0 0.0
      %3338 = vmatpush1.xpose.msra.mxu0 0.0
      %3339 = vmatprep.subr.mxu0 0.0
      %3340 = vmatpush1.xpose.msra.mxu0 0.0
      %3341 = vmatprep.subr.mxu0 0.0
      %3342 = vmatpush1.xpose.msra.mxu0 0.0
      %3343 = vmatprep.subr.mxu0 0.0
      %3344 = vmatpush1.xpose.msra.mxu0 0.0
      %3345 = vmatprep.subr.mxu0 0.0
      %3346 = vmatpush1.xpose.msra.mxu0 0.0
      %3347 = vmatprep.subr.mxu0 0.0
      %3348 = vmatpush1.xpose.msra.mxu0 0.0
      %3349 = vmatprep.subr.mxu0 0.0
      %3350 = vmatpush1.xpose.msra.mxu0 0.0
      %3351 = vmatprep.subr.mxu0 0.0
      %3352 = vmatpush1.xpose.msra.mxu0 0.0
      %3353 = vmatprep.subr.mxu0 0.0
      %3354 = vmatpush1.xpose.msra.mxu0 0.0
      %3355 = vmatprep.subr.mxu0 0.0
      %3356 = vmatpush1.xpose.msra.mxu0 0.0
      %3357 = vmatprep.subr.mxu0 0.0
      %3358 = vmatpush1.xpose.msra.mxu0 0.0
      %3359 = vmatprep.subr.mxu0 0.0
      %3360 = vmatpush1.xpose.msra.mxu0 0.0
      %3361 = vmatprep.subr.mxu0 0.0
      %3362 = vmatpush1.xpose.msra.mxu0 0.0
      %3363 = vmatprep.subr.mxu0 0.0
      %3364 = vmatpush1.xpose.msra.mxu0 0.0
      %3365 = vmatprep.subr.mxu0 0.0
      %3366 = vmatpush1.xpose.msra.mxu0 %v3333
      %3367 = vmatprep.subr.mxu0 0.0
      %3368 = vmatpush2.xpose.msra.mxu0 0.0
      %3369 = vmatprep.subr.mxu0 0.0
      %3370 = vmatpush2.xpose.msra.mxu0 0.0
      %3371 = vmatprep.subr.mxu0 0.0
      %3372 = vmatpush2.xpose.msra.mxu0 0.0
      %3373 = vmatprep.subr.mxu0 0.0
      %3374 = vmatpush2.xpose.msra.mxu0 0.0
      %3375 = vmatprep.subr.mxu0 0.0
      %3376 = vmatpush2.xpose.msra.mxu0 0.0
      %3377 = vmatprep.subr.mxu0 0.0
      %3378 = vmatpush2.xpose.msra.mxu0 0.0
      %3379 = vmatprep.subr.mxu0 0.0
      %3380 = vmatpush2.xpose.msra.mxu0 0.0
      %3381 = vmatprep.subr.mxu0 0.0
      %3382 = vmatpush2.xpose.msra.mxu0 0.0
      %3383 = vmatprep.subr.mxu0 0.0
      %3384 = vmatpush2.xpose.msra.mxu0 0.0
      %3385 = vmatprep.subr.mxu0 0.0
      %3386 = vmatpush2.xpose.msra.mxu0 0.0
      %3387 = vmatprep.subr.mxu0 0.0
      %3388 = vmatpush2.xpose.msra.mxu0 0.0
      %3389 = vmatprep.subr.mxu0 0.0
      %3390 = vmatpush2.xpose.msra.mxu0 0.0
      %3391 = vmatprep.subr.mxu0 0.0
      %3392 = vmatpush2.xpose.msra.mxu0 0.0
      %3393 = vmatprep.subr.mxu0 0.0
      %3394 = vmatpush2.xpose.msra.mxu0 0.0
      %3395 = vmatprep.subr.mxu0 0.0
      %3396 = vmatpush2.xpose.msra.mxu0 0.0
      %3397 = vmatprep.subr.mxu0 0.0
      %3398 = vmatpush2.xpose.msra.mxu0 0.0
      %3399 = vmatprep.mubr.f32.mxu0 0.0
      %3400 = vmatmul.mubr.f32.gmra.mxu0 %v3331
      %v3401 = vpop.f32.mrf.mxu0
      %v3402 = vadd.f32 0.0, %v3401
      %v3403 = vpop.f32.mrf.mxu0
      %3404 = vdwg.mxu0
      %v3405 = vsel %vm974, %v1046, -inf
      %3406 = vmax.xlane.f32.xlu0 %v3405
      %v3407 = vpop.xlane.xlu0 %3406
      %v3408 = vsel %vm974, %v1122, -inf
      %3409 = vmax.xlane.f32.xlu0 %v3408
      %v3410 = vpop.xlane.xlu0 %3409
      %v3411 = vsel %vm974, %v1198, -inf
      %3412 = vmax.xlane.f32.xlu0 %v3411
      %v3413 = vpop.xlane.xlu0 %3412
      %v3414 = vsel %vm974, %v1274, -inf
      %3415 = vmax.xlane.f32.xlu0 %v3414
      %v3416 = vpop.xlane.xlu0 %3415
      %v3417 = vsel %vm974, %v1350, -inf
      %3418 = vmax.xlane.f32.xlu0 %v3417
      %v3419 = vpop.xlane.xlu0 %3418
      %v3420 = vsel %vm974, %v1426, -inf
      %3421 = vmax.xlane.f32.xlu0 %v3420
      %v3422 = vpop.xlane.xlu0 %3421
      %v3423 = vsel %vm974, %v1502, -inf
      %3424 = vmax.xlane.f32.xlu0 %v3423
      %v3425 = vpop.xlane.xlu0 %3424
      %v3426 = vsel %vm974, %v1578, -inf
      %3427 = vmax.xlane.f32.xlu0 %v3426
      %v3428 = vpop.xlane.xlu0 %3427
      %v3429 = vsel %vm974, %v1654, -inf
      %3430 = vmax.xlane.f32.xlu0 %v3429
      %v3431 = vpop.xlane.xlu0 %3430
      %v3432 = vsel %vm974, %v1730, -inf
      %3433 = vmax.xlane.f32.xlu0 %v3432
      %v3434 = vpop.xlane.xlu0 %3433
      %v3435 = vsel %vm974, %v1806, -inf
      %3436 = vmax.xlane.f32.xlu0 %v3435
      %v3437 = vpop.xlane.xlu0 %3436
      %v3438 = vsel %vm974, %v1882, -inf
      %3439 = vmax.xlane.f32.xlu0 %v3438
      %v3440 = vpop.xlane.xlu0 %3439
      %v3441 = vsel %vm974, %v1958, -inf
      %3442 = vmax.xlane.f32.xlu0 %v3441
      %v3443 = vpop.xlane.xlu0 %3442
      %v3444 = vsel %vm974, %v2034, -inf
      %3445 = vmax.xlane.f32.xlu0 %v3444
      %v3446 = vpop.xlane.xlu0 %3445
      %v3447 = vsel %vm974, %v2110, -inf
      %3448 = vmax.xlane.f32.xlu0 %v3447
      %v3449 = vpop.xlane.xlu0 %3448
      %v3450 = vsel %vm974, %v2186, -inf
      %3451 = vmax.xlane.f32.xlu0 %v3450
      %v3452 = vpop.xlane.xlu0 %3451
      %v3453 = vsel %vm974, %v2262, -inf
      %3454 = vmax.xlane.f32.xlu0 %v3453
      %v3455 = vpop.xlane.xlu0 %3454
      %v3456 = vsel %vm974, %v2338, -inf
      %3457 = vmax.xlane.f32.xlu0 %v3456
      %v3458 = vpop.xlane.xlu0 %3457
      %v3459 = vsel %vm974, %v2414, -inf
      %3460 = vmax.xlane.f32.xlu0 %v3459
      %v3461 = vpop.xlane.xlu0 %3460
      %v3462 = vsel %vm974, %v2490, -inf
      %3463 = vmax.xlane.f32.xlu0 %v3462
      %v3464 = vpop.xlane.xlu0 %3463
      %v3465 = vsel %vm974, %v2566, -inf
      %3466 = vmax.xlane.f32.xlu0 %v3465
      %v3467 = vpop.xlane.xlu0 %3466
      %v3468 = vsel %vm974, %v2642, -inf
      %3469 = vmax.xlane.f32.xlu0 %v3468
      %v3470 = vpop.xlane.xlu0 %3469
      %v3471 = vsel %vm974, %v2718, -inf
      %3472 = vmax.xlane.f32.xlu0 %v3471
      %v3473 = vpop.xlane.xlu0 %3472
      %v3474 = vsel %vm974, %v2794, -inf
      %3475 = vmax.xlane.f32.xlu0 %v3474
      %v3476 = vpop.xlane.xlu0 %3475
      %v3477 = vsel %vm974, %v2870, -inf
      %3478 = vmax.xlane.f32.xlu0 %v3477
      %v3479 = vpop.xlane.xlu0 %3478
      %v3480 = vsel %vm974, %v2946, -inf
      %3481 = vmax.xlane.f32.xlu0 %v3480
      %v3482 = vpop.xlane.xlu0 %3481
      %v3483 = vsel %vm974, %v3022, -inf
      %3484 = vmax.xlane.f32.xlu0 %v3483
      %v3485 = vpop.xlane.xlu0 %3484
      %v3486 = vsel %vm974, %v3098, -inf
      %3487 = vmax.xlane.f32.xlu0 %v3486
      %v3488 = vpop.xlane.xlu0 %3487
      %v3489 = vsel %vm974, %v3174, -inf
      %3490 = vmax.xlane.f32.xlu0 %v3489
      %v3491 = vpop.xlane.xlu0 %3490
      %v3492 = vsel %vm974, %v3250, -inf
      %3493 = vmax.xlane.f32.xlu0 %v3492
      %v3494 = vpop.xlane.xlu0 %3493
      %v3495 = vsel %vm974, %v3326, -inf
      %3496 = vmax.xlane.f32.xlu0 %v3495
      %v3497 = vpop.xlane.xlu0 %3496
      %v3498 = vsel %vm974, %v3402, -inf
      %3499 = vmax.xlane.f32.xlu0 %v3498
      %v3500 = vpop.xlane.xlu0 %3499
      %v3501 = vsub.f32 %v1046, %v3407
      %v3502 = vsub.f32 %v1122, %v3410
      %v3503 = vsub.f32 %v1198, %v3413
      %v3504 = vsub.f32 %v1274, %v3416
      %v3505 = vsub.f32 %v1350, %v3419
      %v3506 = vsub.f32 %v1426, %v3422
      %v3507 = vsub.f32 %v1502, %v3425
      %v3508 = vsub.f32 %v1578, %v3428
      %v3509 = vsub.f32 %v1654, %v3431
      %v3510 = vsub.f32 %v1730, %v3434
      %v3511 = vsub.f32 %v1806, %v3437
      %v3512 = vsub.f32 %v1882, %v3440
      %v3513 = vsub.f32 %v1958, %v3443
      %v3514 = vsub.f32 %v2034, %v3446
      %v3515 = vsub.f32 %v2110, %v3449
      %v3516 = vsub.f32 %v2186, %v3452
      %v3517 = vsub.f32 %v2262, %v3455
      %v3518 = vsub.f32 %v2338, %v3458
      %v3519 = vsub.f32 %v2414, %v3461
      %v3520 = vsub.f32 %v2490, %v3464
      %v3521 = vsub.f32 %v2566, %v3467
      %v3522 = vsub.f32 %v2642, %v3470
      %v3523 = vsub.f32 %v2718, %v3473
      %v3524 = vsub.f32 %v2794, %v3476
      %v3525 = vsub.f32 %v2870, %v3479
      %v3526 = vsub.f32 %v2946, %v3482
      %v3527 = vsub.f32 %v3022, %v3485
      %v3528 = vsub.f32 %v3098, %v3488
      %v3529 = vsub.f32 %v3174, %v3491
      %v3530 = vsub.f32 %v3250, %v3494
      %v3531 = vsub.f32 %v3326, %v3497
      %v3532 = vsub.f32 %v3402, %v3500
      %v3533 = vmul.f32 %v3501, 1.442695
      %v3534 = vpow.pop %v3533
      %v3535 = vmul.f32 %v3502, 1.442695
      %v3536 = vpow.pop %v3535
      %v3537 = vmul.f32 %v3503, 1.442695
      %v3538 = vpow.pop %v3537
      %v3539 = vmul.f32 %v3504, 1.442695
      %v3540 = vpow.pop %v3539
      %v3541 = vmul.f32 %v3505, 1.442695
      %v3542 = vpow.pop %v3541
      %v3543 = vmul.f32 %v3506, 1.442695
      %v3544 = vpow.pop %v3543
      %v3545 = vmul.f32 %v3507, 1.442695
      %v3546 = vpow.pop %v3545
      %v3547 = vmul.f32 %v3508, 1.442695
      %v3548 = vpow.pop %v3547
      %v3549 = vmul.f32 %v3509, 1.442695
      %v3550 = vpow.pop %v3549
      %v3551 = vmul.f32 %v3510, 1.442695
      %v3552 = vpow.pop %v3551
      %v3553 = vmul.f32 %v3511, 1.442695
      %v3554 = vpow.pop %v3553
      %v3555 = vmul.f32 %v3512, 1.442695
      %v3556 = vpow.pop %v3555
      %v3557 = vmul.f32 %v3513, 1.442695
      %v3558 = vpow.pop %v3557
      %v3559 = vmul.f32 %v3514, 1.442695
      %v3560 = vpow.pop %v3559
      %v3561 = vmul.f32 %v3515, 1.442695
      %v3562 = vpow.pop %v3561
      %v3563 = vmul.f32 %v3516, 1.442695
      %v3564 = vpow.pop %v3563
      %v3565 = vmul.f32 %v3517, 1.442695
      %v3566 = vpow.pop %v3565
      %v3567 = vmul.f32 %v3518, 1.442695
      %v3568 = vpow.pop %v3567
      %v3569 = vmul.f32 %v3519, 1.442695
      %v3570 = vpow.pop %v3569
      %v3571 = vmul.f32 %v3520, 1.442695
      %v3572 = vpow.pop %v3571
      %v3573 = vmul.f32 %v3521, 1.442695
      %v3574 = vpow.pop %v3573
      %v3575 = vmul.f32 %v3522, 1.442695
      %v3576 = vpow.pop %v3575
      %v3577 = vmul.f32 %v3523, 1.442695
      %v3578 = vpow.pop %v3577
      %v3579 = vmul.f32 %v3524, 1.442695
      %v3580 = vpow.pop %v3579
      %v3581 = vmul.f32 %v3525, 1.442695
      %v3582 = vpow.pop %v3581
      %v3583 = vmul.f32 %v3526, 1.442695
      %v3584 = vpow.pop %v3583
      %v3585 = vmul.f32 %v3527, 1.442695
      %v3586 = vpow.pop %v3585
      %v3587 = vmul.f32 %v3528, 1.442695
      %v3588 = vpow.pop %v3587
      %v3589 = vmul.f32 %v3529, 1.442695
      %v3590 = vpow.pop %v3589
      %v3591 = vmul.f32 %v3530, 1.442695
      %v3592 = vpow.pop %v3591
      %v3593 = vmul.f32 %v3531, 1.442695
      %v3594 = vpow.pop %v3593
      %v3595 = vmul.f32 %v3532, 1.442695
      %v3596 = vpow.pop %v3595
      %v3597 = vsel %vm974, %v3534, 0.0
      %3598 = vadd.xlane.f32.xlu0 %v3597
      %v3599 = vpop.xlane.xlu0 %3598
      %v3600 = vsel %vm974, %v3536, 0.0
      %3601 = vadd.xlane.f32.xlu0 %v3600
      %v3602 = vpop.xlane.xlu0 %3601
      %v3603 = vsel %vm974, %v3538, 0.0
      %3604 = vadd.xlane.f32.xlu0 %v3603
      %v3605 = vpop.xlane.xlu0 %3604
      %v3606 = vsel %vm974, %v3540, 0.0
      %3607 = vadd.xlane.f32.xlu0 %v3606
      %v3608 = vpop.xlane.xlu0 %3607
      %v3609 = vsel %vm974, %v3542, 0.0
      %3610 = vadd.xlane.f32.xlu0 %v3609
      %v3611 = vpop.xlane.xlu0 %3610
      %v3612 = vsel %vm974, %v3544, 0.0
      %3613 = vadd.xlane.f32.xlu0 %v3612
      %v3614 = vpop.xlane.xlu0 %3613
      %v3615 = vsel %vm974, %v3546, 0.0
      %3616 = vadd.xlane.f32.xlu0 %v3615
      %v3617 = vpop.xlane.xlu0 %3616
      %v3618 = vsel %vm974, %v3548, 0.0
      %3619 = vadd.xlane.f32.xlu0 %v3618
      %v3620 = vpop.xlane.xlu0 %3619
      %v3621 = vsel %vm974, %v3550, 0.0
      %3622 = vadd.xlane.f32.xlu0 %v3621
      %v3623 = vpop.xlane.xlu0 %3622
      %v3624 = vsel %vm974, %v3552, 0.0
      %3625 = vadd.xlane.f32.xlu0 %v3624
      %v3626 = vpop.xlane.xlu0 %3625
      %v3627 = vsel %vm974, %v3554, 0.0
      %3628 = vadd.xlane.f32.xlu0 %v3627
      %v3629 = vpop.xlane.xlu0 %3628
      %v3630 = vsel %vm974, %v3556, 0.0
      %3631 = vadd.xlane.f32.xlu0 %v3630
      %v3632 = vpop.xlane.xlu0 %3631
      %v3633 = vsel %vm974, %v3558, 0.0
      %3634 = vadd.xlane.f32.xlu0 %v3633
      %v3635 = vpop.xlane.xlu0 %3634
      %v3636 = vsel %vm974, %v3560, 0.0
      %3637 = vadd.xlane.f32.xlu0 %v3636
      %v3638 = vpop.xlane.xlu0 %3637
      %v3639 = vsel %vm974, %v3562, 0.0
      %3640 = vadd.xlane.f32.xlu0 %v3639
      %v3641 = vpop.xlane.xlu0 %3640
      %v3642 = vsel %vm974, %v3564, 0.0
      %3643 = vadd.xlane.f32.xlu0 %v3642
      %v3644 = vpop.xlane.xlu0 %3643
      %v3645 = vsel %vm974, %v3566, 0.0
      %3646 = vadd.xlane.f32.xlu0 %v3645
      %v3647 = vpop.xlane.xlu0 %3646
      %v3648 = vsel %vm974, %v3568, 0.0
      %3649 = vadd.xlane.f32.xlu0 %v3648
      %v3650 = vpop.xlane.xlu0 %3649
      %v3651 = vsel %vm974, %v3570, 0.0
      %3652 = vadd.xlane.f32.xlu0 %v3651
      %v3653 = vpop.xlane.xlu0 %3652
      %v3654 = vsel %vm974, %v3572, 0.0
      %3655 = vadd.xlane.f32.xlu0 %v3654
      %v3656 = vpop.xlane.xlu0 %3655
      %v3657 = vsel %vm974, %v3574, 0.0
      %3658 = vadd.xlane.f32.xlu0 %v3657
      %v3659 = vpop.xlane.xlu0 %3658
      %v3660 = vsel %vm974, %v3576, 0.0
      %3661 = vadd.xlane.f32.xlu0 %v3660
      %v3662 = vpop.xlane.xlu0 %3661
      %v3663 = vsel %vm974, %v3578, 0.0
      %3664 = vadd.xlane.f32.xlu0 %v3663
      %v3665 = vpop.xlane.xlu0 %3664
      %v3666 = vsel %vm974, %v3580, 0.0
      %3667 = vadd.xlane.f32.xlu0 %v3666
      %v3668 = vpop.xlane.xlu0 %3667
      %v3669 = vsel %vm974, %v3582, 0.0
      %3670 = vadd.xlane.f32.xlu0 %v3669
      %v3671 = vpop.xlane.xlu0 %3670
      %v3672 = vsel %vm974, %v3584, 0.0
      %3673 = vadd.xlane.f32.xlu0 %v3672
      %v3674 = vpop.xlane.xlu0 %3673
      %v3675 = vsel %vm974, %v3586, 0.0
      %3676 = vadd.xlane.f32.xlu0 %v3675
      %v3677 = vpop.xlane.xlu0 %3676
      %v3678 = vsel %vm974, %v3588, 0.0
      %3679 = vadd.xlane.f32.xlu0 %v3678
      %v3680 = vpop.xlane.xlu0 %3679
      %v3681 = vsel %vm974, %v3590, 0.0
      %3682 = vadd.xlane.f32.xlu0 %v3681
      %v3683 = vpop.xlane.xlu0 %3682
      %v3684 = vsel %vm974, %v3592, 0.0
      %3685 = vadd.xlane.f32.xlu0 %v3684
      %v3686 = vpop.xlane.xlu0 %3685
      %v3687 = vsel %vm974, %v3594, 0.0
      %3688 = vadd.xlane.f32.xlu0 %v3687
      %v3689 = vpop.xlane.xlu0 %3688
      %v3690 = vsel %vm974, %v3596, 0.0
      %3691 = vadd.xlane.f32.xlu0 %v3690
      %v3692 = vpop.xlane.xlu0 %3691
      %v3693 = vrcp.pop %v3599
      %v3694 = vrcp.pop %v3602
      %v3695 = vrcp.pop %v3605
      %v3696 = vrcp.pop %v3608
      %v3697 = vrcp.pop %v3611
      %v3698 = vrcp.pop %v3614
      %v3699 = vrcp.pop %v3617
      %v3700 = vrcp.pop %v3620
      %v3701 = vrcp.pop %v3623
      %v3702 = vrcp.pop %v3626
      %v3703 = vrcp.pop %v3629
      %v3704 = vrcp.pop %v3632
      %v3705 = vrcp.pop %v3635
      %v3706 = vrcp.pop %v3638
      %v3707 = vrcp.pop %v3641
      %v3708 = vrcp.pop %v3644
      %v3709 = vrcp.pop %v3647
      %v3710 = vrcp.pop %v3650
      %v3711 = vrcp.pop %v3653
      %v3712 = vrcp.pop %v3656
      %v3713 = vrcp.pop %v3659
      %v3714 = vrcp.pop %v3662
      %v3715 = vrcp.pop %v3665
      %v3716 = vrcp.pop %v3668
      %v3717 = vrcp.pop %v3671
      %v3718 = vrcp.pop %v3674
      %v3719 = vrcp.pop %v3677
      %v3720 = vrcp.pop %v3680
      %v3721 = vrcp.pop %v3683
      %v3722 = vrcp.pop %v3686
      %v3723 = vrcp.pop %v3689
      %v3724 = vrcp.pop %v3692
      %v3725 = vmul.f32 %v3534, %v3693
      %v3726 = vmul.f32 %v3536, %v3694
      %v3727 = vmul.f32 %v3538, %v3695
      %v3728 = vmul.f32 %v3540, %v3696
      %v3729 = vmul.f32 %v3542, %v3697
      %v3730 = vmul.f32 %v3544, %v3698
      %v3731 = vmul.f32 %v3546, %v3699
      %v3732 = vmul.f32 %v3548, %v3700
      %v3733 = vmul.f32 %v3550, %v3701
      %v3734 = vmul.f32 %v3552, %v3702
      %v3735 = vmul.f32 %v3554, %v3703
      %v3736 = vmul.f32 %v3556, %v3704
      %v3737 = vmul.f32 %v3558, %v3705
      %v3738 = vmul.f32 %v3560, %v3706
      %v3739 = vmul.f32 %v3562, %v3707
      %v3740 = vmul.f32 %v3564, %v3708
      %v3741 = vmul.f32 %v3566, %v3709
      %v3742 = vmul.f32 %v3568, %v3710
      %v3743 = vmul.f32 %v3570, %v3711
      %v3744 = vmul.f32 %v3572, %v3712
      %v3745 = vmul.f32 %v3574, %v3713
      %v3746 = vmul.f32 %v3576, %v3714
      %v3747 = vmul.f32 %v3578, %v3715
      %v3748 = vmul.f32 %v3580, %v3716
      %v3749 = vmul.f32 %v3582, %v3717
      %v3750 = vmul.f32 %v3584, %v3718
      %v3751 = vmul.f32 %v3586, %v3719
      %v3752 = vmul.f32 %v3588, %v3720
      %v3753 = vmul.f32 %v3590, %v3721
      %v3754 = vmul.f32 %v3592, %v3722
      %v3755 = vmul.f32 %v3594, %v3723
      %v3756 = vmul.f32 %v3596, %v3724
      %3757 = vrot.lane.b32.xlu0 %v878, 112
      %v3758 = vpop.permute.xlu0 %3757
      %v3761 = vsel %vm974, %v3725, 0
      %3763 = vmatprep.subr.mxu0 0.0
      %3764 = vmatpush1.msra.mxu0 0.0
      %3765 = vmatprep.subr.mxu0 0.0
      %3766 = vmatpush1.msra.mxu0 0.0
      %3767 = vmatprep.subr.mxu0 0.0
      %3768 = vmatpush1.msra.mxu0 0.0
      %3769 = vmatprep.subr.mxu0 0.0
      %3770 = vmatpush1.msra.mxu0 0.0
      %3771 = vmatprep.subr.mxu0 0.0
      %3772 = vmatpush1.msra.mxu0 0.0
      %3773 = vmatprep.subr.mxu0 0.0
      %3774 = vmatpush1.msra.mxu0 0.0
      %3775 = vmatprep.subr.mxu0 0.0
      %3776 = vmatpush1.msra.mxu0 0.0
      %3777 = vmatprep.subr.mxu0 0.0
      %3778 = vmatpush1.msra.mxu0 0.0
      %3779 = vmatprep.subr.mxu0 0.0
      %3780 = vmatpush1.msra.mxu0 0.0
      %3781 = vmatprep.subr.mxu0 0.0
      %3782 = vmatpush1.msra.mxu0 0.0
      %3783 = vmatprep.subr.mxu0 0.0
      %3784 = vmatpush1.msra.mxu0 0.0
      %3785 = vmatprep.subr.mxu0 0.0
      %3786 = vmatpush1.msra.mxu0 0.0
      %3787 = vmatprep.subr.mxu0 0.0
      %3788 = vmatpush1.msra.mxu0 0.0
      %3789 = vmatprep.subr.mxu0 0.0
      %3790 = vmatpush1.msra.mxu0 0.0
      %3791 = vmatprep.subr.mxu0 0.0
      %3792 = vmatpush1.msra.mxu0 0.0
      %3793 = vmatprep.subr.mxu0 0.0
      %3794 = vmatpush1.msra.mxu0 %v3758
      %3795 = vmatprep.subr.mxu0 0.0
      %3796 = vmatpush2.msra.mxu0 0.0
      %3797 = vmatprep.subr.mxu0 0.0
      %3798 = vmatpush2.msra.mxu0 0.0
      %3799 = vmatprep.subr.mxu0 0.0
      %3800 = vmatpush2.msra.mxu0 0.0
      %3801 = vmatprep.subr.mxu0 0.0
      %3802 = vmatpush2.msra.mxu0 0.0
      %3803 = vmatprep.subr.mxu0 0.0
      %3804 = vmatpush2.msra.mxu0 0.0
      %3805 = vmatprep.subr.mxu0 0.0
      %3806 = vmatpush2.msra.mxu0 0.0
      %3807 = vmatprep.subr.mxu0 0.0
      %3808 = vmatpush2.msra.mxu0 0.0
      %3809 = vmatprep.subr.mxu0 0.0
      %3810 = vmatpush2.msra.mxu0 0.0
      %3811 = vmatprep.subr.mxu0 0.0
      %3812 = vmatpush2.msra.mxu0 0.0
      %3813 = vmatprep.subr.mxu0 0.0
      %3814 = vmatpush2.msra.mxu0 0.0
      %3815 = vmatprep.subr.mxu0 0.0
      %3816 = vmatpush2.msra.mxu0 0.0
      %3817 = vmatprep.subr.mxu0 0.0
      %3818 = vmatpush2.msra.mxu0 0.0
      %3819 = vmatprep.subr.mxu0 0.0
      %3820 = vmatpush2.msra.mxu0 0.0
      %3821 = vmatprep.subr.mxu0 0.0
      %3822 = vmatpush2.msra.mxu0 0.0
      %3823 = vmatprep.subr.mxu0 0.0
      %3824 = vmatpush2.msra.mxu0 0.0
      %3825 = vmatprep.subr.mxu0 0.0
      %3826 = vmatpush2.msra.mxu0 0.0
      %3827 = vmatprep.mubr.f32.mxu0 0.0
      %3828 = vmatmul.mubr.f32.gmra.mxu0 %v3761
      %v3829 = vpop.f32.mrf.mxu0
      %v3830 = vadd.f32 0.0, %v3829
      %v3831 = vpop.f32.mrf.mxu0
      %3832 = vdwg.mxu0
      %3833 = vrot.lane.b32.xlu0 %v883, 112
      %v3834 = vpop.permute.xlu0 %3833
      %v3837 = vsel %vm974, %v3726, 0
      %3839 = vmatprep.subr.mxu0 0.0
      %3840 = vmatpush1.msra.mxu0 0.0
      %3841 = vmatprep.subr.mxu0 0.0
      %3842 = vmatpush1.msra.mxu0 0.0
      %3843 = vmatprep.subr.mxu0 0.0
      %3844 = vmatpush1.msra.mxu0 0.0
      %3845 = vmatprep.subr.mxu0 0.0
      %3846 = vmatpush1.msra.mxu0 0.0
      %3847 = vmatprep.subr.mxu0 0.0
      %3848 = vmatpush1.msra.mxu0 0.0
      %3849 = vmatprep.subr.mxu0 0.0
      %3850 = vmatpush1.msra.mxu0 0.0
      %3851 = vmatprep.subr.mxu0 0.0
      %3852 = vmatpush1.msra.mxu0 0.0
      %3853 = vmatprep.subr.mxu0 0.0
      %3854 = vmatpush1.msra.mxu0 0.0
      %3855 = vmatprep.subr.mxu0 0.0
      %3856 = vmatpush1.msra.mxu0 0.0
      %3857 = vmatprep.subr.mxu0 0.0
      %3858 = vmatpush1.msra.mxu0 0.0
      %3859 = vmatprep.subr.mxu0 0.0
      %3860 = vmatpush1.msra.mxu0 0.0
      %3861 = vmatprep.subr.mxu0 0.0
      %3862 = vmatpush1.msra.mxu0 0.0
      %3863 = vmatprep.subr.mxu0 0.0
      %3864 = vmatpush1.msra.mxu0 0.0
      %3865 = vmatprep.subr.mxu0 0.0
      %3866 = vmatpush1.msra.mxu0 0.0
      %3867 = vmatprep.subr.mxu0 0.0
      %3868 = vmatpush1.msra.mxu0 0.0
      %3869 = vmatprep.subr.mxu0 0.0
      %3870 = vmatpush1.msra.mxu0 %v3834
      %3871 = vmatprep.subr.mxu0 0.0
      %3872 = vmatpush2.msra.mxu0 0.0
      %3873 = vmatprep.subr.mxu0 0.0
      %3874 = vmatpush2.msra.mxu0 0.0
      %3875 = vmatprep.subr.mxu0 0.0
      %3876 = vmatpush2.msra.mxu0 0.0
      %3877 = vmatprep.subr.mxu0 0.0
      %3878 = vmatpush2.msra.mxu0 0.0
      %3879 = vmatprep.subr.mxu0 0.0
      %3880 = vmatpush2.msra.mxu0 0.0
      %3881 = vmatprep.subr.mxu0 0.0
      %3882 = vmatpush2.msra.mxu0 0.0
      %3883 = vmatprep.subr.mxu0 0.0
      %3884 = vmatpush2.msra.mxu0 0.0
      %3885 = vmatprep.subr.mxu0 0.0
      %3886 = vmatpush2.msra.mxu0 0.0
      %3887 = vmatprep.subr.mxu0 0.0
      %3888 = vmatpush2.msra.mxu0 0.0
      %3889 = vmatprep.subr.mxu0 0.0
      %3890 = vmatpush2.msra.mxu0 0.0
      %3891 = vmatprep.subr.mxu0 0.0
      %3892 = vmatpush2.msra.mxu0 0.0
      %3893 = vmatprep.subr.mxu0 0.0
      %3894 = vmatpush2.msra.mxu0 0.0
      %3895 = vmatprep.subr.mxu0 0.0
      %3896 = vmatpush2.msra.mxu0 0.0
      %3897 = vmatprep.subr.mxu0 0.0
      %3898 = vmatpush2.msra.mxu0 0.0
      %3899 = vmatprep.subr.mxu0 0.0
      %3900 = vmatpush2.msra.mxu0 0.0
      %3901 = vmatprep.subr.mxu0 0.0
      %3902 = vmatpush2.msra.mxu0 0.0
      %3903 = vmatprep.mubr.f32.mxu0 0.0
      %3904 = vmatmul.mubr.f32.gmra.mxu0 %v3837
      %v3905 = vpop.f32.mrf.mxu0
      %v3906 = vadd.f32 0.0, %v3905
      %v3907 = vpop.f32.mrf.mxu0
      %3908 = vdwg.mxu0
      %3909 = vrot.lane.b32.xlu0 %v888, 112
      %v3910 = vpop.permute.xlu0 %3909
      %v3913 = vsel %vm974, %v3727, 0
      %3915 = vmatprep.subr.mxu0 0.0
      %3916 = vmatpush1.msra.mxu0 0.0
      %3917 = vmatprep.subr.mxu0 0.0
      %3918 = vmatpush1.msra.mxu0 0.0
      %3919 = vmatprep.subr.mxu0 0.0
      %3920 = vmatpush1.msra.mxu0 0.0
      %3921 = vmatprep.subr.mxu0 0.0
      %3922 = vmatpush1.msra.mxu0 0.0
      %3923 = vmatprep.subr.mxu0 0.0
      %3924 = vmatpush1.msra.mxu0 0.0
      %3925 = vmatprep.subr.mxu0 0.0
      %3926 = vmatpush1.msra.mxu0 0.0
      %3927 = vmatprep.subr.mxu0 0.0
      %3928 = vmatpush1.msra.mxu0 0.0
      %3929 = vmatprep.subr.mxu0 0.0
      %3930 = vmatpush1.msra.mxu0 0.0
      %3931 = vmatprep.subr.mxu0 0.0
      %3932 = vmatpush1.msra.mxu0 0.0
      %3933 = vmatprep.subr.mxu0 0.0
      %3934 = vmatpush1.msra.mxu0 0.0
      %3935 = vmatprep.subr.mxu0 0.0
      %3936 = vmatpush1.msra.mxu0 0.0
      %3937 = vmatprep.subr.mxu0 0.0
      %3938 = vmatpush1.msra.mxu0 0.0
      %3939 = vmatprep.subr.mxu0 0.0
      %3940 = vmatpush1.msra.mxu0 0.0
      %3941 = vmatprep.subr.mxu0 0.0
      %3942 = vmatpush1.msra.mxu0 0.0
      %3943 = vmatprep.subr.mxu0 0.0
      %3944 = vmatpush1.msra.mxu0 0.0
      %3945 = vmatprep.subr.mxu0 0.0
      %3946 = vmatpush1.msra.mxu0 %v3910
      %3947 = vmatprep.subr.mxu0 0.0
      %3948 = vmatpush2.msra.mxu0 0.0
      %3949 = vmatprep.subr.mxu0 0.0
      %3950 = vmatpush2.msra.mxu0 0.0
      %3951 = vmatprep.subr.mxu0 0.0
      %3952 = vmatpush2.msra.mxu0 0.0
      %3953 = vmatprep.subr.mxu0 0.0
      %3954 = vmatpush2.msra.mxu0 0.0
      %3955 = vmatprep.subr.mxu0 0.0
      %3956 = vmatpush2.msra.mxu0 0.0
      %3957 = vmatprep.subr.mxu0 0.0
      %3958 = vmatpush2.msra.mxu0 0.0
      %3959 = vmatprep.subr.mxu0 0.0
      %3960 = vmatpush2.msra.mxu0 0.0
      %3961 = vmatprep.subr.mxu0 0.0
      %3962 = vmatpush2.msra.mxu0 0.0
      %3963 = vmatprep.subr.mxu0 0.0
      %3964 = vmatpush2.msra.mxu0 0.0
      %3965 = vmatprep.subr.mxu0 0.0
      %3966 = vmatpush2.msra.mxu0 0.0
      %3967 = vmatprep.subr.mxu0 0.0
      %3968 = vmatpush2.msra.mxu0 0.0
      %3969 = vmatprep.subr.mxu0 0.0
      %3970 = vmatpush2.msra.mxu0 0.0
      %3971 = vmatprep.subr.mxu0 0.0
      %3972 = vmatpush2.msra.mxu0 0.0
      %3973 = vmatprep.subr.mxu0 0.0
      %3974 = vmatpush2.msra.mxu0 0.0
      %3975 = vmatprep.subr.mxu0 0.0
      %3976 = vmatpush2.msra.mxu0 0.0
      %3977 = vmatprep.subr.mxu0 0.0
      %3978 = vmatpush2.msra.mxu0 0.0
      %3979 = vmatprep.mubr.f32.mxu0 0.0
      %3980 = vmatmul.mubr.f32.gmra.mxu0 %v3913
      %v3981 = vpop.f32.mrf.mxu0
      %v3982 = vadd.f32 0.0, %v3981
      %v3983 = vpop.f32.mrf.mxu0
      %3984 = vdwg.mxu0
      %3985 = vrot.lane.b32.xlu0 %v893, 112
      %v3986 = vpop.permute.xlu0 %3985
      %v3989 = vsel %vm974, %v3728, 0
      %3991 = vmatprep.subr.mxu0 0.0
      %3992 = vmatpush1.msra.mxu0 0.0
      %3993 = vmatprep.subr.mxu0 0.0
      %3994 = vmatpush1.msra.mxu0 0.0
      %3995 = vmatprep.subr.mxu0 0.0
      %3996 = vmatpush1.msra.mxu0 0.0
      %3997 = vmatprep.subr.mxu0 0.0
      %3998 = vmatpush1.msra.mxu0 0.0
      %3999 = vmatprep.subr.mxu0 0.0
      %4000 = vmatpush1.msra.mxu0 0.0
      %4001 = vmatprep.subr.mxu0 0.0
      %4002 = vmatpush1.msra.mxu0 0.0
      %4003 = vmatprep.subr.mxu0 0.0
      %4004 = vmatpush1.msra.mxu0 0.0
      %4005 = vmatprep.subr.mxu0 0.0
      %4006 = vmatpush1.msra.mxu0 0.0
      %4007 = vmatprep.subr.mxu0 0.0
      %4008 = vmatpush1.msra.mxu0 0.0
      %4009 = vmatprep.subr.mxu0 0.0
      %4010 = vmatpush1.msra.mxu0 0.0
      %4011 = vmatprep.subr.mxu0 0.0
      %4012 = vmatpush1.msra.mxu0 0.0
      %4013 = vmatprep.subr.mxu0 0.0
      %4014 = vmatpush1.msra.mxu0 0.0
      %4015 = vmatprep.subr.mxu0 0.0
      %4016 = vmatpush1.msra.mxu0 0.0
      %4017 = vmatprep.subr.mxu0 0.0
      %4018 = vmatpush1.msra.mxu0 0.0
      %4019 = vmatprep.subr.mxu0 0.0
      %4020 = vmatpush1.msra.mxu0 0.0
      %4021 = vmatprep.subr.mxu0 0.0
      %4022 = vmatpush1.msra.mxu0 %v3986
      %4023 = vmatprep.subr.mxu0 0.0
      %4024 = vmatpush2.msra.mxu0 0.0
      %4025 = vmatprep.subr.mxu0 0.0
      %4026 = vmatpush2.msra.mxu0 0.0
      %4027 = vmatprep.subr.mxu0 0.0
      %4028 = vmatpush2.msra.mxu0 0.0
      %4029 = vmatprep.subr.mxu0 0.0
      %4030 = vmatpush2.msra.mxu0 0.0
      %4031 = vmatprep.subr.mxu0 0.0
      %4032 = vmatpush2.msra.mxu0 0.0
      %4033 = vmatprep.subr.mxu0 0.0
      %4034 = vmatpush2.msra.mxu0 0.0
      %4035 = vmatprep.subr.mxu0 0.0
      %4036 = vmatpush2.msra.mxu0 0.0
      %4037 = vmatprep.subr.mxu0 0.0
      %4038 = vmatpush2.msra.mxu0 0.0
      %4039 = vmatprep.subr.mxu0 0.0
      %4040 = vmatpush2.msra.mxu0 0.0
      %4041 = vmatprep.subr.mxu0 0.0
      %4042 = vmatpush2.msra.mxu0 0.0
      %4043 = vmatprep.subr.mxu0 0.0
      %4044 = vmatpush2.msra.mxu0 0.0
      %4045 = vmatprep.subr.mxu0 0.0
      %4046 = vmatpush2.msra.mxu0 0.0
      %4047 = vmatprep.subr.mxu0 0.0
      %4048 = vmatpush2.msra.mxu0 0.0
      %4049 = vmatprep.subr.mxu0 0.0
      %4050 = vmatpush2.msra.mxu0 0.0
      %4051 = vmatprep.subr.mxu0 0.0
      %4052 = vmatpush2.msra.mxu0 0.0
      %4053 = vmatprep.subr.mxu0 0.0
      %4054 = vmatpush2.msra.mxu0 0.0
      %4055 = vmatprep.mubr.f32.mxu0 0.0
      %4056 = vmatmul.mubr.f32.gmra.mxu0 %v3989
      %v4057 = vpop.f32.mrf.mxu0
      %v4058 = vadd.f32 0.0, %v4057
      %v4059 = vpop.f32.mrf.mxu0
      %4060 = vdwg.mxu0
      %4061 = vrot.lane.b32.xlu0 %v898, 112
      %v4062 = vpop.permute.xlu0 %4061
      %v4065 = vsel %vm974, %v3729, 0
      %4067 = vmatprep.subr.mxu0 0.0
      %4068 = vmatpush1.msra.mxu0 0.0
      %4069 = vmatprep.subr.mxu0 0.0
      %4070 = vmatpush1.msra.mxu0 0.0
      %4071 = vmatprep.subr.mxu0 0.0
      %4072 = vmatpush1.msra.mxu0 0.0
      %4073 = vmatprep.subr.mxu0 0.0
      %4074 = vmatpush1.msra.mxu0 0.0
      %4075 = vmatprep.subr.mxu0 0.0
      %4076 = vmatpush1.msra.mxu0 0.0
      %4077 = vmatprep.subr.mxu0 0.0
      %4078 = vmatpush1.msra.mxu0 0.0
      %4079 = vmatprep.subr.mxu0 0.0
      %4080 = vmatpush1.msra.mxu0 0.0
      %4081 = vmatprep.subr.mxu0 0.0
      %4082 = vmatpush1.msra.mxu0 0.0
      %4083 = vmatprep.subr.mxu0 0.0
      %4084 = vmatpush1.msra.mxu0 0.0
      %4085 = vmatprep.subr.mxu0 0.0
      %4086 = vmatpush1.msra.mxu0 0.0
      %4087 = vmatprep.subr.mxu0 0.0
      %4088 = vmatpush1.msra.mxu0 0.0
      %4089 = vmatprep.subr.mxu0 0.0
      %4090 = vmatpush1.msra.mxu0 0.0
      %4091 = vmatprep.subr.mxu0 0.0
      %4092 = vmatpush1.msra.mxu0 0.0
      %4093 = vmatprep.subr.mxu0 0.0
      %4094 = vmatpush1.msra.mxu0 0.0
      %4095 = vmatprep.subr.mxu0 0.0
      %4096 = vmatpush1.msra.mxu0 0.0
      %4097 = vmatprep.subr.mxu0 0.0
      %4098 = vmatpush1.msra.mxu0 %v4062
      %4099 = vmatprep.subr.mxu0 0.0
      %4100 = vmatpush2.msra.mxu0 0.0
      %4101 = vmatprep.subr.mxu0 0.0
      %4102 = vmatpush2.msra.mxu0 0.0
      %4103 = vmatprep.subr.mxu0 0.0
      %4104 = vmatpush2.msra.mxu0 0.0
      %4105 = vmatprep.subr.mxu0 0.0
      %4106 = vmatpush2.msra.mxu0 0.0
      %4107 = vmatprep.subr.mxu0 0.0
      %4108 = vmatpush2.msra.mxu0 0.0
      %4109 = vmatprep.subr.mxu0 0.0
      %4110 = vmatpush2.msra.mxu0 0.0
      %4111 = vmatprep.subr.mxu0 0.0
      %4112 = vmatpush2.msra.mxu0 0.0
      %4113 = vmatprep.subr.mxu0 0.0
      %4114 = vmatpush2.msra.mxu0 0.0
      %4115 = vmatprep.subr.mxu0 0.0
      %4116 = vmatpush2.msra.mxu0 0.0
      %4117 = vmatprep.subr.mxu0 0.0
      %4118 = vmatpush2.msra.mxu0 0.0
      %4119 = vmatprep.subr.mxu0 0.0
      %4120 = vmatpush2.msra.mxu0 0.0
      %4121 = vmatprep.subr.mxu0 0.0
      %4122 = vmatpush2.msra.mxu0 0.0
      %4123 = vmatprep.subr.mxu0 0.0
      %4124 = vmatpush2.msra.mxu0 0.0
      %4125 = vmatprep.subr.mxu0 0.0
      %4126 = vmatpush2.msra.mxu0 0.0
      %4127 = vmatprep.subr.mxu0 0.0
      %4128 = vmatpush2.msra.mxu0 0.0
      %4129 = vmatprep.subr.mxu0 0.0
      %4130 = vmatpush2.msra.mxu0 0.0
      %4131 = vmatprep.mubr.f32.mxu0 0.0
      %4132 = vmatmul.mubr.f32.gmra.mxu0 %v4065
      %v4133 = vpop.f32.mrf.mxu0
      %v4134 = vadd.f32 0.0, %v4133
      %v4135 = vpop.f32.mrf.mxu0
      %4136 = vdwg.mxu0
      %4137 = vrot.lane.b32.xlu0 %v903, 112
      %v4138 = vpop.permute.xlu0 %4137
      %v4141 = vsel %vm974, %v3730, 0
      %4143 = vmatprep.subr.mxu0 0.0
      %4144 = vmatpush1.msra.mxu0 0.0
      %4145 = vmatprep.subr.mxu0 0.0
      %4146 = vmatpush1.msra.mxu0 0.0
      %4147 = vmatprep.subr.mxu0 0.0
      %4148 = vmatpush1.msra.mxu0 0.0
      %4149 = vmatprep.subr.mxu0 0.0
      %4150 = vmatpush1.msra.mxu0 0.0
      %4151 = vmatprep.subr.mxu0 0.0
      %4152 = vmatpush1.msra.mxu0 0.0
      %4153 = vmatprep.subr.mxu0 0.0
      %4154 = vmatpush1.msra.mxu0 0.0
      %4155 = vmatprep.subr.mxu0 0.0
      %4156 = vmatpush1.msra.mxu0 0.0
      %4157 = vmatprep.subr.mxu0 0.0
      %4158 = vmatpush1.msra.mxu0 0.0
      %4159 = vmatprep.subr.mxu0 0.0
      %4160 = vmatpush1.msra.mxu0 0.0
      %4161 = vmatprep.subr.mxu0 0.0
      %4162 = vmatpush1.msra.mxu0 0.0
      %4163 = vmatprep.subr.mxu0 0.0
      %4164 = vmatpush1.msra.mxu0 0.0
      %4165 = vmatprep.subr.mxu0 0.0
      %4166 = vmatpush1.msra.mxu0 0.0
      %4167 = vmatprep.subr.mxu0 0.0
      %4168 = vmatpush1.msra.mxu0 0.0
      %4169 = vmatprep.subr.mxu0 0.0
      %4170 = vmatpush1.msra.mxu0 0.0
      %4171 = vmatprep.subr.mxu0 0.0
      %4172 = vmatpush1.msra.mxu0 0.0
      %4173 = vmatprep.subr.mxu0 0.0
      %4174 = vmatpush1.msra.mxu0 %v4138
      %4175 = vmatprep.subr.mxu0 0.0
      %4176 = vmatpush2.msra.mxu0 0.0
      %4177 = vmatprep.subr.mxu0 0.0
      %4178 = vmatpush2.msra.mxu0 0.0
      %4179 = vmatprep.subr.mxu0 0.0
      %4180 = vmatpush2.msra.mxu0 0.0
      %4181 = vmatprep.subr.mxu0 0.0
      %4182 = vmatpush2.msra.mxu0 0.0
      %4183 = vmatprep.subr.mxu0 0.0
      %4184 = vmatpush2.msra.mxu0 0.0
      %4185 = vmatprep.subr.mxu0 0.0
      %4186 = vmatpush2.msra.mxu0 0.0
      %4187 = vmatprep.subr.mxu0 0.0
      %4188 = vmatpush2.msra.mxu0 0.0
      %4189 = vmatprep.subr.mxu0 0.0
      %4190 = vmatpush2.msra.mxu0 0.0
      %4191 = vmatprep.subr.mxu0 0.0
      %4192 = vmatpush2.msra.mxu0 0.0
      %4193 = vmatprep.subr.mxu0 0.0
      %4194 = vmatpush2.msra.mxu0 0.0
      %4195 = vmatprep.subr.mxu0 0.0
      %4196 = vmatpush2.msra.mxu0 0.0
      %4197 = vmatprep.subr.mxu0 0.0
      %4198 = vmatpush2.msra.mxu0 0.0
      %4199 = vmatprep.subr.mxu0 0.0
      %4200 = vmatpush2.msra.mxu0 0.0
      %4201 = vmatprep.subr.mxu0 0.0
      %4202 = vmatpush2.msra.mxu0 0.0
      %4203 = vmatprep.subr.mxu0 0.0
      %4204 = vmatpush2.msra.mxu0 0.0
      %4205 = vmatprep.subr.mxu0 0.0
      %4206 = vmatpush2.msra.mxu0 0.0
      %4207 = vmatprep.mubr.f32.mxu0 0.0
      %4208 = vmatmul.mubr.f32.gmra.mxu0 %v4141
      %v4209 = vpop.f32.mrf.mxu0
      %v4210 = vadd.f32 0.0, %v4209
      %v4211 = vpop.f32.mrf.mxu0
      %4212 = vdwg.mxu0
      %4213 = vrot.lane.b32.xlu0 %v908, 112
      %v4214 = vpop.permute.xlu0 %4213
      %v4217 = vsel %vm974, %v3731, 0
      %4219 = vmatprep.subr.mxu0 0.0
      %4220 = vmatpush1.msra.mxu0 0.0
      %4221 = vmatprep.subr.mxu0 0.0
      %4222 = vmatpush1.msra.mxu0 0.0
      %4223 = vmatprep.subr.mxu0 0.0
      %4224 = vmatpush1.msra.mxu0 0.0
      %4225 = vmatprep.subr.mxu0 0.0
      %4226 = vmatpush1.msra.mxu0 0.0
      %4227 = vmatprep.subr.mxu0 0.0
      %4228 = vmatpush1.msra.mxu0 0.0
      %4229 = vmatprep.subr.mxu0 0.0
      %4230 = vmatpush1.msra.mxu0 0.0
      %4231 = vmatprep.subr.mxu0 0.0
      %4232 = vmatpush1.msra.mxu0 0.0
      %4233 = vmatprep.subr.mxu0 0.0
      %4234 = vmatpush1.msra.mxu0 0.0
      %4235 = vmatprep.subr.mxu0 0.0
      %4236 = vmatpush1.msra.mxu0 0.0
      %4237 = vmatprep.subr.mxu0 0.0
      %4238 = vmatpush1.msra.mxu0 0.0
      %4239 = vmatprep.subr.mxu0 0.0
      %4240 = vmatpush1.msra.mxu0 0.0
      %4241 = vmatprep.subr.mxu0 0.0
      %4242 = vmatpush1.msra.mxu0 0.0
      %4243 = vmatprep.subr.mxu0 0.0
      %4244 = vmatpush1.msra.mxu0 0.0
      %4245 = vmatprep.subr.mxu0 0.0
      %4246 = vmatpush1.msra.mxu0 0.0
      %4247 = vmatprep.subr.mxu0 0.0
      %4248 = vmatpush1.msra.mxu0 0.0
      %4249 = vmatprep.subr.mxu0 0.0
      %4250 = vmatpush1.msra.mxu0 %v4214
      %4251 = vmatprep.subr.mxu0 0.0
      %4252 = vmatpush2.msra.mxu0 0.0
      %4253 = vmatprep.subr.mxu0 0.0
      %4254 = vmatpush2.msra.mxu0 0.0
      %4255 = vmatprep.subr.mxu0 0.0
      %4256 = vmatpush2.msra.mxu0 0.0
      %4257 = vmatprep.subr.mxu0 0.0
      %4258 = vmatpush2.msra.mxu0 0.0
      %4259 = vmatprep.subr.mxu0 0.0
      %4260 = vmatpush2.msra.mxu0 0.0
      %4261 = vmatprep.subr.mxu0 0.0
      %4262 = vmatpush2.msra.mxu0 0.0
      %4263 = vmatprep.subr.mxu0 0.0
      %4264 = vmatpush2.msra.mxu0 0.0
      %4265 = vmatprep.subr.mxu0 0.0
      %4266 = vmatpush2.msra.mxu0 0.0
      %4267 = vmatprep.subr.mxu0 0.0
      %4268 = vmatpush2.msra.mxu0 0.0
      %4269 = vmatprep.subr.mxu0 0.0
      %4270 = vmatpush2.msra.mxu0 0.0
      %4271 = vmatprep.subr.mxu0 0.0
      %4272 = vmatpush2.msra.mxu0 0.0
      %4273 = vmatprep.subr.mxu0 0.0
      %4274 = vmatpush2.msra.mxu0 0.0
      %4275 = vmatprep.subr.mxu0 0.0
      %4276 = vmatpush2.msra.mxu0 0.0
      %4277 = vmatprep.subr.mxu0 0.0
      %4278 = vmatpush2.msra.mxu0 0.0
      %4279 = vmatprep.subr.mxu0 0.0
      %4280 = vmatpush2.msra.mxu0 0.0
      %4281 = vmatprep.subr.mxu0 0.0
      %4282 = vmatpush2.msra.mxu0 0.0
      %4283 = vmatprep.mubr.f32.mxu0 0.0
      %4284 = vmatmul.mubr.f32.gmra.mxu0 %v4217
      %v4285 = vpop.f32.mrf.mxu0
      %v4286 = vadd.f32 0.0, %v4285
      %v4287 = vpop.f32.mrf.mxu0
      %4288 = vdwg.mxu0
      %4289 = vrot.lane.b32.xlu0 %v913, 112
      %v4290 = vpop.permute.xlu0 %4289
      %v4293 = vsel %vm974, %v3732, 0
      %4295 = vmatprep.subr.mxu0 0.0
      %4296 = vmatpush1.msra.mxu0 0.0
      %4297 = vmatprep.subr.mxu0 0.0
      %4298 = vmatpush1.msra.mxu0 0.0
      %4299 = vmatprep.subr.mxu0 0.0
      %4300 = vmatpush1.msra.mxu0 0.0
      %4301 = vmatprep.subr.mxu0 0.0
      %4302 = vmatpush1.msra.mxu0 0.0
      %4303 = vmatprep.subr.mxu0 0.0
      %4304 = vmatpush1.msra.mxu0 0.0
      %4305 = vmatprep.subr.mxu0 0.0
      %4306 = vmatpush1.msra.mxu0 0.0
      %4307 = vmatprep.subr.mxu0 0.0
      %4308 = vmatpush1.msra.mxu0 0.0
      %4309 = vmatprep.subr.mxu0 0.0
      %4310 = vmatpush1.msra.mxu0 0.0
      %4311 = vmatprep.subr.mxu0 0.0
      %4312 = vmatpush1.msra.mxu0 0.0
      %4313 = vmatprep.subr.mxu0 0.0
      %4314 = vmatpush1.msra.mxu0 0.0
      %4315 = vmatprep.subr.mxu0 0.0
      %4316 = vmatpush1.msra.mxu0 0.0
      %4317 = vmatprep.subr.mxu0 0.0
      %4318 = vmatpush1.msra.mxu0 0.0
      %4319 = vmatprep.subr.mxu0 0.0
      %4320 = vmatpush1.msra.mxu0 0.0
      %4321 = vmatprep.subr.mxu0 0.0
      %4322 = vmatpush1.msra.mxu0 0.0
      %4323 = vmatprep.subr.mxu0 0.0
      %4324 = vmatpush1.msra.mxu0 0.0
      %4325 = vmatprep.subr.mxu0 0.0
      %4326 = vmatpush1.msra.mxu0 %v4290
      %4327 = vmatprep.subr.mxu0 0.0
      %4328 = vmatpush2.msra.mxu0 0.0
      %4329 = vmatprep.subr.mxu0 0.0
      %4330 = vmatpush2.msra.mxu0 0.0
      %4331 = vmatprep.subr.mxu0 0.0
      %4332 = vmatpush2.msra.mxu0 0.0
      %4333 = vmatprep.subr.mxu0 0.0
      %4334 = vmatpush2.msra.mxu0 0.0
      %4335 = vmatprep.subr.mxu0 0.0
      %4336 = vmatpush2.msra.mxu0 0.0
      %4337 = vmatprep.subr.mxu0 0.0
      %4338 = vmatpush2.msra.mxu0 0.0
      %4339 = vmatprep.subr.mxu0 0.0
      %4340 = vmatpush2.msra.mxu0 0.0
      %4341 = vmatprep.subr.mxu0 0.0
      %4342 = vmatpush2.msra.mxu0 0.0
      %4343 = vmatprep.subr.mxu0 0.0
      %4344 = vmatpush2.msra.mxu0 0.0
      %4345 = vmatprep.subr.mxu0 0.0
      %4346 = vmatpush2.msra.mxu0 0.0
      %4347 = vmatprep.subr.mxu0 0.0
      %4348 = vmatpush2.msra.mxu0 0.0
      %4349 = vmatprep.subr.mxu0 0.0
      %4350 = vmatpush2.msra.mxu0 0.0
      %4351 = vmatprep.subr.mxu0 0.0
      %4352 = vmatpush2.msra.mxu0 0.0
      %4353 = vmatprep.subr.mxu0 0.0
      %4354 = vmatpush2.msra.mxu0 0.0
      %4355 = vmatprep.subr.mxu0 0.0
      %4356 = vmatpush2.msra.mxu0 0.0
      %4357 = vmatprep.subr.mxu0 0.0
      %4358 = vmatpush2.msra.mxu0 0.0
      %4359 = vmatprep.mubr.f32.mxu0 0.0
      %4360 = vmatmul.mubr.f32.gmra.mxu0 %v4293
      %v4361 = vpop.f32.mrf.mxu0
      %v4362 = vadd.f32 0.0, %v4361
      %v4363 = vpop.f32.mrf.mxu0
      %4364 = vdwg.mxu0
      %4365 = vrot.lane.b32.xlu0 %v925, 112
      %v4366 = vpop.permute.xlu0 %4365
      %v4369 = vsel %vm974, %v3733, 0
      %4371 = vmatprep.subr.mxu0 0.0
      %4372 = vmatpush1.msra.mxu0 0.0
      %4373 = vmatprep.subr.mxu0 0.0
      %4374 = vmatpush1.msra.mxu0 0.0
      %4375 = vmatprep.subr.mxu0 0.0
      %4376 = vmatpush1.msra.mxu0 0.0
      %4377 = vmatprep.subr.mxu0 0.0
      %4378 = vmatpush1.msra.mxu0 0.0
      %4379 = vmatprep.subr.mxu0 0.0
      %4380 = vmatpush1.msra.mxu0 0.0
      %4381 = vmatprep.subr.mxu0 0.0
      %4382 = vmatpush1.msra.mxu0 0.0
      %4383 = vmatprep.subr.mxu0 0.0
      %4384 = vmatpush1.msra.mxu0 0.0
      %4385 = vmatprep.subr.mxu0 0.0
      %4386 = vmatpush1.msra.mxu0 0.0
      %4387 = vmatprep.subr.mxu0 0.0
      %4388 = vmatpush1.msra.mxu0 0.0
      %4389 = vmatprep.subr.mxu0 0.0
      %4390 = vmatpush1.msra.mxu0 0.0
      %4391 = vmatprep.subr.mxu0 0.0
      %4392 = vmatpush1.msra.mxu0 0.0
      %4393 = vmatprep.subr.mxu0 0.0
      %4394 = vmatpush1.msra.mxu0 0.0
      %4395 = vmatprep.subr.mxu0 0.0
      %4396 = vmatpush1.msra.mxu0 0.0
      %4397 = vmatprep.subr.mxu0 0.0
      %4398 = vmatpush1.msra.mxu0 0.0
      %4399 = vmatprep.subr.mxu0 0.0
      %4400 = vmatpush1.msra.mxu0 0.0
      %4401 = vmatprep.subr.mxu0 0.0
      %4402 = vmatpush1.msra.mxu0 %v4366
      %4403 = vmatprep.subr.mxu0 0.0
      %4404 = vmatpush2.msra.mxu0 0.0
      %4405 = vmatprep.subr.mxu0 0.0
      %4406 = vmatpush2.msra.mxu0 0.0
      %4407 = vmatprep.subr.mxu0 0.0
      %4408 = vmatpush2.msra.mxu0 0.0
      %4409 = vmatprep.subr.mxu0 0.0
      %4410 = vmatpush2.msra.mxu0 0.0
      %4411 = vmatprep.subr.mxu0 0.0
      %4412 = vmatpush2.msra.mxu0 0.0
      %4413 = vmatprep.subr.mxu0 0.0
      %4414 = vmatpush2.msra.mxu0 0.0
      %4415 = vmatprep.subr.mxu0 0.0
      %4416 = vmatpush2.msra.mxu0 0.0
      %4417 = vmatprep.subr.mxu0 0.0
      %4418 = vmatpush2.msra.mxu0 0.0
      %4419 = vmatprep.subr.mxu0 0.0
      %4420 = vmatpush2.msra.mxu0 0.0
      %4421 = vmatprep.subr.mxu0 0.0
      %4422 = vmatpush2.msra.mxu0 0.0
      %4423 = vmatprep.subr.mxu0 0.0
      %4424 = vmatpush2.msra.mxu0 0.0
      %4425 = vmatprep.subr.mxu0 0.0
      %4426 = vmatpush2.msra.mxu0 0.0
      %4427 = vmatprep.subr.mxu0 0.0
      %4428 = vmatpush2.msra.mxu0 0.0
      %4429 = vmatprep.subr.mxu0 0.0
      %4430 = vmatpush2.msra.mxu0 0.0
      %4431 = vmatprep.subr.mxu0 0.0
      %4432 = vmatpush2.msra.mxu0 0.0
      %4433 = vmatprep.subr.mxu0 0.0
      %4434 = vmatpush2.msra.mxu0 0.0
      %4435 = vmatprep.mubr.f32.mxu0 0.0
      %4436 = vmatmul.mubr.f32.gmra.mxu0 %v4369
      %v4437 = vpop.f32.mrf.mxu0
      %v4438 = vadd.f32 0.0, %v4437
      %v4439 = vpop.f32.mrf.mxu0
      %4440 = vdwg.mxu0
      %4441 = vrot.lane.b32.xlu0 %v927, 112
      %v4442 = vpop.permute.xlu0 %4441
      %v4445 = vsel %vm974, %v3734, 0
      %4447 = vmatprep.subr.mxu0 0.0
      %4448 = vmatpush1.msra.mxu0 0.0
      %4449 = vmatprep.subr.mxu0 0.0
      %4450 = vmatpush1.msra.mxu0 0.0
      %4451 = vmatprep.subr.mxu0 0.0
      %4452 = vmatpush1.msra.mxu0 0.0
      %4453 = vmatprep.subr.mxu0 0.0
      %4454 = vmatpush1.msra.mxu0 0.0
      %4455 = vmatprep.subr.mxu0 0.0
      %4456 = vmatpush1.msra.mxu0 0.0
      %4457 = vmatprep.subr.mxu0 0.0
      %4458 = vmatpush1.msra.mxu0 0.0
      %4459 = vmatprep.subr.mxu0 0.0
      %4460 = vmatpush1.msra.mxu0 0.0
      %4461 = vmatprep.subr.mxu0 0.0
      %4462 = vmatpush1.msra.mxu0 0.0
      %4463 = vmatprep.subr.mxu0 0.0
      %4464 = vmatpush1.msra.mxu0 0.0
      %4465 = vmatprep.subr.mxu0 0.0
      %4466 = vmatpush1.msra.mxu0 0.0
      %4467 = vmatprep.subr.mxu0 0.0
      %4468 = vmatpush1.msra.mxu0 0.0
      %4469 = vmatprep.subr.mxu0 0.0
      %4470 = vmatpush1.msra.mxu0 0.0
      %4471 = vmatprep.subr.mxu0 0.0
      %4472 = vmatpush1.msra.mxu0 0.0
      %4473 = vmatprep.subr.mxu0 0.0
      %4474 = vmatpush1.msra.mxu0 0.0
      %4475 = vmatprep.subr.mxu0 0.0
      %4476 = vmatpush1.msra.mxu0 0.0
      %4477 = vmatprep.subr.mxu0 0.0
      %4478 = vmatpush1.msra.mxu0 %v4442
      %4479 = vmatprep.subr.mxu0 0.0
      %4480 = vmatpush2.msra.mxu0 0.0
      %4481 = vmatprep.subr.mxu0 0.0
      %4482 = vmatpush2.msra.mxu0 0.0
      %4483 = vmatprep.subr.mxu0 0.0
      %4484 = vmatpush2.msra.mxu0 0.0
      %4485 = vmatprep.subr.mxu0 0.0
      %4486 = vmatpush2.msra.mxu0 0.0
      %4487 = vmatprep.subr.mxu0 0.0
      %4488 = vmatpush2.msra.mxu0 0.0
      %4489 = vmatprep.subr.mxu0 0.0
      %4490 = vmatpush2.msra.mxu0 0.0
      %4491 = vmatprep.subr.mxu0 0.0
      %4492 = vmatpush2.msra.mxu0 0.0
      %4493 = vmatprep.subr.mxu0 0.0
      %4494 = vmatpush2.msra.mxu0 0.0
      %4495 = vmatprep.subr.mxu0 0.0
      %4496 = vmatpush2.msra.mxu0 0.0
      %4497 = vmatprep.subr.mxu0 0.0
      %4498 = vmatpush2.msra.mxu0 0.0
      %4499 = vmatprep.subr.mxu0 0.0
      %4500 = vmatpush2.msra.mxu0 0.0
      %4501 = vmatprep.subr.mxu0 0.0
      %4502 = vmatpush2.msra.mxu0 0.0
      %4503 = vmatprep.subr.mxu0 0.0
      %4504 = vmatpush2.msra.mxu0 0.0
      %4505 = vmatprep.subr.mxu0 0.0
      %4506 = vmatpush2.msra.mxu0 0.0
      %4507 = vmatprep.subr.mxu0 0.0
      %4508 = vmatpush2.msra.mxu0 0.0
      %4509 = vmatprep.subr.mxu0 0.0
      %4510 = vmatpush2.msra.mxu0 0.0
      %4511 = vmatprep.mubr.f32.mxu0 0.0
      %4512 = vmatmul.mubr.f32.gmra.mxu0 %v4445
      %v4513 = vpop.f32.mrf.mxu0
      %v4514 = vadd.f32 0.0, %v4513
      %v4515 = vpop.f32.mrf.mxu0
      %4516 = vdwg.mxu0
      %4517 = vrot.lane.b32.xlu0 %v929, 112
      %v4518 = vpop.permute.xlu0 %4517
      %v4521 = vsel %vm974, %v3735, 0
      %4523 = vmatprep.subr.mxu0 0.0
      %4524 = vmatpush1.msra.mxu0 0.0
      %4525 = vmatprep.subr.mxu0 0.0
      %4526 = vmatpush1.msra.mxu0 0.0
      %4527 = vmatprep.subr.mxu0 0.0
      %4528 = vmatpush1.msra.mxu0 0.0
      %4529 = vmatprep.subr.mxu0 0.0
      %4530 = vmatpush1.msra.mxu0 0.0
      %4531 = vmatprep.subr.mxu0 0.0
      %4532 = vmatpush1.msra.mxu0 0.0
      %4533 = vmatprep.subr.mxu0 0.0
      %4534 = vmatpush1.msra.mxu0 0.0
      %4535 = vmatprep.subr.mxu0 0.0
      %4536 = vmatpush1.msra.mxu0 0.0
      %4537 = vmatprep.subr.mxu0 0.0
      %4538 = vmatpush1.msra.mxu0 0.0
      %4539 = vmatprep.subr.mxu0 0.0
      %4540 = vmatpush1.msra.mxu0 0.0
      %4541 = vmatprep.subr.mxu0 0.0
      %4542 = vmatpush1.msra.mxu0 0.0
      %4543 = vmatprep.subr.mxu0 0.0
      %4544 = vmatpush1.msra.mxu0 0.0
      %4545 = vmatprep.subr.mxu0 0.0
      %4546 = vmatpush1.msra.mxu0 0.0
      %4547 = vmatprep.subr.mxu0 0.0
      %4548 = vmatpush1.msra.mxu0 0.0
      %4549 = vmatprep.subr.mxu0 0.0
      %4550 = vmatpush1.msra.mxu0 0.0
      %4551 = vmatprep.subr.mxu0 0.0
      %4552 = vmatpush1.msra.mxu0 0.0
      %4553 = vmatprep.subr.mxu0 0.0
      %4554 = vmatpush1.msra.mxu0 %v4518
      %4555 = vmatprep.subr.mxu0 0.0
      %4556 = vmatpush2.msra.mxu0 0.0
      %4557 = vmatprep.subr.mxu0 0.0
      %4558 = vmatpush2.msra.mxu0 0.0
      %4559 = vmatprep.subr.mxu0 0.0
      %4560 = vmatpush2.msra.mxu0 0.0
      %4561 = vmatprep.subr.mxu0 0.0
      %4562 = vmatpush2.msra.mxu0 0.0
      %4563 = vmatprep.subr.mxu0 0.0
      %4564 = vmatpush2.msra.mxu0 0.0
      %4565 = vmatprep.subr.mxu0 0.0
      %4566 = vmatpush2.msra.mxu0 0.0
      %4567 = vmatprep.subr.mxu0 0.0
      %4568 = vmatpush2.msra.mxu0 0.0
      %4569 = vmatprep.subr.mxu0 0.0
      %4570 = vmatpush2.msra.mxu0 0.0
      %4571 = vmatprep.subr.mxu0 0.0
      %4572 = vmatpush2.msra.mxu0 0.0
      %4573 = vmatprep.subr.mxu0 0.0
      %4574 = vmatpush2.msra.mxu0 0.0
      %4575 = vmatprep.subr.mxu0 0.0
      %4576 = vmatpush2.msra.mxu0 0.0
      %4577 = vmatprep.subr.mxu0 0.0
      %4578 = vmatpush2.msra.mxu0 0.0
      %4579 = vmatprep.subr.mxu0 0.0
      %4580 = vmatpush2.msra.mxu0 0.0
      %4581 = vmatprep.subr.mxu0 0.0
      %4582 = vmatpush2.msra.mxu0 0.0
      %4583 = vmatprep.subr.mxu0 0.0
      %4584 = vmatpush2.msra.mxu0 0.0
      %4585 = vmatprep.subr.mxu0 0.0
      %4586 = vmatpush2.msra.mxu0 0.0
      %4587 = vmatprep.mubr.f32.mxu0 0.0
      %4588 = vmatmul.mubr.f32.gmra.mxu0 %v4521
      %v4589 = vpop.f32.mrf.mxu0
      %v4590 = vadd.f32 0.0, %v4589
      %v4591 = vpop.f32.mrf.mxu0
      %4592 = vdwg.mxu0
      %4593 = vrot.lane.b32.xlu0 %v931, 112
      %v4594 = vpop.permute.xlu0 %4593
      %v4597 = vsel %vm974, %v3736, 0
      %4599 = vmatprep.subr.mxu0 0.0
      %4600 = vmatpush1.msra.mxu0 0.0
      %4601 = vmatprep.subr.mxu0 0.0
      %4602 = vmatpush1.msra.mxu0 0.0
      %4603 = vmatprep.subr.mxu0 0.0
      %4604 = vmatpush1.msra.mxu0 0.0
      %4605 = vmatprep.subr.mxu0 0.0
      %4606 = vmatpush1.msra.mxu0 0.0
      %4607 = vmatprep.subr.mxu0 0.0
      %4608 = vmatpush1.msra.mxu0 0.0
      %4609 = vmatprep.subr.mxu0 0.0
      %4610 = vmatpush1.msra.mxu0 0.0
      %4611 = vmatprep.subr.mxu0 0.0
      %4612 = vmatpush1.msra.mxu0 0.0
      %4613 = vmatprep.subr.mxu0 0.0
      %4614 = vmatpush1.msra.mxu0 0.0
      %4615 = vmatprep.subr.mxu0 0.0
      %4616 = vmatpush1.msra.mxu0 0.0
      %4617 = vmatprep.subr.mxu0 0.0
      %4618 = vmatpush1.msra.mxu0 0.0
      %4619 = vmatprep.subr.mxu0 0.0
      %4620 = vmatpush1.msra.mxu0 0.0
      %4621 = vmatprep.subr.mxu0 0.0
      %4622 = vmatpush1.msra.mxu0 0.0
      %4623 = vmatprep.subr.mxu0 0.0
      %4624 = vmatpush1.msra.mxu0 0.0
      %4625 = vmatprep.subr.mxu0 0.0
      %4626 = vmatpush1.msra.mxu0 0.0
      %4627 = vmatprep.subr.mxu0 0.0
      %4628 = vmatpush1.msra.mxu0 0.0
      %4629 = vmatprep.subr.mxu0 0.0
      %4630 = vmatpush1.msra.mxu0 %v4594
      %4631 = vmatprep.subr.mxu0 0.0
      %4632 = vmatpush2.msra.mxu0 0.0
      %4633 = vmatprep.subr.mxu0 0.0
      %4634 = vmatpush2.msra.mxu0 0.0
      %4635 = vmatprep.subr.mxu0 0.0
      %4636 = vmatpush2.msra.mxu0 0.0
      %4637 = vmatprep.subr.mxu0 0.0
      %4638 = vmatpush2.msra.mxu0 0.0
      %4639 = vmatprep.subr.mxu0 0.0
      %4640 = vmatpush2.msra.mxu0 0.0
      %4641 = vmatprep.subr.mxu0 0.0
      %4642 = vmatpush2.msra.mxu0 0.0
      %4643 = vmatprep.subr.mxu0 0.0
      %4644 = vmatpush2.msra.mxu0 0.0
      %4645 = vmatprep.subr.mxu0 0.0
      %4646 = vmatpush2.msra.mxu0 0.0
      %4647 = vmatprep.subr.mxu0 0.0
      %4648 = vmatpush2.msra.mxu0 0.0
      %4649 = vmatprep.subr.mxu0 0.0
      %4650 = vmatpush2.msra.mxu0 0.0
      %4651 = vmatprep.subr.mxu0 0.0
      %4652 = vmatpush2.msra.mxu0 0.0
      %4653 = vmatprep.subr.mxu0 0.0
      %4654 = vmatpush2.msra.mxu0 0.0
      %4655 = vmatprep.subr.mxu0 0.0
      %4656 = vmatpush2.msra.mxu0 0.0
      %4657 = vmatprep.subr.mxu0 0.0
      %4658 = vmatpush2.msra.mxu0 0.0
      %4659 = vmatprep.subr.mxu0 0.0
      %4660 = vmatpush2.msra.mxu0 0.0
      %4661 = vmatprep.subr.mxu0 0.0
      %4662 = vmatpush2.msra.mxu0 0.0
      %4663 = vmatprep.mubr.f32.mxu0 0.0
      %4664 = vmatmul.mubr.f32.gmra.mxu0 %v4597
      %v4665 = vpop.f32.mrf.mxu0
      %v4666 = vadd.f32 0.0, %v4665
      %v4667 = vpop.f32.mrf.mxu0
      %4668 = vdwg.mxu0
      %4669 = vrot.lane.b32.xlu0 %v933, 112
      %v4670 = vpop.permute.xlu0 %4669
      %v4673 = vsel %vm974, %v3737, 0
      %4675 = vmatprep.subr.mxu0 0.0
      %4676 = vmatpush1.msra.mxu0 0.0
      %4677 = vmatprep.subr.mxu0 0.0
      %4678 = vmatpush1.msra.mxu0 0.0
      %4679 = vmatprep.subr.mxu0 0.0
      %4680 = vmatpush1.msra.mxu0 0.0
      %4681 = vmatprep.subr.mxu0 0.0
      %4682 = vmatpush1.msra.mxu0 0.0
      %4683 = vmatprep.subr.mxu0 0.0
      %4684 = vmatpush1.msra.mxu0 0.0
      %4685 = vmatprep.subr.mxu0 0.0
      %4686 = vmatpush1.msra.mxu0 0.0
      %4687 = vmatprep.subr.mxu0 0.0
      %4688 = vmatpush1.msra.mxu0 0.0
      %4689 = vmatprep.subr.mxu0 0.0
      %4690 = vmatpush1.msra.mxu0 0.0
      %4691 = vmatprep.subr.mxu0 0.0
      %4692 = vmatpush1.msra.mxu0 0.0
      %4693 = vmatprep.subr.mxu0 0.0
      %4694 = vmatpush1.msra.mxu0 0.0
      %4695 = vmatprep.subr.mxu0 0.0
      %4696 = vmatpush1.msra.mxu0 0.0
      %4697 = vmatprep.subr.mxu0 0.0
      %4698 = vmatpush1.msra.mxu0 0.0
      %4699 = vmatprep.subr.mxu0 0.0
      %4700 = vmatpush1.msra.mxu0 0.0
      %4701 = vmatprep.subr.mxu0 0.0
      %4702 = vmatpush1.msra.mxu0 0.0
      %4703 = vmatprep.subr.mxu0 0.0
      %4704 = vmatpush1.msra.mxu0 0.0
      %4705 = vmatprep.subr.mxu0 0.0
      %4706 = vmatpush1.msra.mxu0 %v4670
      %4707 = vmatprep.subr.mxu0 0.0
      %4708 = vmatpush2.msra.mxu0 0.0
      %4709 = vmatprep.subr.mxu0 0.0
      %4710 = vmatpush2.msra.mxu0 0.0
      %4711 = vmatprep.subr.mxu0 0.0
      %4712 = vmatpush2.msra.mxu0 0.0
      %4713 = vmatprep.subr.mxu0 0.0
      %4714 = vmatpush2.msra.mxu0 0.0
      %4715 = vmatprep.subr.mxu0 0.0
      %4716 = vmatpush2.msra.mxu0 0.0
      %4717 = vmatprep.subr.mxu0 0.0
      %4718 = vmatpush2.msra.mxu0 0.0
      %4719 = vmatprep.subr.mxu0 0.0
      %4720 = vmatpush2.msra.mxu0 0.0
      %4721 = vmatprep.subr.mxu0 0.0
      %4722 = vmatpush2.msra.mxu0 0.0
      %4723 = vmatprep.subr.mxu0 0.0
      %4724 = vmatpush2.msra.mxu0 0.0
      %4725 = vmatprep.subr.mxu0 0.0
      %4726 = vmatpush2.msra.mxu0 0.0
      %4727 = vmatprep.subr.mxu0 0.0
      %4728 = vmatpush2.msra.mxu0 0.0
      %4729 = vmatprep.subr.mxu0 0.0
      %4730 = vmatpush2.msra.mxu0 0.0
      %4731 = vmatprep.subr.mxu0 0.0
      %4732 = vmatpush2.msra.mxu0 0.0
      %4733 = vmatprep.subr.mxu0 0.0
      %4734 = vmatpush2.msra.mxu0 0.0
      %4735 = vmatprep.subr.mxu0 0.0
      %4736 = vmatpush2.msra.mxu0 0.0
      %4737 = vmatprep.subr.mxu0 0.0
      %4738 = vmatpush2.msra.mxu0 0.0
      %4739 = vmatprep.mubr.f32.mxu0 0.0
      %4740 = vmatmul.mubr.f32.gmra.mxu0 %v4673
      %v4741 = vpop.f32.mrf.mxu0
      %v4742 = vadd.f32 0.0, %v4741
      %v4743 = vpop.f32.mrf.mxu0
      %4744 = vdwg.mxu0
      %4745 = vrot.lane.b32.xlu0 %v935, 112
      %v4746 = vpop.permute.xlu0 %4745
      %v4749 = vsel %vm974, %v3738, 0
      %4751 = vmatprep.subr.mxu0 0.0
      %4752 = vmatpush1.msra.mxu0 0.0
      %4753 = vmatprep.subr.mxu0 0.0
      %4754 = vmatpush1.msra.mxu0 0.0
      %4755 = vmatprep.subr.mxu0 0.0
      %4756 = vmatpush1.msra.mxu0 0.0
      %4757 = vmatprep.subr.mxu0 0.0
      %4758 = vmatpush1.msra.mxu0 0.0
      %4759 = vmatprep.subr.mxu0 0.0
      %4760 = vmatpush1.msra.mxu0 0.0
      %4761 = vmatprep.subr.mxu0 0.0
      %4762 = vmatpush1.msra.mxu0 0.0
      %4763 = vmatprep.subr.mxu0 0.0
      %4764 = vmatpush1.msra.mxu0 0.0
      %4765 = vmatprep.subr.mxu0 0.0
      %4766 = vmatpush1.msra.mxu0 0.0
      %4767 = vmatprep.subr.mxu0 0.0
      %4768 = vmatpush1.msra.mxu0 0.0
      %4769 = vmatprep.subr.mxu0 0.0
      %4770 = vmatpush1.msra.mxu0 0.0
      %4771 = vmatprep.subr.mxu0 0.0
      %4772 = vmatpush1.msra.mxu0 0.0
      %4773 = vmatprep.subr.mxu0 0.0
      %4774 = vmatpush1.msra.mxu0 0.0
      %4775 = vmatprep.subr.mxu0 0.0
      %4776 = vmatpush1.msra.mxu0 0.0
      %4777 = vmatprep.subr.mxu0 0.0
      %4778 = vmatpush1.msra.mxu0 0.0
      %4779 = vmatprep.subr.mxu0 0.0
      %4780 = vmatpush1.msra.mxu0 0.0
      %4781 = vmatprep.subr.mxu0 0.0
      %4782 = vmatpush1.msra.mxu0 %v4746
      %4783 = vmatprep.subr.mxu0 0.0
      %4784 = vmatpush2.msra.mxu0 0.0
      %4785 = vmatprep.subr.mxu0 0.0
      %4786 = vmatpush2.msra.mxu0 0.0
      %4787 = vmatprep.subr.mxu0 0.0
      %4788 = vmatpush2.msra.mxu0 0.0
      %4789 = vmatprep.subr.mxu0 0.0
      %4790 = vmatpush2.msra.mxu0 0.0
      %4791 = vmatprep.subr.mxu0 0.0
      %4792 = vmatpush2.msra.mxu0 0.0
      %4793 = vmatprep.subr.mxu0 0.0
      %4794 = vmatpush2.msra.mxu0 0.0
      %4795 = vmatprep.subr.mxu0 0.0
      %4796 = vmatpush2.msra.mxu0 0.0
      %4797 = vmatprep.subr.mxu0 0.0
      %4798 = vmatpush2.msra.mxu0 0.0
      %4799 = vmatprep.subr.mxu0 0.0
      %4800 = vmatpush2.msra.mxu0 0.0
      %4801 = vmatprep.subr.mxu0 0.0
      %4802 = vmatpush2.msra.mxu0 0.0
      %4803 = vmatprep.subr.mxu0 0.0
      %4804 = vmatpush2.msra.mxu0 0.0
      %4805 = vmatprep.subr.mxu0 0.0
      %4806 = vmatpush2.msra.mxu0 0.0
      %4807 = vmatprep.subr.mxu0 0.0
      %4808 = vmatpush2.msra.mxu0 0.0
      %4809 = vmatprep.subr.mxu0 0.0
      %4810 = vmatpush2.msra.mxu0 0.0
      %4811 = vmatprep.subr.mxu0 0.0
      %4812 = vmatpush2.msra.mxu0 0.0
      %4813 = vmatprep.subr.mxu0 0.0
      %4814 = vmatpush2.msra.mxu0 0.0
      %4815 = vmatprep.mubr.f32.mxu0 0.0
      %4816 = vmatmul.mubr.f32.gmra.mxu0 %v4749
      %v4817 = vpop.f32.mrf.mxu0
      %v4818 = vadd.f32 0.0, %v4817
      %v4819 = vpop.f32.mrf.mxu0
      %4820 = vdwg.mxu0
      %4821 = vrot.lane.b32.xlu0 %v937, 112
      %v4822 = vpop.permute.xlu0 %4821
      %v4825 = vsel %vm974, %v3739, 0
      %4827 = vmatprep.subr.mxu0 0.0
      %4828 = vmatpush1.msra.mxu0 0.0
      %4829 = vmatprep.subr.mxu0 0.0
      %4830 = vmatpush1.msra.mxu0 0.0
      %4831 = vmatprep.subr.mxu0 0.0
      %4832 = vmatpush1.msra.mxu0 0.0
      %4833 = vmatprep.subr.mxu0 0.0
      %4834 = vmatpush1.msra.mxu0 0.0
      %4835 = vmatprep.subr.mxu0 0.0
      %4836 = vmatpush1.msra.mxu0 0.0
      %4837 = vmatprep.subr.mxu0 0.0
      %4838 = vmatpush1.msra.mxu0 0.0
      %4839 = vmatprep.subr.mxu0 0.0
      %4840 = vmatpush1.msra.mxu0 0.0
      %4841 = vmatprep.subr.mxu0 0.0
      %4842 = vmatpush1.msra.mxu0 0.0
      %4843 = vmatprep.subr.mxu0 0.0
      %4844 = vmatpush1.msra.mxu0 0.0
      %4845 = vmatprep.subr.mxu0 0.0
      %4846 = vmatpush1.msra.mxu0 0.0
      %4847 = vmatprep.subr.mxu0 0.0
      %4848 = vmatpush1.msra.mxu0 0.0
      %4849 = vmatprep.subr.mxu0 0.0
      %4850 = vmatpush1.msra.mxu0 0.0
      %4851 = vmatprep.subr.mxu0 0.0
      %4852 = vmatpush1.msra.mxu0 0.0
      %4853 = vmatprep.subr.mxu0 0.0
      %4854 = vmatpush1.msra.mxu0 0.0
      %4855 = vmatprep.subr.mxu0 0.0
      %4856 = vmatpush1.msra.mxu0 0.0
      %4857 = vmatprep.subr.mxu0 0.0
      %4858 = vmatpush1.msra.mxu0 %v4822
      %4859 = vmatprep.subr.mxu0 0.0
      %4860 = vmatpush2.msra.mxu0 0.0
      %4861 = vmatprep.subr.mxu0 0.0
      %4862 = vmatpush2.msra.mxu0 0.0
      %4863 = vmatprep.subr.mxu0 0.0
      %4864 = vmatpush2.msra.mxu0 0.0
      %4865 = vmatprep.subr.mxu0 0.0
      %4866 = vmatpush2.msra.mxu0 0.0
      %4867 = vmatprep.subr.mxu0 0.0
      %4868 = vmatpush2.msra.mxu0 0.0
      %4869 = vmatprep.subr.mxu0 0.0
      %4870 = vmatpush2.msra.mxu0 0.0
      %4871 = vmatprep.subr.mxu0 0.0
      %4872 = vmatpush2.msra.mxu0 0.0
      %4873 = vmatprep.subr.mxu0 0.0
      %4874 = vmatpush2.msra.mxu0 0.0
      %4875 = vmatprep.subr.mxu0 0.0
      %4876 = vmatpush2.msra.mxu0 0.0
      %4877 = vmatprep.subr.mxu0 0.0
      %4878 = vmatpush2.msra.mxu0 0.0
      %4879 = vmatprep.subr.mxu0 0.0
      %4880 = vmatpush2.msra.mxu0 0.0
      %4881 = vmatprep.subr.mxu0 0.0
      %4882 = vmatpush2.msra.mxu0 0.0
      %4883 = vmatprep.subr.mxu0 0.0
      %4884 = vmatpush2.msra.mxu0 0.0
      %4885 = vmatprep.subr.mxu0 0.0
      %4886 = vmatpush2.msra.mxu0 0.0
      %4887 = vmatprep.subr.mxu0 0.0
      %4888 = vmatpush2.msra.mxu0 0.0
      %4889 = vmatprep.subr.mxu0 0.0
      %4890 = vmatpush2.msra.mxu0 0.0
      %4891 = vmatprep.mubr.f32.mxu0 0.0
      %4892 = vmatmul.mubr.f32.gmra.mxu0 %v4825
      %v4893 = vpop.f32.mrf.mxu0
      %v4894 = vadd.f32 0.0, %v4893
      %v4895 = vpop.f32.mrf.mxu0
      %4896 = vdwg.mxu0
      %4897 = vrot.lane.b32.xlu0 %v939, 112
      %v4898 = vpop.permute.xlu0 %4897
      %v4901 = vsel %vm974, %v3740, 0
      %4903 = vmatprep.subr.mxu0 0.0
      %4904 = vmatpush1.msra.mxu0 0.0
      %4905 = vmatprep.subr.mxu0 0.0
      %4906 = vmatpush1.msra.mxu0 0.0
      %4907 = vmatprep.subr.mxu0 0.0
      %4908 = vmatpush1.msra.mxu0 0.0
      %4909 = vmatprep.subr.mxu0 0.0
      %4910 = vmatpush1.msra.mxu0 0.0
      %4911 = vmatprep.subr.mxu0 0.0
      %4912 = vmatpush1.msra.mxu0 0.0
      %4913 = vmatprep.subr.mxu0 0.0
      %4914 = vmatpush1.msra.mxu0 0.0
      %4915 = vmatprep.subr.mxu0 0.0
      %4916 = vmatpush1.msra.mxu0 0.0
      %4917 = vmatprep.subr.mxu0 0.0
      %4918 = vmatpush1.msra.mxu0 0.0
      %4919 = vmatprep.subr.mxu0 0.0
      %4920 = vmatpush1.msra.mxu0 0.0
      %4921 = vmatprep.subr.mxu0 0.0
      %4922 = vmatpush1.msra.mxu0 0.0
      %4923 = vmatprep.subr.mxu0 0.0
      %4924 = vmatpush1.msra.mxu0 0.0
      %4925 = vmatprep.subr.mxu0 0.0
      %4926 = vmatpush1.msra.mxu0 0.0
      %4927 = vmatprep.subr.mxu0 0.0
      %4928 = vmatpush1.msra.mxu0 0.0
      %4929 = vmatprep.subr.mxu0 0.0
      %4930 = vmatpush1.msra.mxu0 0.0
      %4931 = vmatprep.subr.mxu0 0.0
      %4932 = vmatpush1.msra.mxu0 0.0
      %4933 = vmatprep.subr.mxu0 0.0
      %4934 = vmatpush1.msra.mxu0 %v4898
      %4935 = vmatprep.subr.mxu0 0.0
      %4936 = vmatpush2.msra.mxu0 0.0
      %4937 = vmatprep.subr.mxu0 0.0
      %4938 = vmatpush2.msra.mxu0 0.0
      %4939 = vmatprep.subr.mxu0 0.0
      %4940 = vmatpush2.msra.mxu0 0.0
      %4941 = vmatprep.subr.mxu0 0.0
      %4942 = vmatpush2.msra.mxu0 0.0
      %4943 = vmatprep.subr.mxu0 0.0
      %4944 = vmatpush2.msra.mxu0 0.0
      %4945 = vmatprep.subr.mxu0 0.0
      %4946 = vmatpush2.msra.mxu0 0.0
      %4947 = vmatprep.subr.mxu0 0.0
      %4948 = vmatpush2.msra.mxu0 0.0
      %4949 = vmatprep.subr.mxu0 0.0
      %4950 = vmatpush2.msra.mxu0 0.0
      %4951 = vmatprep.subr.mxu0 0.0
      %4952 = vmatpush2.msra.mxu0 0.0
      %4953 = vmatprep.subr.mxu0 0.0
      %4954 = vmatpush2.msra.mxu0 0.0
      %4955 = vmatprep.subr.mxu0 0.0
      %4956 = vmatpush2.msra.mxu0 0.0
      %4957 = vmatprep.subr.mxu0 0.0
      %4958 = vmatpush2.msra.mxu0 0.0
      %4959 = vmatprep.subr.mxu0 0.0
      %4960 = vmatpush2.msra.mxu0 0.0
      %4961 = vmatprep.subr.mxu0 0.0
      %4962 = vmatpush2.msra.mxu0 0.0
      %4963 = vmatprep.subr.mxu0 0.0
      %4964 = vmatpush2.msra.mxu0 0.0
      %4965 = vmatprep.subr.mxu0 0.0
      %4966 = vmatpush2.msra.mxu0 0.0
      %4967 = vmatprep.mubr.f32.mxu0 0.0
      %4968 = vmatmul.mubr.f32.gmra.mxu0 %v4901
      %v4969 = vpop.f32.mrf.mxu0
      %v4970 = vadd.f32 0.0, %v4969
      %v4971 = vpop.f32.mrf.mxu0
      %4972 = vdwg.mxu0
      %4973 = vrot.lane.b32.xlu0 %v941, 112
      %v4974 = vpop.permute.xlu0 %4973
      %v4977 = vsel %vm974, %v3741, 0
      %4979 = vmatprep.subr.mxu0 0.0
      %4980 = vmatpush1.msra.mxu0 0.0
      %4981 = vmatprep.subr.mxu0 0.0
      %4982 = vmatpush1.msra.mxu0 0.0
      %4983 = vmatprep.subr.mxu0 0.0
      %4984 = vmatpush1.msra.mxu0 0.0
      %4985 = vmatprep.subr.mxu0 0.0
      %4986 = vmatpush1.msra.mxu0 0.0
      %4987 = vmatprep.subr.mxu0 0.0
      %4988 = vmatpush1.msra.mxu0 0.0
      %4989 = vmatprep.subr.mxu0 0.0
      %4990 = vmatpush1.msra.mxu0 0.0
      %4991 = vmatprep.subr.mxu0 0.0
      %4992 = vmatpush1.msra.mxu0 0.0
      %4993 = vmatprep.subr.mxu0 0.0
      %4994 = vmatpush1.msra.mxu0 0.0
      %4995 = vmatprep.subr.mxu0 0.0
      %4996 = vmatpush1.msra.mxu0 0.0
      %4997 = vmatprep.subr.mxu0 0.0
      %4998 = vmatpush1.msra.mxu0 0.0
      %4999 = vmatprep.subr.mxu0 0.0
      %5000 = vmatpush1.msra.mxu0 0.0
      %5001 = vmatprep.subr.mxu0 0.0
      %5002 = vmatpush1.msra.mxu0 0.0
      %5003 = vmatprep.subr.mxu0 0.0
      %5004 = vmatpush1.msra.mxu0 0.0
      %5005 = vmatprep.subr.mxu0 0.0
      %5006 = vmatpush1.msra.mxu0 0.0
      %5007 = vmatprep.subr.mxu0 0.0
      %5008 = vmatpush1.msra.mxu0 0.0
      %5009 = vmatprep.subr.mxu0 0.0
      %5010 = vmatpush1.msra.mxu0 %v4974
      %5011 = vmatprep.subr.mxu0 0.0
      %5012 = vmatpush2.msra.mxu0 0.0
      %5013 = vmatprep.subr.mxu0 0.0
      %5014 = vmatpush2.msra.mxu0 0.0
      %5015 = vmatprep.subr.mxu0 0.0
      %5016 = vmatpush2.msra.mxu0 0.0
      %5017 = vmatprep.subr.mxu0 0.0
      %5018 = vmatpush2.msra.mxu0 0.0
      %5019 = vmatprep.subr.mxu0 0.0
      %5020 = vmatpush2.msra.mxu0 0.0
      %5021 = vmatprep.subr.mxu0 0.0
      %5022 = vmatpush2.msra.mxu0 0.0
      %5023 = vmatprep.subr.mxu0 0.0
      %5024 = vmatpush2.msra.mxu0 0.0
      %5025 = vmatprep.subr.mxu0 0.0
      %5026 = vmatpush2.msra.mxu0 0.0
      %5027 = vmatprep.subr.mxu0 0.0
      %5028 = vmatpush2.msra.mxu0 0.0
      %5029 = vmatprep.subr.mxu0 0.0
      %5030 = vmatpush2.msra.mxu0 0.0
      %5031 = vmatprep.subr.mxu0 0.0
      %5032 = vmatpush2.msra.mxu0 0.0
      %5033 = vmatprep.subr.mxu0 0.0
      %5034 = vmatpush2.msra.mxu0 0.0
      %5035 = vmatprep.subr.mxu0 0.0
      %5036 = vmatpush2.msra.mxu0 0.0
      %5037 = vmatprep.subr.mxu0 0.0
      %5038 = vmatpush2.msra.mxu0 0.0
      %5039 = vmatprep.subr.mxu0 0.0
      %5040 = vmatpush2.msra.mxu0 0.0
      %5041 = vmatprep.subr.mxu0 0.0
      %5042 = vmatpush2.msra.mxu0 0.0
      %5043 = vmatprep.mubr.f32.mxu0 0.0
      %5044 = vmatmul.mubr.f32.gmra.mxu0 %v4977
      %v5045 = vpop.f32.mrf.mxu0
      %v5046 = vadd.f32 0.0, %v5045
      %v5047 = vpop.f32.mrf.mxu0
      %5048 = vdwg.mxu0
      %5049 = vrot.lane.b32.xlu0 %v943, 112
      %v5050 = vpop.permute.xlu0 %5049
      %v5053 = vsel %vm974, %v3742, 0
      %5055 = vmatprep.subr.mxu0 0.0
      %5056 = vmatpush1.msra.mxu0 0.0
      %5057 = vmatprep.subr.mxu0 0.0
      %5058 = vmatpush1.msra.mxu0 0.0
      %5059 = vmatprep.subr.mxu0 0.0
      %5060 = vmatpush1.msra.mxu0 0.0
      %5061 = vmatprep.subr.mxu0 0.0
      %5062 = vmatpush1.msra.mxu0 0.0
      %5063 = vmatprep.subr.mxu0 0.0
      %5064 = vmatpush1.msra.mxu0 0.0
      %5065 = vmatprep.subr.mxu0 0.0
      %5066 = vmatpush1.msra.mxu0 0.0
      %5067 = vmatprep.subr.mxu0 0.0
      %5068 = vmatpush1.msra.mxu0 0.0
      %5069 = vmatprep.subr.mxu0 0.0
      %5070 = vmatpush1.msra.mxu0 0.0
      %5071 = vmatprep.subr.mxu0 0.0
      %5072 = vmatpush1.msra.mxu0 0.0
      %5073 = vmatprep.subr.mxu0 0.0
      %5074 = vmatpush1.msra.mxu0 0.0
      %5075 = vmatprep.subr.mxu0 0.0
      %5076 = vmatpush1.msra.mxu0 0.0
      %5077 = vmatprep.subr.mxu0 0.0
      %5078 = vmatpush1.msra.mxu0 0.0
      %5079 = vmatprep.subr.mxu0 0.0
      %5080 = vmatpush1.msra.mxu0 0.0
      %5081 = vmatprep.subr.mxu0 0.0
      %5082 = vmatpush1.msra.mxu0 0.0
      %5083 = vmatprep.subr.mxu0 0.0
      %5084 = vmatpush1.msra.mxu0 0.0
      %5085 = vmatprep.subr.mxu0 0.0
      %5086 = vmatpush1.msra.mxu0 %v5050
      %5087 = vmatprep.subr.mxu0 0.0
      %5088 = vmatpush2.msra.mxu0 0.0
      %5089 = vmatprep.subr.mxu0 0.0
      %5090 = vmatpush2.msra.mxu0 0.0
      %5091 = vmatprep.subr.mxu0 0.0
      %5092 = vmatpush2.msra.mxu0 0.0
      %5093 = vmatprep.subr.mxu0 0.0
      %5094 = vmatpush2.msra.mxu0 0.0
      %5095 = vmatprep.subr.mxu0 0.0
      %5096 = vmatpush2.msra.mxu0 0.0
      %5097 = vmatprep.subr.mxu0 0.0
      %5098 = vmatpush2.msra.mxu0 0.0
      %5099 = vmatprep.subr.mxu0 0.0
      %5100 = vmatpush2.msra.mxu0 0.0
      %5101 = vmatprep.subr.mxu0 0.0
      %5102 = vmatpush2.msra.mxu0 0.0
      %5103 = vmatprep.subr.mxu0 0.0
      %5104 = vmatpush2.msra.mxu0 0.0
      %5105 = vmatprep.subr.mxu0 0.0
      %5106 = vmatpush2.msra.mxu0 0.0
      %5107 = vmatprep.subr.mxu0 0.0
      %5108 = vmatpush2.msra.mxu0 0.0
      %5109 = vmatprep.subr.mxu0 0.0
      %5110 = vmatpush2.msra.mxu0 0.0
      %5111 = vmatprep.subr.mxu0 0.0
      %5112 = vmatpush2.msra.mxu0 0.0
      %5113 = vmatprep.subr.mxu0 0.0
      %5114 = vmatpush2.msra.mxu0 0.0
      %5115 = vmatprep.subr.mxu0 0.0
      %5116 = vmatpush2.msra.mxu0 0.0
      %5117 = vmatprep.subr.mxu0 0.0
      %5118 = vmatpush2.msra.mxu0 0.0
      %5119 = vmatprep.mubr.f32.mxu0 0.0
      %5120 = vmatmul.mubr.f32.gmra.mxu0 %v5053
      %v5121 = vpop.f32.mrf.mxu0
      %v5122 = vadd.f32 0.0, %v5121
      %v5123 = vpop.f32.mrf.mxu0
      %5124 = vdwg.mxu0
      %5125 = vrot.lane.b32.xlu0 %v945, 112
      %v5126 = vpop.permute.xlu0 %5125
      %v5129 = vsel %vm974, %v3743, 0
      %5131 = vmatprep.subr.mxu0 0.0
      %5132 = vmatpush1.msra.mxu0 0.0
      %5133 = vmatprep.subr.mxu0 0.0
      %5134 = vmatpush1.msra.mxu0 0.0
      %5135 = vmatprep.subr.mxu0 0.0
      %5136 = vmatpush1.msra.mxu0 0.0
      %5137 = vmatprep.subr.mxu0 0.0
      %5138 = vmatpush1.msra.mxu0 0.0
      %5139 = vmatprep.subr.mxu0 0.0
      %5140 = vmatpush1.msra.mxu0 0.0
      %5141 = vmatprep.subr.mxu0 0.0
      %5142 = vmatpush1.msra.mxu0 0.0
      %5143 = vmatprep.subr.mxu0 0.0
      %5144 = vmatpush1.msra.mxu0 0.0
      %5145 = vmatprep.subr.mxu0 0.0
      %5146 = vmatpush1.msra.mxu0 0.0
      %5147 = vmatprep.subr.mxu0 0.0
      %5148 = vmatpush1.msra.mxu0 0.0
      %5149 = vmatprep.subr.mxu0 0.0
      %5150 = vmatpush1.msra.mxu0 0.0
      %5151 = vmatprep.subr.mxu0 0.0
      %5152 = vmatpush1.msra.mxu0 0.0
      %5153 = vmatprep.subr.mxu0 0.0
      %5154 = vmatpush1.msra.mxu0 0.0
      %5155 = vmatprep.subr.mxu0 0.0
      %5156 = vmatpush1.msra.mxu0 0.0
      %5157 = vmatprep.subr.mxu0 0.0
      %5158 = vmatpush1.msra.mxu0 0.0
      %5159 = vmatprep.subr.mxu0 0.0
      %5160 = vmatpush1.msra.mxu0 0.0
      %5161 = vmatprep.subr.mxu0 0.0
      %5162 = vmatpush1.msra.mxu0 %v5126
      %5163 = vmatprep.subr.mxu0 0.0
      %5164 = vmatpush2.msra.mxu0 0.0
      %5165 = vmatprep.subr.mxu0 0.0
      %5166 = vmatpush2.msra.mxu0 0.0
      %5167 = vmatprep.subr.mxu0 0.0
      %5168 = vmatpush2.msra.mxu0 0.0
      %5169 = vmatprep.subr.mxu0 0.0
      %5170 = vmatpush2.msra.mxu0 0.0
      %5171 = vmatprep.subr.mxu0 0.0
      %5172 = vmatpush2.msra.mxu0 0.0
      %5173 = vmatprep.subr.mxu0 0.0
      %5174 = vmatpush2.msra.mxu0 0.0
      %5175 = vmatprep.subr.mxu0 0.0
      %5176 = vmatpush2.msra.mxu0 0.0
      %5177 = vmatprep.subr.mxu0 0.0
      %5178 = vmatpush2.msra.mxu0 0.0
      %5179 = vmatprep.subr.mxu0 0.0
      %5180 = vmatpush2.msra.mxu0 0.0
      %5181 = vmatprep.subr.mxu0 0.0
      %5182 = vmatpush2.msra.mxu0 0.0
      %5183 = vmatprep.subr.mxu0 0.0
      %5184 = vmatpush2.msra.mxu0 0.0
      %5185 = vmatprep.subr.mxu0 0.0
      %5186 = vmatpush2.msra.mxu0 0.0
      %5187 = vmatprep.subr.mxu0 0.0
      %5188 = vmatpush2.msra.mxu0 0.0
      %5189 = vmatprep.subr.mxu0 0.0
      %5190 = vmatpush2.msra.mxu0 0.0
      %5191 = vmatprep.subr.mxu0 0.0
      %5192 = vmatpush2.msra.mxu0 0.0
      %5193 = vmatprep.subr.mxu0 0.0
      %5194 = vmatpush2.msra.mxu0 0.0
      %5195 = vmatprep.mubr.f32.mxu0 0.0
      %5196 = vmatmul.mubr.f32.gmra.mxu0 %v5129
      %v5197 = vpop.f32.mrf.mxu0
      %v5198 = vadd.f32 0.0, %v5197
      %v5199 = vpop.f32.mrf.mxu0
      %5200 = vdwg.mxu0
      %5201 = vrot.lane.b32.xlu0 %v947, 112
      %v5202 = vpop.permute.xlu0 %5201
      %v5205 = vsel %vm974, %v3744, 0
      %5207 = vmatprep.subr.mxu0 0.0
      %5208 = vmatpush1.msra.mxu0 0.0
      %5209 = vmatprep.subr.mxu0 0.0
      %5210 = vmatpush1.msra.mxu0 0.0
      %5211 = vmatprep.subr.mxu0 0.0
      %5212 = vmatpush1.msra.mxu0 0.0
      %5213 = vmatprep.subr.mxu0 0.0
      %5214 = vmatpush1.msra.mxu0 0.0
      %5215 = vmatprep.subr.mxu0 0.0
      %5216 = vmatpush1.msra.mxu0 0.0
      %5217 = vmatprep.subr.mxu0 0.0
      %5218 = vmatpush1.msra.mxu0 0.0
      %5219 = vmatprep.subr.mxu0 0.0
      %5220 = vmatpush1.msra.mxu0 0.0
      %5221 = vmatprep.subr.mxu0 0.0
      %5222 = vmatpush1.msra.mxu0 0.0
      %5223 = vmatprep.subr.mxu0 0.0
      %5224 = vmatpush1.msra.mxu0 0.0
      %5225 = vmatprep.subr.mxu0 0.0
      %5226 = vmatpush1.msra.mxu0 0.0
      %5227 = vmatprep.subr.mxu0 0.0
      %5228 = vmatpush1.msra.mxu0 0.0
      %5229 = vmatprep.subr.mxu0 0.0
      %5230 = vmatpush1.msra.mxu0 0.0
      %5231 = vmatprep.subr.mxu0 0.0
      %5232 = vmatpush1.msra.mxu0 0.0
      %5233 = vmatprep.subr.mxu0 0.0
      %5234 = vmatpush1.msra.mxu0 0.0
      %5235 = vmatprep.subr.mxu0 0.0
      %5236 = vmatpush1.msra.mxu0 0.0
      %5237 = vmatprep.subr.mxu0 0.0
      %5238 = vmatpush1.msra.mxu0 %v5202
      %5239 = vmatprep.subr.mxu0 0.0
      %5240 = vmatpush2.msra.mxu0 0.0
      %5241 = vmatprep.subr.mxu0 0.0
      %5242 = vmatpush2.msra.mxu0 0.0
      %5243 = vmatprep.subr.mxu0 0.0
      %5244 = vmatpush2.msra.mxu0 0.0
      %5245 = vmatprep.subr.mxu0 0.0
      %5246 = vmatpush2.msra.mxu0 0.0
      %5247 = vmatprep.subr.mxu0 0.0
      %5248 = vmatpush2.msra.mxu0 0.0
      %5249 = vmatprep.subr.mxu0 0.0
      %5250 = vmatpush2.msra.mxu0 0.0
      %5251 = vmatprep.subr.mxu0 0.0
      %5252 = vmatpush2.msra.mxu0 0.0
      %5253 = vmatprep.subr.mxu0 0.0
      %5254 = vmatpush2.msra.mxu0 0.0
      %5255 = vmatprep.subr.mxu0 0.0
      %5256 = vmatpush2.msra.mxu0 0.0
      %5257 = vmatprep.subr.mxu0 0.0
      %5258 = vmatpush2.msra.mxu0 0.0
      %5259 = vmatprep.subr.mxu0 0.0
      %5260 = vmatpush2.msra.mxu0 0.0
      %5261 = vmatprep.subr.mxu0 0.0
      %5262 = vmatpush2.msra.mxu0 0.0
      %5263 = vmatprep.subr.mxu0 0.0
      %5264 = vmatpush2.msra.mxu0 0.0
      %5265 = vmatprep.subr.mxu0 0.0
      %5266 = vmatpush2.msra.mxu0 0.0
      %5267 = vmatprep.subr.mxu0 0.0
      %5268 = vmatpush2.msra.mxu0 0.0
      %5269 = vmatprep.subr.mxu0 0.0
      %5270 = vmatpush2.msra.mxu0 0.0
      %5271 = vmatprep.mubr.f32.mxu0 0.0
      %5272 = vmatmul.mubr.f32.gmra.mxu0 %v5205
      %v5273 = vpop.f32.mrf.mxu0
      %v5274 = vadd.f32 0.0, %v5273
      %v5275 = vpop.f32.mrf.mxu0
      %5276 = vdwg.mxu0
      %5277 = vrot.lane.b32.xlu0 %v949, 112
      %v5278 = vpop.permute.xlu0 %5277
      %v5281 = vsel %vm974, %v3745, 0
      %5283 = vmatprep.subr.mxu0 0.0
      %5284 = vmatpush1.msra.mxu0 0.0
      %5285 = vmatprep.subr.mxu0 0.0
      %5286 = vmatpush1.msra.mxu0 0.0
      %5287 = vmatprep.subr.mxu0 0.0
      %5288 = vmatpush1.msra.mxu0 0.0
      %5289 = vmatprep.subr.mxu0 0.0
      %5290 = vmatpush1.msra.mxu0 0.0
      %5291 = vmatprep.subr.mxu0 0.0
      %5292 = vmatpush1.msra.mxu0 0.0
      %5293 = vmatprep.subr.mxu0 0.0
      %5294 = vmatpush1.msra.mxu0 0.0
      %5295 = vmatprep.subr.mxu0 0.0
      %5296 = vmatpush1.msra.mxu0 0.0
      %5297 = vmatprep.subr.mxu0 0.0
      %5298 = vmatpush1.msra.mxu0 0.0
      %5299 = vmatprep.subr.mxu0 0.0
      %5300 = vmatpush1.msra.mxu0 0.0
      %5301 = vmatprep.subr.mxu0 0.0
      %5302 = vmatpush1.msra.mxu0 0.0
      %5303 = vmatprep.subr.mxu0 0.0
      %5304 = vmatpush1.msra.mxu0 0.0
      %5305 = vmatprep.subr.mxu0 0.0
      %5306 = vmatpush1.msra.mxu0 0.0
      %5307 = vmatprep.subr.mxu0 0.0
      %5308 = vmatpush1.msra.mxu0 0.0
      %5309 = vmatprep.subr.mxu0 0.0
      %5310 = vmatpush1.msra.mxu0 0.0
      %5311 = vmatprep.subr.mxu0 0.0
      %5312 = vmatpush1.msra.mxu0 0.0
      %5313 = vmatprep.subr.mxu0 0.0
      %5314 = vmatpush1.msra.mxu0 %v5278
      %5315 = vmatprep.subr.mxu0 0.0
      %5316 = vmatpush2.msra.mxu0 0.0
      %5317 = vmatprep.subr.mxu0 0.0
      %5318 = vmatpush2.msra.mxu0 0.0
      %5319 = vmatprep.subr.mxu0 0.0
      %5320 = vmatpush2.msra.mxu0 0.0
      %5321 = vmatprep.subr.mxu0 0.0
      %5322 = vmatpush2.msra.mxu0 0.0
      %5323 = vmatprep.subr.mxu0 0.0
      %5324 = vmatpush2.msra.mxu0 0.0
      %5325 = vmatprep.subr.mxu0 0.0
      %5326 = vmatpush2.msra.mxu0 0.0
      %5327 = vmatprep.subr.mxu0 0.0
      %5328 = vmatpush2.msra.mxu0 0.0
      %5329 = vmatprep.subr.mxu0 0.0
      %5330 = vmatpush2.msra.mxu0 0.0
      %5331 = vmatprep.subr.mxu0 0.0
      %5332 = vmatpush2.msra.mxu0 0.0
      %5333 = vmatprep.subr.mxu0 0.0
      %5334 = vmatpush2.msra.mxu0 0.0
      %5335 = vmatprep.subr.mxu0 0.0
      %5336 = vmatpush2.msra.mxu0 0.0
      %5337 = vmatprep.subr.mxu0 0.0
      %5338 = vmatpush2.msra.mxu0 0.0
      %5339 = vmatprep.subr.mxu0 0.0
      %5340 = vmatpush2.msra.mxu0 0.0
      %5341 = vmatprep.subr.mxu0 0.0
      %5342 = vmatpush2.msra.mxu0 0.0
      %5343 = vmatprep.subr.mxu0 0.0
      %5344 = vmatpush2.msra.mxu0 0.0
      %5345 = vmatprep.subr.mxu0 0.0
      %5346 = vmatpush2.msra.mxu0 0.0
      %5347 = vmatprep.mubr.f32.mxu0 0.0
      %5348 = vmatmul.mubr.f32.gmra.mxu0 %v5281
      %v5349 = vpop.f32.mrf.mxu0
      %v5350 = vadd.f32 0.0, %v5349
      %v5351 = vpop.f32.mrf.mxu0
      %5352 = vdwg.mxu0
      %5353 = vrot.lane.b32.xlu0 %v951, 112
      %v5354 = vpop.permute.xlu0 %5353
      %v5357 = vsel %vm974, %v3746, 0
      %5359 = vmatprep.subr.mxu0 0.0
      %5360 = vmatpush1.msra.mxu0 0.0
      %5361 = vmatprep.subr.mxu0 0.0
      %5362 = vmatpush1.msra.mxu0 0.0
      %5363 = vmatprep.subr.mxu0 0.0
      %5364 = vmatpush1.msra.mxu0 0.0
      %5365 = vmatprep.subr.mxu0 0.0
      %5366 = vmatpush1.msra.mxu0 0.0
      %5367 = vmatprep.subr.mxu0 0.0
      %5368 = vmatpush1.msra.mxu0 0.0
      %5369 = vmatprep.subr.mxu0 0.0
      %5370 = vmatpush1.msra.mxu0 0.0
      %5371 = vmatprep.subr.mxu0 0.0
      %5372 = vmatpush1.msra.mxu0 0.0
      %5373 = vmatprep.subr.mxu0 0.0
      %5374 = vmatpush1.msra.mxu0 0.0
      %5375 = vmatprep.subr.mxu0 0.0
      %5376 = vmatpush1.msra.mxu0 0.0
      %5377 = vmatprep.subr.mxu0 0.0
      %5378 = vmatpush1.msra.mxu0 0.0
      %5379 = vmatprep.subr.mxu0 0.0
      %5380 = vmatpush1.msra.mxu0 0.0
      %5381 = vmatprep.subr.mxu0 0.0
      %5382 = vmatpush1.msra.mxu0 0.0
      %5383 = vmatprep.subr.mxu0 0.0
      %5384 = vmatpush1.msra.mxu0 0.0
      %5385 = vmatprep.subr.mxu0 0.0
      %5386 = vmatpush1.msra.mxu0 0.0
      %5387 = vmatprep.subr.mxu0 0.0
      %5388 = vmatpush1.msra.mxu0 0.0
      %5389 = vmatprep.subr.mxu0 0.0
      %5390 = vmatpush1.msra.mxu0 %v5354
      %5391 = vmatprep.subr.mxu0 0.0
      %5392 = vmatpush2.msra.mxu0 0.0
      %5393 = vmatprep.subr.mxu0 0.0
      %5394 = vmatpush2.msra.mxu0 0.0
      %5395 = vmatprep.subr.mxu0 0.0
      %5396 = vmatpush2.msra.mxu0 0.0
      %5397 = vmatprep.subr.mxu0 0.0
      %5398 = vmatpush2.msra.mxu0 0.0
      %5399 = vmatprep.subr.mxu0 0.0
      %5400 = vmatpush2.msra.mxu0 0.0
      %5401 = vmatprep.subr.mxu0 0.0
      %5402 = vmatpush2.msra.mxu0 0.0
      %5403 = vmatprep.subr.mxu0 0.0
      %5404 = vmatpush2.msra.mxu0 0.0
      %5405 = vmatprep.subr.mxu0 0.0
      %5406 = vmatpush2.msra.mxu0 0.0
      %5407 = vmatprep.subr.mxu0 0.0
      %5408 = vmatpush2.msra.mxu0 0.0
      %5409 = vmatprep.subr.mxu0 0.0
      %5410 = vmatpush2.msra.mxu0 0.0
      %5411 = vmatprep.subr.mxu0 0.0
      %5412 = vmatpush2.msra.mxu0 0.0
      %5413 = vmatprep.subr.mxu0 0.0
      %5414 = vmatpush2.msra.mxu0 0.0
      %5415 = vmatprep.subr.mxu0 0.0
      %5416 = vmatpush2.msra.mxu0 0.0
      %5417 = vmatprep.subr.mxu0 0.0
      %5418 = vmatpush2.msra.mxu0 0.0
      %5419 = vmatprep.subr.mxu0 0.0
      %5420 = vmatpush2.msra.mxu0 0.0
      %5421 = vmatprep.subr.mxu0 0.0
      %5422 = vmatpush2.msra.mxu0 0.0
      %5423 = vmatprep.mubr.f32.mxu0 0.0
      %5424 = vmatmul.mubr.f32.gmra.mxu0 %v5357
      %v5425 = vpop.f32.mrf.mxu0
      %v5426 = vadd.f32 0.0, %v5425
      %v5427 = vpop.f32.mrf.mxu0
      %5428 = vdwg.mxu0
      %5429 = vrot.lane.b32.xlu0 %v953, 112
      %v5430 = vpop.permute.xlu0 %5429
      %v5433 = vsel %vm974, %v3747, 0
      %5435 = vmatprep.subr.mxu0 0.0
      %5436 = vmatpush1.msra.mxu0 0.0
      %5437 = vmatprep.subr.mxu0 0.0
      %5438 = vmatpush1.msra.mxu0 0.0
      %5439 = vmatprep.subr.mxu0 0.0
      %5440 = vmatpush1.msra.mxu0 0.0
      %5441 = vmatprep.subr.mxu0 0.0
      %5442 = vmatpush1.msra.mxu0 0.0
      %5443 = vmatprep.subr.mxu0 0.0
      %5444 = vmatpush1.msra.mxu0 0.0
      %5445 = vmatprep.subr.mxu0 0.0
      %5446 = vmatpush1.msra.mxu0 0.0
      %5447 = vmatprep.subr.mxu0 0.0
      %5448 = vmatpush1.msra.mxu0 0.0
      %5449 = vmatprep.subr.mxu0 0.0
      %5450 = vmatpush1.msra.mxu0 0.0
      %5451 = vmatprep.subr.mxu0 0.0
      %5452 = vmatpush1.msra.mxu0 0.0
      %5453 = vmatprep.subr.mxu0 0.0
      %5454 = vmatpush1.msra.mxu0 0.0
      %5455 = vmatprep.subr.mxu0 0.0
      %5456 = vmatpush1.msra.mxu0 0.0
      %5457 = vmatprep.subr.mxu0 0.0
      %5458 = vmatpush1.msra.mxu0 0.0
      %5459 = vmatprep.subr.mxu0 0.0
      %5460 = vmatpush1.msra.mxu0 0.0
      %5461 = vmatprep.subr.mxu0 0.0
      %5462 = vmatpush1.msra.mxu0 0.0
      %5463 = vmatprep.subr.mxu0 0.0
      %5464 = vmatpush1.msra.mxu0 0.0
      %5465 = vmatprep.subr.mxu0 0.0
      %5466 = vmatpush1.msra.mxu0 %v5430
      %5467 = vmatprep.subr.mxu0 0.0
      %5468 = vmatpush2.msra.mxu0 0.0
      %5469 = vmatprep.subr.mxu0 0.0
      %5470 = vmatpush2.msra.mxu0 0.0
      %5471 = vmatprep.subr.mxu0 0.0
      %5472 = vmatpush2.msra.mxu0 0.0
      %5473 = vmatprep.subr.mxu0 0.0
      %5474 = vmatpush2.msra.mxu0 0.0
      %5475 = vmatprep.subr.mxu0 0.0
      %5476 = vmatpush2.msra.mxu0 0.0
      %5477 = vmatprep.subr.mxu0 0.0
      %5478 = vmatpush2.msra.mxu0 0.0
      %5479 = vmatprep.subr.mxu0 0.0
      %5480 = vmatpush2.msra.mxu0 0.0
      %5481 = vmatprep.subr.mxu0 0.0
      %5482 = vmatpush2.msra.mxu0 0.0
      %5483 = vmatprep.subr.mxu0 0.0
      %5484 = vmatpush2.msra.mxu0 0.0
      %5485 = vmatprep.subr.mxu0 0.0
      %5486 = vmatpush2.msra.mxu0 0.0
      %5487 = vmatprep.subr.mxu0 0.0
      %5488 = vmatpush2.msra.mxu0 0.0
      %5489 = vmatprep.subr.mxu0 0.0
      %5490 = vmatpush2.msra.mxu0 0.0
      %5491 = vmatprep.subr.mxu0 0.0
      %5492 = vmatpush2.msra.mxu0 0.0
      %5493 = vmatprep.subr.mxu0 0.0
      %5494 = vmatpush2.msra.mxu0 0.0
      %5495 = vmatprep.subr.mxu0 0.0
      %5496 = vmatpush2.msra.mxu0 0.0
      %5497 = vmatprep.subr.mxu0 0.0
      %5498 = vmatpush2.msra.mxu0 0.0
      %5499 = vmatprep.mubr.f32.mxu0 0.0
      %5500 = vmatmul.mubr.f32.gmra.mxu0 %v5433
      %v5501 = vpop.f32.mrf.mxu0
      %v5502 = vadd.f32 0.0, %v5501
      %v5503 = vpop.f32.mrf.mxu0
      %5504 = vdwg.mxu0
      %5505 = vrot.lane.b32.xlu0 %v955, 112
      %v5506 = vpop.permute.xlu0 %5505
      %v5509 = vsel %vm974, %v3748, 0
      %5511 = vmatprep.subr.mxu0 0.0
      %5512 = vmatpush1.msra.mxu0 0.0
      %5513 = vmatprep.subr.mxu0 0.0
      %5514 = vmatpush1.msra.mxu0 0.0
      %5515 = vmatprep.subr.mxu0 0.0
      %5516 = vmatpush1.msra.mxu0 0.0
      %5517 = vmatprep.subr.mxu0 0.0
      %5518 = vmatpush1.msra.mxu0 0.0
      %5519 = vmatprep.subr.mxu0 0.0
      %5520 = vmatpush1.msra.mxu0 0.0
      %5521 = vmatprep.subr.mxu0 0.0
      %5522 = vmatpush1.msra.mxu0 0.0
      %5523 = vmatprep.subr.mxu0 0.0
      %5524 = vmatpush1.msra.mxu0 0.0
      %5525 = vmatprep.subr.mxu0 0.0
      %5526 = vmatpush1.msra.mxu0 0.0
      %5527 = vmatprep.subr.mxu0 0.0
      %5528 = vmatpush1.msra.mxu0 0.0
      %5529 = vmatprep.subr.mxu0 0.0
      %5530 = vmatpush1.msra.mxu0 0.0
      %5531 = vmatprep.subr.mxu0 0.0
      %5532 = vmatpush1.msra.mxu0 0.0
      %5533 = vmatprep.subr.mxu0 0.0
      %5534 = vmatpush1.msra.mxu0 0.0
      %5535 = vmatprep.subr.mxu0 0.0
      %5536 = vmatpush1.msra.mxu0 0.0
      %5537 = vmatprep.subr.mxu0 0.0
      %5538 = vmatpush1.msra.mxu0 0.0
      %5539 = vmatprep.subr.mxu0 0.0
      %5540 = vmatpush1.msra.mxu0 0.0
      %5541 = vmatprep.subr.mxu0 0.0
      %5542 = vmatpush1.msra.mxu0 %v5506
      %5543 = vmatprep.subr.mxu0 0.0
      %5544 = vmatpush2.msra.mxu0 0.0
      %5545 = vmatprep.subr.mxu0 0.0
      %5546 = vmatpush2.msra.mxu0 0.0
      %5547 = vmatprep.subr.mxu0 0.0
      %5548 = vmatpush2.msra.mxu0 0.0
      %5549 = vmatprep.subr.mxu0 0.0
      %5550 = vmatpush2.msra.mxu0 0.0
      %5551 = vmatprep.subr.mxu0 0.0
      %5552 = vmatpush2.msra.mxu0 0.0
      %5553 = vmatprep.subr.mxu0 0.0
      %5554 = vmatpush2.msra.mxu0 0.0
      %5555 = vmatprep.subr.mxu0 0.0
      %5556 = vmatpush2.msra.mxu0 0.0
      %5557 = vmatprep.subr.mxu0 0.0
      %5558 = vmatpush2.msra.mxu0 0.0
      %5559 = vmatprep.subr.mxu0 0.0
      %5560 = vmatpush2.msra.mxu0 0.0
      %5561 = vmatprep.subr.mxu0 0.0
      %5562 = vmatpush2.msra.mxu0 0.0
      %5563 = vmatprep.subr.mxu0 0.0
      %5564 = vmatpush2.msra.mxu0 0.0
      %5565 = vmatprep.subr.mxu0 0.0
      %5566 = vmatpush2.msra.mxu0 0.0
      %5567 = vmatprep.subr.mxu0 0.0
      %5568 = vmatpush2.msra.mxu0 0.0
      %5569 = vmatprep.subr.mxu0 0.0
      %5570 = vmatpush2.msra.mxu0 0.0
      %5571 = vmatprep.subr.mxu0 0.0
      %5572 = vmatpush2.msra.mxu0 0.0
      %5573 = vmatprep.subr.mxu0 0.0
      %5574 = vmatpush2.msra.mxu0 0.0
      %5575 = vmatprep.mubr.f32.mxu0 0.0
      %5576 = vmatmul.mubr.f32.gmra.mxu0 %v5509
      %v5577 = vpop.f32.mrf.mxu0
      %v5578 = vadd.f32 0.0, %v5577
      %v5579 = vpop.f32.mrf.mxu0
      %5580 = vdwg.mxu0
      %5581 = vrot.lane.b32.xlu0 %v957, 112
      %v5582 = vpop.permute.xlu0 %5581
      %v5585 = vsel %vm974, %v3749, 0
      %5587 = vmatprep.subr.mxu0 0.0
      %5588 = vmatpush1.msra.mxu0 0.0
      %5589 = vmatprep.subr.mxu0 0.0
      %5590 = vmatpush1.msra.mxu0 0.0
      %5591 = vmatprep.subr.mxu0 0.0
      %5592 = vmatpush1.msra.mxu0 0.0
      %5593 = vmatprep.subr.mxu0 0.0
      %5594 = vmatpush1.msra.mxu0 0.0
      %5595 = vmatprep.subr.mxu0 0.0
      %5596 = vmatpush1.msra.mxu0 0.0
      %5597 = vmatprep.subr.mxu0 0.0
      %5598 = vmatpush1.msra.mxu0 0.0
      %5599 = vmatprep.subr.mxu0 0.0
      %5600 = vmatpush1.msra.mxu0 0.0
      %5601 = vmatprep.subr.mxu0 0.0
      %5602 = vmatpush1.msra.mxu0 0.0
      %5603 = vmatprep.subr.mxu0 0.0
      %5604 = vmatpush1.msra.mxu0 0.0
      %5605 = vmatprep.subr.mxu0 0.0
      %5606 = vmatpush1.msra.mxu0 0.0
      %5607 = vmatprep.subr.mxu0 0.0
      %5608 = vmatpush1.msra.mxu0 0.0
      %5609 = vmatprep.subr.mxu0 0.0
      %5610 = vmatpush1.msra.mxu0 0.0
      %5611 = vmatprep.subr.mxu0 0.0
      %5612 = vmatpush1.msra.mxu0 0.0
      %5613 = vmatprep.subr.mxu0 0.0
      %5614 = vmatpush1.msra.mxu0 0.0
      %5615 = vmatprep.subr.mxu0 0.0
      %5616 = vmatpush1.msra.mxu0 0.0
      %5617 = vmatprep.subr.mxu0 0.0
      %5618 = vmatpush1.msra.mxu0 %v5582
      %5619 = vmatprep.subr.mxu0 0.0
      %5620 = vmatpush2.msra.mxu0 0.0
      %5621 = vmatprep.subr.mxu0 0.0
      %5622 = vmatpush2.msra.mxu0 0.0
      %5623 = vmatprep.subr.mxu0 0.0
      %5624 = vmatpush2.msra.mxu0 0.0
      %5625 = vmatprep.subr.mxu0 0.0
      %5626 = vmatpush2.msra.mxu0 0.0
      %5627 = vmatprep.subr.mxu0 0.0
      %5628 = vmatpush2.msra.mxu0 0.0
      %5629 = vmatprep.subr.mxu0 0.0
      %5630 = vmatpush2.msra.mxu0 0.0
      %5631 = vmatprep.subr.mxu0 0.0
      %5632 = vmatpush2.msra.mxu0 0.0
      %5633 = vmatprep.subr.mxu0 0.0
      %5634 = vmatpush2.msra.mxu0 0.0
      %5635 = vmatprep.subr.mxu0 0.0
      %5636 = vmatpush2.msra.mxu0 0.0
      %5637 = vmatprep.subr.mxu0 0.0
      %5638 = vmatpush2.msra.mxu0 0.0
      %5639 = vmatprep.subr.mxu0 0.0
      %5640 = vmatpush2.msra.mxu0 0.0
      %5641 = vmatprep.subr.mxu0 0.0
      %5642 = vmatpush2.msra.mxu0 0.0
      %5643 = vmatprep.subr.mxu0 0.0
      %5644 = vmatpush2.msra.mxu0 0.0
      %5645 = vmatprep.subr.mxu0 0.0
      %5646 = vmatpush2.msra.mxu0 0.0
      %5647 = vmatprep.subr.mxu0 0.0
      %5648 = vmatpush2.msra.mxu0 0.0
      %5649 = vmatprep.subr.mxu0 0.0
      %5650 = vmatpush2.msra.mxu0 0.0
      %5651 = vmatprep.mubr.f32.mxu0 0.0
      %5652 = vmatmul.mubr.f32.gmra.mxu0 %v5585
      %v5653 = vpop.f32.mrf.mxu0
      %v5654 = vadd.f32 0.0, %v5653
      %v5655 = vpop.f32.mrf.mxu0
      %5656 = vdwg.mxu0
      %5657 = vrot.lane.b32.xlu0 %v959, 112
      %v5658 = vpop.permute.xlu0 %5657
      %v5661 = vsel %vm974, %v3750, 0
      %5663 = vmatprep.subr.mxu0 0.0
      %5664 = vmatpush1.msra.mxu0 0.0
      %5665 = vmatprep.subr.mxu0 0.0
      %5666 = vmatpush1.msra.mxu0 0.0
      %5667 = vmatprep.subr.mxu0 0.0
      %5668 = vmatpush1.msra.mxu0 0.0
      %5669 = vmatprep.subr.mxu0 0.0
      %5670 = vmatpush1.msra.mxu0 0.0
      %5671 = vmatprep.subr.mxu0 0.0
      %5672 = vmatpush1.msra.mxu0 0.0
      %5673 = vmatprep.subr.mxu0 0.0
      %5674 = vmatpush1.msra.mxu0 0.0
      %5675 = vmatprep.subr.mxu0 0.0
      %5676 = vmatpush1.msra.mxu0 0.0
      %5677 = vmatprep.subr.mxu0 0.0
      %5678 = vmatpush1.msra.mxu0 0.0
      %5679 = vmatprep.subr.mxu0 0.0
      %5680 = vmatpush1.msra.mxu0 0.0
      %5681 = vmatprep.subr.mxu0 0.0
      %5682 = vmatpush1.msra.mxu0 0.0
      %5683 = vmatprep.subr.mxu0 0.0
      %5684 = vmatpush1.msra.mxu0 0.0
      %5685 = vmatprep.subr.mxu0 0.0
      %5686 = vmatpush1.msra.mxu0 0.0
      %5687 = vmatprep.subr.mxu0 0.0
      %5688 = vmatpush1.msra.mxu0 0.0
      %5689 = vmatprep.subr.mxu0 0.0
      %5690 = vmatpush1.msra.mxu0 0.0
      %5691 = vmatprep.subr.mxu0 0.0
      %5692 = vmatpush1.msra.mxu0 0.0
      %5693 = vmatprep.subr.mxu0 0.0
      %5694 = vmatpush1.msra.mxu0 %v5658
      %5695 = vmatprep.subr.mxu0 0.0
      %5696 = vmatpush2.msra.mxu0 0.0
      %5697 = vmatprep.subr.mxu0 0.0
      %5698 = vmatpush2.msra.mxu0 0.0
      %5699 = vmatprep.subr.mxu0 0.0
      %5700 = vmatpush2.msra.mxu0 0.0
      %5701 = vmatprep.subr.mxu0 0.0
      %5702 = vmatpush2.msra.mxu0 0.0
      %5703 = vmatprep.subr.mxu0 0.0
      %5704 = vmatpush2.msra.mxu0 0.0
      %5705 = vmatprep.subr.mxu0 0.0
      %5706 = vmatpush2.msra.mxu0 0.0
      %5707 = vmatprep.subr.mxu0 0.0
      %5708 = vmatpush2.msra.mxu0 0.0
      %5709 = vmatprep.subr.mxu0 0.0
      %5710 = vmatpush2.msra.mxu0 0.0
      %5711 = vmatprep.subr.mxu0 0.0
      %5712 = vmatpush2.msra.mxu0 0.0
      %5713 = vmatprep.subr.mxu0 0.0
      %5714 = vmatpush2.msra.mxu0 0.0
      %5715 = vmatprep.subr.mxu0 0.0
      %5716 = vmatpush2.msra.mxu0 0.0
      %5717 = vmatprep.subr.mxu0 0.0
      %5718 = vmatpush2.msra.mxu0 0.0
      %5719 = vmatprep.subr.mxu0 0.0
      %5720 = vmatpush2.msra.mxu0 0.0
      %5721 = vmatprep.subr.mxu0 0.0
      %5722 = vmatpush2.msra.mxu0 0.0
      %5723 = vmatprep.subr.mxu0 0.0
      %5724 = vmatpush2.msra.mxu0 0.0
      %5725 = vmatprep.subr.mxu0 0.0
      %5726 = vmatpush2.msra.mxu0 0.0
      %5727 = vmatprep.mubr.f32.mxu0 0.0
      %5728 = vmatmul.mubr.f32.gmra.mxu0 %v5661
      %v5729 = vpop.f32.mrf.mxu0
      %v5730 = vadd.f32 0.0, %v5729
      %v5731 = vpop.f32.mrf.mxu0
      %5732 = vdwg.mxu0
      %5733 = vrot.lane.b32.xlu0 %v961, 112
      %v5734 = vpop.permute.xlu0 %5733
      %v5737 = vsel %vm974, %v3751, 0
      %5739 = vmatprep.subr.mxu0 0.0
      %5740 = vmatpush1.msra.mxu0 0.0
      %5741 = vmatprep.subr.mxu0 0.0
      %5742 = vmatpush1.msra.mxu0 0.0
      %5743 = vmatprep.subr.mxu0 0.0
      %5744 = vmatpush1.msra.mxu0 0.0
      %5745 = vmatprep.subr.mxu0 0.0
      %5746 = vmatpush1.msra.mxu0 0.0
      %5747 = vmatprep.subr.mxu0 0.0
      %5748 = vmatpush1.msra.mxu0 0.0
      %5749 = vmatprep.subr.mxu0 0.0
      %5750 = vmatpush1.msra.mxu0 0.0
      %5751 = vmatprep.subr.mxu0 0.0
      %5752 = vmatpush1.msra.mxu0 0.0
      %5753 = vmatprep.subr.mxu0 0.0
      %5754 = vmatpush1.msra.mxu0 0.0
      %5755 = vmatprep.subr.mxu0 0.0
      %5756 = vmatpush1.msra.mxu0 0.0
      %5757 = vmatprep.subr.mxu0 0.0
      %5758 = vmatpush1.msra.mxu0 0.0
      %5759 = vmatprep.subr.mxu0 0.0
      %5760 = vmatpush1.msra.mxu0 0.0
      %5761 = vmatprep.subr.mxu0 0.0
      %5762 = vmatpush1.msra.mxu0 0.0
      %5763 = vmatprep.subr.mxu0 0.0
      %5764 = vmatpush1.msra.mxu0 0.0
      %5765 = vmatprep.subr.mxu0 0.0
      %5766 = vmatpush1.msra.mxu0 0.0
      %5767 = vmatprep.subr.mxu0 0.0
      %5768 = vmatpush1.msra.mxu0 0.0
      %5769 = vmatprep.subr.mxu0 0.0
      %5770 = vmatpush1.msra.mxu0 %v5734
      %5771 = vmatprep.subr.mxu0 0.0
      %5772 = vmatpush2.msra.mxu0 0.0
      %5773 = vmatprep.subr.mxu0 0.0
      %5774 = vmatpush2.msra.mxu0 0.0
      %5775 = vmatprep.subr.mxu0 0.0
      %5776 = vmatpush2.msra.mxu0 0.0
      %5777 = vmatprep.subr.mxu0 0.0
      %5778 = vmatpush2.msra.mxu0 0.0
      %5779 = vmatprep.subr.mxu0 0.0
      %5780 = vmatpush2.msra.mxu0 0.0
      %5781 = vmatprep.subr.mxu0 0.0
      %5782 = vmatpush2.msra.mxu0 0.0
      %5783 = vmatprep.subr.mxu0 0.0
      %5784 = vmatpush2.msra.mxu0 0.0
      %5785 = vmatprep.subr.mxu0 0.0
      %5786 = vmatpush2.msra.mxu0 0.0
      %5787 = vmatprep.subr.mxu0 0.0
      %5788 = vmatpush2.msra.mxu0 0.0
      %5789 = vmatprep.subr.mxu0 0.0
      %5790 = vmatpush2.msra.mxu0 0.0
      %5791 = vmatprep.subr.mxu0 0.0
      %5792 = vmatpush2.msra.mxu0 0.0
      %5793 = vmatprep.subr.mxu0 0.0
      %5794 = vmatpush2.msra.mxu0 0.0
      %5795 = vmatprep.subr.mxu0 0.0
      %5796 = vmatpush2.msra.mxu0 0.0
      %5797 = vmatprep.subr.mxu0 0.0
      %5798 = vmatpush2.msra.mxu0 0.0
      %5799 = vmatprep.subr.mxu0 0.0
      %5800 = vmatpush2.msra.mxu0 0.0
      %5801 = vmatprep.subr.mxu0 0.0
      %5802 = vmatpush2.msra.mxu0 0.0
      %5803 = vmatprep.mubr.f32.mxu0 0.0
      %5804 = vmatmul.mubr.f32.gmra.mxu0 %v5737
      %v5805 = vpop.f32.mrf.mxu0
      %v5806 = vadd.f32 0.0, %v5805
      %v5807 = vpop.f32.mrf.mxu0
      %5808 = vdwg.mxu0
      %5809 = vrot.lane.b32.xlu0 %v963, 112
      %v5810 = vpop.permute.xlu0 %5809
      %v5813 = vsel %vm974, %v3752, 0
      %5815 = vmatprep.subr.mxu0 0.0
      %5816 = vmatpush1.msra.mxu0 0.0
      %5817 = vmatprep.subr.mxu0 0.0
      %5818 = vmatpush1.msra.mxu0 0.0
      %5819 = vmatprep.subr.mxu0 0.0
      %5820 = vmatpush1.msra.mxu0 0.0
      %5821 = vmatprep.subr.mxu0 0.0
      %5822 = vmatpush1.msra.mxu0 0.0
      %5823 = vmatprep.subr.mxu0 0.0
      %5824 = vmatpush1.msra.mxu0 0.0
      %5825 = vmatprep.subr.mxu0 0.0
      %5826 = vmatpush1.msra.mxu0 0.0
      %5827 = vmatprep.subr.mxu0 0.0
      %5828 = vmatpush1.msra.mxu0 0.0
      %5829 = vmatprep.subr.mxu0 0.0
      %5830 = vmatpush1.msra.mxu0 0.0
      %5831 = vmatprep.subr.mxu0 0.0
      %5832 = vmatpush1.msra.mxu0 0.0
      %5833 = vmatprep.subr.mxu0 0.0
      %5834 = vmatpush1.msra.mxu0 0.0
      %5835 = vmatprep.subr.mxu0 0.0
      %5836 = vmatpush1.msra.mxu0 0.0
      %5837 = vmatprep.subr.mxu0 0.0
      %5838 = vmatpush1.msra.mxu0 0.0
      %5839 = vmatprep.subr.mxu0 0.0
      %5840 = vmatpush1.msra.mxu0 0.0
      %5841 = vmatprep.subr.mxu0 0.0
      %5842 = vmatpush1.msra.mxu0 0.0
      %5843 = vmatprep.subr.mxu0 0.0
      %5844 = vmatpush1.msra.mxu0 0.0
      %5845 = vmatprep.subr.mxu0 0.0
      %5846 = vmatpush1.msra.mxu0 %v5810
      %5847 = vmatprep.subr.mxu0 0.0
      %5848 = vmatpush2.msra.mxu0 0.0
      %5849 = vmatprep.subr.mxu0 0.0
      %5850 = vmatpush2.msra.mxu0 0.0
      %5851 = vmatprep.subr.mxu0 0.0
      %5852 = vmatpush2.msra.mxu0 0.0
      %5853 = vmatprep.subr.mxu0 0.0
      %5854 = vmatpush2.msra.mxu0 0.0
      %5855 = vmatprep.subr.mxu0 0.0
      %5856 = vmatpush2.msra.mxu0 0.0
      %5857 = vmatprep.subr.mxu0 0.0
      %5858 = vmatpush2.msra.mxu0 0.0
      %5859 = vmatprep.subr.mxu0 0.0
      %5860 = vmatpush2.msra.mxu0 0.0
      %5861 = vmatprep.subr.mxu0 0.0
      %5862 = vmatpush2.msra.mxu0 0.0
      %5863 = vmatprep.subr.mxu0 0.0
      %5864 = vmatpush2.msra.mxu0 0.0
      %5865 = vmatprep.subr.mxu0 0.0
      %5866 = vmatpush2.msra.mxu0 0.0
      %5867 = vmatprep.subr.mxu0 0.0
      %5868 = vmatpush2.msra.mxu0 0.0
      %5869 = vmatprep.subr.mxu0 0.0
      %5870 = vmatpush2.msra.mxu0 0.0
      %5871 = vmatprep.subr.mxu0 0.0
      %5872 = vmatpush2.msra.mxu0 0.0
      %5873 = vmatprep.subr.mxu0 0.0
      %5874 = vmatpush2.msra.mxu0 0.0
      %5875 = vmatprep.subr.mxu0 0.0
      %5876 = vmatpush2.msra.mxu0 0.0
      %5877 = vmatprep.subr.mxu0 0.0
      %5878 = vmatpush2.msra.mxu0 0.0
      %5879 = vmatprep.mubr.f32.mxu0 0.0
      %5880 = vmatmul.mubr.f32.gmra.mxu0 %v5813
      %v5881 = vpop.f32.mrf.mxu0
      %v5882 = vadd.f32 0.0, %v5881
      %v5883 = vpop.f32.mrf.mxu0
      %5884 = vdwg.mxu0
      %5885 = vrot.lane.b32.xlu0 %v965, 112
      %v5886 = vpop.permute.xlu0 %5885
      %v5889 = vsel %vm974, %v3753, 0
      %5891 = vmatprep.subr.mxu0 0.0
      %5892 = vmatpush1.msra.mxu0 0.0
      %5893 = vmatprep.subr.mxu0 0.0
      %5894 = vmatpush1.msra.mxu0 0.0
      %5895 = vmatprep.subr.mxu0 0.0
      %5896 = vmatpush1.msra.mxu0 0.0
      %5897 = vmatprep.subr.mxu0 0.0
      %5898 = vmatpush1.msra.mxu0 0.0
      %5899 = vmatprep.subr.mxu0 0.0
      %5900 = vmatpush1.msra.mxu0 0.0
      %5901 = vmatprep.subr.mxu0 0.0
      %5902 = vmatpush1.msra.mxu0 0.0
      %5903 = vmatprep.subr.mxu0 0.0
      %5904 = vmatpush1.msra.mxu0 0.0
      %5905 = vmatprep.subr.mxu0 0.0
      %5906 = vmatpush1.msra.mxu0 0.0
      %5907 = vmatprep.subr.mxu0 0.0
      %5908 = vmatpush1.msra.mxu0 0.0
      %5909 = vmatprep.subr.mxu0 0.0
      %5910 = vmatpush1.msra.mxu0 0.0
      %5911 = vmatprep.subr.mxu0 0.0
      %5912 = vmatpush1.msra.mxu0 0.0
      %5913 = vmatprep.subr.mxu0 0.0
      %5914 = vmatpush1.msra.mxu0 0.0
      %5915 = vmatprep.subr.mxu0 0.0
      %5916 = vmatpush1.msra.mxu0 0.0
      %5917 = vmatprep.subr.mxu0 0.0
      %5918 = vmatpush1.msra.mxu0 0.0
      %5919 = vmatprep.subr.mxu0 0.0
      %5920 = vmatpush1.msra.mxu0 0.0
      %5921 = vmatprep.subr.mxu0 0.0
      %5922 = vmatpush1.msra.mxu0 %v5886
      %5923 = vmatprep.subr.mxu0 0.0
      %5924 = vmatpush2.msra.mxu0 0.0
      %5925 = vmatprep.subr.mxu0 0.0
      %5926 = vmatpush2.msra.mxu0 0.0
      %5927 = vmatprep.subr.mxu0 0.0
      %5928 = vmatpush2.msra.mxu0 0.0
      %5929 = vmatprep.subr.mxu0 0.0
      %5930 = vmatpush2.msra.mxu0 0.0
      %5931 = vmatprep.subr.mxu0 0.0
      %5932 = vmatpush2.msra.mxu0 0.0
      %5933 = vmatprep.subr.mxu0 0.0
      %5934 = vmatpush2.msra.mxu0 0.0
      %5935 = vmatprep.subr.mxu0 0.0
      %5936 = vmatpush2.msra.mxu0 0.0
      %5937 = vmatprep.subr.mxu0 0.0
      %5938 = vmatpush2.msra.mxu0 0.0
      %5939 = vmatprep.subr.mxu0 0.0
      %5940 = vmatpush2.msra.mxu0 0.0
      %5941 = vmatprep.subr.mxu0 0.0
      %5942 = vmatpush2.msra.mxu0 0.0
      %5943 = vmatprep.subr.mxu0 0.0
      %5944 = vmatpush2.msra.mxu0 0.0
      %5945 = vmatprep.subr.mxu0 0.0
      %5946 = vmatpush2.msra.mxu0 0.0
      %5947 = vmatprep.subr.mxu0 0.0
      %5948 = vmatpush2.msra.mxu0 0.0
      %5949 = vmatprep.subr.mxu0 0.0
      %5950 = vmatpush2.msra.mxu0 0.0
      %5951 = vmatprep.subr.mxu0 0.0
      %5952 = vmatpush2.msra.mxu0 0.0
      %5953 = vmatprep.subr.mxu0 0.0
      %5954 = vmatpush2.msra.mxu0 0.0
      %5955 = vmatprep.mubr.f32.mxu0 0.0
      %5956 = vmatmul.mubr.f32.gmra.mxu0 %v5889
      %v5957 = vpop.f32.mrf.mxu0
      %v5958 = vadd.f32 0.0, %v5957
      %v5959 = vpop.f32.mrf.mxu0
      %5960 = vdwg.mxu0
      %5961 = vrot.lane.b32.xlu0 %v967, 112
      %v5962 = vpop.permute.xlu0 %5961
      %v5965 = vsel %vm974, %v3754, 0
      %5967 = vmatprep.subr.mxu0 0.0
      %5968 = vmatpush1.msra.mxu0 0.0
      %5969 = vmatprep.subr.mxu0 0.0
      %5970 = vmatpush1.msra.mxu0 0.0
      %5971 = vmatprep.subr.mxu0 0.0
      %5972 = vmatpush1.msra.mxu0 0.0
      %5973 = vmatprep.subr.mxu0 0.0
      %5974 = vmatpush1.msra.mxu0 0.0
      %5975 = vmatprep.subr.mxu0 0.0
      %5976 = vmatpush1.msra.mxu0 0.0
      %5977 = vmatprep.subr.mxu0 0.0
      %5978 = vmatpush1.msra.mxu0 0.0
      %5979 = vmatprep.subr.mxu0 0.0
      %5980 = vmatpush1.msra.mxu0 0.0
      %5981 = vmatprep.subr.mxu0 0.0
      %5982 = vmatpush1.msra.mxu0 0.0
      %5983 = vmatprep.subr.mxu0 0.0
      %5984 = vmatpush1.msra.mxu0 0.0
      %5985 = vmatprep.subr.mxu0 0.0
      %5986 = vmatpush1.msra.mxu0 0.0
      %5987 = vmatprep.subr.mxu0 0.0
      %5988 = vmatpush1.msra.mxu0 0.0
      %5989 = vmatprep.subr.mxu0 0.0
      %5990 = vmatpush1.msra.mxu0 0.0
      %5991 = vmatprep.subr.mxu0 0.0
      %5992 = vmatpush1.msra.mxu0 0.0
      %5993 = vmatprep.subr.mxu0 0.0
      %5994 = vmatpush1.msra.mxu0 0.0
      %5995 = vmatprep.subr.mxu0 0.0
      %5996 = vmatpush1.msra.mxu0 0.0
      %5997 = vmatprep.subr.mxu0 0.0
      %5998 = vmatpush1.msra.mxu0 %v5962
      %5999 = vmatprep.subr.mxu0 0.0
      %6000 = vmatpush2.msra.mxu0 0.0
      %6001 = vmatprep.subr.mxu0 0.0
      %6002 = vmatpush2.msra.mxu0 0.0
      %6003 = vmatprep.subr.mxu0 0.0
      %6004 = vmatpush2.msra.mxu0 0.0
      %6005 = vmatprep.subr.mxu0 0.0
      %6006 = vmatpush2.msra.mxu0 0.0
      %6007 = vmatprep.subr.mxu0 0.0
      %6008 = vmatpush2.msra.mxu0 0.0
      %6009 = vmatprep.subr.mxu0 0.0
      %6010 = vmatpush2.msra.mxu0 0.0
      %6011 = vmatprep.subr.mxu0 0.0
      %6012 = vmatpush2.msra.mxu0 0.0
      %6013 = vmatprep.subr.mxu0 0.0
      %6014 = vmatpush2.msra.mxu0 0.0
      %6015 = vmatprep.subr.mxu0 0.0
      %6016 = vmatpush2.msra.mxu0 0.0
      %6017 = vmatprep.subr.mxu0 0.0
      %6018 = vmatpush2.msra.mxu0 0.0
      %6019 = vmatprep.subr.mxu0 0.0
      %6020 = vmatpush2.msra.mxu0 0.0
      %6021 = vmatprep.subr.mxu0 0.0
      %6022 = vmatpush2.msra.mxu0 0.0
      %6023 = vmatprep.subr.mxu0 0.0
      %6024 = vmatpush2.msra.mxu0 0.0
      %6025 = vmatprep.subr.mxu0 0.0
      %6026 = vmatpush2.msra.mxu0 0.0
      %6027 = vmatprep.subr.mxu0 0.0
      %6028 = vmatpush2.msra.mxu0 0.0
      %6029 = vmatprep.subr.mxu0 0.0
      %6030 = vmatpush2.msra.mxu0 0.0
      %6031 = vmatprep.mubr.f32.mxu0 0.0
      %6032 = vmatmul.mubr.f32.gmra.mxu0 %v5965
      %v6033 = vpop.f32.mrf.mxu0
      %v6034 = vadd.f32 0.0, %v6033
      %v6035 = vpop.f32.mrf.mxu0
      %6036 = vdwg.mxu0
      %6037 = vrot.lane.b32.xlu0 %v969, 112
      %v6038 = vpop.permute.xlu0 %6037
      %v6041 = vsel %vm974, %v3755, 0
      %6043 = vmatprep.subr.mxu0 0.0
      %6044 = vmatpush1.msra.mxu0 0.0
      %6045 = vmatprep.subr.mxu0 0.0
      %6046 = vmatpush1.msra.mxu0 0.0
      %6047 = vmatprep.subr.mxu0 0.0
      %6048 = vmatpush1.msra.mxu0 0.0
      %6049 = vmatprep.subr.mxu0 0.0
      %6050 = vmatpush1.msra.mxu0 0.0
      %6051 = vmatprep.subr.mxu0 0.0
      %6052 = vmatpush1.msra.mxu0 0.0
      %6053 = vmatprep.subr.mxu0 0.0
      %6054 = vmatpush1.msra.mxu0 0.0
      %6055 = vmatprep.subr.mxu0 0.0
      %6056 = vmatpush1.msra.mxu0 0.0
      %6057 = vmatprep.subr.mxu0 0.0
      %6058 = vmatpush1.msra.mxu0 0.0
      %6059 = vmatprep.subr.mxu0 0.0
      %6060 = vmatpush1.msra.mxu0 0.0
      %6061 = vmatprep.subr.mxu0 0.0
      %6062 = vmatpush1.msra.mxu0 0.0
      %6063 = vmatprep.subr.mxu0 0.0
      %6064 = vmatpush1.msra.mxu0 0.0
      %6065 = vmatprep.subr.mxu0 0.0
      %6066 = vmatpush1.msra.mxu0 0.0
      %6067 = vmatprep.subr.mxu0 0.0
      %6068 = vmatpush1.msra.mxu0 0.0
      %6069 = vmatprep.subr.mxu0 0.0
      %6070 = vmatpush1.msra.mxu0 0.0
      %6071 = vmatprep.subr.mxu0 0.0
      %6072 = vmatpush1.msra.mxu0 0.0
      %6073 = vmatprep.subr.mxu0 0.0
      %6074 = vmatpush1.msra.mxu0 %v6038
      %6075 = vmatprep.subr.mxu0 0.0
      %6076 = vmatpush2.msra.mxu0 0.0
      %6077 = vmatprep.subr.mxu0 0.0
      %6078 = vmatpush2.msra.mxu0 0.0
      %6079 = vmatprep.subr.mxu0 0.0
      %6080 = vmatpush2.msra.mxu0 0.0
      %6081 = vmatprep.subr.mxu0 0.0
      %6082 = vmatpush2.msra.mxu0 0.0
      %6083 = vmatprep.subr.mxu0 0.0
      %6084 = vmatpush2.msra.mxu0 0.0
      %6085 = vmatprep.subr.mxu0 0.0
      %6086 = vmatpush2.msra.mxu0 0.0
      %6087 = vmatprep.subr.mxu0 0.0
      %6088 = vmatpush2.msra.mxu0 0.0
      %6089 = vmatprep.subr.mxu0 0.0
      %6090 = vmatpush2.msra.mxu0 0.0
      %6091 = vmatprep.subr.mxu0 0.0
      %6092 = vmatpush2.msra.mxu0 0.0
      %6093 = vmatprep.subr.mxu0 0.0
      %6094 = vmatpush2.msra.mxu0 0.0
      %6095 = vmatprep.subr.mxu0 0.0
      %6096 = vmatpush2.msra.mxu0 0.0
      %6097 = vmatprep.subr.mxu0 0.0
      %6098 = vmatpush2.msra.mxu0 0.0
      %6099 = vmatprep.subr.mxu0 0.0
      %6100 = vmatpush2.msra.mxu0 0.0
      %6101 = vmatprep.subr.mxu0 0.0
      %6102 = vmatpush2.msra.mxu0 0.0
      %6103 = vmatprep.subr.mxu0 0.0
      %6104 = vmatpush2.msra.mxu0 0.0
      %6105 = vmatprep.subr.mxu0 0.0
      %6106 = vmatpush2.msra.mxu0 0.0
      %6107 = vmatprep.mubr.f32.mxu0 0.0
      %6108 = vmatmul.mubr.f32.gmra.mxu0 %v6041
      %v6109 = vpop.f32.mrf.mxu0
      %v6110 = vadd.f32 0.0, %v6109
      %v6111 = vpop.f32.mrf.mxu0
      %6112 = vdwg.mxu0
      %6113 = vrot.lane.b32.xlu0 %v971, 112
      %v6114 = vpop.permute.xlu0 %6113
      %v6117 = vsel %vm974, %v3756, 0
      %6119 = vmatprep.subr.mxu0 0.0
      %6120 = vmatpush1.msra.mxu0 0.0
      %6121 = vmatprep.subr.mxu0 0.0
      %6122 = vmatpush1.msra.mxu0 0.0
      %6123 = vmatprep.subr.mxu0 0.0
      %6124 = vmatpush1.msra.mxu0 0.0
      %6125 = vmatprep.subr.mxu0 0.0
      %6126 = vmatpush1.msra.mxu0 0.0
      %6127 = vmatprep.subr.mxu0 0.0
      %6128 = vmatpush1.msra.mxu0 0.0
      %6129 = vmatprep.subr.mxu0 0.0
      %6130 = vmatpush1.msra.mxu0 0.0
      %6131 = vmatprep.subr.mxu0 0.0
      %6132 = vmatpush1.msra.mxu0 0.0
      %6133 = vmatprep.subr.mxu0 0.0
      %6134 = vmatpush1.msra.mxu0 0.0
      %6135 = vmatprep.subr.mxu0 0.0
      %6136 = vmatpush1.msra.mxu0 0.0
      %6137 = vmatprep.subr.mxu0 0.0
      %6138 = vmatpush1.msra.mxu0 0.0
      %6139 = vmatprep.subr.mxu0 0.0
      %6140 = vmatpush1.msra.mxu0 0.0
      %6141 = vmatprep.subr.mxu0 0.0
      %6142 = vmatpush1.msra.mxu0 0.0
      %6143 = vmatprep.subr.mxu0 0.0
      %6144 = vmatpush1.msra.mxu0 0.0
      %6145 = vmatprep.subr.mxu0 0.0
      %6146 = vmatpush1.msra.mxu0 0.0
      %6147 = vmatprep.subr.mxu0 0.0
      %6148 = vmatpush1.msra.mxu0 0.0
      %6149 = vmatprep.subr.mxu0 0.0
      %6150 = vmatpush1.msra.mxu0 %v6114
      %6151 = vmatprep.subr.mxu0 0.0
      %6152 = vmatpush2.msra.mxu0 0.0
      %6153 = vmatprep.subr.mxu0 0.0
      %6154 = vmatpush2.msra.mxu0 0.0
      %6155 = vmatprep.subr.mxu0 0.0
      %6156 = vmatpush2.msra.mxu0 0.0
      %6157 = vmatprep.subr.mxu0 0.0
      %6158 = vmatpush2.msra.mxu0 0.0
      %6159 = vmatprep.subr.mxu0 0.0
      %6160 = vmatpush2.msra.mxu0 0.0
      %6161 = vmatprep.subr.mxu0 0.0
      %6162 = vmatpush2.msra.mxu0 0.0
      %6163 = vmatprep.subr.mxu0 0.0
      %6164 = vmatpush2.msra.mxu0 0.0
      %6165 = vmatprep.subr.mxu0 0.0
      %6166 = vmatpush2.msra.mxu0 0.0
      %6167 = vmatprep.subr.mxu0 0.0
      %6168 = vmatpush2.msra.mxu0 0.0
      %6169 = vmatprep.subr.mxu0 0.0
      %6170 = vmatpush2.msra.mxu0 0.0
      %6171 = vmatprep.subr.mxu0 0.0
      %6172 = vmatpush2.msra.mxu0 0.0
      %6173 = vmatprep.subr.mxu0 0.0
      %6174 = vmatpush2.msra.mxu0 0.0
      %6175 = vmatprep.subr.mxu0 0.0
      %6176 = vmatpush2.msra.mxu0 0.0
      %6177 = vmatprep.subr.mxu0 0.0
      %6178 = vmatpush2.msra.mxu0 0.0
      %6179 = vmatprep.subr.mxu0 0.0
      %6180 = vmatpush2.msra.mxu0 0.0
      %6181 = vmatprep.subr.mxu0 0.0
      %6182 = vmatpush2.msra.mxu0 0.0
      %6183 = vmatprep.mubr.f32.mxu0 0.0
      %6184 = vmatmul.mubr.f32.gmra.mxu0 %v6117
      %v6185 = vpop.f32.mrf.mxu0
      %v6186 = vadd.f32 0.0, %v6185
      %v6187 = vpop.f32.mrf.mxu0
      %6188 = vdwg.mxu0
      %6197 = vrot.lane.b32.xlu0 %v4438, 8
      %v6198 = vpop.permute.xlu0 %6197
      %6199 = vrot.lane.b32.xlu0 %v4514, 8
      %v6200 = vpop.permute.xlu0 %6199
      %6201 = vrot.lane.b32.xlu0 %v4590, 8
      %v6202 = vpop.permute.xlu0 %6201
      %6203 = vrot.lane.b32.xlu0 %v4666, 8
      %v6204 = vpop.permute.xlu0 %6203
      %6205 = vrot.lane.b32.xlu0 %v4742, 8
      %v6206 = vpop.permute.xlu0 %6205
      %6207 = vrot.lane.b32.xlu0 %v4818, 8
      %v6208 = vpop.permute.xlu0 %6207
      %6209 = vrot.lane.b32.xlu0 %v4894, 8
      %v6210 = vpop.permute.xlu0 %6209
      %6211 = vrot.lane.b32.xlu0 %v4970, 8
      %v6212 = vpop.permute.xlu0 %6211
      %6229 = vrot.lane.b32.xlu0 %v5046, 16
      %v6230 = vpop.permute.xlu0 %6229
      %6231 = vrot.lane.b32.xlu0 %v5122, 16
      %v6232 = vpop.permute.xlu0 %6231
      %6233 = vrot.lane.b32.xlu0 %v5198, 16
      %v6234 = vpop.permute.xlu0 %6233
      %6235 = vrot.lane.b32.xlu0 %v5274, 16
      %v6236 = vpop.permute.xlu0 %6235
      %6237 = vrot.lane.b32.xlu0 %v5350, 16
      %v6238 = vpop.permute.xlu0 %6237
      %6239 = vrot.lane.b32.xlu0 %v5426, 16
      %v6240 = vpop.permute.xlu0 %6239
      %6241 = vrot.lane.b32.xlu0 %v5502, 16
      %v6242 = vpop.permute.xlu0 %6241
      %6243 = vrot.lane.b32.xlu0 %v5578, 16
      %v6244 = vpop.permute.xlu0 %6243
      %6261 = vrot.lane.b32.xlu0 %v5654, 24
      %v6262 = vpop.permute.xlu0 %6261
      %6263 = vrot.lane.b32.xlu0 %v5730, 24
      %v6264 = vpop.permute.xlu0 %6263
      %6265 = vrot.lane.b32.xlu0 %v5806, 24
      %v6266 = vpop.permute.xlu0 %6265
      %6267 = vrot.lane.b32.xlu0 %v5882, 24
      %v6268 = vpop.permute.xlu0 %6267
      %6269 = vrot.lane.b32.xlu0 %v5958, 24
      %v6270 = vpop.permute.xlu0 %6269
      %6271 = vrot.lane.b32.xlu0 %v6034, 24
      %v6272 = vpop.permute.xlu0 %6271
      %6273 = vrot.lane.b32.xlu0 %v6110, 24
      %v6274 = vpop.permute.xlu0 %6273
      %6275 = vrot.lane.b32.xlu0 %v6186, 24
      %v6276 = vpop.permute.xlu0 %6275
      %v6285 = vsel %vm974, %v3830, %v6198
      %v6286 = vsel %vm974, %v3906, %v6200
      %v6287 = vsel %vm974, %v3982, %v6202
      %v6288 = vsel %vm974, %v4058, %v6204
      %v6289 = vsel %vm974, %v4134, %v6206
      %v6290 = vsel %vm974, %v4210, %v6208
      %v6291 = vsel %vm974, %v4286, %v6210
      %v6292 = vsel %vm974, %v4362, %v6212
      %vm6293 = vcmask 130048
      %v6294 = vsel %vm6293, %v6285, %v6230
      %v6295 = vsel %vm6293, %v6286, %v6232
      %v6296 = vsel %vm6293, %v6287, %v6234
      %v6297 = vsel %vm6293, %v6288, %v6236
      %v6298 = vsel %vm6293, %v6289, %v6238
      %v6299 = vsel %vm6293, %v6290, %v6240
      %v6300 = vsel %vm6293, %v6291, %v6242
      %v6301 = vsel %vm6293, %v6292, %v6244
      %vm6302 = vcmask 195584
      %v6303 = vsel %vm6302, %v6294, %v6262
      %v6304 = vsel %vm6302, %v6295, %v6264
      %v6305 = vsel %vm6302, %v6296, %v6266
      %v6306 = vsel %vm6302, %v6297, %v6268
      %v6307 = vsel %vm6302, %v6298, %v6270
      %v6308 = vsel %vm6302, %v6299, %v6272
      %v6309 = vsel %vm6302, %v6300, %v6274
      %v6310 = vsel %vm6302, %v6301, %v6276
      %v6311 = vld [vmem:[%s691] sm:$0xff]
      %v6312 = vld [vmem:[%s691 + $0x8] sm:$0xff]
      %v6313 = vld [vmem:[%s691 + $0x10] sm:$0xff]
      %v6314 = vld [vmem:[%s691 + $0x18] sm:$0xff]
      %v6315 = vld [vmem:[%s694] sm:$0x1]
      %v6317 = vlaneseq
      %v6318 = vshrl.u32 %v6317, 7
      %v6319 = vsub.s32 0, %v6318
      %v6320 = vrot.slane %v6315, %v6319
      %v6323 = vsel %vm786, %v6303, 0
      %v6326 = vsel %vm786, %v6304, 0
      %v6329 = vsel %vm786, %v6305, 0
      %v6332 = vsel %vm786, %v6306, 0
      %v6335 = vsel %vm786, %v6307, 0
      %v6338 = vsel %vm786, %v6308, 0
      %v6341 = vsel %vm786, %v6309, 0
      %v6344 = vsel %vm786, %v6310, 0
      %6346 = vmatprep.subr.mxu0 0.0
      %6347 = vmatpush1.msra.mxu0 0.0
      %6348 = vmatprep.subr.mxu0 0.0
      %6349 = vmatpush1.msra.mxu0 0.0
      %6350 = vmatprep.subr.mxu0 0.0
      %6351 = vmatpush1.msra.mxu0 0.0
      %6352 = vmatprep.subr.mxu0 0.0
      %6353 = vmatpush1.msra.mxu0 0.0
      %6354 = vmatprep.subr.mxu0 0.0
      %6355 = vmatpush1.msra.mxu0 0.0
      %6356 = vmatprep.subr.mxu0 0.0
      %6357 = vmatpush1.msra.mxu0 0.0
      %6358 = vmatprep.subr.mxu0 0.0
      %6359 = vmatpush1.msra.mxu0 0.0
      %6360 = vmatprep.subr.mxu0 0.0
      %6361 = vmatpush1.msra.mxu0 0.0
      %6362 = vmatprep.subr.mxu0 0.0
      %6363 = vmatpush1.msra.mxu0 0.0
      %6364 = vmatprep.subr.mxu0 0.0
      %6365 = vmatpush1.msra.mxu0 0.0
      %6366 = vmatprep.subr.mxu0 0.0
      %6367 = vmatpush1.msra.mxu0 0.0
      %6368 = vmatprep.subr.mxu0 0.0
      %6369 = vmatpush1.msra.mxu0 0.0
      %6370 = vmatprep.subr.mxu0 0.0
      %6371 = vmatpush1.msra.mxu0 %v6314
      %6372 = vmatprep.subr.mxu0 0.0
      %6373 = vmatpush1.msra.mxu0 %v6313
      %6374 = vmatprep.subr.mxu0 0.0
      %6375 = vmatpush1.msra.mxu0 %v6312
      %6376 = vmatprep.subr.mxu0 0.0
      %6377 = vmatpush1.msra.mxu0 %v6311
      %6378 = vmatprep.subr.mxu0 0.0
      %6379 = vmatpush2.msra.mxu0 0.0
      %6380 = vmatprep.subr.mxu0 0.0
      %6381 = vmatpush2.msra.mxu0 0.0
      %6382 = vmatprep.subr.mxu0 0.0
      %6383 = vmatpush2.msra.mxu0 0.0
      %6384 = vmatprep.subr.mxu0 0.0
      %6385 = vmatpush2.msra.mxu0 0.0
      %6386 = vmatprep.subr.mxu0 0.0
      %6387 = vmatpush2.msra.mxu0 0.0
      %6388 = vmatprep.subr.mxu0 0.0
      %6389 = vmatpush2.msra.mxu0 0.0
      %6390 = vmatprep.subr.mxu0 0.0
      %6391 = vmatpush2.msra.mxu0 0.0
      %6392 = vmatprep.subr.mxu0 0.0
      %6393 = vmatpush2.msra.mxu0 0.0
      %6394 = vmatprep.subr.mxu0 0.0
      %6395 = vmatpush2.msra.mxu0 0.0
      %6396 = vmatprep.subr.mxu0 0.0
      %6397 = vmatpush2.msra.mxu0 0.0
      %6398 = vmatprep.subr.mxu0 0.0
      %6399 = vmatpush2.msra.mxu0 0.0
      %6400 = vmatprep.subr.mxu0 0.0
      %6401 = vmatpush2.msra.mxu0 0.0
      %6402 = vmatprep.subr.mxu0 0.0
      %6403 = vmatpush2.msra.mxu0 0.0
      %6404 = vmatprep.subr.mxu0 0.0
      %6405 = vmatpush2.msra.mxu0 0.0
      %6406 = vmatprep.subr.mxu0 0.0
      %6407 = vmatpush2.msra.mxu0 0.0
      %6408 = vmatprep.subr.mxu0 0.0
      %6409 = vmatpush2.msra.mxu0 0.0
      %6410 = vmatprep.mubr.f32.mxu0 0.0
      %6411 = vmatmul.mubr.f32.gmra.mxu0 %v6323
      %v6412 = vpop.f32.mrf.mxu0
      %v6413 = vadd.f32 %v6320, %v6412
      %v6414 = vpop.f32.mrf.mxu0
      %6415 = vmatprep.mubr.f32.mxu0 0.0
      %6416 = vmatmul.mubr.f32.gmra.mxu0 %v6326
      %v6417 = vpop.f32.mrf.mxu0
      %v6418 = vadd.f32 %v6320, %v6417
      %v6419 = vpop.f32.mrf.mxu0
      %6420 = vmatprep.mubr.f32.mxu0 0.0
      %6421 = vmatmul.mubr.f32.gmra.mxu0 %v6329
      %v6422 = vpop.f32.mrf.mxu0
      %v6423 = vadd.f32 %v6320, %v6422
      %v6424 = vpop.f32.mrf.mxu0
      %6425 = vmatprep.mubr.f32.mxu0 0.0
      %6426 = vmatmul.mubr.f32.gmra.mxu0 %v6332
      %v6427 = vpop.f32.mrf.mxu0
      %v6428 = vadd.f32 %v6320, %v6427
      %v6429 = vpop.f32.mrf.mxu0
      %6430 = vmatprep.mubr.f32.mxu0 0.0
      %6431 = vmatmul.mubr.f32.gmra.mxu0 %v6335
      %v6432 = vpop.f32.mrf.mxu0
      %v6433 = vadd.f32 %v6320, %v6432
      %v6434 = vpop.f32.mrf.mxu0
      %6435 = vmatprep.mubr.f32.mxu0 0.0
      %6436 = vmatmul.mubr.f32.gmra.mxu0 %v6338
      %v6437 = vpop.f32.mrf.mxu0
      %v6438 = vadd.f32 %v6320, %v6437
      %v6439 = vpop.f32.mrf.mxu0
      %6440 = vmatprep.mubr.f32.mxu0 0.0
      %6441 = vmatmul.mubr.f32.gmra.mxu0 %v6341
      %v6442 = vpop.f32.mrf.mxu0
      %v6443 = vadd.f32 %v6320, %v6442
      %v6444 = vpop.f32.mrf.mxu0
      %6445 = vmatprep.mubr.f32.mxu0 0.0
      %6446 = vmatmul.mubr.f32.gmra.mxu0 %v6344
      %v6447 = vpop.f32.mrf.mxu0
      %v6448 = vadd.f32 %v6320, %v6447
      %v6449 = vpop.f32.mrf.mxu0
      %6450 = vdwg.mxu0
      %v6451 = vadd.f32 %v767, %v6413
      %v6452 = vadd.f32 %v768, %v6418
      %v6453 = vadd.f32 %v769, %v6423
      %v6454 = vadd.f32 %v770, %v6428
      %v6455 = vadd.f32 %v771, %v6433
      %v6456 = vadd.f32 %v772, %v6438
      %v6457 = vadd.f32 %v773, %v6443
      %v6458 = vadd.f32 %v774, %v6448
      %v6459 = vld [vmem:[%s697] sm:$0x1]
      %v6460 = vld [vmem:[%s700] sm:$0x1]
      %v6461 = vsel %vm786, %v6451, 0.0
      %6462 = vadd.xlane.f32.xlu0 %v6461
      %v6463 = vpop.xlane.xlu0 %6462
      %v6464 = vsel %vm786, %v6452, 0.0
      %6465 = vadd.xlane.f32.xlu0 %v6464
      %v6466 = vpop.xlane.xlu0 %6465
      %v6467 = vsel %vm786, %v6453, 0.0
      %6468 = vadd.xlane.f32.xlu0 %v6467
      %v6469 = vpop.xlane.xlu0 %6468
      %v6470 = vsel %vm786, %v6454, 0.0
      %6471 = vadd.xlane.f32.xlu0 %v6470
      %v6472 = vpop.xlane.xlu0 %6471
      %v6473 = vsel %vm786, %v6455, 0.0
      %6474 = vadd.xlane.f32.xlu0 %v6473
      %v6475 = vpop.xlane.xlu0 %6474
      %v6476 = vsel %vm786, %v6456, 0.0
      %6477 = vadd.xlane.f32.xlu0 %v6476
      %v6478 = vpop.xlane.xlu0 %6477
      %v6479 = vsel %vm786, %v6457, 0.0
      %6480 = vadd.xlane.f32.xlu0 %v6479
      %v6481 = vpop.xlane.xlu0 %6480
      %v6482 = vsel %vm786, %v6458, 0.0
      %6483 = vadd.xlane.f32.xlu0 %v6482
      %v6484 = vpop.xlane.xlu0 %6483
      %v6485 = vrcp.pop 32.0
      %v6486 = vmul.f32 %v6463, %v6485
      %v6487 = vmul.f32 %v6466, %v6485
      %v6488 = vmul.f32 %v6469, %v6485
      %v6489 = vmul.f32 %v6472, %v6485
      %v6490 = vmul.f32 %v6475, %v6485
      %v6491 = vmul.f32 %v6478, %v6485
      %v6492 = vmul.f32 %v6481, %v6485
      %v6493 = vmul.f32 %v6484, %v6485
      %v6494 = vsub.f32 %v6451, %v6486
      %v6495 = vsub.f32 %v6452, %v6487
      %v6496 = vsub.f32 %v6453, %v6488
      %v6497 = vsub.f32 %v6454, %v6489
      %v6498 = vsub.f32 %v6455, %v6490
      %v6499 = vsub.f32 %v6456, %v6491
      %v6500 = vsub.f32 %v6457, %v6492
      %v6501 = vsub.f32 %v6458, %v6493
      %v6502 = vmul.f32 %v6494, %v6494
      %v6503 = vmul.f32 %v6495, %v6495
      %v6504 = vmul.f32 %v6496, %v6496
      %v6505 = vmul.f32 %v6497, %v6497
      %v6506 = vmul.f32 %v6498, %v6498
      %v6507 = vmul.f32 %v6499, %v6499
      %v6508 = vmul.f32 %v6500, %v6500
      %v6509 = vmul.f32 %v6501, %v6501
      %v6510 = vsel %vm786, %v6502, 0.0
      %6511 = vadd.xlane.f32.xlu0 %v6510
      %v6512 = vpop.xlane.xlu0 %6511
      %v6513 = vsel %vm786, %v6503, 0.0
      %6514 = vadd.xlane.f32.xlu0 %v6513
      %v6515 = vpop.xlane.xlu0 %6514
      %v6516 = vsel %vm786, %v6504, 0.0
      %6517 = vadd.xlane.f32.xlu0 %v6516
      %v6518 = vpop.xlane.xlu0 %6517
      %v6519 = vsel %vm786, %v6505, 0.0
      %6520 = vadd.xlane.f32.xlu0 %v6519
      %v6521 = vpop.xlane.xlu0 %6520
      %v6522 = vsel %vm786, %v6506, 0.0
      %6523 = vadd.xlane.f32.xlu0 %v6522
      %v6524 = vpop.xlane.xlu0 %6523
      %v6525 = vsel %vm786, %v6507, 0.0
      %6526 = vadd.xlane.f32.xlu0 %v6525
      %v6527 = vpop.xlane.xlu0 %6526
      %v6528 = vsel %vm786, %v6508, 0.0
      %6529 = vadd.xlane.f32.xlu0 %v6528
      %v6530 = vpop.xlane.xlu0 %6529
      %v6531 = vsel %vm786, %v6509, 0.0
      %6532 = vadd.xlane.f32.xlu0 %v6531
      %v6533 = vpop.xlane.xlu0 %6532
      %v6534 = vmul.f32 %v6512, %v6485
      %v6535 = vmul.f32 %v6515, %v6485
      %v6536 = vmul.f32 %v6518, %v6485
      %v6537 = vmul.f32 %v6521, %v6485
      %v6538 = vmul.f32 %v6524, %v6485
      %v6539 = vmul.f32 %v6527, %v6485
      %v6540 = vmul.f32 %v6530, %v6485
      %v6541 = vmul.f32 %v6533, %v6485
      %v6542 = vadd.f32 %v6534, 1e-12
      %v6543 = vadd.f32 %v6535, 1e-12
      %v6544 = vadd.f32 %v6536, 1e-12
      %v6545 = vadd.f32 %v6537, 1e-12
      %v6546 = vadd.f32 %v6538, 1e-12
      %v6547 = vadd.f32 %v6539, 1e-12
      %v6548 = vadd.f32 %v6540, 1e-12
      %v6549 = vadd.f32 %v6541, 1e-12
      %v6550 = vrsqrt.pop %v6542
      %v6551 = vrsqrt.pop %v6543
      %v6552 = vrsqrt.pop %v6544
      %v6553 = vrsqrt.pop %v6545
      %v6554 = vrsqrt.pop %v6546
      %v6555 = vrsqrt.pop %v6547
      %v6556 = vrsqrt.pop %v6548
      %v6557 = vrsqrt.pop %v6549
      %v6558 = vmul.f32 %v6494, %v6550
      %v6559 = vmul.f32 %v6495, %v6551
      %v6560 = vmul.f32 %v6496, %v6552
      %v6561 = vmul.f32 %v6497, %v6553
      %v6562 = vmul.f32 %v6498, %v6554
      %v6563 = vmul.f32 %v6499, %v6555
      %v6564 = vmul.f32 %v6500, %v6556
      %v6565 = vmul.f32 %v6501, %v6557
      %v6567 = vlaneseq
      %v6568 = vshrl.u32 %v6567, 7
      %v6569 = vsub.s32 0, %v6568
      %v6570 = vrot.slane %v6459, %v6569
      %v6572 = vmul.f32 %v6558, %v6570
      %v6573 = vmul.f32 %v6559, %v6570
      %v6574 = vmul.f32 %v6560, %v6570
      %v6575 = vmul.f32 %v6561, %v6570
      %v6576 = vmul.f32 %v6562, %v6570
      %v6577 = vmul.f32 %v6563, %v6570
      %v6578 = vmul.f32 %v6564, %v6570
      %v6579 = vmul.f32 %v6565, %v6570
      %v6581 = vlaneseq
      %v6582 = vshrl.u32 %v6581, 7
      %v6583 = vsub.s32 0, %v6582
      %v6584 = vrot.slane %v6460, %v6583
      %v6586 = vadd.f32 %v6572, %v6584
      %v6587 = vadd.f32 %v6573, %v6584
      %v6588 = vadd.f32 %v6574, %v6584
      %v6589 = vadd.f32 %v6575, %v6584
      %v6590 = vadd.f32 %v6576, %v6584
      %v6591 = vadd.f32 %v6577, %v6584
      %v6592 = vadd.f32 %v6578, %v6584
      %v6593 = vadd.f32 %v6579, %v6584
      %v6594 = vld [vmem:[%s705] sm:$0xff]
      %v6595 = vld [vmem:[%s705 + $0x8] sm:$0xff]
      %v6596 = vld [vmem:[%s705 + $0x10] sm:$0xff]
      %v6597 = vld [vmem:[%s705 + $0x18] sm:$0xff]
      %v6598 = vld [vmem:[%s708] sm:$0x1]
      %v6600 = vlaneseq
      %v6601 = vshrl.u32 %v6600, 7
      %v6602 = vsub.s32 0, %v6601
      %v6603 = vrot.slane %v6598, %v6602
      %v6606 = vsel %vm786, %v6586, 0
      %v6609 = vsel %vm786, %v6587, 0
      %v6612 = vsel %vm786, %v6588, 0
      %v6615 = vsel %vm786, %v6589, 0
      %v6618 = vsel %vm786, %v6590, 0
      %v6621 = vsel %vm786, %v6591, 0
      %v6624 = vsel %vm786, %v6592, 0
      %v6627 = vsel %vm786, %v6593, 0
      %6629 = vmatprep.subr.mxu0 0.0
      %6630 = vmatpush1.msra.mxu0 0.0
      %6631 = vmatprep.subr.mxu0 0.0
      %6632 = vmatpush1.msra.mxu0 0.0
      %6633 = vmatprep.subr.mxu0 0.0
      %6634 = vmatpush1.msra.mxu0 0.0
      %6635 = vmatprep.subr.mxu0 0.0
      %6636 = vmatpush1.msra.mxu0 0.0
      %6637 = vmatprep.subr.mxu0 0.0
      %6638 = vmatpush1.msra.mxu0 0.0
      %6639 = vmatprep.subr.mxu0 0.0
      %6640 = vmatpush1.msra.mxu0 0.0
      %6641 = vmatprep.subr.mxu0 0.0
      %6642 = vmatpush1.msra.mxu0 0.0
      %6643 = vmatprep.subr.mxu0 0.0
      %6644 = vmatpush1.msra.mxu0 0.0
      %6645 = vmatprep.subr.mxu0 0.0
      %6646 = vmatpush1.msra.mxu0 0.0
      %6647 = vmatprep.subr.mxu0 0.0
      %6648 = vmatpush1.msra.mxu0 0.0
      %6649 = vmatprep.subr.mxu0 0.0
      %6650 = vmatpush1.msra.mxu0 0.0
      %6651 = vmatprep.subr.mxu0 0.0
      %6652 = vmatpush1.msra.mxu0 0.0
      %6653 = vmatprep.subr.mxu0 0.0
      %6654 = vmatpush1.msra.mxu0 %v6597
      %6655 = vmatprep.subr.mxu0 0.0
      %6656 = vmatpush1.msra.mxu0 %v6596
      %6657 = vmatprep.subr.mxu0 0.0
      %6658 = vmatpush1.msra.mxu0 %v6595
      %6659 = vmatprep.subr.mxu0 0.0
      %6660 = vmatpush1.msra.mxu0 %v6594
      %6661 = vmatprep.subr.mxu0 0.0
      %6662 = vmatpush2.msra.mxu0 0.0
      %6663 = vmatprep.subr.mxu0 0.0
      %6664 = vmatpush2.msra.mxu0 0.0
      %6665 = vmatprep.subr.mxu0 0.0
      %6666 = vmatpush2.msra.mxu0 0.0
      %6667 = vmatprep.subr.mxu0 0.0
      %6668 = vmatpush2.msra.mxu0 0.0
      %6669 = vmatprep.subr.mxu0 0.0
      %6670 = vmatpush2.msra.mxu0 0.0
      %6671 = vmatprep.subr.mxu0 0.0
      %6672 = vmatpush2.msra.mxu0 0.0
      %6673 = vmatprep.subr.mxu0 0.0
      %6674 = vmatpush2.msra.mxu0 0.0
      %6675 = vmatprep.subr.mxu0 0.0
      %6676 = vmatpush2.msra.mxu0 0.0
      %6677 = vmatprep.subr.mxu0 0.0
      %6678 = vmatpush2.msra.mxu0 0.0
      %6679 = vmatprep.subr.mxu0 0.0
      %6680 = vmatpush2.msra.mxu0 0.0
      %6681 = vmatprep.subr.mxu0 0.0
      %6682 = vmatpush2.msra.mxu0 0.0
      %6683 = vmatprep.subr.mxu0 0.0
      %6684 = vmatpush2.msra.mxu0 0.0
      %6685 = vmatprep.subr.mxu0 0.0
      %6686 = vmatpush2.msra.mxu0 0.0
      %6687 = vmatprep.subr.mxu0 0.0
      %6688 = vmatpush2.msra.mxu0 0.0
      %6689 = vmatprep.subr.mxu0 0.0
      %6690 = vmatpush2.msra.mxu0 0.0
      %6691 = vmatprep.subr.mxu0 0.0
      %6692 = vmatpush2.msra.mxu0 0.0
      %6693 = vmatprep.mubr.f32.mxu0 0.0
      %6694 = vmatmul.mubr.f32.gmra.mxu0 %v6606
      %v6695 = vpop.f32.mrf.mxu0
      %v6696 = vadd.f32 %v6603, %v6695
      %v6697 = vpop.f32.mrf.mxu0
      %6698 = vmatprep.mubr.f32.mxu0 0.0
      %6699 = vmatmul.mubr.f32.gmra.mxu0 %v6609
      %v6700 = vpop.f32.mrf.mxu0
      %v6701 = vadd.f32 %v6603, %v6700
      %v6702 = vpop.f32.mrf.mxu0
      %6703 = vmatprep.mubr.f32.mxu0 0.0
      %6704 = vmatmul.mubr.f32.gmra.mxu0 %v6612
      %v6705 = vpop.f32.mrf.mxu0
      %v6706 = vadd.f32 %v6603, %v6705
      %v6707 = vpop.f32.mrf.mxu0
      %6708 = vmatprep.mubr.f32.mxu0 0.0
      %6709 = vmatmul.mubr.f32.gmra.mxu0 %v6615
      %v6710 = vpop.f32.mrf.mxu0
      %v6711 = vadd.f32 %v6603, %v6710
      %v6712 = vpop.f32.mrf.mxu0
      %6713 = vmatprep.mubr.f32.mxu0 0.0
      %6714 = vmatmul.mubr.f32.gmra.mxu0 %v6618
      %v6715 = vpop.f32.mrf.mxu0
      %v6716 = vadd.f32 %v6603, %v6715
      %v6717 = vpop.f32.mrf.mxu0
      %6718 = vmatprep.mubr.f32.mxu0 0.0
      %6719 = vmatmul.mubr.f32.gmra.mxu0 %v6621
      %v6720 = vpop.f32.mrf.mxu0
      %v6721 = vadd.f32 %v6603, %v6720
      %v6722 = vpop.f32.mrf.mxu0
      %6723 = vmatprep.mubr.f32.mxu0 0.0
      %6724 = vmatmul.mubr.f32.gmra.mxu0 %v6624
      %v6725 = vpop.f32.mrf.mxu0
      %v6726 = vadd.f32 %v6603, %v6725
      %v6727 = vpop.f32.mrf.mxu0
      %6728 = vmatprep.mubr.f32.mxu0 0.0
      %6729 = vmatmul.mubr.f32.gmra.mxu0 %v6627
      %v6730 = vpop.f32.mrf.mxu0
      %v6731 = vadd.f32 %v6603, %v6730
      %v6732 = vpop.f32.mrf.mxu0
      %6733 = vdwg.mxu0
      %v6734 = vmax.f32 %v6696, 0.0
      %v6735 = vmax.f32 %v6701, 0.0
      %v6736 = vmax.f32 %v6706, 0.0
      %v6737 = vmax.f32 %v6711, 0.0
      %v6738 = vmax.f32 %v6716, 0.0
      %v6739 = vmax.f32 %v6721, 0.0
      %v6740 = vmax.f32 %v6726, 0.0
      %v6741 = vmax.f32 %v6731, 0.0
      %v6742 = vld [vmem:[%s713] sm:$0xff]
      %v6743 = vld [vmem:[%s713 + $0x8] sm:$0xff]
      %v6744 = vld [vmem:[%s713 + $0x10] sm:$0xff]
      %v6745 = vld [vmem:[%s713 + $0x18] sm:$0xff]
      %v6746 = vld [vmem:[%s713 + $0x20] sm:$0xff]
      %v6747 = vld [vmem:[%s713 + $0x28] sm:$0xff]
      %v6748 = vld [vmem:[%s713 + $0x30] sm:$0xff]
      %v6749 = vld [vmem:[%s713 + $0x38] sm:$0xff]
      %v6750 = vld [vmem:[%s716] sm:$0x1]
      %v6752 = vlaneseq
      %v6753 = vshrl.u32 %v6752, 7
      %v6754 = vsub.s32 0, %v6753
      %v6755 = vrot.slane %v6750, %v6754
      %vm6757 = vcmask 523264
      %v6759 = vsel %vm6757, %v6734, 0
      %v6762 = vsel %vm6757, %v6735, 0
      %v6765 = vsel %vm6757, %v6736, 0
      %v6768 = vsel %vm6757, %v6737, 0
      %v6771 = vsel %vm6757, %v6738, 0
      %v6774 = vsel %vm6757, %v6739, 0
      %v6777 = vsel %vm6757, %v6740, 0
      %v6780 = vsel %vm6757, %v6741, 0
      %6782 = vmatprep.subr.mxu0 0.0
      %6783 = vmatpush1.msra.mxu0 0.0
      %6784 = vmatprep.subr.mxu0 0.0
      %6785 = vmatpush1.msra.mxu0 0.0
      %6786 = vmatprep.subr.mxu0 0.0
      %6787 = vmatpush1.msra.mxu0 0.0
      %6788 = vmatprep.subr.mxu0 0.0
      %6789 = vmatpush1.msra.mxu0 0.0
      %6790 = vmatprep.subr.mxu0 0.0
      %6791 = vmatpush1.msra.mxu0 0.0
      %6792 = vmatprep.subr.mxu0 0.0
      %6793 = vmatpush1.msra.mxu0 0.0
      %6794 = vmatprep.subr.mxu0 0.0
      %6795 = vmatpush1.msra.mxu0 0.0
      %6796 = vmatprep.subr.mxu0 0.0
      %6797 = vmatpush1.msra.mxu0 0.0
      %6798 = vmatprep.subr.mxu0 0.0
      %6799 = vmatpush1.msra.mxu0 %v6749
      %6800 = vmatprep.subr.mxu0 0.0
      %6801 = vmatpush1.msra.mxu0 %v6748
      %6802 = vmatprep.subr.mxu0 0.0
      %6803 = vmatpush1.msra.mxu0 %v6747
      %6804 = vmatprep.subr.mxu0 0.0
      %6805 = vmatpush1.msra.mxu0 %v6746
      %6806 = vmatprep.subr.mxu0 0.0
      %6807 = vmatpush1.msra.mxu0 %v6745
      %6808 = vmatprep.subr.mxu0 0.0
      %6809 = vmatpush1.msra.mxu0 %v6744
      %6810 = vmatprep.subr.mxu0 0.0
      %6811 = vmatpush1.msra.mxu0 %v6743
      %6812 = vmatprep.subr.mxu0 0.0
      %6813 = vmatpush1.msra.mxu0 %v6742
      %6814 = vmatprep.subr.mxu0 0.0
      %6815 = vmatpush2.msra.mxu0 0.0
      %6816 = vmatprep.subr.mxu0 0.0
      %6817 = vmatpush2.msra.mxu0 0.0
      %6818 = vmatprep.subr.mxu0 0.0
      %6819 = vmatpush2.msra.mxu0 0.0
      %6820 = vmatprep.subr.mxu0 0.0
      %6821 = vmatpush2.msra.mxu0 0.0
      %6822 = vmatprep.subr.mxu0 0.0
      %6823 = vmatpush2.msra.mxu0 0.0
      %6824 = vmatprep.subr.mxu0 0.0
      %6825 = vmatpush2.msra.mxu0 0.0
      %6826 = vmatprep.subr.mxu0 0.0
      %6827 = vmatpush2.msra.mxu0 0.0
      %6828 = vmatprep.subr.mxu0 0.0
      %6829 = vmatpush2.msra.mxu0 0.0
      %6830 = vmatprep.subr.mxu0 0.0
      %6831 = vmatpush2.msra.mxu0 0.0
      %6832 = vmatprep.subr.mxu0 0.0
      %6833 = vmatpush2.msra.mxu0 0.0
      %6834 = vmatprep.subr.mxu0 0.0
      %6835 = vmatpush2.msra.mxu0 0.0
      %6836 = vmatprep.subr.mxu0 0.0
      %6837 = vmatpush2.msra.mxu0 0.0
      %6838 = vmatprep.subr.mxu0 0.0
      %6839 = vmatpush2.msra.mxu0 0.0
      %6840 = vmatprep.subr.mxu0 0.0
      %6841 = vmatpush2.msra.mxu0 0.0
      %6842 = vmatprep.subr.mxu0 0.0
      %6843 = vmatpush2.msra.mxu0 0.0
      %6844 = vmatprep.subr.mxu0 0.0
      %6845 = vmatpush2.msra.mxu0 0.0
      %6846 = vmatprep.mubr.f32.mxu0 0.0
      %6847 = vmatmul.mubr.f32.gmra.mxu0 %v6759
      %v6848 = vpop.f32.mrf.mxu0
      %v6849 = vadd.f32 %v6755, %v6848
      %v6850 = vpop.f32.mrf.mxu0
      %6851 = vmatprep.mubr.f32.mxu0 0.0
      %6852 = vmatmul.mubr.f32.gmra.mxu0 %v6762
      %v6853 = vpop.f32.mrf.mxu0
      %v6854 = vadd.f32 %v6755, %v6853
      %v6855 = vpop.f32.mrf.mxu0
      %6856 = vmatprep.mubr.f32.mxu0 0.0
      %6857 = vmatmul.mubr.f32.gmra.mxu0 %v6765
      %v6858 = vpop.f32.mrf.mxu0
      %v6859 = vadd.f32 %v6755, %v6858
      %v6860 = vpop.f32.mrf.mxu0
      %6861 = vmatprep.mubr.f32.mxu0 0.0
      %6862 = vmatmul.mubr.f32.gmra.mxu0 %v6768
      %v6863 = vpop.f32.mrf.mxu0
      %v6864 = vadd.f32 %v6755, %v6863
      %v6865 = vpop.f32.mrf.mxu0
      %6866 = vmatprep.mubr.f32.mxu0 0.0
      %6867 = vmatmul.mubr.f32.gmra.mxu0 %v6771
      %v6868 = vpop.f32.mrf.mxu0
      %v6869 = vadd.f32 %v6755, %v6868
      %v6870 = vpop.f32.mrf.mxu0
      %6871 = vmatprep.mubr.f32.mxu0 0.0
      %6872 = vmatmul.mubr.f32.gmra.mxu0 %v6774
      %v6873 = vpop.f32.mrf.mxu0
      %v6874 = vadd.f32 %v6755, %v6873
      %v6875 = vpop.f32.mrf.mxu0
      %6876 = vmatprep.mubr.f32.mxu0 0.0
      %6877 = vmatmul.mubr.f32.gmra.mxu0 %v6777
      %v6878 = vpop.f32.mrf.mxu0
      %v6879 = vadd.f32 %v6755, %v6878
      %v6880 = vpop.f32.mrf.mxu0
      %6881 = vmatprep.mubr.f32.mxu0 0.0
      %6882 = vmatmul.mubr.f32.gmra.mxu0 %v6780
      %v6883 = vpop.f32.mrf.mxu0
      %v6884 = vadd.f32 %v6755, %v6883
      %v6885 = vpop.f32.mrf.mxu0
      %6886 = vdwg.mxu0
      %v6887 = vadd.f32 %v6586, %v6849
      %v6888 = vadd.f32 %v6587, %v6854
      %v6889 = vadd.f32 %v6588, %v6859
      %v6890 = vadd.f32 %v6589, %v6864
      %v6891 = vadd.f32 %v6590, %v6869
      %v6892 = vadd.f32 %v6591, %v6874
      %v6893 = vadd.f32 %v6592, %v6879
      %v6894 = vadd.f32 %v6593, %v6884
      %v6895 = vld [vmem:[%s719] sm:$0x1]
      %v6896 = vld [vmem:[%s722] sm:$0x1]
      %v6897 = vsel %vm786, %v6887, 0.0
      %6898 = vadd.xlane.f32.xlu0 %v6897
      %v6899 = vpop.xlane.xlu0 %6898
      %v6900 = vsel %vm786, %v6888, 0.0
      %6901 = vadd.xlane.f32.xlu0 %v6900
      %v6902 = vpop.xlane.xlu0 %6901
      %v6903 = vsel %vm786, %v6889, 0.0
      %6904 = vadd.xlane.f32.xlu0 %v6903
      %v6905 = vpop.xlane.xlu0 %6904
      %v6906 = vsel %vm786, %v6890, 0.0
      %6907 = vadd.xlane.f32.xlu0 %v6906
      %v6908 = vpop.xlane.xlu0 %6907
      %v6909 = vsel %vm786, %v6891, 0.0
      %6910 = vadd.xlane.f32.xlu0 %v6909
      %v6911 = vpop.xlane.xlu0 %6910
      %v6912 = vsel %vm786, %v6892, 0.0
      %6913 = vadd.xlane.f32.xlu0 %v6912
      %v6914 = vpop.xlane.xlu0 %6913
      %v6915 = vsel %vm786, %v6893, 0.0
      %6916 = vadd.xlane.f32.xlu0 %v6915
      %v6917 = vpop.xlane.xlu0 %6916
      %v6918 = vsel %vm786, %v6894, 0.0
      %6919 = vadd.xlane.f32.xlu0 %v6918
      %v6920 = vpop.xlane.xlu0 %6919
      %v6921 = vmul.f32 %v6899, %v6485
      %v6922 = vmul.f32 %v6902, %v6485
      %v6923 = vmul.f32 %v6905, %v6485
      %v6924 = vmul.f32 %v6908, %v6485
      %v6925 = vmul.f32 %v6911, %v6485
      %v6926 = vmul.f32 %v6914, %v6485
      %v6927 = vmul.f32 %v6917, %v6485
      %v6928 = vmul.f32 %v6920, %v6485
      %v6929 = vsub.f32 %v6887, %v6921
      %v6930 = vsub.f32 %v6888, %v6922
      %v6931 = vsub.f32 %v6889, %v6923
      %v6932 = vsub.f32 %v6890, %v6924
      %v6933 = vsub.f32 %v6891, %v6925
      %v6934 = vsub.f32 %v6892, %v6926
      %v6935 = vsub.f32 %v6893, %v6927
      %v6936 = vsub.f32 %v6894, %v6928
      %v6937 = vmul.f32 %v6929, %v6929
      %v6938 = vmul.f32 %v6930, %v6930
      %v6939 = vmul.f32 %v6931, %v6931
      %v6940 = vmul.f32 %v6932, %v6932
      %v6941 = vmul.f32 %v6933, %v6933
      %v6942 = vmul.f32 %v6934, %v6934
      %v6943 = vmul.f32 %v6935, %v6935
      %v6944 = vmul.f32 %v6936, %v6936
      %v6945 = vsel %vm786, %v6937, 0.0
      %6946 = vadd.xlane.f32.xlu0 %v6945
      %v6947 = vpop.xlane.xlu0 %6946
      %v6948 = vsel %vm786, %v6938, 0.0
      %6949 = vadd.xlane.f32.xlu0 %v6948
      %v6950 = vpop.xlane.xlu0 %6949
      %v6951 = vsel %vm786, %v6939, 0.0
      %6952 = vadd.xlane.f32.xlu0 %v6951
      %v6953 = vpop.xlane.xlu0 %6952
      %v6954 = vsel %vm786, %v6940, 0.0
      %6955 = vadd.xlane.f32.xlu0 %v6954
      %v6956 = vpop.xlane.xlu0 %6955
      %v6957 = vsel %vm786, %v6941, 0.0
      %6958 = vadd.xlane.f32.xlu0 %v6957
      %v6959 = vpop.xlane.xlu0 %6958
      %v6960 = vsel %vm786, %v6942, 0.0
      %6961 = vadd.xlane.f32.xlu0 %v6960
      %v6962 = vpop.xlane.xlu0 %6961
      %v6963 = vsel %vm786, %v6943, 0.0
      %6964 = vadd.xlane.f32.xlu0 %v6963
      %v6965 = vpop.xlane.xlu0 %6964
      %v6966 = vsel %vm786, %v6944, 0.0
      %6967 = vadd.xlane.f32.xlu0 %v6966
      %v6968 = vpop.xlane.xlu0 %6967
      %v6969 = vmul.f32 %v6947, %v6485
      %v6970 = vmul.f32 %v6950, %v6485
      %v6971 = vmul.f32 %v6953, %v6485
      %v6972 = vmul.f32 %v6956, %v6485
      %v6973 = vmul.f32 %v6959, %v6485
      %v6974 = vmul.f32 %v6962, %v6485
      %v6975 = vmul.f32 %v6965, %v6485
      %v6976 = vmul.f32 %v6968, %v6485
      %v6977 = vadd.f32 %v6969, 1e-12
      %v6978 = vadd.f32 %v6970, 1e-12
      %v6979 = vadd.f32 %v6971, 1e-12
      %v6980 = vadd.f32 %v6972, 1e-12
      %v6981 = vadd.f32 %v6973, 1e-12
      %v6982 = vadd.f32 %v6974, 1e-12
      %v6983 = vadd.f32 %v6975, 1e-12
      %v6984 = vadd.f32 %v6976, 1e-12
      %v6985 = vrsqrt.pop %v6977
      %v6986 = vrsqrt.pop %v6978
      %v6987 = vrsqrt.pop %v6979
      %v6988 = vrsqrt.pop %v6980
      %v6989 = vrsqrt.pop %v6981
      %v6990 = vrsqrt.pop %v6982
      %v6991 = vrsqrt.pop %v6983
      %v6992 = vrsqrt.pop %v6984
      %v6993 = vmul.f32 %v6929, %v6985
      %v6994 = vmul.f32 %v6930, %v6986
      %v6995 = vmul.f32 %v6931, %v6987
      %v6996 = vmul.f32 %v6932, %v6988
      %v6997 = vmul.f32 %v6933, %v6989
      %v6998 = vmul.f32 %v6934, %v6990
      %v6999 = vmul.f32 %v6935, %v6991
      %v7000 = vmul.f32 %v6936, %v6992
      %v7002 = vlaneseq
      %v7003 = vshrl.u32 %v7002, 7
      %v7004 = vsub.s32 0, %v7003
      %v7005 = vrot.slane %v6895, %v7004
      %v7007 = vmul.f32 %v6993, %v7005
      %v7008 = vmul.f32 %v6994, %v7005
      %v7009 = vmul.f32 %v6995, %v7005
      %v7010 = vmul.f32 %v6996, %v7005
      %v7011 = vmul.f32 %v6997, %v7005
      %v7012 = vmul.f32 %v6998, %v7005
      %v7013 = vmul.f32 %v6999, %v7005
      %v7014 = vmul.f32 %v7000, %v7005
      %v7016 = vlaneseq
      %v7017 = vshrl.u32 %v7016, 7
      %v7018 = vsub.s32 0, %v7017
      %v7019 = vrot.slane %v6896, %v7018
      %v7021 = vadd.f32 %v7007, %v7019
      %v7022 = vadd.f32 %v7008, %v7019
      %v7023 = vadd.f32 %v7009, %v7019
      %v7024 = vadd.f32 %v7010, %v7019
      %v7025 = vadd.f32 %v7011, %v7019
      %v7026 = vadd.f32 %v7012, %v7019
      %v7027 = vadd.f32 %v7013, %v7019
      %v7028 = vadd.f32 %v7014, %v7019
      %7029 = vst.msk [vmem:[#allocation2] sm:$0xff] %vm786, %v7021
      %7030 = vst.msk [vmem:[#allocation2 + $0x8] sm:$0xff] %vm786, %v7022
      %7031 = vst.msk [vmem:[#allocation2 + $0x10] sm:$0xff] %vm786, %v7023
      %7032 = vst.msk [vmem:[#allocation2 + $0x18] sm:$0xff] %vm786, %v7024
      %7033 = vst.msk [vmem:[#allocation2 + $0x20] sm:$0xff] %vm786, %v7025
      %7034 = vst.msk [vmem:[#allocation2 + $0x28] sm:$0xff] %vm786, %v7026
      %7035 = vst.msk [vmem:[#allocation2 + $0x30] sm:$0xff] %vm786, %v7027
      %7036 = vst.msk [vmem:[#allocation2 + $0x38] sm:$0xff] %vm786, %v7028
      %p7037 = scmp.eq.s32.totalorder %s32, 1
      // Predicated region
      $region89: #{inter_transformer_forward.1} parent=83 // pred_check
        %p7038 = pneg %p7037
      $region90: #{inter_transformer_forward.1} parent=83 // pred_check_branch
        %7040 = sbr.rel (%p7038) target = $region92
      $region91: #{inter_transformer_forward.1} parent=83 // pred_region
        %v7041 = vsel %vm786, %v7021, 0.0
        %7042 = vadd.xlane.f32.xlu0 %v7041
        %v7043 = vpop.xlane.xlu0 %7042
        %v7044 = vsel %vm786, %v7022, 0.0
        %7045 = vadd.xlane.f32.xlu0 %v7044
        %v7046 = vpop.xlane.xlu0 %7045
        %v7047 = vsel %vm786, %v7023, 0.0
        %7048 = vadd.xlane.f32.xlu0 %v7047
        %v7049 = vpop.xlane.xlu0 %7048
        %v7050 = vsel %vm786, %v7024, 0.0
        %7051 = vadd.xlane.f32.xlu0 %v7050
        %v7052 = vpop.xlane.xlu0 %7051
        %v7053 = vsel %vm786, %v7025, 0.0
        %7054 = vadd.xlane.f32.xlu0 %v7053
        %v7055 = vpop.xlane.xlu0 %7054
        %v7056 = vsel %vm786, %v7026, 0.0
        %7057 = vadd.xlane.f32.xlu0 %v7056
        %v7058 = vpop.xlane.xlu0 %7057
        %v7059 = vsel %vm786, %v7027, 0.0
        %7060 = vadd.xlane.f32.xlu0 %v7059
        %v7061 = vpop.xlane.xlu0 %7060
        %v7062 = vsel %vm786, %v7028, 0.0
        %7063 = vadd.xlane.f32.xlu0 %v7062
        %v7064 = vpop.xlane.xlu0 %7063
        %v7065 = vmul.f32 %v7043, %v6485
        %v7066 = vmul.f32 %v7046, %v6485
        %v7067 = vmul.f32 %v7049, %v6485
        %v7068 = vmul.f32 %v7052, %v6485
        %v7069 = vmul.f32 %v7055, %v6485
        %v7070 = vmul.f32 %v7058, %v6485
        %v7071 = vmul.f32 %v7061, %v6485
        %v7072 = vmul.f32 %v7064, %v6485
        %v7073 = vrot.slane %v7065, 4
        %v7074 = vadd.f32 %v7065, %v7073
        %v7075 = vrot.slane %v7074, 2
        %v7076 = vadd.f32 %v7074, %v7075
        %v7077 = vrot.slane %v7076, 1
        %v7078 = vadd.f32 %v7076, %v7077
        %v7079 = vrot.slane %v7066, 4
        %v7080 = vadd.f32 %v7066, %v7079
        %v7081 = vrot.slane %v7080, 2
        %v7082 = vadd.f32 %v7080, %v7081
        %v7083 = vrot.slane %v7082, 1
        %v7084 = vadd.f32 %v7082, %v7083
        %v7085 = vrot.slane %v7067, 4
        %v7086 = vadd.f32 %v7067, %v7085
        %v7087 = vrot.slane %v7086, 2
        %v7088 = vadd.f32 %v7086, %v7087
        %v7089 = vrot.slane %v7088, 1
        %v7090 = vadd.f32 %v7088, %v7089
        %v7091 = vrot.slane %v7068, 4
        %v7092 = vadd.f32 %v7068, %v7091
        %v7093 = vrot.slane %v7092, 2
        %v7094 = vadd.f32 %v7092, %v7093
        %v7095 = vrot.slane %v7094, 1
        %v7096 = vadd.f32 %v7094, %v7095
        %v7097 = vrot.slane %v7069, 4
        %v7098 = vadd.f32 %v7069, %v7097
        %v7099 = vrot.slane %v7098, 2
        %v7100 = vadd.f32 %v7098, %v7099
        %v7101 = vrot.slane %v7100, 1
        %v7102 = vadd.f32 %v7100, %v7101
        %v7103 = vrot.slane %v7070, 4
        %v7104 = vadd.f32 %v7070, %v7103
        %v7105 = vrot.slane %v7104, 2
        %v7106 = vadd.f32 %v7104, %v7105
        %v7107 = vrot.slane %v7106, 1
        %v7108 = vadd.f32 %v7106, %v7107
        %v7109 = vrot.slane %v7071, 4
        %v7110 = vadd.f32 %v7071, %v7109
        %v7111 = vrot.slane %v7110, 2
        %v7112 = vadd.f32 %v7110, %v7111
        %v7113 = vrot.slane %v7112, 1
        %v7114 = vadd.f32 %v7112, %v7113
        %v7115 = vrot.slane %v7072, 4
        %v7116 = vadd.f32 %v7072, %v7115
        %v7117 = vrot.slane %v7116, 2
        %v7118 = vadd.f32 %v7116, %v7117
        %v7119 = vrot.slane %v7118, 1
        %v7120 = vadd.f32 %v7118, %v7119
        %v7121 = vrcp.pop 8.0
        %v7122 = vmul.f32 %v7078, %v7121
        %v7123 = vmul.f32 %v7084, %v7121
        %v7124 = vmul.f32 %v7090, %v7121
        %v7125 = vmul.f32 %v7096, %v7121
        %v7126 = vmul.f32 %v7102, %v7121
        %v7127 = vmul.f32 %v7108, %v7121
        %v7128 = vmul.f32 %v7114, %v7121
        %v7129 = vmul.f32 %v7120, %v7121
        %v7130 = vsub.f32 %v7021, %v7122
        %v7131 = vsub.f32 %v7022, %v7123
        %v7132 = vsub.f32 %v7023, %v7124
        %v7133 = vsub.f32 %v7024, %v7125
        %v7134 = vsub.f32 %v7025, %v7126
        %v7135 = vsub.f32 %v7026, %v7127
        %v7136 = vsub.f32 %v7027, %v7128
        %v7137 = vsub.f32 %v7028, %v7129
        %v7138 = vmul.f32 %v7130, %v7130
        %v7139 = vmul.f32 %v7131, %v7131
        %v7140 = vmul.f32 %v7132, %v7132
        %v7141 = vmul.f32 %v7133, %v7133
        %v7142 = vmul.f32 %v7134, %v7134
        %v7143 = vmul.f32 %v7135, %v7135
        %v7144 = vmul.f32 %v7136, %v7136
        %v7145 = vmul.f32 %v7137, %v7137
        %v7146 = vsel %vm786, %v7138, 0.0
        %7147 = vadd.xlane.f32.xlu0 %v7146
        %v7148 = vpop.xlane.xlu0 %7147
        %v7149 = vsel %vm786, %v7139, 0.0
        %7150 = vadd.xlane.f32.xlu0 %v7149
        %v7151 = vpop.xlane.xlu0 %7150
        %v7152 = vsel %vm786, %v7140, 0.0
        %7153 = vadd.xlane.f32.xlu0 %v7152
        %v7154 = vpop.xlane.xlu0 %7153
        %v7155 = vsel %vm786, %v7141, 0.0
        %7156 = vadd.xlane.f32.xlu0 %v7155
        %v7157 = vpop.xlane.xlu0 %7156
        %v7158 = vsel %vm786, %v7142, 0.0
        %7159 = vadd.xlane.f32.xlu0 %v7158
        %v7160 = vpop.xlane.xlu0 %7159
        %v7161 = vsel %vm786, %v7143, 0.0
        %7162 = vadd.xlane.f32.xlu0 %v7161
        %v7163 = vpop.xlane.xlu0 %7162
        %v7164 = vsel %vm786, %v7144, 0.0
        %7165 = vadd.xlane.f32.xlu0 %v7164
        %v7166 = vpop.xlane.xlu0 %7165
        %v7167 = vsel %vm786, %v7145, 0.0
        %7168 = vadd.xlane.f32.xlu0 %v7167
        %v7169 = vpop.xlane.xlu0 %7168
        %v7170 = vmul.f32 %v7148, %v6485
        %v7171 = vmul.f32 %v7151, %v6485
        %v7172 = vmul.f32 %v7154, %v6485
        %v7173 = vmul.f32 %v7157, %v6485
        %v7174 = vmul.f32 %v7160, %v6485
        %v7175 = vmul.f32 %v7163, %v6485
        %v7176 = vmul.f32 %v7166, %v6485
        %v7177 = vmul.f32 %v7169, %v6485
        %v7178 = vrot.slane %v7170, 4
        %v7179 = vadd.f32 %v7170, %v7178
        %v7180 = vrot.slane %v7179, 2
        %v7181 = vadd.f32 %v7179, %v7180
        %v7182 = vrot.slane %v7181, 1
        %v7183 = vadd.f32 %v7181, %v7182
        %v7184 = vrot.slane %v7171, 4
        %v7185 = vadd.f32 %v7171, %v7184
        %v7186 = vrot.slane %v7185, 2
        %v7187 = vadd.f32 %v7185, %v7186
        %v7188 = vrot.slane %v7187, 1
        %v7189 = vadd.f32 %v7187, %v7188
        %v7190 = vrot.slane %v7172, 4
        %v7191 = vadd.f32 %v7172, %v7190
        %v7192 = vrot.slane %v7191, 2
        %v7193 = vadd.f32 %v7191, %v7192
        %v7194 = vrot.slane %v7193, 1
        %v7195 = vadd.f32 %v7193, %v7194
        %v7196 = vrot.slane %v7173, 4
        %v7197 = vadd.f32 %v7173, %v7196
        %v7198 = vrot.slane %v7197, 2
        %v7199 = vadd.f32 %v7197, %v7198
        %v7200 = vrot.slane %v7199, 1
        %v7201 = vadd.f32 %v7199, %v7200
        %v7202 = vrot.slane %v7174, 4
        %v7203 = vadd.f32 %v7174, %v7202
        %v7204 = vrot.slane %v7203, 2
        %v7205 = vadd.f32 %v7203, %v7204
        %v7206 = vrot.slane %v7205, 1
        %v7207 = vadd.f32 %v7205, %v7206
        %v7208 = vrot.slane %v7175, 4
        %v7209 = vadd.f32 %v7175, %v7208
        %v7210 = vrot.slane %v7209, 2
        %v7211 = vadd.f32 %v7209, %v7210
        %v7212 = vrot.slane %v7211, 1
        %v7213 = vadd.f32 %v7211, %v7212
        %v7214 = vrot.slane %v7176, 4
        %v7215 = vadd.f32 %v7176, %v7214
        %v7216 = vrot.slane %v7215, 2
        %v7217 = vadd.f32 %v7215, %v7216
        %v7218 = vrot.slane %v7217, 1
        %v7219 = vadd.f32 %v7217, %v7218
        %v7220 = vrot.slane %v7177, 4
        %v7221 = vadd.f32 %v7177, %v7220
        %v7222 = vrot.slane %v7221, 2
        %v7223 = vadd.f32 %v7221, %v7222
        %v7224 = vrot.slane %v7223, 1
        %v7225 = vadd.f32 %v7223, %v7224
        %v7226 = vmul.f32 %v7183, %v7121
        %v7227 = vmul.f32 %v7189, %v7121
        %v7228 = vmul.f32 %v7195, %v7121
        %v7229 = vmul.f32 %v7201, %v7121
        %v7230 = vmul.f32 %v7207, %v7121
        %v7231 = vmul.f32 %v7213, %v7121
        %v7232 = vmul.f32 %v7219, %v7121
        %v7233 = vmul.f32 %v7225, %v7121
        %v7234 = vadd.f32 %v7226, 1e-12
        %v7235 = vadd.f32 %v7227, 1e-12
        %v7236 = vadd.f32 %v7228, 1e-12
        %v7237 = vadd.f32 %v7229, 1e-12
        %v7238 = vadd.f32 %v7230, 1e-12
        %v7239 = vadd.f32 %v7231, 1e-12
        %v7240 = vadd.f32 %v7232, 1e-12
        %v7241 = vadd.f32 %v7233, 1e-12
        %v7242 = vrsqrt.pop %v7234
        %v7243 = vrsqrt.pop %v7235
        %v7244 = vrsqrt.pop %v7236
        %v7245 = vrsqrt.pop %v7237
        %v7246 = vrsqrt.pop %v7238
        %v7247 = vrsqrt.pop %v7239
        %v7248 = vrsqrt.pop %v7240
        %v7249 = vrsqrt.pop %v7241
        %v7250 = vmul.f32 %v7130, %v7242
        %v7251 = vmul.f32 %v7131, %v7243
        %v7252 = vmul.f32 %v7132, %v7244
        %v7253 = vmul.f32 %v7133, %v7245
        %v7254 = vmul.f32 %v7134, %v7246
        %v7255 = vmul.f32 %v7135, %v7247
        %v7256 = vmul.f32 %v7136, %v7248
        %v7257 = vmul.f32 %v7137, %v7249
        %v7258 = vld [vmem:[%s14] sm:$0x1]
        %v7260 = vlaneseq
        %v7261 = vshrl.u32 %v7260, 7
        %v7262 = vsub.s32 0, %v7261
        %v7263 = vrot.slane %v7258, %v7262
        %v7265 = vmul.f32 %v7250, %v7263
        %v7266 = vmul.f32 %v7251, %v7263
        %v7267 = vmul.f32 %v7252, %v7263
        %v7268 = vmul.f32 %v7253, %v7263
        %v7269 = vmul.f32 %v7254, %v7263
        %v7270 = vmul.f32 %v7255, %v7263
        %v7271 = vmul.f32 %v7256, %v7263
        %v7272 = vmul.f32 %v7257, %v7263
        %v7273 = vld [vmem:[%s15] sm:$0x1]
        %v7275 = vlaneseq
        %v7276 = vshrl.u32 %v7275, 7
        %v7277 = vsub.s32 0, %v7276
        %v7278 = vrot.slane %v7273, %v7277
        %v7280 = vadd.f32 %v7265, %v7278
        %v7281 = vadd.f32 %v7266, %v7278
        %v7282 = vadd.f32 %v7267, %v7278
        %v7283 = vadd.f32 %v7268, %v7278
        %v7284 = vadd.f32 %v7269, %v7278
        %v7285 = vadd.f32 %v7270, %v7278
        %v7286 = vadd.f32 %v7271, %v7278
        %v7287 = vadd.f32 %v7272, %v7278
        %v7288 = vld [vmem:[%s677] sm:$0xff]
        %v7289 = vld [vmem:[%s677 + $0x8] sm:$0xff]
        %v7290 = vld [vmem:[%s677 + $0x10] sm:$0xff]
        %v7291 = vld [vmem:[%s677 + $0x18] sm:$0xff]
        %v7292 = vld [vmem:[%s677 + $0x20] sm:$0xff]
        %v7293 = vld [vmem:[%s677 + $0x28] sm:$0xff]
        %v7294 = vld [vmem:[%s677 + $0x30] sm:$0xff]
        %v7295 = vld [vmem:[%s677 + $0x38] sm:$0xff]
        %v7296 = vadd.f32 %v7280, %v7288
        %v7297 = vadd.f32 %v7281, %v7289
        %v7298 = vadd.f32 %v7282, %v7290
        %v7299 = vadd.f32 %v7283, %v7291
        %v7300 = vadd.f32 %v7284, %v7292
        %v7301 = vadd.f32 %v7285, %v7293
        %v7302 = vadd.f32 %v7286, %v7294
        %v7303 = vadd.f32 %v7287, %v7295
        %7304 = vst.msk [vmem:[%s727] sm:$0xff] %vm786, %v7296
        %7305 = vst.msk [vmem:[%s727 + $0x8] sm:$0xff] %vm786, %v7297
        %7306 = vst.msk [vmem:[%s727 + $0x10] sm:$0xff] %vm786, %v7298
        %7307 = vst.msk [vmem:[%s727 + $0x18] sm:$0xff] %vm786, %v7299
        %7308 = vst.msk [vmem:[%s727 + $0x20] sm:$0xff] %vm786, %v7300
        %7309 = vst.msk [vmem:[%s727 + $0x28] sm:$0xff] %vm786, %v7301
        %7310 = vst.msk [vmem:[%s727 + $0x30] sm:$0xff] %vm786, %v7302
        %7311 = vst.msk [vmem:[%s727 + $0x38] sm:$0xff] %vm786, %v7303
      $region92: #{inter_transformer_forward.1} parent=83 // pred_fallthru
        _
      %s7312 = smul.u32 8, %s31
      %p7313 = scmp.lt.s32.totalorder %s7312, 7
      %s7314 = scalar_select %p7313, %s7312, 7
      %s7315 = smul.addr %s7314, 8
      %s7316 = scalar_lea.vmem %s16, %s7315
      // Predicated region
      $region93: #{inter_transformer_forward.1} parent=83 // pred_check
        %p7317 = pneg %p458
      $region94: #{inter_transformer_forward.1} parent=83 // pred_check_branch
        %7319 = sbr.rel (%p7317) target = $region96
      $region95: #{inter_transformer_forward.1} parent=83 // pred_region
        %s7320 = smul.u32 8, %s31
      $region96: #{inter_transformer_forward.1} parent=83 // pred_fallthru
        _
      // Predicated region
      $region97: #{inter_transformer_forward.1} parent=83 // pred_check
        %p7321 = pneg %p458
      $region98: #{inter_transformer_forward.1} parent=83 // pred_check_branch
        %7323 = sbr.rel (%p7321) target = $region100
      $region99: #{inter_transformer_forward.1} parent=83 // pred_region
        %s7324 = smul.u32 8, %s31
        %p7325 = scmp.lt.s32.totalorder %s7324, 7
        %s7326 = scalar_select %p7325, %s7324, 7
        %s7327 = smul.addr %s7326, 8
        %s7328 = scalar_lea.vmem %s16, %s7327
      $region100: #{inter_transformer_forward.1} parent=83 // pred_fallthru
        _
    $region84: #{inter_transformer_forward.1} parent=5 // pred_fallthru
      _
    %p7329 = scmp.le.s32.totalorder 2, %s22
    // Predicated region
    $region101: #{inter_transformer_forward.1} parent=5 // pred_check
      %p7330 = pneg %p7329
    $region102: #{inter_transformer_forward.1} parent=5 // pred_check_branch
      %7332 = sbr.rel (%p7330) target = $region104
    $region103: #{inter_transformer_forward.1} parent=5 // pred_region
      %s7333 = ssub.s32 %s22, 2
    $region104: #{inter_transformer_forward.1} parent=5 // pred_fallthru
      _
  $region6: #{inter_transformer_forward.1} parent=0 // loop_footer
    %s26 = sadd.s32 1, %s22
  $region7: #{inter_transformer_forward.1} parent=0 // loop_footer_branch
    %21 = sbr.rel target = $region3
  $region8: #{inter_transformer_forward.1} parent=0 // loop_exit
    _

</llo_original>
